<compile_context>
chip_gen: v7x
topology: tpu7x:2x2x1
jax: 0.10.0
libtpu: 0.0.40
codegen_flags: <defaults>
</compile_context>

<pallas_src>
import jax
import jax.numpy as jnp
from jax.experimental import pallas as pl
from jax.experimental.pallas import tpu as pltpu

# ----------------------------------------------------------------------------
# Hyper-parameters implied by DeformableAttention2D(c) defaults
# ----------------------------------------------------------------------------
HEADS = 8
DIM_HEAD = 64
INNER = HEADS * DIM_HEAD                      # 512
OFFSET_GROUPS = HEADS                         # default: offset_groups = heads
OFFSET_DIMS = INNER // OFFSET_GROUPS          # 64
DOWNSAMPLE = 4
OFFSET_KERNEL = 6
OFFSET_PAD = (OFFSET_KERNEL - DOWNSAMPLE) // 2   # 1
OFFSET_SCALE = float(DOWNSAMPLE)
SCALE = DIM_HEAD ** -0.5
BN_EPS = 1e-3                                 # ultralytics Conv: BatchNorm2d(eps=0.001)


def _device_kind():
    try:
        return jax.devices()[0].device_kind.lower()
    except Exception:
        return ""


_IS_V7 = "v7" in _device_kind()
# v7x: 64 MiB VMEM / 2 TCs -> smaller tiles + tighter explicit scoped limit.
# v5e/v6e: 128 MiB VMEM -> bigger tiles; default scoped limits (16/32 MiB) are too
# small so the limit is always passed explicitly.
TILE_N = 512 if _IS_V7 else 1024
TILE_Q = 128 if _IS_V7 else 256
VMEM_LIMIT_BYTES = (44 if _IS_V7 else 96) * 1024 * 1024


def _pick_tile(n, target):
    """Largest multiple of 128 that divides n and is <= target; else the full extent."""
    if n <= target or n % 128 != 0:
        return n
    t = max((target // 128) * 128, 128)
    while n % t != 0:
        t -= 128
    return t


def _cparams(n_axes):
    return pltpu.CompilerParams(
        dimension_semantics=("parallel",) * n_axes,
        vmem_limit_bytes=VMEM_LIMIT_BYTES)


# ----------------------------------------------------------------------------
# Pallas kernel 1: grouped pointwise (1x1) conv == per-group matmul.
#   x: (B, G, Cin, N), w: (G, Cout, Cin) -> (B, G, Cout, N)
# Group axis collapsed into the block (static unroll over G inside the kernel):
# 8x fewer grid steps, one big DMA per step, weights VMEM-resident.
# ----------------------------------------------------------------------------
def grouped_pw_conv(x, w, *, out_dtype=None, precise=False, tile_n=None):
    B, G, Cin, N = x.shape
    Cout = w.shape[1]
    out_dtype = out_dtype or x.dtype
    TN = _pick_tile(N, tile_n or TILE_N)
    cdt = jnp.float32 if precise else jnp.bfloat16

    def kernel(x_ref, w_ref, o_ref):
        for g in range(G):                                   # G is small (1 or 8)
            if Cin == 1:
                # rank-1 outer product on the VPU (avoids a K=1 MXU matmul)
                o_ref[0, g] = (w_ref[g].astype(jnp.float32)
                               * x_ref[0, g].astype(jnp.float32)).astype(o_ref.dtype)
            else:
                o_ref[0, g] = jax.lax.dot_general(
                    w_ref[g].astype(cdt), x_ref[0, g].astype(cdt),
                    (((1,), (0,)), ((), ())),
                    preferred_element_type=jnp.float32).astype(o_ref.dtype)

    return pl.pallas_call(
        kernel,
        out_shape=jax.ShapeDtypeStruct((B, G, Cout, N), out_dtype),
        grid=(N // TN, B),                      # spatial leading: megacore even at B=1
        in_specs=[
            pl.BlockSpec((1, G, Cin, TN), lambda n, b: (b, 0, 0, n)),
            pl.BlockSpec((G, Cout, Cin), lambda n, b: (0, 0, 0)),
        ],
        out_specs=pl.BlockSpec((1, G, Cout, TN), lambda n, b: (b, 0, 0, n)),
        compiler_params=_cparams(2),
    )(x, w)


# ----------------------------------------------------------------------------
# Pallas kernel 2: fused deformable-attention core, per (head==group, batch),
# tiled over queries.  Channel-major (D, seq) layout end to end:
#   scores = q^T k        (scale pre-folded into k)
#   scores += CPB(grid_q - vgrid)   built row-by-row in VMEM (never hits HBM);
#                                   the cpb x cpb layer runs on the MXU and live
#                                   temporaries stay at (cpb, Nk) regardless of TQ.
#   p      = softmax(scores);  out = v p^T  -> (D, TQ) lane-dense store.
# ----------------------------------------------------------------------------
def attention_fused(q, kv, vgrid_t, grid_q, cpb_packed, *, tile_q=None):
    B, G, D, N = q.shape
    Nk = kv.shape[3]
    P = cpb_packed.shape[0]                        # cpb hidden dim = c // 4
    TQ = _pick_tile(N, tile_q or TILE_Q)

    def kernel(q_ref, kv_ref, vg_ref, gq_ref, cpb_ref, o_ref, s_ref):
        qb = q_ref[0, 0].astype(jnp.bfloat16)      # (D, TQ)
        kb = kv_ref[0, 0, :D, :]                   # (D, Nk) bf16 (scale folded in)
        vb = kv_ref[0, 0, D:, :]                   # (D, Nk) bf16

        # scores (TQ, Nk), f32 MXU accumulate.
        # NOTE(layout): both operands contract dim 0 (channel-major producers keep
        # the output store lane-dense); if Mosaic ever inserts an XLU transpose
        # here, fix the orientation in the producer kernel, not in-kernel.
        s_ref[...] = jax.lax.dot_general(
            qb, kb, (((0,), (0,)), ((), ())), preferred_element_type=jnp.float32)

        # ---- CPB relative position bias: tiny MLP applied per query row ------
        vg = vg_ref[0, 0].astype(jnp.float32)      # (2, Nk)
        vgx, vgy = vg[0:1, :], vg[1:2, :]
        w0x = cpb_ref[:, 0:1]                      # (P, 1)
        w0y = cpb_ref[:, 1:2]
        b0 = cpb_ref[:, 2:3]
        w1 = cpb_ref[:, 3:3 + P].astype(jnp.bfloat16)        # (P, P)   MXU operand
        b1 = cpb_ref[:, 3 + P:4 + P]
        w2t = cpb_ref[:, 4 + P:5 + P].astype(jnp.bfloat16)   # (P, 1) == w2^T

        def sgn_log1p(d):
            lg = jnp.log(jnp.abs(d) + 1.0)
            return jnp.where(d >= 0.0, lg, -lg)    # lg == 0 at d == 0

        def row(r, carry):
            gq = gq_ref[pl.ds(r, 1), :]            # (1, 2)
            fx = sgn_log1p(gq[:, 0:1] - vgx)       # (1, Nk)
            fy = sgn_log1p(gq[:, 1:2] - vgy)
            h0 = jnp.maximum(w0x * fx + w0y * fy + b0, 0.0)            # (P, Nk) VPU
            h1 = jax.lax.dot_general(w1, h0.astype(jnp.bfloat16),
                                     (((1,), (0,)), ((), ())),
                                     preferred_element_type=jnp.float32) + b1
            h1 = jnp.maximum(h1, 0.0)                                   # (P, Nk)
            brow = jax.lax.dot_general(w2t, h1.astype(jnp.bfloat16),
                                       (((0,), (0,)), ((), ())),
                                       preferred_element_type=jnp.float32)  # (1,Nk)
            s_ref[pl.ds(r, 1), :] += brow
            return carry

        jax.lax.fori_loop(0, TQ, row, 0)

        # ---- softmax over keys (lane axis) + weighted value sum --------------
        s = s_ref[...]
        s = s - jnp.max(s, axis=-1, keepdims=True)
        e = jnp.exp(s)
        # approx reciprocal runs on the EUP; ~1e-4 rel err vs exact division.
        p = e * pl.reciprocal(jnp.sum(e, axis=-1, keepdims=True), approx=True)
        out = jax.lax.dot_general(vb, p.astype(jnp.bfloat16),
                                  (((1,), (1,)), ((), ())),
                                  preferred_element_type=jnp.float32)   # (D, TQ)
        o_ref[0, 0] = out.astype(o_ref.dtype)

    return pl.pallas_call(
        kernel,
        out_shape=jax.ShapeDtypeStruct((B, G, D, N), jnp.bfloat16),
        grid=(G, B, N // TQ),                      # leading extent >= 8 for megacore
        in_specs=[
            pl.BlockSpec((1, 1, D, TQ), lambda g, b, i: (b, g, 0, i)),
            pl.BlockSpec((1, 1, 2 * D, Nk), lambda g, b, i: (b, g, 0, 0)),
            pl.BlockSpec((1, 1, 2, Nk), lambda g, b, i: (b, g, 0, 0)),
            pl.BlockSpec((TQ, 2), lambda g, b, i: (i, 0)),
            pl.BlockSpec((P, P + 5), lambda g, b, i: (0, 0)),
        ],
        out_specs=pl.BlockSpec((1, 1, D, TQ), lambda g, b, i: (b, g, 0, i)),
        scratch_shapes=[pltpu.VMEM((TQ, Nk), jnp.float32)],
        compiler_params=_cparams(3),
    )(q, kv, vgrid_t, grid_q, cpb_packed)


# ----------------------------------------------------------------------------
# Pallas kernel 3: fused  to_out(+bias) + residual + FFN(folded BN) + residual.
#   attn: (B, INNER, N) bf16,  x: (B, c, N) f32  ->  y: (B, c, N) f32
# Tiled over N (spatial axis leading); weights stay VMEM-resident.
# ----------------------------------------------------------------------------
def out_ffn_fused(attn, x, wo, bo, w1, b1, w2, b2, *, tile_n=None):
    B, CI, N = attn.shape
    C = x.shape[1]
    C2 = w1.shape[0]
    TN = _pick_tile(N, tile_n or TILE_N)

    def kernel(a_ref, x_ref, wo_ref, bo_ref, w1_ref, b1_ref, w2_ref, b2_ref, o_ref):
        a = a_ref[0]                                   # (CI, TN) bf16
        xb = x_ref[0].astype(jnp.float32)              # (C, TN)
        att = jax.lax.dot_general(wo_ref[...], a, (((1,), (0,)), ((), ())),
                                  preferred_element_type=jnp.float32)
        x1 = xb + att + bo_ref[...]                    # residual 1 (+ to_out bias)
        h = jax.lax.dot_general(w1_ref[...], x1.astype(jnp.bfloat16),
                                (((1,), (0,)), ((), ())),
                                preferred_element_type=jnp.float32) + b1_ref[...]
        h = h * jax.nn.sigmoid(h)                      # SiLU, f32
        y = jax.lax.dot_general(w2_ref[...], h.astype(jnp.bfloat16),
                                (((1,), (0,)), ((), ())),
                                preferred_element_type=jnp.float32) + b2_ref[...]
        o_ref[0] = (x1 + y).astype(o_ref.dtype)        # residual 2

    return pl.pallas_call(
        kernel,
        out_shape=jax.ShapeDtypeStruct((B, C, N), x.dtype),
        grid=(N // TN, B),                             # spatial leading (B may be 1)
        in_specs=[
            pl.BlockSpec((1, CI, TN), lambda n, b: (b, 0, n)),
            pl.BlockSpec((1, C, TN), lambda n, b: (b, 0, n)),
            pl.BlockSpec((C, CI), lambda n, b: (0, 0)),
            pl.BlockSpec((C, 1), lambda n, b: (0, 0)),
            pl.BlockSpec((C2, C), lambda n, b: (0, 0)),
            pl.BlockSpec((C2, 1), lambda n, b: (0, 0)),
            pl.BlockSpec((C, C2), lambda n, b: (0, 0)),
            pl.BlockSpec((C, 1), lambda n, b: (0, 0)),
        ],
        out_specs=pl.BlockSpec((1, C, TN), lambda n, b: (b, 0, n)),
        compiler_params=_cparams(2),
    )(attn, x, wo, bo, w1, b1, w2, b2)


# ----------------------------------------------------------------------------
# Plain-JAX glue: grid_sample (bilinear, zeros padding, align_corners=False).
# Channels-last gather: one index per spatial location fetching a contiguous
# (C,)-vector — the fast gather layout on TPU.
# TODO(synk): data-dependent bilinear gather has no clean Pallas TPU equivalent.
# ----------------------------------------------------------------------------
def grid_sample_bilinear_zeros(inp, grid):
    Nb, C, Hin, Win = inp.shape
    Ho, Wo = grid.shape[1], grid.shape[2]
    gx, gy = grid[..., 0], grid[..., 1]
    ix = ((gx + 1.0) * Win - 1.0) * 0.5
    iy = ((gy + 1.0) * Hin - 1.0) * 0.5
    x0 = jnp.floor(ix); y0 = jnp.floor(iy)
    x1 = x0 + 1.0;      y1 = y0 + 1.0
    w00 = ((x1 - ix) * (y1 - iy)).reshape(Nb, Ho * Wo, 1)
    w01 = ((ix - x0) * (y1 - iy)).reshape(Nb, Ho * Wo, 1)
    w10 = ((x1 - ix) * (iy - y0)).reshape(Nb, Ho * Wo, 1)
    w11 = ((ix - x0) * (iy - y0)).reshape(Nb, Ho * Wo, 1)
    table = inp.transpose(0, 2, 3, 1).reshape(Nb, Hin * Win, C)   # channels-last

    def gather(xi, yi):
        valid = (xi >= 0) & (xi <= Win - 1) & (yi >= 0) & (yi <= Hin - 1)
        xc = jnp.clip(xi, 0, Win - 1).astype(jnp.int32)
        yc = jnp.clip(yi, 0, Hin - 1).astype(jnp.int32)
        idx = (yc * Win + xc).reshape(Nb, Ho * Wo)                # one index per loc
        vals = jax.vmap(lambda t, i: jnp.take(t, i, axis=0))(table, idx)
        return vals * valid.reshape(Nb, Ho * Wo, 1).astype(inp.dtype)

    out = (gather(x0, y0) * w00 + gather(x1, y0) * w01
           + gather(x0, y1) * w10 + gather(x1, y1) * w11)
    return out.transpose(0, 2, 1).reshape(Nb, C, Ho, Wo)


# ----------------------------------------------------------------------------
# Parameters (deterministic synthetic init)
# ----------------------------------------------------------------------------
def init_params(key, c):
    assert c % OFFSET_GROUPS == 0, "dim must be divisible by offset_groups (=heads=8)"
    cpb_dim = c // 4
    keys = jax.random.split(key, 24)

    def nrm(k, shape, s=0.1):
        return jax.random.normal(k, shape, jnp.float32) * s

    def bn(n):
        i = jnp.arange(n, dtype=jnp.float32)
        return dict(gamma=1.0 + 0.02 * i, beta=0.01 * i, mean=0.005 * i, var=1.0 + 0.03 * i)

    return {
        # grouped 1x1 projections, stored (G, Cout_per_group, Cin_per_group)
        "wq": nrm(keys[0], (OFFSET_GROUPS, DIM_HEAD, c // OFFSET_GROUPS)),
        "wk": nrm(keys[1], (OFFSET_GROUPS, DIM_HEAD, c // OFFSET_GROUPS)),
        "wv": nrm(keys[2], (OFFSET_GROUPS, DIM_HEAD, c // OFFSET_GROUPS)),
        "w_out": nrm(keys[3], (c, INNER)),
        "b_out": nrm(keys[4], (c,)),
        # to_offsets: depthwise 6x6 s4 (+bias), GELU, 1x1 (no bias), tanh, *scale
        "w_off_dw": nrm(keys[5], (OFFSET_DIMS, 1, OFFSET_KERNEL, OFFSET_KERNEL)),
        "b_off_dw": nrm(keys[6], (OFFSET_DIMS,)),
        "w_off_pw": nrm(keys[7], (2, OFFSET_DIMS)),
        # CPB relative position bias MLP (Linear weights torch-style (out, in))
        "cpb_w0": nrm(keys[8], (cpb_dim, 2)), "cpb_b0": nrm(keys[9], (cpb_dim,)),
        "cpb_w1": nrm(keys[10], (cpb_dim, cpb_dim)), "cpb_b1": nrm(keys[11], (cpb_dim,)),
        "cpb_w2": nrm(keys[12], (HEADS // OFFSET_GROUPS, cpb_dim)),
        "cpb_b2": nrm(keys[13], (HEADS // OFFSET_GROUPS,)),
        # FFN: Conv(c,2c,1)+BN+SiLU ; Conv(2c,c,1)+BN (no act)
        "ffn_w1": nrm(keys[14], (2 * c, c)),
        "ffn_w2": nrm(keys[15], (c, 2 * c)),
        "ffn_bn1": bn(2 * c),
        "ffn_bn2": bn(c),
    }


# ----------------------------------------------------------------------------
# DABlock forward
# ----------------------------------------------------------------------------
def dablock_forward(params, x):
    B, c, H, W = x.shape
    N = H * W
    G = OFFSET_GROUPS
    f32 = jnp.float32

    # ---- derived / folded parameters (tiny ops, fused by XLA under jit) ------
    # Softmax scale folded into wk (NOT wq: offsets are computed from unscaled q).
    w_kv = jnp.concatenate([params["wk"] * SCALE, params["wv"]], axis=1)  # (G,2Dh,c/G)
    # CPB params packed into one VMEM block: [w0 | b0 | w1 | b1 | w2^T].
    # cpb_b2 is omitted: it is constant across keys, so the softmax cancels it.
    cpb_packed = jnp.concatenate(
        [params["cpb_w0"], params["cpb_b0"][:, None], params["cpb_w1"],
         params["cpb_b1"][:, None], params["cpb_w2"].T], axis=1).astype(f32)
    wo_bf = params["w_out"].astype(jnp.bfloat16)
    bo = params["b_out"][:, None].astype(f32)
    bn1, bn2 = params["ffn_bn1"], params["ffn_bn2"]
    s1 = bn1["gamma"] * jax.lax.rsqrt(bn1["var"] + BN_EPS)
    s2 = bn2["gamma"] * jax.lax.rsqrt(bn2["var"] + BN_EPS)
    w1f = (params["ffn_w1"] * s1[:, None]).astype(jnp.bfloat16)
    b1f = (bn1["beta"] - bn1["mean"] * s1)[:, None]
    w2f = (params["ffn_w2"] * s2[:, None]).astype(jnp.bfloat16)
    b2f = (bn2["beta"] - bn2["mean"] * s2)[:, None]

    # ---- lane-alignment padding of the flattened spatial axis ----------------
    N_pad = ((N + 127) // 128) * 128
    x_flat = x.reshape(B, c, N)
    if N_pad != N:
        x_flat = jnp.pad(x_flat, ((0, 0), (0, 0), (0, N_pad - N)))

    # ---------------- DeformableAttention2D ----------------
    # q = to_q(x): grouped 1x1 -> (B, G, Dh, N_pad), f32 (offset path needs f32 q)
    xg = x_flat.reshape(B, G, c // G, N_pad)
    q = grouped_pw_conv(xg, params["wq"], out_dtype=f32, precise=True)

    # offsets = to_offsets(group(q))  (tiny depthwise conv + GELU/tanh, plain JAX)
    q_sp = q[..., :N].reshape(B * G, OFFSET_DIMS, H, W)
    off = jax.lax.conv_general_dilated(
        q_sp, params["w_off_dw"],
        window_strides=(DOWNSAMPLE, DOWNSAMPLE),
        padding=[(OFFSET_PAD, OFFSET_PAD), (OFFSET_PAD, OFFSET_PAD)],
        dimension_numbers=("NCHW", "OIHW", "NCHW"),
        feature_group_count=OFFSET_DIMS)
    off = off + params["b_off_dw"][None, :, None, None]
    off = jax.nn.gelu(off, approximate=False)             # exact GELU (torch default)
    Hk, Wk = off.shape[-2:]
    Nk = Hk * Wk
    off = grouped_pw_conv(off.reshape(B * G, 1, OFFSET_DIMS, Nk),
                          params["w_off_pw"][None], out_dtype=f32, precise=True)
    off = off.reshape(B * G, 2, Hk, Wk)
    off = jnp.tanh(off) * OFFSET_SCALE

    # vgrid = grid + offsets; normalize (lucidrains quirk: ch0/(Hk-1), ch1/(Wk-1))
    gx = jnp.broadcast_to(jnp.arange(Wk, dtype=f32)[None, :], (Hk, Wk))   # ch0 = x
    gy = jnp.broadcast_to(jnp.arange(Hk, dtype=f32)[:, None], (Hk, Wk))   # ch1 = y
    vgrid = jnp.stack([gx, gy], axis=0)[None] + off                       # (B*G,2,Hk,Wk)
    v0 = 2.0 * vgrid[:, 0] / max(Hk - 1, 1) - 1.0
    v1 = 2.0 * vgrid[:, 1] / max(Wk - 1, 1) - 1.0
    vgrid_scaled = jnp.stack([v0, v1], axis=-1)                           # (B*G,Hk,Wk,2)

    # kv_feats = grid_sample(group(x), vgrid_scaled)
    x_grp = x.reshape(B * G, c // G, H, W)
    kv_feats = grid_sample_bilinear_zeros(x_grp, vgrid_scaled).reshape(B, G, c // G, Nk)

    # fused to_k/to_v grouped 1x1 -> (B, G, 2*Dh, Nk) bf16 (scale folded into k)
    kv = grouped_pw_conv(kv_feats, w_kv, out_dtype=jnp.bfloat16)

    # normalized query grid (quirk: x/(H-1), y/(W-1)) + kv grid, channel-major
    gqx = jnp.broadcast_to(jnp.arange(W, dtype=f32)[None, :], (H, W))
    gqy = jnp.broadcast_to(jnp.arange(H, dtype=f32)[:, None], (H, W))
    gq0 = 2.0 * gqx / max(H - 1, 1) - 1.0
    gq1 = 2.0 * gqy / max(W - 1, 1) - 1.0
    grid_q = jnp.stack([gq0, gq1], axis=-1).reshape(N, 2)                 # (N, 2)
    if N_pad != N:
        grid_q = jnp.pad(grid_q, ((0, N_pad - N), (0, 0)))
    vgrid_t = vgrid_scaled.reshape(B, G, Nk, 2).transpose(0, 1, 3, 2)     # (B,G,2,Nk)

    # fused attention core -> (B, G, Dh, N_pad) bf16
    attn = attention_fused(q, kv, vgrid_t, grid_q, cpb_packed)
    attn = attn.reshape(B, INNER, N_pad)                                  # free reshape

    # fused to_out(+bias) + residual + FFN(folded BN) + residual
    y = out_ffn_fused(attn, x_flat, wo_bf, bo, w1f, b1f, w2f, b2f)
    return y[..., :N].reshape(B, c, H, W)


# ----------------------------------------------------------------------------
if __name__ == "__main__":
    key = jax.random.PRNGKey(0)
    kx, kp = jax.random.split(key)
    # channels must be divisible by offset_groups(=heads=8) -> c=8, spatial 16x16
    B, C, H, W = 2, 8, 16, 16
    x = jax.random.normal(kx, (B, C, H, W), jnp.float32)
    params = init_params(kp, C)

    out = jax.jit(dablock_forward)(params, x)
    out = jax.block_until_ready(out)

    assert out.shape == (B, C, H, W)
    assert bool(jnp.all(jnp.isfinite(out)))
    print("KERNEL_OK")
</pallas_src>

<mosaic_0001>
module attributes {stable_mosaic.version = 11 : i64} {
  func.func @kernel(%arg0: i32, %arg1: i32, %arg2: memref<1x8x1x256xf32, #tpu.memory_space<vmem>>, %arg3: memref<8x64x1xf32, #tpu.memory_space<vmem>>, %arg4: memref<1x8x64x256xf32, #tpu.memory_space<vmem>>) attributes {dimension_semantics = [#tpu.dimension_semantics<parallel>, #tpu.dimension_semantics<parallel>], iteration_bounds = array<i64: 1, 2>, scalar_prefetch = 0 : i64, scratch_operands = 0 : i64, tpu.core_type = #tpu.core_type<tc>, window_params = [{transform_indices = @transform_0, window_bounds = array<i64: 1, 8, 1, 256>}, {pipeline_mode = #tpu.pipeline_mode<synchronous>, transform_indices = @transform_1, window_bounds = array<i64: 8, 64, 1>}, {transform_indices = @transform_2, window_bounds = array<i64: 1, 8, 64, 256>}]} {
    %c0 = arith.constant 0 : index
    %c0_0 = arith.constant 0 : index
    %c0_1 = arith.constant 0 : index
    %0 = vector.load %arg3[%c0, %c0_0, %c0_1] : memref<8x64x1xf32, #tpu.memory_space<vmem>>, vector<1x64x1xf32>
    %1 = vector.shape_cast %0 : vector<1x64x1xf32> to vector<64x1xf32>
    %c0_2 = arith.constant 0 : index
    %c0_3 = arith.constant 0 : index
    %c0_4 = arith.constant 0 : index
    %c0_5 = arith.constant 0 : index
    %2 = vector.load %arg2[%c0_2, %c0_3, %c0_4, %c0_5] : memref<1x8x1x256xf32, #tpu.memory_space<vmem>>, vector<1x1x1x256xf32>
    %3 = vector.shape_cast %2 : vector<1x1x1x256xf32> to vector<1x256xf32>
    %4 = vector.broadcast %1 : vector<64x1xf32> to vector<64x256xf32>
    %5 = vector.broadcast %3 : vector<1x256xf32> to vector<64x256xf32>
    %6 = arith.mulf %4, %5 : vector<64x256xf32>
    %c0_6 = arith.constant 0 : index
    %c0_7 = arith.constant 0 : index
    %c0_8 = arith.constant 0 : index
    %c0_9 = arith.constant 0 : index
    %7 = vector.load %arg4[%c0_6, %c0_7, %c0_8, %c0_9] : memref<1x8x64x256xf32, #tpu.memory_space<vmem>>, vector<1x1x64x256xf32>
    %8 = vector.shape_cast %7 : vector<1x1x64x256xf32> to vector<64x256xf32>
    %9 = vector.shape_cast %6 : vector<64x256xf32> to vector<1x1x64x256xf32>
    tpu.vector_store %arg4[%c0_6, %c0_7, %c0_8, %c0_9], %9 {strides = array<i32>} : memref<1x8x64x256xf32, #tpu.memory_space<vmem>>, vector<1x1x64x256xf32>,
    %c1 = arith.constant 1 : index
    %c0_10 = arith.constant 0 : index
    %c0_11 = arith.constant 0 : index
    %10 = vector.load %arg3[%c1, %c0_10, %c0_11] : memref<8x64x1xf32, #tpu.memory_space<vmem>>, vector<1x64x1xf32>
    %11 = vector.shape_cast %10 : vector<1x64x1xf32> to vector<64x1xf32>
    %c0_12 = arith.constant 0 : index
    %c1_13 = arith.constant 1 : index
    %c0_14 = arith.constant 0 : index
    %c0_15 = arith.constant 0 : index
    %12 = vector.load %arg2[%c0_12, %c1_13, %c0_14, %c0_15] : memref<1x8x1x256xf32, #tpu.memory_space<vmem>>, vector<1x1x1x256xf32>
    %13 = vector.shape_cast %12 : vector<1x1x1x256xf32> to vector<1x256xf32>
    %14 = vector.broadcast %11 : vector<64x1xf32> to vector<64x256xf32>
    %15 = vector.broadcast %13 : vector<1x256xf32> to vector<64x256xf32>
    %16 = arith.mulf %14, %15 : vector<64x256xf32>
    %c0_16 = arith.constant 0 : index
    %c1_17 = arith.constant 1 : index
    %c0_18 = arith.constant 0 : index
    %c0_19 = arith.constant 0 : index
    %17 = vector.load %arg4[%c0_16, %c1_17, %c0_18, %c0_19] : memref<1x8x64x256xf32, #tpu.memory_space<vmem>>, vector<1x1x64x256xf32>
    %18 = vector.shape_cast %17 : vector<1x1x64x256xf32> to vector<64x256xf32>
    %19 = vector.shape_cast %16 : vector<64x256xf32> to vector<1x1x64x256xf32>
    tpu.vector_store %arg4[%c0_16, %c1_17, %c0_18, %c0_19], %19 {strides = array<i32>} : memref<1x8x64x256xf32, #tpu.memory_space<vmem>>, vector<1x1x64x256xf32>,
    %c2 = arith.constant 2 : index
    %c0_20 = arith.constant 0 : index
    %c0_21 = arith.constant 0 : index
    %20 = vector.load %arg3[%c2, %c0_20, %c0_21] : memref<8x64x1xf32, #tpu.memory_space<vmem>>, vector<1x64x1xf32>
    %21 = vector.shape_cast %20 : vector<1x64x1xf32> to vector<64x1xf32>
    %c0_22 = arith.constant 0 : index
    %c2_23 = arith.constant 2 : index
    %c0_24 = arith.constant 0 : index
    %c0_25 = arith.constant 0 : index
    %22 = vector.load %arg2[%c0_22, %c2_23, %c0_24, %c0_25] : memref<1x8x1x256xf32, #tpu.memory_space<vmem>>, vector<1x1x1x256xf32>
    %23 = vector.shape_cast %22 : vector<1x1x1x256xf32> to vector<1x256xf32>
    %24 = vector.broadcast %21 : vector<64x1xf32> to vector<64x256xf32>
    %25 = vector.broadcast %23 : vector<1x256xf32> to vector<64x256xf32>
    %26 = arith.mulf %24, %25 : vector<64x256xf32>
    %c0_26 = arith.constant 0 : index
    %c2_27 = arith.constant 2 : index
    %c0_28 = arith.constant 0 : index
    %c0_29 = arith.constant 0 : index
    %27 = vector.load %arg4[%c0_26, %c2_27, %c0_28, %c0_29] : memref<1x8x64x256xf32, #tpu.memory_space<vmem>>, vector<1x1x64x256xf32>
    %28 = vector.shape_cast %27 : vector<1x1x64x256xf32> to vector<64x256xf32>
    %29 = vector.shape_cast %26 : vector<64x256xf32> to vector<1x1x64x256xf32>
    tpu.vector_store %arg4[%c0_26, %c2_27, %c0_28, %c0_29], %29 {strides = array<i32>} : memref<1x8x64x256xf32, #tpu.memory_space<vmem>>, vector<1x1x64x256xf32>,
    %c3 = arith.constant 3 : index
    %c0_30 = arith.constant 0 : index
    %c0_31 = arith.constant 0 : index
    %30 = vector.load %arg3[%c3, %c0_30, %c0_31] : memref<8x64x1xf32, #tpu.memory_space<vmem>>, vector<1x64x1xf32>
    %31 = vector.shape_cast %30 : vector<1x64x1xf32> to vector<64x1xf32>
    %c0_32 = arith.constant 0 : index
    %c3_33 = arith.constant 3 : index
    %c0_34 = arith.constant 0 : index
    %c0_35 = arith.constant 0 : index
    %32 = vector.load %arg2[%c0_32, %c3_33, %c0_34, %c0_35] : memref<1x8x1x256xf32, #tpu.memory_space<vmem>>, vector<1x1x1x256xf32>
    %33 = vector.shape_cast %32 : vector<1x1x1x256xf32> to vector<1x256xf32>
    %34 = vector.broadcast %31 : vector<64x1xf32> to vector<64x256xf32>
    %35 = vector.broadcast %33 : vector<1x256xf32> to vector<64x256xf32>
    %36 = arith.mulf %34, %35 : vector<64x256xf32>
    %c0_36 = arith.constant 0 : index
    %c3_37 = arith.constant 3 : index
    %c0_38 = arith.constant 0 : index
    %c0_39 = arith.constant 0 : index
    %37 = vector.load %arg4[%c0_36, %c3_37, %c0_38, %c0_39] : memref<1x8x64x256xf32, #tpu.memory_space<vmem>>, vector<1x1x64x256xf32>
    %38 = vector.shape_cast %37 : vector<1x1x64x256xf32> to vector<64x256xf32>
    %39 = vector.shape_cast %36 : vector<64x256xf32> to vector<1x1x64x256xf32>
    tpu.vector_store %arg4[%c0_36, %c3_37, %c0_38, %c0_39], %39 {strides = array<i32>} : memref<1x8x64x256xf32, #tpu.memory_space<vmem>>, vector<1x1x64x256xf32>,
    %c4 = arith.constant 4 : index
    %c0_40 = arith.constant 0 : index
    %c0_41 = arith.constant 0 : index
    %40 = vector.load %arg3[%c4, %c0_40, %c0_41] : memref<8x64x1xf32, #tpu.memory_space<vmem>>, vector<1x64x1xf32>
    %41 = vector.shape_cast %40 : vector<1x64x1xf32> to vector<64x1xf32>
    %c0_42 = arith.constant 0 : index
    %c4_43 = arith.constant 4 : index
    %c0_44 = arith.constant 0 : index
    %c0_45 = arith.constant 0 : index
    %42 = vector.load %arg2[%c0_42, %c4_43, %c0_44, %c0_45] : memref<1x8x1x256xf32, #tpu.memory_space<vmem>>, vector<1x1x1x256xf32>
    %43 = vector.shape_cast %42 : vector<1x1x1x256xf32> to vector<1x256xf32>
    %44 = vector.broadcast %41 : vector<64x1xf32> to vector<64x256xf32>
    %45 = vector.broadcast %43 : vector<1x256xf32> to vector<64x256xf32>
    %46 = arith.mulf %44, %45 : vector<64x256xf32>
    %c0_46 = arith.constant 0 : index
    %c4_47 = arith.constant 4 : index
    %c0_48 = arith.constant 0 : index
    %c0_49 = arith.constant 0 : index
    %47 = vector.load %arg4[%c0_46, %c4_47, %c0_48, %c0_49] : memref<1x8x64x256xf32, #tpu.memory_space<vmem>>, vector<1x1x64x256xf32>
    %48 = vector.shape_cast %47 : vector<1x1x64x256xf32> to vector<64x256xf32>
    %49 = vector.shape_cast %46 : vector<64x256xf32> to vector<1x1x64x256xf32>
    tpu.vector_store %arg4[%c0_46, %c4_47, %c0_48, %c0_49], %49 {strides = array<i32>} : memref<1x8x64x256xf32, #tpu.memory_space<vmem>>, vector<1x1x64x256xf32>,
    %c5 = arith.constant 5 : index
    %c0_50 = arith.constant 0 : index
    %c0_51 = arith.constant 0 : index
    %50 = vector.load %arg3[%c5, %c0_50, %c0_51] : memref<8x64x1xf32, #tpu.memory_space<vmem>>, vector<1x64x1xf32>
    %51 = vector.shape_cast %50 : vector<1x64x1xf32> to vector<64x1xf32>
    %c0_52 = arith.constant 0 : index
    %c5_53 = arith.constant 5 : index
    %c0_54 = arith.constant 0 : index
    %c0_55 = arith.constant 0 : index
    %52 = vector.load %arg2[%c0_52, %c5_53, %c0_54, %c0_55] : memref<1x8x1x256xf32, #tpu.memory_space<vmem>>, vector<1x1x1x256xf32>
    %53 = vector.shape_cast %52 : vector<1x1x1x256xf32> to vector<1x256xf32>
    %54 = vector.broadcast %51 : vector<64x1xf32> to vector<64x256xf32>
    %55 = vector.broadcast %53 : vector<1x256xf32> to vector<64x256xf32>
    %56 = arith.mulf %54, %55 : vector<64x256xf32>
    %c0_56 = arith.constant 0 : index
    %c5_57 = arith.constant 5 : index
    %c0_58 = arith.constant 0 : index
    %c0_59 = arith.constant 0 : index
    %57 = vector.load %arg4[%c0_56, %c5_57, %c0_58, %c0_59] : memref<1x8x64x256xf32, #tpu.memory_space<vmem>>, vector<1x1x64x256xf32>
    %58 = vector.shape_cast %57 : vector<1x1x64x256xf32> to vector<64x256xf32>
    %59 = vector.shape_cast %56 : vector<64x256xf32> to vector<1x1x64x256xf32>
    tpu.vector_store %arg4[%c0_56, %c5_57, %c0_58, %c0_59], %59 {strides = array<i32>} : memref<1x8x64x256xf32, #tpu.memory_space<vmem>>, vector<1x1x64x256xf32>,
    %c6 = arith.constant 6 : index
    %c0_60 = arith.constant 0 : index
    %c0_61 = arith.constant 0 : index
    %60 = vector.load %arg3[%c6, %c0_60, %c0_61] : memref<8x64x1xf32, #tpu.memory_space<vmem>>, vector<1x64x1xf32>
    %61 = vector.shape_cast %60 : vector<1x64x1xf32> to vector<64x1xf32>
    %c0_62 = arith.constant 0 : index
    %c6_63 = arith.constant 6 : index
    %c0_64 = arith.constant 0 : index
    %c0_65 = arith.constant 0 : index
    %62 = vector.load %arg2[%c0_62, %c6_63, %c0_64, %c0_65] : memref<1x8x1x256xf32, #tpu.memory_space<vmem>>, vector<1x1x1x256xf32>
    %63 = vector.shape_cast %62 : vector<1x1x1x256xf32> to vector<1x256xf32>
    %64 = vector.broadcast %61 : vector<64x1xf32> to vector<64x256xf32>
    %65 = vector.broadcast %63 : vector<1x256xf32> to vector<64x256xf32>
    %66 = arith.mulf %64, %65 : vector<64x256xf32>
    %c0_66 = arith.constant 0 : index
    %c6_67 = arith.constant 6 : index
    %c0_68 = arith.constant 0 : index
    %c0_69 = arith.constant 0 : index
    %67 = vector.load %arg4[%c0_66, %c6_67, %c0_68, %c0_69] : memref<1x8x64x256xf32, #tpu.memory_space<vmem>>, vector<1x1x64x256xf32>
    %68 = vector.shape_cast %67 : vector<1x1x64x256xf32> to vector<64x256xf32>
    %69 = vector.shape_cast %66 : vector<64x256xf32> to vector<1x1x64x256xf32>
    tpu.vector_store %arg4[%c0_66, %c6_67, %c0_68, %c0_69], %69 {strides = array<i32>} : memref<1x8x64x256xf32, #tpu.memory_space<vmem>>, vector<1x1x64x256xf32>,
    %c7 = arith.constant 7 : index
    %c0_70 = arith.constant 0 : index
    %c0_71 = arith.constant 0 : index
    %70 = vector.load %arg3[%c7, %c0_70, %c0_71] : memref<8x64x1xf32, #tpu.memory_space<vmem>>, vector<1x64x1xf32>
    %71 = vector.shape_cast %70 : vector<1x64x1xf32> to vector<64x1xf32>
    %c0_72 = arith.constant 0 : index
    %c7_73 = arith.constant 7 : index
    %c0_74 = arith.constant 0 : index
    %c0_75 = arith.constant 0 : index
    %72 = vector.load %arg2[%c0_72, %c7_73, %c0_74, %c0_75] : memref<1x8x1x256xf32, #tpu.memory_space<vmem>>, vector<1x1x1x256xf32>
    %73 = vector.shape_cast %72 : vector<1x1x1x256xf32> to vector<1x256xf32>
    %74 = vector.broadcast %71 : vector<64x1xf32> to vector<64x256xf32>
    %75 = vector.broadcast %73 : vector<1x256xf32> to vector<64x256xf32>
    %76 = arith.mulf %74, %75 : vector<64x256xf32>
    %c0_76 = arith.constant 0 : index
    %c7_77 = arith.constant 7 : index
    %c0_78 = arith.constant 0 : index
    %c0_79 = arith.constant 0 : index
    %77 = vector.load %arg4[%c0_76, %c7_77, %c0_78, %c0_79] : memref<1x8x64x256xf32, #tpu.memory_space<vmem>>, vector<1x1x64x256xf32>
    %78 = vector.shape_cast %77 : vector<1x1x64x256xf32> to vector<64x256xf32>
    %79 = vector.shape_cast %76 : vector<64x256xf32> to vector<1x1x64x256xf32>
    tpu.vector_store %arg4[%c0_76, %c7_77, %c0_78, %c0_79], %79 {strides = array<i32>} : memref<1x8x64x256xf32, #tpu.memory_space<vmem>>, vector<1x1x64x256xf32>,
    return
  }
  func.func @transform_0(%arg0: i32, %arg1: i32) -> (i32, i32, i32, i32) {
    %c0_i32 = arith.constant 0 : i32
    %c0_i32_0 = arith.constant 0 : i32
    %c0_i32_1 = arith.constant 0 : i32
    return %arg1, %c0_i32, %c0_i32_0, %arg0 : i32, i32, i32, i32
  }
  func.func @transform_1(%arg0: i32, %arg1: i32) -> (i32, i32, i32) {
    %c0_i32 = arith.constant 0 : i32
    %c0_i32_0 = arith.constant 0 : i32
    %c0_i32_1 = arith.constant 0 : i32
    %c0_i32_2 = arith.constant 0 : i32
    return %c0_i32, %c0_i32_0, %c0_i32_1 : i32, i32, i32
  }
  func.func @transform_2(%arg0: i32, %arg1: i32) -> (i32, i32, i32, i32) {
    %c0_i32 = arith.constant 0 : i32
    %c0_i32_0 = arith.constant 0 : i32
    %c0_i32_1 = arith.constant 0 : i32
    return %arg1, %c0_i32, %c0_i32_0, %arg0 : i32, i32, i32, i32
  }
}

module attributes {stable_mosaic.version = 11 : i64} {
  func.func @kernel(%arg0: i32, %arg1: i32, %arg2: memref<1x1x64x16xf32, #tpu.memory_space<vmem>>, %arg3: memref<1x2x64xf32, #tpu.memory_space<vmem>>, %arg4: memref<1x1x2x16xf32, #tpu.memory_space<vmem>>) attributes {dimension_semantics = [#tpu.dimension_semantics<parallel>, #tpu.dimension_semantics<parallel>], iteration_bounds = array<i64: 1, 16>, scalar_prefetch = 0 : i64, scratch_operands = 0 : i64, tpu.core_type = #tpu.core_type<tc>, window_params = [{transform_indices = @transform_0, window_bounds = array<i64: 1, 1, 64, 16>}, {pipeline_mode = #tpu.pipeline_mode<synchronous>, transform_indices = @transform_1, window_bounds = array<i64: 1, 2, 64>}, {transform_indices = @transform_2, window_bounds = array<i64: 1, 1, 2, 16>}]} {
    %c0 = arith.constant 0 : index
    %c0_0 = arith.constant 0 : index
    %c0_1 = arith.constant 0 : index
    %0 = vector.load %arg3[%c0, %c0_0, %c0_1] : memref<1x2x64xf32, #tpu.memory_space<vmem>>, vector<1x2x64xf32>
    %1 = vector.shape_cast %0 : vector<1x2x64xf32> to vector<2x64xf32>
    %c0_2 = arith.constant 0 : index
    %c0_3 = arith.constant 0 : index
    %c0_4 = arith.constant 0 : index
    %c0_5 = arith.constant 0 : index
    %2 = vector.load %arg2[%c0_2, %c0_3, %c0_4, %c0_5] : memref<1x1x64x16xf32, #tpu.memory_space<vmem>>, vector<1x1x64x16xf32>
    %3 = vector.shape_cast %2 : vector<1x1x64x16xf32> to vector<64x16xf32>
    %cst = arith.constant dense<0.000000e+00> : vector<2x16xf32>
    %4 = tpu.matmul %1, %3, %cst {dimension_numbers = #tpu.dot_dimension_numbers<[1], [0], [0], [1], [0, 0, 1, 1], [], []>} : vector<2x64xf32>, vector<64x16xf32>, vector<2x16xf32> -> vector<2x16xf32>
    %c0_6 = arith.constant 0 : index
    %c0_7 = arith.constant 0 : index
    %c0_8 = arith.constant 0 : index
    %c0_9 = arith.constant 0 : index
    %5 = vector.load %arg4[%c0_6, %c0_7, %c0_8, %c0_9] : memref<1x1x2x16xf32, #tpu.memory_space<vmem>>, vector<1x1x2x16xf32>
    %6 = vector.shape_cast %5 : vector<1x1x2x16xf32> to vector<2x16xf32>
    %7 = vector.shape_cast %4 : vector<2x16xf32> to vector<1x1x2x16xf32>
    tpu.vector_store %arg4[%c0_6, %c0_7, %c0_8, %c0_9], %7 {strides = array<i32>} : memref<1x1x2x16xf32, #tpu.memory_space<vmem>>, vector<1x1x2x16xf32>,
    return
  }
  func.func @transform_0(%arg0: i32, %arg1: i32) -> (i32, i32, i32, i32) {
    %c0_i32 = arith.constant 0 : i32
    %c0_i32_0 = arith.constant 0 : i32
    %c0_i32_1 = arith.constant 0 : i32
    return %arg1, %c0_i32, %c0_i32_0, %arg0 : i32, i32, i32, i32
  }
  func.func @transform_1(%arg0: i32, %arg1: i32) -> (i32, i32, i32) {
    %c0_i32 = arith.constant 0 : i32
    %c0_i32_0 = arith.constant 0 : i32
    %c0_i32_1 = arith.constant 0 : i32
    %c0_i32_2 = arith.constant 0 : i32
    return %c0_i32, %c0_i32_0, %c0_i32_1 : i32, i32, i32
  }
  func.func @transform_2(%arg0: i32, %arg1: i32) -> (i32, i32, i32, i32) {
    %c0_i32 = arith.constant 0 : i32
    %c0_i32_0 = arith.constant 0 : i32
    %c0_i32_1 = arith.constant 0 : i32
    return %arg1, %c0_i32, %c0_i32_0, %arg0 : i32, i32, i32, i32
  }
}

module attributes {stable_mosaic.version = 11 : i64} {
  func.func @kernel(%arg0: i32, %arg1: i32, %arg2: memref<1x8x1x16xf32, #tpu.memory_space<vmem>>, %arg3: memref<8x128x1xf32, #tpu.memory_space<vmem>>, %arg4: memref<1x8x128x16xbf16, #tpu.memory_space<vmem>>) attributes {dimension_semantics = [#tpu.dimension_semantics<parallel>, #tpu.dimension_semantics<parallel>], iteration_bounds = array<i64: 1, 2>, scalar_prefetch = 0 : i64, scratch_operands = 0 : i64, tpu.core_type = #tpu.core_type<tc>, window_params = [{transform_indices = @transform_0, window_bounds = array<i64: 1, 8, 1, 16>}, {pipeline_mode = #tpu.pipeline_mode<synchronous>, transform_indices = @transform_1, window_bounds = array<i64: 8, 128, 1>}, {transform_indices = @transform_2, window_bounds = array<i64: 1, 8, 128, 16>}]} {
    %c0 = arith.constant 0 : index
    %c0_0 = arith.constant 0 : index
    %c0_1 = arith.constant 0 : index
    %0 = vector.load %arg3[%c0, %c0_0, %c0_1] : memref<8x128x1xf32, #tpu.memory_space<vmem>>, vector<1x128x1xf32>
    %1 = vector.shape_cast %0 : vector<1x128x1xf32> to vector<128x1xf32>
    %c0_2 = arith.constant 0 : index
    %c0_3 = arith.constant 0 : index
    %c0_4 = arith.constant 0 : index
    %c0_5 = arith.constant 0 : index
    %2 = vector.load %arg2[%c0_2, %c0_3, %c0_4, %c0_5] : memref<1x8x1x16xf32, #tpu.memory_space<vmem>>, vector<1x1x1x16xf32>
    %3 = vector.shape_cast %2 : vector<1x1x1x16xf32> to vector<1x16xf32>
    %4 = vector.broadcast %1 : vector<128x1xf32> to vector<128x16xf32>
    %5 = vector.broadcast %3 : vector<1x16xf32> to vector<128x16xf32>
    %6 = arith.mulf %4, %5 : vector<128x16xf32>
    %7 = arith.truncf %6 : vector<128x16xf32> to vector<128x16xbf16>
    %c0_6 = arith.constant 0 : index
    %c0_7 = arith.constant 0 : index
    %c0_8 = arith.constant 0 : index
    %c0_9 = arith.constant 0 : index
    %8 = vector.load %arg4[%c0_6, %c0_7, %c0_8, %c0_9] : memref<1x8x128x16xbf16, #tpu.memory_space<vmem>>, vector<1x1x128x16xbf16>
    %9 = vector.shape_cast %8 : vector<1x1x128x16xbf16> to vector<128x16xbf16>
    %10 = vector.shape_cast %7 : vector<128x16xbf16> to vector<1x1x128x16xbf16>
    tpu.vector_store %arg4[%c0_6, %c0_7, %c0_8, %c0_9], %10 {strides = array<i32>} : memref<1x8x128x16xbf16, #tpu.memory_space<vmem>>, vector<1x1x128x16xbf16>,
    %c1 = arith.constant 1 : index
    %c0_10 = arith.constant 0 : index
    %c0_11 = arith.constant 0 : index
    %11 = vector.load %arg3[%c1, %c0_10, %c0_11] : memref<8x128x1xf32, #tpu.memory_space<vmem>>, vector<1x128x1xf32>
    %12 = vector.shape_cast %11 : vector<1x128x1xf32> to vector<128x1xf32>
    %c0_12 = arith.constant 0 : index
    %c1_13 = arith.constant 1 : index
    %c0_14 = arith.constant 0 : index
    %c0_15 = arith.constant 0 : index
    %13 = vector.load %arg2[%c0_12, %c1_13, %c0_14, %c0_15] : memref<1x8x1x16xf32, #tpu.memory_space<vmem>>, vector<1x1x1x16xf32>
    %14 = vector.shape_cast %13 : vector<1x1x1x16xf32> to vector<1x16xf32>
    %15 = vector.broadcast %12 : vector<128x1xf32> to vector<128x16xf32>
    %16 = vector.broadcast %14 : vector<1x16xf32> to vector<128x16xf32>
    %17 = arith.mulf %15, %16 : vector<128x16xf32>
    %18 = arith.truncf %17 : vector<128x16xf32> to vector<128x16xbf16>
    %c0_16 = arith.constant 0 : index
    %c1_17 = arith.constant 1 : index
    %c0_18 = arith.constant 0 : index
    %c0_19 = arith.constant 0 : index
    %19 = vector.load %arg4[%c0_16, %c1_17, %c0_18, %c0_19] : memref<1x8x128x16xbf16, #tpu.memory_space<vmem>>, vector<1x1x128x16xbf16>
    %20 = vector.shape_cast %19 : vector<1x1x128x16xbf16> to vector<128x16xbf16>
    %21 = vector.shape_cast %18 : vector<128x16xbf16> to vector<1x1x128x16xbf16>
    tpu.vector_store %arg4[%c0_16, %c1_17, %c0_18, %c0_19], %21 {strides = array<i32>} : memref<1x8x128x16xbf16, #tpu.memory_space<vmem>>, vector<1x1x128x16xbf16>,
    %c2 = arith.constant 2 : index
    %c0_20 = arith.constant 0 : index
    %c0_21 = arith.constant 0 : index
    %22 = vector.load %arg3[%c2, %c0_20, %c0_21] : memref<8x128x1xf32, #tpu.memory_space<vmem>>, vector<1x128x1xf32>
    %23 = vector.shape_cast %22 : vector<1x128x1xf32> to vector<128x1xf32>
    %c0_22 = arith.constant 0 : index
    %c2_23 = arith.constant 2 : index
    %c0_24 = arith.constant 0 : index
    %c0_25 = arith.constant 0 : index
    %24 = vector.load %arg2[%c0_22, %c2_23, %c0_24, %c0_25] : memref<1x8x1x16xf32, #tpu.memory_space<vmem>>, vector<1x1x1x16xf32>
    %25 = vector.shape_cast %24 : vector<1x1x1x16xf32> to vector<1x16xf32>
    %26 = vector.broadcast %23 : vector<128x1xf32> to vector<128x16xf32>
    %27 = vector.broadcast %25 : vector<1x16xf32> to vector<128x16xf32>
    %28 = arith.mulf %26, %27 : vector<128x16xf32>
    %29 = arith.truncf %28 : vector<128x16xf32> to vector<128x16xbf16>
    %c0_26 = arith.constant 0 : index
    %c2_27 = arith.constant 2 : index
    %c0_28 = arith.constant 0 : index
    %c0_29 = arith.constant 0 : index
    %30 = vector.load %arg4[%c0_26, %c2_27, %c0_28, %c0_29] : memref<1x8x128x16xbf16, #tpu.memory_space<vmem>>, vector<1x1x128x16xbf16>
    %31 = vector.shape_cast %30 : vector<1x1x128x16xbf16> to vector<128x16xbf16>
    %32 = vector.shape_cast %29 : vector<128x16xbf16> to vector<1x1x128x16xbf16>
    tpu.vector_store %arg4[%c0_26, %c2_27, %c0_28, %c0_29], %32 {strides = array<i32>} : memref<1x8x128x16xbf16, #tpu.memory_space<vmem>>, vector<1x1x128x16xbf16>,
    %c3 = arith.constant 3 : index
    %c0_30 = arith.constant 0 : index
    %c0_31 = arith.constant 0 : index
    %33 = vector.load %arg3[%c3, %c0_30, %c0_31] : memref<8x128x1xf32, #tpu.memory_space<vmem>>, vector<1x128x1xf32>
    %34 = vector.shape_cast %33 : vector<1x128x1xf32> to vector<128x1xf32>
    %c0_32 = arith.constant 0 : index
    %c3_33 = arith.constant 3 : index
    %c0_34 = arith.constant 0 : index
    %c0_35 = arith.constant 0 : index
    %35 = vector.load %arg2[%c0_32, %c3_33, %c0_34, %c0_35] : memref<1x8x1x16xf32, #tpu.memory_space<vmem>>, vector<1x1x1x16xf32>
    %36 = vector.shape_cast %35 : vector<1x1x1x16xf32> to vector<1x16xf32>
    %37 = vector.broadcast %34 : vector<128x1xf32> to vector<128x16xf32>
    %38 = vector.broadcast %36 : vector<1x16xf32> to vector<128x16xf32>
    %39 = arith.mulf %37, %38 : vector<128x16xf32>
    %40 = arith.truncf %39 : vector<128x16xf32> to vector<128x16xbf16>
    %c0_36 = arith.constant 0 : index
    %c3_37 = arith.constant 3 : index
    %c0_38 = arith.constant 0 : index
    %c0_39 = arith.constant 0 : index
    %41 = vector.load %arg4[%c0_36, %c3_37, %c0_38, %c0_39] : memref<1x8x128x16xbf16, #tpu.memory_space<vmem>>, vector<1x1x128x16xbf16>
    %42 = vector.shape_cast %41 : vector<1x1x128x16xbf16> to vector<128x16xbf16>
    %43 = vector.shape_cast %40 : vector<128x16xbf16> to vector<1x1x128x16xbf16>
    tpu.vector_store %arg4[%c0_36, %c3_37, %c0_38, %c0_39], %43 {strides = array<i32>} : memref<1x8x128x16xbf16, #tpu.memory_space<vmem>>, vector<1x1x128x16xbf16>,
    %c4 = arith.constant 4 : index
    %c0_40 = arith.constant 0 : index
    %c0_41 = arith.constant 0 : index
    %44 = vector.load %arg3[%c4, %c0_40, %c0_41] : memref<8x128x1xf32, #tpu.memory_space<vmem>>, vector<1x128x1xf32>
    %45 = vector.shape_cast %44 : vector<1x128x1xf32> to vector<128x1xf32>
    %c0_42 = arith.constant 0 : index
    %c4_43 = arith.constant 4 : index
    %c0_44 = arith.constant 0 : index
    %c0_45 = arith.constant 0 : index
    %46 = vector.load %arg2[%c0_42, %c4_43, %c0_44, %c0_45] : memref<1x8x1x16xf32, #tpu.memory_space<vmem>>, vector<1x1x1x16xf32>
    %47 = vector.shape_cast %46 : vector<1x1x1x16xf32> to vector<1x16xf32>
    %48 = vector.broadcast %45 : vector<128x1xf32> to vector<128x16xf32>
    %49 = vector.broadcast %47 : vector<1x16xf32> to vector<128x16xf32>
    %50 = arith.mulf %48, %49 : vector<128x16xf32>
    %51 = arith.truncf %50 : vector<128x16xf32> to vector<128x16xbf16>
    %c0_46 = arith.constant 0 : index
    %c4_47 = arith.constant 4 : index
    %c0_48 = arith.constant 0 : index
    %c0_49 = arith.constant 0 : index
    %52 = vector.load %arg4[%c0_46, %c4_47, %c0_48, %c0_49] : memref<1x8x128x16xbf16, #tpu.memory_space<vmem>>, vector<1x1x128x16xbf16>
    %53 = vector.shape_cast %52 : vector<1x1x128x16xbf16> to vector<128x16xbf16>
    %54 = vector.shape_cast %51 : vector<128x16xbf16> to vector<1x1x128x16xbf16>
    tpu.vector_store %arg4[%c0_46, %c4_47, %c0_48, %c0_49], %54 {strides = array<i32>} : memref<1x8x128x16xbf16, #tpu.memory_space<vmem>>, vector<1x1x128x16xbf16>,
    %c5 = arith.constant 5 : index
    %c0_50 = arith.constant 0 : index
    %c0_51 = arith.constant 0 : index
    %55 = vector.load %arg3[%c5, %c0_50, %c0_51] : memref<8x128x1xf32, #tpu.memory_space<vmem>>, vector<1x128x1xf32>
    %56 = vector.shape_cast %55 : vector<1x128x1xf32> to vector<128x1xf32>
    %c0_52 = arith.constant 0 : index
    %c5_53 = arith.constant 5 : index
    %c0_54 = arith.constant 0 : index
    %c0_55 = arith.constant 0 : index
    %57 = vector.load %arg2[%c0_52, %c5_53, %c0_54, %c0_55] : memref<1x8x1x16xf32, #tpu.memory_space<vmem>>, vector<1x1x1x16xf32>
    %58 = vector.shape_cast %57 : vector<1x1x1x16xf32> to vector<1x16xf32>
    %59 = vector.broadcast %56 : vector<128x1xf32> to vector<128x16xf32>
    %60 = vector.broadcast %58 : vector<1x16xf32> to vector<128x16xf32>
    %61 = arith.mulf %59, %60 : vector<128x16xf32>
    %62 = arith.truncf %61 : vector<128x16xf32> to vector<128x16xbf16>
    %c0_56 = arith.constant 0 : index
    %c5_57 = arith.constant 5 : index
    %c0_58 = arith.constant 0 : index
    %c0_59 = arith.constant 0 : index
    %63 = vector.load %arg4[%c0_56, %c5_57, %c0_58, %c0_59] : memref<1x8x128x16xbf16, #tpu.memory_space<vmem>>, vector<1x1x128x16xbf16>
    %64 = vector.shape_cast %63 : vector<1x1x128x16xbf16> to vector<128x16xbf16>
    %65 = vector.shape_cast %62 : vector<128x16xbf16> to vector<1x1x128x16xbf16>
    tpu.vector_store %arg4[%c0_56, %c5_57, %c0_58, %c0_59], %65 {strides = array<i32>} : memref<1x8x128x16xbf16, #tpu.memory_space<vmem>>, vector<1x1x128x16xbf16>,
    %c6 = arith.constant 6 : index
    %c0_60 = arith.constant 0 : index
    %c0_61 = arith.constant 0 : index
    %66 = vector.load %arg3[%c6, %c0_60, %c0_61] : memref<8x128x1xf32, #tpu.memory_space<vmem>>, vector<1x128x1xf32>
    %67 = vector.shape_cast %66 : vector<1x128x1xf32> to vector<128x1xf32>
    %c0_62 = arith.constant 0 : index
    %c6_63 = arith.constant 6 : index
    %c0_64 = arith.constant 0 : index
    %c0_65 = arith.constant 0 : index
    %68 = vector.load %arg2[%c0_62, %c6_63, %c0_64, %c0_65] : memref<1x8x1x16xf32, #tpu.memory_space<vmem>>, vector<1x1x1x16xf32>
    %69 = vector.shape_cast %68 : vector<1x1x1x16xf32> to vector<1x16xf32>
    %70 = vector.broadcast %67 : vector<128x1xf32> to vector<128x16xf32>
    %71 = vector.broadcast %69 : vector<1x16xf32> to vector<128x16xf32>
    %72 = arith.mulf %70, %71 : vector<128x16xf32>
    %73 = arith.truncf %72 : vector<128x16xf32> to vector<128x16xbf16>
    %c0_66 = arith.constant 0 : index
    %c6_67 = arith.constant 6 : index
    %c0_68 = arith.constant 0 : index
    %c0_69 = arith.constant 0 : index
    %74 = vector.load %arg4[%c0_66, %c6_67, %c0_68, %c0_69] : memref<1x8x128x16xbf16, #tpu.memory_space<vmem>>, vector<1x1x128x16xbf16>
    %75 = vector.shape_cast %74 : vector<1x1x128x16xbf16> to vector<128x16xbf16>
    %76 = vector.shape_cast %73 : vector<128x16xbf16> to vector<1x1x128x16xbf16>
    tpu.vector_store %arg4[%c0_66, %c6_67, %c0_68, %c0_69], %76 {strides = array<i32>} : memref<1x8x128x16xbf16, #tpu.memory_space<vmem>>, vector<1x1x128x16xbf16>,
    %c7 = arith.constant 7 : index
    %c0_70 = arith.constant 0 : index
    %c0_71 = arith.constant 0 : index
    %77 = vector.load %arg3[%c7, %c0_70, %c0_71] : memref<8x128x1xf32, #tpu.memory_space<vmem>>, vector<1x128x1xf32>
    %78 = vector.shape_cast %77 : vector<1x128x1xf32> to vector<128x1xf32>
    %c0_72 = arith.constant 0 : index
    %c7_73 = arith.constant 7 : index
    %c0_74 = arith.constant 0 : index
    %c0_75 = arith.constant 0 : index
    %79 = vector.load %arg2[%c0_72, %c7_73, %c0_74, %c0_75] : memref<1x8x1x16xf32, #tpu.memory_space<vmem>>, vector<1x1x1x16xf32>
    %80 = vector.shape_cast %79 : vector<1x1x1x16xf32> to vector<1x16xf32>
    %81 = vector.broadcast %78 : vector<128x1xf32> to vector<128x16xf32>
    %82 = vector.broadcast %80 : vector<1x16xf32> to vector<128x16xf32>
    %83 = arith.mulf %81, %82 : vector<128x16xf32>
    %84 = arith.truncf %83 : vector<128x16xf32> to vector<128x16xbf16>
    %c0_76 = arith.constant 0 : index
    %c7_77 = arith.constant 7 : index
    %c0_78 = arith.constant 0 : index
    %c0_79 = arith.constant 0 : index
    %85 = vector.load %arg4[%c0_76, %c7_77, %c0_78, %c0_79] : memref<1x8x128x16xbf16, #tpu.memory_space<vmem>>, vector<1x1x128x16xbf16>
    %86 = vector.shape_cast %85 : vector<1x1x128x16xbf16> to vector<128x16xbf16>
    %87 = vector.shape_cast %84 : vector<128x16xbf16> to vector<1x1x128x16xbf16>
    tpu.vector_store %arg4[%c0_76, %c7_77, %c0_78, %c0_79], %87 {strides = array<i32>} : memref<1x8x128x16xbf16, #tpu.memory_space<vmem>>, vector<1x1x128x16xbf16>,
    return
  }
  func.func @transform_0(%arg0: i32, %arg1: i32) -> (i32, i32, i32, i32) {
    %c0_i32 = arith.constant 0 : i32
    %c0_i32_0 = arith.constant 0 : i32
    %c0_i32_1 = arith.constant 0 : i32
    return %arg1, %c0_i32, %c0_i32_0, %arg0 : i32, i32, i32, i32
  }
  func.func @transform_1(%arg0: i32, %arg1: i32) -> (i32, i32, i32) {
    %c0_i32 = arith.constant 0 : i32
    %c0_i32_0 = arith.constant 0 : i32
    %c0_i32_1 = arith.constant 0 : i32
    %c0_i32_2 = arith.constant 0 : i32
    return %c0_i32, %c0_i32_0, %c0_i32_1 : i32, i32, i32
  }
  func.func @transform_2(%arg0: i32, %arg1: i32) -> (i32, i32, i32, i32) {
    %c0_i32 = arith.constant 0 : i32
    %c0_i32_0 = arith.constant 0 : i32
    %c0_i32_1 = arith.constant 0 : i32
    return %arg1, %c0_i32, %c0_i32_0, %arg0 : i32, i32, i32, i32
  }
}

module attributes {stable_mosaic.version = 11 : i64} {
  func.func @kernel(%arg0: i32, %arg1: i32, %arg2: i32, %arg3: memref<1x1x64x256xf32, #tpu.memory_space<vmem>>, %arg4: memref<1x1x128x16xbf16, #tpu.memory_space<vmem>>, %arg5: memref<1x1x2x16xf32, #tpu.memory_space<vmem>>, %arg6: memref<256x2xf32, #tpu.memory_space<vmem>>, %arg7: memref<2x7xf32, #tpu.memory_space<vmem>>, %arg8: memref<1x1x64x256xbf16, #tpu.memory_space<vmem>>, %arg9: memref<256x16xf32, #tpu.memory_space<vmem>>) attributes {dimension_semantics = [#tpu.dimension_semantics<parallel>, #tpu.dimension_semantics<parallel>, #tpu.dimension_semantics<parallel>], iteration_bounds = array<i64: 8, 2, 1>, scalar_prefetch = 0 : i64, scratch_operands = 1 : i64, tpu.core_type = #tpu.core_type<tc>, window_params = [{transform_indices = @transform_0, window_bounds = array<i64: 1, 1, 64, 256>}, {transform_indices = @transform_1, window_bounds = array<i64: 1, 1, 128, 16>}, {transform_indices = @transform_2, window_bounds = array<i64: 1, 1, 2, 16>}, {transform_indices = @transform_3, window_bounds = array<i64: 256, 2>}, {pipeline_mode = #tpu.pipeline_mode<synchronous>, transform_indices = @transform_4, window_bounds = array<i64: 2, 7>}, {transform_indices = @transform_5, window_bounds = array<i64: 1, 1, 64, 256>}]} {
    %c0 = arith.constant 0 : index
    %c0_0 = arith.constant 0 : index
    %c0_1 = arith.constant 0 : index
    %c0_2 = arith.constant 0 : index
    %0 = vector.load %arg3[%c0, %c0_0, %c0_1, %c0_2] : memref<1x1x64x256xf32, #tpu.memory_space<vmem>>, vector<1x1x64x256xf32>
    %1 = vector.shape_cast %0 : vector<1x1x64x256xf32> to vector<64x256xf32>
    %2 = arith.truncf %1 : vector<64x256xf32> to vector<64x256xbf16>
    %c0_3 = arith.constant 0 : index
    %c0_4 = arith.constant 0 : index
    %c0_5 = arith.constant 0 : index
    %c0_6 = arith.constant 0 : index
    %3 = vector.load %arg4[%c0_3, %c0_4, %c0_5, %c0_6] : memref<1x1x128x16xbf16, #tpu.memory_space<vmem>>, vector<1x1x64x16xbf16>
    %4 = vector.shape_cast %3 : vector<1x1x64x16xbf16> to vector<64x16xbf16>
    %c0_7 = arith.constant 0 : index
    %c0_8 = arith.constant 0 : index
    %c64 = arith.constant 64 : index
    %c0_9 = arith.constant 0 : index
    %5 = vector.load %arg4[%c0_7, %c0_8, %c64, %c0_9] : memref<1x1x128x16xbf16, #tpu.memory_space<vmem>>, vector<1x1x64x16xbf16>
    %6 = vector.shape_cast %5 : vector<1x1x64x16xbf16> to vector<64x16xbf16>
    %cst = arith.constant dense<0.000000e+00> : vector<256x16xf32>
    %7 = tpu.matmul %2, %4, %cst {dimension_numbers = #tpu.dot_dimension_numbers<[0], [0], [1], [1], [0, 1, 1, 1], [], []>} : vector<64x256xbf16>, vector<64x16xbf16>, vector<256x16xf32> -> vector<256x16xf32>
    %c0_10 = arith.constant 0 : index
    %c0_11 = arith.constant 0 : index
    %8 = vector.load %arg9[%c0_10, %c0_11] : memref<256x16xf32, #tpu.memory_space<vmem>>, vector<256x16xf32>
    tpu.vector_store %arg9[%c0_10, %c0_11], %7 {strides = array<i32>} : memref<256x16xf32, #tpu.memory_space<vmem>>, vector<256x16xf32>,
    %c0_12 = arith.constant 0 : index
    %c0_13 = arith.constant 0 : index
    %c0_14 = arith.constant 0 : index
    %c0_15 = arith.constant 0 : index
    %9 = vector.load %arg5[%c0_12, %c0_13, %c0_14, %c0_15] : memref<1x1x2x16xf32, #tpu.memory_space<vmem>>, vector<1x1x2x16xf32>
    %10 = vector.shape_cast %9 : vector<1x1x2x16xf32> to vector<2x16xf32>
    %11 = vector.extract_strided_slice %10 {offsets = [0, 0], sizes = [1, 16], strides = [1, 1]} : vector<2x16xf32> to vector<1x16xf32>
    %12 = vector.extract_strided_slice %10 {offsets = [1, 0], sizes = [1, 16], strides = [1, 1]} : vector<2x16xf32> to vector<1x16xf32>
    %c0_16 = arith.constant 0 : index
    %c0_17 = arith.constant 0 : index
    %13 = vector.load %arg7[%c0_16, %c0_17] : memref<2x7xf32, #tpu.memory_space<vmem>>, vector<2x1xf32>
    %c0_18 = arith.constant 0 : index
    %c1 = arith.constant 1 : index
    %14 = vector.load %arg7[%c0_18, %c1] : memref<2x7xf32, #tpu.memory_space<vmem>>, vector<2x1xf32>
    %c0_19 = arith.constant 0 : index
    %c2 = arith.constant 2 : index
    %15 = vector.load %arg7[%c0_19, %c2] : memref<2x7xf32, #tpu.memory_space<vmem>>, vector<2x1xf32>
    %c0_20 = arith.constant 0 : index
    %c3 = arith.constant 3 : index
    %16 = vector.load %arg7[%c0_20, %c3] : memref<2x7xf32, #tpu.memory_space<vmem>>, vector<2x2xf32>
    %17 = arith.truncf %16 : vector<2x2xf32> to vector<2x2xbf16>
    %c0_21 = arith.constant 0 : index
    %c5 = arith.constant 5 : index
    %18 = vector.load %arg7[%c0_21, %c5] : memref<2x7xf32, #tpu.memory_space<vmem>>, vector<2x1xf32>
    %c0_22 = arith.constant 0 : index
    %c6 = arith.constant 6 : index
    %19 = vector.load %arg7[%c0_22, %c6] : memref<2x7xf32, #tpu.memory_space<vmem>>, vector<2x1xf32>
    %20 = arith.truncf %19 : vector<2x1xf32> to vector<2x1xbf16>
    %c0_i32 = arith.constant 0 : i32
    %c256_i32 = arith.constant 256 : i32
    %21 = arith.addi %c0_i32, %c256_i32 : i32
    %c1_i32 = arith.constant 1 : i32
    scf.for %arg10 = %c0_i32 to %21 step %c1_i32  : i32 {
      %39 = arith.index_cast %arg10 : i32 to index
      %c0_33 = arith.constant 0 : index
      %40 = vector.load %arg6[%39, %c0_33] : memref<256x2xf32, #tpu.memory_space<vmem>>, vector<1x2xf32>
      %41 = vector.extract_strided_slice %40 {offsets = [0, 0], sizes = [1, 1], strides = [1, 1]} : vector<1x2xf32> to vector<1x1xf32>
      %42 = vector.broadcast %41 : vector<1x1xf32> to vector<1x16xf32>
      %43 = arith.subf %42, %11 : vector<1x16xf32>
      %44 = math.absf %43 : vector<1x16xf32>
      %cst_34 = arith.constant 1.000000e+00 : f32
      %45 = vector.broadcast %cst_34 : f32 to vector<1x16xf32>
      %46 = arith.addf %44, %45 : vector<1x16xf32>
      %47 = math.log %46 : vector<1x16xf32>
      %cst_35 = arith.constant 0.000000e+00 : f32
      %48 = vector.broadcast %cst_35 : f32 to vector<1x16xf32>
      %49 = arith.cmpf oge, %43, %48 : vector<1x16xf32>
      %cst_36 = arith.constant 0.000000e+00 : f32
      %50 = vector.broadcast %cst_36 : f32 to vector<1x16xf32>
      %51 = arith.subf %50, %47 : vector<1x16xf32>
      %52 = arith.select %49, %47, %51 : vector<1x16xi1>, vector<1x16xf32>
      %53 = vector.extract_strided_slice %40 {offsets = [0, 1], sizes = [1, 1], strides = [1, 1]} : vector<1x2xf32> to vector<1x1xf32>
      %54 = vector.broadcast %53 : vector<1x1xf32> to vector<1x16xf32>
      %55 = arith.subf %54, %12 : vector<1x16xf32>
      %56 = math.absf %55 : vector<1x16xf32>
      %cst_37 = arith.constant 1.000000e+00 : f32
      %57 = vector.broadcast %cst_37 : f32 to vector<1x16xf32>
      %58 = arith.addf %56, %57 : vector<1x16xf32>
      %59 = math.log %58 : vector<1x16xf32>
      %cst_38 = arith.constant 0.000000e+00 : f32
      %60 = vector.broadcast %cst_38 : f32 to vector<1x16xf32>
      %61 = arith.cmpf oge, %55, %60 : vector<1x16xf32>
      %cst_39 = arith.constant 0.000000e+00 : f32
      %62 = vector.broadcast %cst_39 : f32 to vector<1x16xf32>
      %63 = arith.subf %62, %59 : vector<1x16xf32>
      %64 = arith.select %61, %59, %63 : vector<1x16xi1>, vector<1x16xf32>
      %65 = vector.broadcast %13 : vector<2x1xf32> to vector<2x16xf32>
      %66 = vector.broadcast %52 : vector<1x16xf32> to vector<2x16xf32>
      %67 = arith.mulf %65, %66 : vector<2x16xf32>
      %68 = vector.broadcast %14 : vector<2x1xf32> to vector<2x16xf32>
      %69 = vector.broadcast %64 : vector<1x16xf32> to vector<2x16xf32>
      %70 = arith.mulf %68, %69 : vector<2x16xf32>
      %71 = arith.addf %67, %70 : vector<2x16xf32>
      %72 = vector.broadcast %15 : vector<2x1xf32> to vector<2x16xf32>
      %73 = arith.addf %71, %72 : vector<2x16xf32>
      %cst_40 = arith.constant 0.000000e+00 : f32
      %74 = vector.broadcast %cst_40 : f32 to vector<2x16xf32>
      %75 = arith.maximumf %73, %74 : vector<2x16xf32>
      %76 = arith.truncf %75 : vector<2x16xf32> to vector<2x16xbf16>
      %cst_41 = arith.constant dense<0.000000e+00> : vector<2x16xf32>
      %77 = tpu.matmul %17, %76, %cst_41 {dimension_numbers = #tpu.dot_dimension_numbers<[1], [0], [0], [1], [0, 0, 1, 1], [], []>} : vector<2x2xbf16>, vector<2x16xbf16>, vector<2x16xf32> -> vector<2x16xf32>
      %78 = vector.broadcast %18 : vector<2x1xf32> to vector<2x16xf32>
      %79 = arith.addf %77, %78 : vector<2x16xf32>
      %cst_42 = arith.constant 0.000000e+00 : f32
      %80 = vector.broadcast %cst_42 : f32 to vector<2x16xf32>
      %81 = arith.maximumf %79, %80 : vector<2x16xf32>
      %82 = arith.truncf %81 : vector<2x16xf32> to vector<2x16xbf16>
      %cst_43 = arith.constant dense<0.000000e+00> : vector<1x16xf32>
      %83 = tpu.matmul %20, %82, %cst_43 {dimension_numbers = #tpu.dot_dimension_numbers<[0], [0], [1], [1], [0, 1, 1, 1], [], []>} : vector<2x1xbf16>, vector<2x16xbf16>, vector<1x16xf32> -> vector<1x16xf32>
      %84 = arith.index_cast %arg10 : i32 to index
      %c0_44 = arith.constant 0 : index
      %85 = vector.load %arg9[%84, %c0_44] : memref<256x16xf32, #tpu.memory_space<vmem>>, vector<1x16xf32>
      %86 = arith.addf %85, %83 : vector<1x16xf32>
      %87 = arith.index_cast %arg10 : i32 to index
      %c0_45 = arith.constant 0 : index
      %88 = vector.load %arg9[%87, %c0_45] : memref<256x16xf32, #tpu.memory_space<vmem>>, vector<1x16xf32>
      tpu.vector_store %arg9[%87, %c0_45], %86 {strides = array<i32>} : memref<256x16xf32, #tpu.memory_space<vmem>>, vector<1x16xf32>,
    }
    %c256_i32_23 = arith.constant 256 : i32
    %c0_24 = arith.constant 0 : index
    %c0_25 = arith.constant 0 : index
    %22 = vector.load %arg9[%c0_24, %c0_25] : memref<256x16xf32, #tpu.memory_space<vmem>>, vector<256x16xf32>
    %cst_26 = arith.constant dense<0xFF800000> : vector<256xf32>
    %23 = vector.multi_reduction <maximumf>, %22, %cst_26 [1] : vector<256x16xf32> to vector<256xf32>
    %24 = vector.shape_cast %23 : vector<256xf32> to vector<256x1xf32>
    %25 = vector.broadcast %24 : vector<256x1xf32> to vector<256x16xf32>
    %26 = arith.subf %22, %25 : vector<256x16xf32>
    %27 = math.exp %26 : vector<256x16xf32>
    %cst_27 = arith.constant dense<0.000000e+00> : vector<256xf32>
    %28 = vector.multi_reduction <add>, %27, %cst_27 [1] : vector<256x16xf32> to vector<256xf32>
    %29 = vector.shape_cast %28 : vector<256xf32> to vector<256x1xf32>
    %30 = tpu.reciprocal %29 {approx = true} : vector<256x1xf32> -> vector<256x1xf32>
    %31 = vector.broadcast %30 : vector<256x1xf32> to vector<256x16xf32>
    %32 = arith.mulf %27, %31 : vector<256x16xf32>
    %33 = arith.truncf %32 : vector<256x16xf32> to vector<256x16xbf16>
    %cst_28 = arith.constant dense<0.000000e+00> : vector<64x256xf32>
    %34 = tpu.matmul %6, %33, %cst_28 {dimension_numbers = #tpu.dot_dimension_numbers<[1], [1], [0], [0], [0, 0, 1, 0], [], []>} : vector<64x16xbf16>, vector<256x16xbf16>, vector<64x256xf32> -> vector<64x256xf32>
    %35 = arith.truncf %34 : vector<64x256xf32> to vector<64x256xbf16>
    %c0_29 = arith.constant 0 : index
    %c0_30 = arith.constant 0 : index
    %c0_31 = arith.constant 0 : index
    %c0_32 = arith.constant 0 : index
    %36 = vector.load %arg8[%c0_29, %c0_30, %c0_31, %c0_32] : memref<1x1x64x256xbf16, #tpu.memory_space<vmem>>, vector<1x1x64x256xbf16>
    %37 = vector.shape_cast %36 : vector<1x1x64x256xbf16> to vector<64x256xbf16>
    %38 = vector.shape_cast %35 : vector<64x256xbf16> to vector<1x1x64x256xbf16>
    tpu.vector_store %arg8[%c0_29, %c0_30, %c0_31, %c0_32], %38 {strides = array<i32>} : memref<1x1x64x256xbf16, #tpu.memory_space<vmem>>, vector<1x1x64x256xbf16>,
    return
  }
  func.func @transform_0(%arg0: i32, %arg1: i32, %arg2: i32) -> (i32, i32, i32, i32) {
    %c0_i32 = arith.constant 0 : i32
    %c0_i32_0 = arith.constant 0 : i32
    return %arg1, %arg0, %c0_i32, %arg2 : i32, i32, i32, i32
  }
  func.func @transform_1(%arg0: i32, %arg1: i32, %arg2: i32) -> (i32, i32, i32, i32) {
    %c0_i32 = arith.constant 0 : i32
    %c0_i32_0 = arith.constant 0 : i32
    %c0_i32_1 = arith.constant 0 : i32
    return %arg1, %arg0, %c0_i32, %c0_i32_0 : i32, i32, i32, i32
  }
  func.func @transform_2(%arg0: i32, %arg1: i32, %arg2: i32) -> (i32, i32, i32, i32) {
    %c0_i32 = arith.constant 0 : i32
    %c0_i32_0 = arith.constant 0 : i32
    %c0_i32_1 = arith.constant 0 : i32
    return %arg1, %arg0, %c0_i32, %c0_i32_0 : i32, i32, i32, i32
  }
  func.func @transform_3(%arg0: i32, %arg1: i32, %arg2: i32) -> (i32, i32) {
    %c0_i32 = arith.constant 0 : i32
    %c0_i32_0 = arith.constant 0 : i32
    return %arg2, %c0_i32 : i32, i32
  }
  func.func @transform_4(%arg0: i32, %arg1: i32, %arg2: i32) -> (i32, i32) {
    %c0_i32 = arith.constant 0 : i32
    %c0_i32_0 = arith.constant 0 : i32
    %c0_i32_1 = arith.constant 0 : i32
    return %c0_i32, %c0_i32_0 : i32, i32
  }
  func.func @transform_5(%arg0: i32, %arg1: i32, %arg2: i32) -> (i32, i32, i32, i32) {
    %c0_i32 = arith.constant 0 : i32
    %c0_i32_0 = arith.constant 0 : i32
    return %arg1, %arg0, %c0_i32, %arg2 : i32, i32, i32, i32
  }
}

module attributes {stable_mosaic.version = 11 : i64} {
  func.func @kernel(%arg0: i32, %arg1: i32, %arg2: memref<1x512x256xbf16, #tpu.memory_space<vmem>>, %arg3: memref<1x8x256xf32, #tpu.memory_space<vmem>>, %arg4: memref<8x512xbf16, #tpu.memory_space<vmem>>, %arg5: memref<8x1xf32, #tpu.memory_space<vmem>>, %arg6: memref<16x8xbf16, #tpu.memory_space<vmem>>, %arg7: memref<16x1xf32, #tpu.memory_space<vmem>>, %arg8: memref<8x16xbf16, #tpu.memory_space<vmem>>, %arg9: memref<8x1xf32, #tpu.memory_space<vmem>>, %arg10: memref<1x8x256xf32, #tpu.memory_space<vmem>>) attributes {dimension_semantics = [#tpu.dimension_semantics<parallel>, #tpu.dimension_semantics<parallel>], iteration_bounds = array<i64: 1, 2>, scalar_prefetch = 0 : i64, scratch_operands = 0 : i64, tpu.core_type = #tpu.core_type<tc>, window_params = [{transform_indices = @transform_0, window_bounds = array<i64: 1, 512, 256>}, {transform_indices = @transform_1, window_bounds = array<i64: 1, 8, 256>}, {pipeline_mode = #tpu.pipeline_mode<synchronous>, transform_indices = @transform_2, window_bounds = array<i64: 8, 512>}, {pipeline_mode = #tpu.pipeline_mode<synchronous>, transform_indices = @transform_3, window_bounds = array<i64: 8, 1>}, {pipeline_mode = #tpu.pipeline_mode<synchronous>, transform_indices = @transform_4, window_bounds = array<i64: 16, 8>}, {pipeline_mode = #tpu.pipeline_mode<synchronous>, transform_indices = @transform_5, window_bounds = array<i64: 16, 1>}, {pipeline_mode = #tpu.pipeline_mode<synchronous>, transform_indices = @transform_6, window_bounds = array<i64: 8, 16>}, {pipeline_mode = #tpu.pipeline_mode<synchronous>, transform_indices = @transform_7, window_bounds = array<i64: 8, 1>}, {transform_indices = @transform_8, window_bounds = array<i64: 1, 8, 256>}]} {
    %c0 = arith.constant 0 : index
    %c0_0 = arith.constant 0 : index
    %c0_1 = arith.constant 0 : index
    %0 = vector.load %arg2[%c0, %c0_0, %c0_1] : memref<1x512x256xbf16, #tpu.memory_space<vmem>>, vector<1x512x256xbf16>
    %1 = vector.shape_cast %0 : vector<1x512x256xbf16> to vector<512x256xbf16>
    %c0_2 = arith.constant 0 : index
    %c0_3 = arith.constant 0 : index
    %c0_4 = arith.constant 0 : index
    %2 = vector.load %arg3[%c0_2, %c0_3, %c0_4] : memref<1x8x256xf32, #tpu.memory_space<vmem>>, vector<1x8x256xf32>
    %3 = vector.shape_cast %2 : vector<1x8x256xf32> to vector<8x256xf32>
    %c0_5 = arith.constant 0 : index
    %c0_6 = arith.constant 0 : index
    %4 = vector.load %arg4[%c0_5, %c0_6] : memref<8x512xbf16, #tpu.memory_space<vmem>>, vector<8x512xbf16>
    %cst = arith.constant dense<0.000000e+00> : vector<8x256xf32>
    %5 = tpu.matmul %4, %1, %cst {dimension_numbers = #tpu.dot_dimension_numbers<[1], [0], [0], [1], [0, 0, 1, 1], [], []>} : vector<8x512xbf16>, vector<512x256xbf16>, vector<8x256xf32> -> vector<8x256xf32>
    %6 = arith.addf %3, %5 : vector<8x256xf32>
    %c0_7 = arith.constant 0 : index
    %c0_8 = arith.constant 0 : index
    %7 = vector.load %arg5[%c0_7, %c0_8] : memref<8x1xf32, #tpu.memory_space<vmem>>, vector<8x1xf32>
    %8 = vector.broadcast %7 : vector<8x1xf32> to vector<8x256xf32>
    %9 = arith.addf %6, %8 : vector<8x256xf32>
    %c0_9 = arith.constant 0 : index
    %c0_10 = arith.constant 0 : index
    %10 = vector.load %arg6[%c0_9, %c0_10] : memref<16x8xbf16, #tpu.memory_space<vmem>>, vector<16x8xbf16>
    %11 = arith.truncf %9 : vector<8x256xf32> to vector<8x256xbf16>
    %cst_11 = arith.constant dense<0.000000e+00> : vector<16x256xf32>
    %12 = tpu.matmul %10, %11, %cst_11 {dimension_numbers = #tpu.dot_dimension_numbers<[1], [0], [0], [1], [0, 0, 1, 1], [], []>} : vector<16x8xbf16>, vector<8x256xbf16>, vector<16x256xf32> -> vector<16x256xf32>
    %c0_12 = arith.constant 0 : index
    %c0_13 = arith.constant 0 : index
    %13 = vector.load %arg7[%c0_12, %c0_13] : memref<16x1xf32, #tpu.memory_space<vmem>>, vector<16x1xf32>
    %14 = vector.broadcast %13 : vector<16x1xf32> to vector<16x256xf32>
    %15 = arith.addf %12, %14 : vector<16x256xf32>
    %16 = arith.negf %15 : vector<16x256xf32>
    %17 = math.exp %16 : vector<16x256xf32>
    %cst_14 = arith.constant 1.000000e+00 : f32
    %18 = vector.broadcast %cst_14 : f32 to vector<16x256xf32>
    %19 = arith.addf %18, %17 : vector<16x256xf32>
    %20 = arith.divf %18, %19 : vector<16x256xf32>
    %21 = arith.mulf %15, %20 : vector<16x256xf32>
    %c0_15 = arith.constant 0 : index
    %c0_16 = arith.constant 0 : index
    %22 = vector.load %arg8[%c0_15, %c0_16] : memref<8x16xbf16, #tpu.memory_space<vmem>>, vector<8x16xbf16>
    %23 = arith.truncf %21 : vector<16x256xf32> to vector<16x256xbf16>
    %cst_17 = arith.constant dense<0.000000e+00> : vector<8x256xf32>
    %24 = tpu.matmul %22, %23, %cst_17 {dimension_numbers = #tpu.dot_dimension_numbers<[1], [0], [0], [1], [0, 0, 1, 1], [], []>} : vector<8x16xbf16>, vector<16x256xbf16>, vector<8x256xf32> -> vector<8x256xf32>
    %c0_18 = arith.constant 0 : index
    %c0_19 = arith.constant 0 : index
    %25 = vector.load %arg9[%c0_18, %c0_19] : memref<8x1xf32, #tpu.memory_space<vmem>>, vector<8x1xf32>
    %26 = vector.broadcast %25 : vector<8x1xf32> to vector<8x256xf32>
    %27 = arith.addf %24, %26 : vector<8x256xf32>
    %28 = arith.addf %9, %27 : vector<8x256xf32>
    %c0_20 = arith.constant 0 : index
    %c0_21 = arith.constant 0 : index
    %c0_22 = arith.constant 0 : index
    %29 = vector.load %arg10[%c0_20, %c0_21, %c0_22] : memref<1x8x256xf32, #tpu.memory_space<vmem>>, vector<1x8x256xf32>
    %30 = vector.shape_cast %29 : vector<1x8x256xf32> to vector<8x256xf32>
    %31 = vector.shape_cast %28 : vector<8x256xf32> to vector<1x8x256xf32>
    tpu.vector_store %arg10[%c0_20, %c0_21, %c0_22], %31 {strides = array<i32>} : memref<1x8x256xf32, #tpu.memory_space<vmem>>, vector<1x8x256xf32>,
    return
  }
  func.func @transform_0(%arg0: i32, %arg1: i32) -> (i32, i32, i32) {
    %c0_i32 = arith.constant 0 : i32
    %c0_i32_0 = arith.constant 0 : i32
    return %arg1, %c0_i32, %arg0 : i32, i32, i32
  }
  func.func @transform_1(%arg0: i32, %arg1: i32) -> (i32, i32, i32) {
    %c0_i32 = arith.constant 0 : i32
    %c0_i32_0 = arith.constant 0 : i32
    return %arg1, %c0_i32, %arg0 : i32, i32, i32
  }
  func.func @transform_2(%arg0: i32, %arg1: i32) -> (i32, i32) {
    %c0_i32 = arith.constant 0 : i32
    %c0_i32_0 = arith.constant 0 : i32
    %c0_i32_1 = arith.constant 0 : i32
    return %c0_i32, %c0_i32_0 : i32, i32
  }
  func.func @transform_3(%arg0: i32, %arg1: i32) -> (i32, i32) {
    %c0_i32 = arith.constant 0 : i32
    %c0_i32_0 = arith.constant 0 : i32
    %c0_i32_1 = arith.constant 0 : i32
    return %c0_i32, %c0_i32_0 : i32, i32
  }
  func.func @transform_4(%arg0: i32, %arg1: i32) -> (i32, i32) {
    %c0_i32 = arith.constant 0 : i32
    %c0_i32_0 = arith.constant 0 : i32
    %c0_i32_1 = arith.constant 0 : i32
    return %c0_i32, %c0_i32_0 : i32, i32
  }
  func.func @transform_5(%arg0: i32, %arg1: i32) -> (i32, i32) {
    %c0_i32 = arith.constant 0 : i32
    %c0_i32_0 = arith.constant 0 : i32
    %c0_i32_1 = arith.constant 0 : i32
    return %c0_i32, %c0_i32_0 : i32, i32
  }
  func.func @transform_6(%arg0: i32, %arg1: i32) -> (i32, i32) {
    %c0_i32 = arith.constant 0 : i32
    %c0_i32_0 = arith.constant 0 : i32
    %c0_i32_1 = arith.constant 0 : i32
    return %c0_i32, %c0_i32_0 : i32, i32
  }
  func.func @transform_7(%arg0: i32, %arg1: i32) -> (i32, i32) {
    %c0_i32 = arith.constant 0 : i32
    %c0_i32_0 = arith.constant 0 : i32
    %c0_i32_1 = arith.constant 0 : i32
    return %c0_i32, %c0_i32_0 : i32, i32
  }
  func.func @transform_8(%arg0: i32, %arg1: i32) -> (i32, i32, i32) {
    %c0_i32 = arith.constant 0 : i32
    %c0_i32_0 = arith.constant 0 : i32
    return %arg1, %c0_i32, %arg0 : i32, i32, i32
  }
}

</mosaic_0001>

<llo_original>
// kernel: dablock_forward.5
$region0: #{dablock_forward.5}
  #allocation0 [shape = 'u32[]', space=smem, size = 0x4, offset = 0x4, fixed_abs, tag = 'smem constant byte address 0x4 - core index']
  #allocation1 [shape = 'u32[144,128]{1,0:T(1,128)}', space=vmem, size = 0x12000, scoped, tag = 'internal scratch']
  %s0 = inlined_call_operand.hbm [shape: f32[2,8,1,256], index: 0, kind: input, shape index: {}]
  %s1 = inlined_call_operand.hbm [shape: f32[8,64,1], index: 1, kind: input, shape index: {}]
  %s2 = inlined_call_operand.hbm [shape: f32[2,8,64,256], index: 2, kind: output, shape index: {}]
  %s3 = sld [smem:[#allocation0]]
  $region49: #{dablock_forward.5} parent=0
    _
  %s5 = ssub.s32 1, %s3
  %s6 = scalar_select 0, %s5, %s3
  $region1: #{dablock_forward.5} parent=0
    #allocation2 [shape = 'u8[16384]{0}', space=vmem, size = 0x4000, scoped, tag = 'input window, operand 0']
    #allocation3 [shape = 's32[2]{0}', space=sflag, size = 0x8, scoped, tag = 'scoped memory for dablock_forward.5']
    #allocation4 [shape = 's32[2]{0}', space=sflag, size = 0x8, scoped, tag = 'scoped memory for dablock_forward.5']
    #allocation5 [shape = 'u8[262144]{0}', space=vmem, size = 0x40000, scoped, tag = 'input window, operand 1, single buffered']
    #allocation6 [shape = 's32[1]{0}', space=sflag, size = 0x4, scoped, tag = 'scoped memory for dablock_forward.5']
    #allocation7 [shape = 'u8[1048576]{0}', space=vmem, size = 0x100000, scoped, tag = 'output window, operand 0']
    %7 = vsyncpa [#allocation3], 0
    %s8 = scalar_lea.sflag [#allocation3], 1
    %9 = vsyncpa %s8, 0
    %10 = vsyncpa [#allocation6], 0
    %11 = vsyncpa [#allocation4], 0
    %s12 = scalar_lea.sflag [#allocation4], 1
    %13 = vsyncpa %s12, 0
    loop: start=0, step=1, limit=4
    $region2: #{dablock_forward.5} parent=1 // loop_pre_header
      _
    $region3: #{dablock_forward.5} parent=1 // loop_header
      %s15 = sphi 0, %s19
      %p16 = scmp.ge.s32.totalorder %s15, 4
      %s22 = sphi 0, %s34
      %s23 = sphi 0, %s30
      %s24 = sphi 0, %s22
      %s25 = sphi 0, %s23
      %s26 = sphi 0, %s24
      %s27 = sphi 0, %s25
      %s39 = sphi 0, %s41
      %s42 = sphi 0, %s39
      %s43 = sphi 0, %s42
      %s59 = sphi 0, %s43
      %s63 = sphi 0, %s63
      %s65 = sphi 0, %s63
      %s66 = sphi 0, %s65
      %s80 = sphi 0, %s66
      %s88 = sphi 0, %s90
      %s91 = sphi 0, %s88
      %s92 = sphi 0, %s91
      %s108 = sphi 0, %s92
    $region4: #{dablock_forward.5} parent=1 // loop_header_branch
      %18 = sbr.rel (%p16) target = $region8
    $region5: #{dablock_forward.5} parent=1 // loop_body
      %s20 = ssub.s32 %s15, 1
      %s21 = ssub.s32 %s15, 2
      %s28 = sadd.s32 1, %s23
      %p29 = scmp.ge.s32.totalorder %s28, 2
      %s30 = scalar_select %p29, 0, %s28
      %s31 = sadd.s32 1, %s22
      %s32 = scalar_select %p29, %s31, %s22
      %p33 = scmp.ge.s32.totalorder %s32, 1
      %s34 = scalar_select %p33, 0, %s32
      %s35 = ssub.s32 %s23, %s30
      %s36 = ssub.s32 %s22, %s34
      %s37 = sor.u32 %s35, %s36
      %p38 = scmp.eq.s32.totalorder %s37, 0
      %s40 = sadd.s32 %s39, 1
      %s41 = scalar_select %p38, %s39, %s40
      %p44 = pneg %p38
      %p45 = scmp.eq.s32.totalorder %s15, 1
      %p46 = por %p44, %p45
      %p47 = scmp.ne.s32.totalorder %s39, %s42
      %p48 = scmp.eq.s32.totalorder %s15, 0
      %p49 = por %p47, %p48
      %p50 = scmp.ne.s32.totalorder %s39, %s42
      %p51 = scmp.eq.s32.totalorder %s20, 1
      %p52 = por %p50, %p51
      %p53 = scmp.ne.s32.totalorder %s42, %s43
      %p54 = scmp.eq.s32.totalorder %s20, 0
      %p55 = por %p53, %p54
      %p56 = scmp.ne.s32.totalorder %s42, %s43
      %p57 = scmp.eq.s32.totalorder %s21, 1
      %p58 = por %p56, %p57
      %p60 = scmp.ne.s32.totalorder %s43, %s59
      %p61 = scmp.eq.s32.totalorder %s21, 0
      %p62 = por %p60, %p61
      %s64 = sadd.s32 %s63, 1
      %p67 = scmp.eq.s32.totalorder %s15, 1
      %p68 = scmp.ne.s32.totalorder %s63, %s65
      %p69 = scmp.eq.s32.totalorder %s15, 0
      %p70 = por %p68, %p69
      %p71 = scmp.ne.s32.totalorder %s63, %s65
      %p72 = scmp.eq.s32.totalorder %s20, 1
      %p73 = por %p71, %p72
      %p74 = scmp.ne.s32.totalorder %s65, %s66
      %p75 = scmp.eq.s32.totalorder %s20, 0
      %p76 = por %p74, %p75
      %p77 = scmp.ne.s32.totalorder %s65, %s66
      %p78 = scmp.eq.s32.totalorder %s21, 1
      %p79 = por %p77, %p78
      %p81 = scmp.ne.s32.totalorder %s66, %s80
      %p82 = scmp.eq.s32.totalorder %s21, 0
      %p83 = por %p81, %p82
      %s84 = ssub.s32 %s23, %s30
      %s85 = ssub.s32 %s22, %s34
      %s86 = sor.u32 %s84, %s85
      %p87 = scmp.eq.s32.totalorder %s86, 0
      %s89 = sadd.s32 %s88, 1
      %s90 = scalar_select %p87, %s88, %s89
      %p93 = pneg %p87
      %p94 = scmp.eq.s32.totalorder %s15, 1
      %p95 = por %p93, %p94
      %p96 = scmp.ne.s32.totalorder %s88, %s91
      %p97 = scmp.eq.s32.totalorder %s15, 0
      %p98 = por %p96, %p97
      %p99 = scmp.ne.s32.totalorder %s88, %s91
      %p100 = scmp.eq.s32.totalorder %s20, 1
      %p101 = por %p99, %p100
      %p102 = scmp.ne.s32.totalorder %s91, %s92
      %p103 = scmp.eq.s32.totalorder %s20, 0
      %p104 = por %p102, %p103
      %p105 = scmp.ne.s32.totalorder %s91, %s92
      %p106 = scmp.eq.s32.totalorder %s21, 1
      %p107 = por %p105, %p106
      %p109 = scmp.ne.s32.totalorder %s92, %s108
      %p110 = scmp.eq.s32.totalorder %s21, 0
      %p111 = por %p109, %p110
      %p112 = scmp.le.s32.totalorder 1, %s15
      %p113 = scmp.lt.s32.totalorder %s15, 3
      %p114 = pnand %p112, %p113
      %p115 = pneg %p114
      // Predicated region
      $region9: #{dablock_forward.5} parent=5 // pred_check
        _
      $region10: #{dablock_forward.5} parent=5 // pred_check_branch
        %117 = sbr.rel (%p114) target = $region12
      $region11: #{dablock_forward.5} parent=5 // pred_region
        %s118 = ssub.s32 %s15, 1
        // Predicated region
        $region13: #{dablock_forward.5} parent=11 // pred_check
          %p119 = pneg %p76
        $region14: #{dablock_forward.5} parent=11 // pred_check_branch
          %121 = sbr.rel (%p119) target = $region16
        $region15: #{dablock_forward.5} parent=11 // pred_region
          %s123 = ssub.s32 8192, 8192
          %124 = vsyncadd [#allocation6], %s123
          %s125 = sshll.u32 [#allocation5], 4
          %s126 = int_to_ptr.vmem [resolvable:$true] %s125
          %131 = dma.hbm_to_vmem [thread:$0]  %s1, 8192, %s126, [#allocation6], 128, 128, 8
        $region16: #{dablock_forward.5} parent=11 // pred_fallthru
          _
      $region12: #{dablock_forward.5} parent=5 // pred_fallthru
        _
      %p132 = scmp.lt.s32.totalorder %s15, 2
      // Predicated region
      $region17: #{dablock_forward.5} parent=5 // pred_check
        %p133 = pneg %p132
      $region18: #{dablock_forward.5} parent=5 // pred_check_branch
        %135 = sbr.rel (%p133) target = $region20
      $region19: #{dablock_forward.5} parent=5 // pred_region
        // Predicated region
        $region21: #{dablock_forward.5} parent=19 // pred_check
          %p136 = pneg %p49
        $region22: #{dablock_forward.5} parent=19 // pred_check_branch
          %138 = sbr.rel (%p136) target = $region24
        $region23: #{dablock_forward.5} parent=19 // pred_region
          %s139 = sand.u32 %s39, 1
          %s140 = scalar_lea.sflag [#allocation3], %s139
          %s141 = sand.u32 %s39, 1
          %s142 = smul.addr %s141, 16
          %s143 = scalar_lea.vmem [#allocation2], %s142
          %s144 = smul.u32 2, %s22
          %s146 = ssub.s32 256, 256
          %147 = vsyncadd %s140, %s146
          %s148 = smul.addr %s23, 16
          %s149 = sadd.s32 %s144, %s148
          %s150 = smul.addr %s149, 16
          %s151 = scalar_lea.hbm %s0, %s150
          %s152 = sshll.u32 %s143, 4
          %s153 = int_to_ptr.vmem [resolvable:$true] %s152
          %158 = dma.hbm_to_vmem [thread:$0]  %s151, 256, %s153, %s140, 32, 32, 2
        $region24: #{dablock_forward.5} parent=19 // pred_fallthru
          _
      $region20: #{dablock_forward.5} parent=5 // pred_fallthru
        _
      %p159 = scmp.le.s32.totalorder 1, %s15
      %p160 = scmp.lt.s32.totalorder %s15, 3
      %p161 = pnand %p159, %p160
      %p162 = pneg %p161
      // Predicated region
      $region25: #{dablock_forward.5} parent=5 // pred_check
        _
      $region26: #{dablock_forward.5} parent=5 // pred_check_branch
        %164 = sbr.rel (%p161) target = $region28
      $region27: #{dablock_forward.5} parent=5 // pred_region
        %s165 = ssub.s32 %s15, 1
        %s166 = sand.u32 %s42, 1
        %s167 = scalar_lea.sflag [#allocation3], %s166
        %s168 = sand.u32 %s42, 1
        %s169 = smul.addr %s168, 16
        %s170 = scalar_lea.vmem [#allocation2], %s169
        // Predicated region
        $region29: #{dablock_forward.5} parent=27 // pred_check
          %p171 = pneg %p55
        $region30: #{dablock_forward.5} parent=27 // pred_check_branch
          %173 = sbr.rel (%p171) target = $region32
        $region31: #{dablock_forward.5} parent=27 // pred_region
          %174 = dma.done %s167, 256
        $region32: #{dablock_forward.5} parent=27 // pred_fallthru
          _
        // Predicated region
        $region33: #{dablock_forward.5} parent=27 // pred_check
          %p175 = pneg %p76
        $region34: #{dablock_forward.5} parent=27 // pred_check_branch
          %177 = sbr.rel (%p175) target = $region36
        $region35: #{dablock_forward.5} parent=27 // pred_region
          %178 = dma.done [#allocation6], 8192
        $region36: #{dablock_forward.5} parent=27 // pred_fallthru
          _
        %s179 = sand.u32 %s42, 1
        %s180 = scalar_lea.sflag [#allocation3], %s179
        %s181 = sand.u32 %s42, 1
        %s182 = smul.addr %s181, 16
        %s183 = scalar_lea.vmem [#allocation2], %s182
        %p184 = pneg %p55
        %p185 = pneg %p52
        %p186 = pneg %p76
        %p187 = pneg %p73
        %p188 = pneg %p104
        %p189 = pneg %p101
        %s190 = sand.u32 %s91, 1
        %s191 = scalar_lea.sflag [#allocation4], %s190
        %s192 = sand.u32 %s91, 1
        %s193 = smul.addr %s192, 1024
        %s194 = scalar_lea.vmem [#allocation7], %s193
        %s195 = smul.u32 2, %s24
        %s196 = smul.u32 2, %s24
        %v197 = vld [vmem:[#allocation5] sm:$0xff]
        %v198 = vld [vmem:[#allocation5 + $0x8] sm:$0xff]
        %v199 = vld [vmem:[#allocation5 + $0x10] sm:$0xff]
        %v200 = vld [vmem:[#allocation5 + $0x18] sm:$0xff]
        %v201 = vld [vmem:[#allocation5 + $0x20] sm:$0xff]
        %v202 = vld [vmem:[#allocation5 + $0x28] sm:$0xff]
        %v203 = vld [vmem:[#allocation5 + $0x30] sm:$0xff]
        %v204 = vld [vmem:[#allocation5 + $0x38] sm:$0xff]
        %v205 = vld [vmem:[%s170] sm:$0x3]
        %207 = vset.pattern.permute.xlu0 0
        %208 = vperm.xlu0 %207, %v197
        %v209 = vpop.permute.xlu0 %208
        %212 = vset.pattern.permute.xlu0 0
        %213 = vperm.xlu0 %212, %v198
        %v214 = vpop.permute.xlu0 %213
        %217 = vset.pattern.permute.xlu0 0
        %218 = vperm.xlu0 %217, %v199
        %v219 = vpop.permute.xlu0 %218
        %222 = vset.pattern.permute.xlu0 0
        %223 = vperm.xlu0 %222, %v200
        %v224 = vpop.permute.xlu0 %223
        %227 = vset.pattern.permute.xlu0 0
        %228 = vperm.xlu0 %227, %v201
        %v229 = vpop.permute.xlu0 %228
        %232 = vset.pattern.permute.xlu0 0
        %233 = vperm.xlu0 %232, %v202
        %v234 = vpop.permute.xlu0 %233
        %237 = vset.pattern.permute.xlu0 0
        %238 = vperm.xlu0 %237, %v203
        %v239 = vpop.permute.xlu0 %238
        %242 = vset.pattern.permute.xlu0 0
        %243 = vperm.xlu0 %242, %v204
        %v244 = vpop.permute.xlu0 %243
        %v247 = vlaneseq
        %v248 = vshrl.u32 %v247, 7
        %v249 = vsub.s32 0, %v248
        %v250 = vrot.slane %v205, %v249
        %v251 = vlaneseq
        %v252 = vshrl.u32 %v251, 7
        %v253 = vsub.s32 1, %v252
        %v254 = vrot.slane %v205, %v253
        %v257 = vmul.f32 %v209, %v250
        %v258 = vmul.f32 %v209, %v254
        %v259 = vmul.f32 %v214, %v250
        %v260 = vmul.f32 %v214, %v254
        %v261 = vmul.f32 %v219, %v250
        %v262 = vmul.f32 %v219, %v254
        %v263 = vmul.f32 %v224, %v250
        %v264 = vmul.f32 %v224, %v254
        %v265 = vmul.f32 %v229, %v250
        %v266 = vmul.f32 %v229, %v254
        %v267 = vmul.f32 %v234, %v250
        %v268 = vmul.f32 %v234, %v254
        %v269 = vmul.f32 %v239, %v250
        %v270 = vmul.f32 %v239, %v254
        %v271 = vmul.f32 %v244, %v250
        %v272 = vmul.f32 %v244, %v254
        %273 = vst [vmem:[%s194] sm:$0xff] %v257
        %274 = vst [vmem:[%s194 + $0x8] sm:$0xff] %v258
        %275 = vst [vmem:[%s194 + $0x10] sm:$0xff] %v259
        %276 = vst [vmem:[%s194 + $0x18] sm:$0xff] %v260
        %277 = vst [vmem:[%s194 + $0x20] sm:$0xff] %v261
        %278 = vst [vmem:[%s194 + $0x28] sm:$0xff] %v262
        %279 = vst [vmem:[%s194 + $0x30] sm:$0xff] %v263
        %280 = vst [vmem:[%s194 + $0x38] sm:$0xff] %v264
        %281 = vst [vmem:[%s194 + $0x40] sm:$0xff] %v265
        %282 = vst [vmem:[%s194 + $0x48] sm:$0xff] %v266
        %283 = vst [vmem:[%s194 + $0x50] sm:$0xff] %v267
        %284 = vst [vmem:[%s194 + $0x58] sm:$0xff] %v268
        %285 = vst [vmem:[%s194 + $0x60] sm:$0xff] %v269
        %286 = vst [vmem:[%s194 + $0x68] sm:$0xff] %v270
        %287 = vst [vmem:[%s194 + $0x70] sm:$0xff] %v271
        %288 = vst [vmem:[%s194 + $0x78] sm:$0xff] %v272
        %s289 = scalar_lea.vmem [#allocation5], 64
        %v290 = vld [vmem:[%s289] sm:$0xff]
        %v291 = vld [vmem:[%s289 + $0x8] sm:$0xff]
        %v292 = vld [vmem:[%s289 + $0x10] sm:$0xff]
        %v293 = vld [vmem:[%s289 + $0x18] sm:$0xff]
        %v294 = vld [vmem:[%s289 + $0x20] sm:$0xff]
        %v295 = vld [vmem:[%s289 + $0x28] sm:$0xff]
        %v296 = vld [vmem:[%s289 + $0x30] sm:$0xff]
        %v297 = vld [vmem:[%s289 + $0x38] sm:$0xff]
        %s298 = scalar_lea.vmem %s170, 2 [#allocation2]
        %v299 = vld [vmem:[%s298] sm:$0x3]
        %301 = vset.pattern.permute.xlu0 0
        %302 = vperm.xlu0 %301, %v290
        %v303 = vpop.permute.xlu0 %302
        %306 = vset.pattern.permute.xlu0 0
        %307 = vperm.xlu0 %306, %v291
        %v308 = vpop.permute.xlu0 %307
        %311 = vset.pattern.permute.xlu0 0
        %312 = vperm.xlu0 %311, %v292
        %v313 = vpop.permute.xlu0 %312
        %316 = vset.pattern.permute.xlu0 0
        %317 = vperm.xlu0 %316, %v293
        %v318 = vpop.permute.xlu0 %317
        %321 = vset.pattern.permute.xlu0 0
        %322 = vperm.xlu0 %321, %v294
        %v323 = vpop.permute.xlu0 %322
        %326 = vset.pattern.permute.xlu0 0
        %327 = vperm.xlu0 %326, %v295
        %v328 = vpop.permute.xlu0 %327
        %331 = vset.pattern.permute.xlu0 0
        %332 = vperm.xlu0 %331, %v296
        %v333 = vpop.permute.xlu0 %332
        %336 = vset.pattern.permute.xlu0 0
        %337 = vperm.xlu0 %336, %v297
        %v338 = vpop.permute.xlu0 %337
        %v341 = vlaneseq
        %v342 = vshrl.u32 %v341, 7
        %v343 = vsub.s32 0, %v342
        %v344 = vrot.slane %v299, %v343
        %v345 = vlaneseq
        %v346 = vshrl.u32 %v345, 7
        %v347 = vsub.s32 1, %v346
        %v348 = vrot.slane %v299, %v347
        %v351 = vmul.f32 %v303, %v344
        %v352 = vmul.f32 %v303, %v348
        %v353 = vmul.f32 %v308, %v344
        %v354 = vmul.f32 %v308, %v348
        %v355 = vmul.f32 %v313, %v344
        %v356 = vmul.f32 %v313, %v348
        %v357 = vmul.f32 %v318, %v344
        %v358 = vmul.f32 %v318, %v348
        %v359 = vmul.f32 %v323, %v344
        %v360 = vmul.f32 %v323, %v348
        %v361 = vmul.f32 %v328, %v344
        %v362 = vmul.f32 %v328, %v348
        %v363 = vmul.f32 %v333, %v344
        %v364 = vmul.f32 %v333, %v348
        %v365 = vmul.f32 %v338, %v344
        %v366 = vmul.f32 %v338, %v348
        %s367 = scalar_lea.vmem %s194, 128 [#allocation7]
        %368 = vst [vmem:[%s367] sm:$0xff] %v351
        %369 = vst [vmem:[%s367 + $0x8] sm:$0xff] %v352
        %370 = vst [vmem:[%s367 + $0x10] sm:$0xff] %v353
        %371 = vst [vmem:[%s367 + $0x18] sm:$0xff] %v354
        %372 = vst [vmem:[%s367 + $0x20] sm:$0xff] %v355
        %373 = vst [vmem:[%s367 + $0x28] sm:$0xff] %v356
        %374 = vst [vmem:[%s367 + $0x30] sm:$0xff] %v357
        %375 = vst [vmem:[%s367 + $0x38] sm:$0xff] %v358
        %376 = vst [vmem:[%s367 + $0x40] sm:$0xff] %v359
        %377 = vst [vmem:[%s367 + $0x48] sm:$0xff] %v360
        %378 = vst [vmem:[%s367 + $0x50] sm:$0xff] %v361
        %379 = vst [vmem:[%s367 + $0x58] sm:$0xff] %v362
        %380 = vst [vmem:[%s367 + $0x60] sm:$0xff] %v363
        %381 = vst [vmem:[%s367 + $0x68] sm:$0xff] %v364
        %382 = vst [vmem:[%s367 + $0x70] sm:$0xff] %v365
        %383 = vst [vmem:[%s367 + $0x78] sm:$0xff] %v366
        %s384 = scalar_lea.vmem [#allocation5], 128
        %v385 = vld [vmem:[%s384] sm:$0xff]
        %v386 = vld [vmem:[%s384 + $0x8] sm:$0xff]
        %v387 = vld [vmem:[%s384 + $0x10] sm:$0xff]
        %v388 = vld [vmem:[%s384 + $0x18] sm:$0xff]
        %v389 = vld [vmem:[%s384 + $0x20] sm:$0xff]
        %v390 = vld [vmem:[%s384 + $0x28] sm:$0xff]
        %v391 = vld [vmem:[%s384 + $0x30] sm:$0xff]
        %v392 = vld [vmem:[%s384 + $0x38] sm:$0xff]
        %s393 = scalar_lea.vmem %s170, 4 [#allocation2]
        %v394 = vld [vmem:[%s393] sm:$0x3]
        %396 = vset.pattern.permute.xlu0 0
        %397 = vperm.xlu0 %396, %v385
        %v398 = vpop.permute.xlu0 %397
        %401 = vset.pattern.permute.xlu0 0
        %402 = vperm.xlu0 %401, %v386
        %v403 = vpop.permute.xlu0 %402
        %406 = vset.pattern.permute.xlu0 0
        %407 = vperm.xlu0 %406, %v387
        %v408 = vpop.permute.xlu0 %407
        %411 = vset.pattern.permute.xlu0 0
        %412 = vperm.xlu0 %411, %v388
        %v413 = vpop.permute.xlu0 %412
        %416 = vset.pattern.permute.xlu0 0
        %417 = vperm.xlu0 %416, %v389
        %v418 = vpop.permute.xlu0 %417
        %421 = vset.pattern.permute.xlu0 0
        %422 = vperm.xlu0 %421, %v390
        %v423 = vpop.permute.xlu0 %422
        %426 = vset.pattern.permute.xlu0 0
        %427 = vperm.xlu0 %426, %v391
        %v428 = vpop.permute.xlu0 %427
        %431 = vset.pattern.permute.xlu0 0
        %432 = vperm.xlu0 %431, %v392
        %v433 = vpop.permute.xlu0 %432
        %v436 = vlaneseq
        %v437 = vshrl.u32 %v436, 7
        %v438 = vsub.s32 0, %v437
        %v439 = vrot.slane %v394, %v438
        %v440 = vlaneseq
        %v441 = vshrl.u32 %v440, 7
        %v442 = vsub.s32 1, %v441
        %v443 = vrot.slane %v394, %v442
        %v446 = vmul.f32 %v398, %v439
        %v447 = vmul.f32 %v398, %v443
        %v448 = vmul.f32 %v403, %v439
        %v449 = vmul.f32 %v403, %v443
        %v450 = vmul.f32 %v408, %v439
        %v451 = vmul.f32 %v408, %v443
        %v452 = vmul.f32 %v413, %v439
        %v453 = vmul.f32 %v413, %v443
        %v454 = vmul.f32 %v418, %v439
        %v455 = vmul.f32 %v418, %v443
        %v456 = vmul.f32 %v423, %v439
        %v457 = vmul.f32 %v423, %v443
        %v458 = vmul.f32 %v428, %v439
        %v459 = vmul.f32 %v428, %v443
        %v460 = vmul.f32 %v433, %v439
        %v461 = vmul.f32 %v433, %v443
        %s462 = scalar_lea.vmem %s194, 256 [#allocation7]
        %463 = vst [vmem:[%s462] sm:$0xff] %v446
        %464 = vst [vmem:[%s462 + $0x8] sm:$0xff] %v447
        %465 = vst [vmem:[%s462 + $0x10] sm:$0xff] %v448
        %466 = vst [vmem:[%s462 + $0x18] sm:$0xff] %v449
        %467 = vst [vmem:[%s462 + $0x20] sm:$0xff] %v450
        %468 = vst [vmem:[%s462 + $0x28] sm:$0xff] %v451
        %469 = vst [vmem:[%s462 + $0x30] sm:$0xff] %v452
        %470 = vst [vmem:[%s462 + $0x38] sm:$0xff] %v453
        %471 = vst [vmem:[%s462 + $0x40] sm:$0xff] %v454
        %472 = vst [vmem:[%s462 + $0x48] sm:$0xff] %v455
        %473 = vst [vmem:[%s462 + $0x50] sm:$0xff] %v456
        %474 = vst [vmem:[%s462 + $0x58] sm:$0xff] %v457
        %475 = vst [vmem:[%s462 + $0x60] sm:$0xff] %v458
        %476 = vst [vmem:[%s462 + $0x68] sm:$0xff] %v459
        %477 = vst [vmem:[%s462 + $0x70] sm:$0xff] %v460
        %478 = vst [vmem:[%s462 + $0x78] sm:$0xff] %v461
        %s479 = scalar_lea.vmem [#allocation5], 192
        %v480 = vld [vmem:[%s479] sm:$0xff]
        %v481 = vld [vmem:[%s479 + $0x8] sm:$0xff]
        %v482 = vld [vmem:[%s479 + $0x10] sm:$0xff]
        %v483 = vld [vmem:[%s479 + $0x18] sm:$0xff]
        %v484 = vld [vmem:[%s479 + $0x20] sm:$0xff]
        %v485 = vld [vmem:[%s479 + $0x28] sm:$0xff]
        %v486 = vld [vmem:[%s479 + $0x30] sm:$0xff]
        %v487 = vld [vmem:[%s479 + $0x38] sm:$0xff]
        %s488 = scalar_lea.vmem %s170, 6 [#allocation2]
        %v489 = vld [vmem:[%s488] sm:$0x3]
        %491 = vset.pattern.permute.xlu0 0
        %492 = vperm.xlu0 %491, %v480
        %v493 = vpop.permute.xlu0 %492
        %496 = vset.pattern.permute.xlu0 0
        %497 = vperm.xlu0 %496, %v481
        %v498 = vpop.permute.xlu0 %497
        %501 = vset.pattern.permute.xlu0 0
        %502 = vperm.xlu0 %501, %v482
        %v503 = vpop.permute.xlu0 %502
        %506 = vset.pattern.permute.xlu0 0
        %507 = vperm.xlu0 %506, %v483
        %v508 = vpop.permute.xlu0 %507
        %511 = vset.pattern.permute.xlu0 0
        %512 = vperm.xlu0 %511, %v484
        %v513 = vpop.permute.xlu0 %512
        %516 = vset.pattern.permute.xlu0 0
        %517 = vperm.xlu0 %516, %v485
        %v518 = vpop.permute.xlu0 %517
        %521 = vset.pattern.permute.xlu0 0
        %522 = vperm.xlu0 %521, %v486
        %v523 = vpop.permute.xlu0 %522
        %526 = vset.pattern.permute.xlu0 0
        %527 = vperm.xlu0 %526, %v487
        %v528 = vpop.permute.xlu0 %527
        %v531 = vlaneseq
        %v532 = vshrl.u32 %v531, 7
        %v533 = vsub.s32 0, %v532
        %v534 = vrot.slane %v489, %v533
        %v535 = vlaneseq
        %v536 = vshrl.u32 %v535, 7
        %v537 = vsub.s32 1, %v536
        %v538 = vrot.slane %v489, %v537
        %v541 = vmul.f32 %v493, %v534
        %v542 = vmul.f32 %v493, %v538
        %v543 = vmul.f32 %v498, %v534
        %v544 = vmul.f32 %v498, %v538
        %v545 = vmul.f32 %v503, %v534
        %v546 = vmul.f32 %v503, %v538
        %v547 = vmul.f32 %v508, %v534
        %v548 = vmul.f32 %v508, %v538
        %v549 = vmul.f32 %v513, %v534
        %v550 = vmul.f32 %v513, %v538
        %v551 = vmul.f32 %v518, %v534
        %v552 = vmul.f32 %v518, %v538
        %v553 = vmul.f32 %v523, %v534
        %v554 = vmul.f32 %v523, %v538
        %v555 = vmul.f32 %v528, %v534
        %v556 = vmul.f32 %v528, %v538
        %s557 = scalar_lea.vmem %s194, 384 [#allocation7]
        %558 = vst [vmem:[%s557] sm:$0xff] %v541
        %559 = vst [vmem:[%s557 + $0x8] sm:$0xff] %v542
        %560 = vst [vmem:[%s557 + $0x10] sm:$0xff] %v543
        %561 = vst [vmem:[%s557 + $0x18] sm:$0xff] %v544
        %562 = vst [vmem:[%s557 + $0x20] sm:$0xff] %v545
        %563 = vst [vmem:[%s557 + $0x28] sm:$0xff] %v546
        %564 = vst [vmem:[%s557 + $0x30] sm:$0xff] %v547
        %565 = vst [vmem:[%s557 + $0x38] sm:$0xff] %v548
        %566 = vst [vmem:[%s557 + $0x40] sm:$0xff] %v549
        %567 = vst [vmem:[%s557 + $0x48] sm:$0xff] %v550
        %568 = vst [vmem:[%s557 + $0x50] sm:$0xff] %v551
        %569 = vst [vmem:[%s557 + $0x58] sm:$0xff] %v552
        %570 = vst [vmem:[%s557 + $0x60] sm:$0xff] %v553
        %571 = vst [vmem:[%s557 + $0x68] sm:$0xff] %v554
        %572 = vst [vmem:[%s557 + $0x70] sm:$0xff] %v555
        %573 = vst [vmem:[%s557 + $0x78] sm:$0xff] %v556
        %s574 = scalar_lea.vmem [#allocation5], 256
        %v575 = vld [vmem:[%s574] sm:$0xff]
        %v576 = vld [vmem:[%s574 + $0x8] sm:$0xff]
        %v577 = vld [vmem:[%s574 + $0x10] sm:$0xff]
        %v578 = vld [vmem:[%s574 + $0x18] sm:$0xff]
        %v579 = vld [vmem:[%s574 + $0x20] sm:$0xff]
        %v580 = vld [vmem:[%s574 + $0x28] sm:$0xff]
        %v581 = vld [vmem:[%s574 + $0x30] sm:$0xff]
        %v582 = vld [vmem:[%s574 + $0x38] sm:$0xff]
        %s583 = scalar_lea.vmem %s170, 8 [#allocation2]
        %v584 = vld [vmem:[%s583] sm:$0x3]
        %586 = vset.pattern.permute.xlu0 0
        %587 = vperm.xlu0 %586, %v575
        %v588 = vpop.permute.xlu0 %587
        %591 = vset.pattern.permute.xlu0 0
        %592 = vperm.xlu0 %591, %v576
        %v593 = vpop.permute.xlu0 %592
        %596 = vset.pattern.permute.xlu0 0
        %597 = vperm.xlu0 %596, %v577
        %v598 = vpop.permute.xlu0 %597
        %601 = vset.pattern.permute.xlu0 0
        %602 = vperm.xlu0 %601, %v578
        %v603 = vpop.permute.xlu0 %602
        %606 = vset.pattern.permute.xlu0 0
        %607 = vperm.xlu0 %606, %v579
        %v608 = vpop.permute.xlu0 %607
        %611 = vset.pattern.permute.xlu0 0
        %612 = vperm.xlu0 %611, %v580
        %v613 = vpop.permute.xlu0 %612
        %616 = vset.pattern.permute.xlu0 0
        %617 = vperm.xlu0 %616, %v581
        %v618 = vpop.permute.xlu0 %617
        %621 = vset.pattern.permute.xlu0 0
        %622 = vperm.xlu0 %621, %v582
        %v623 = vpop.permute.xlu0 %622
        %v626 = vlaneseq
        %v627 = vshrl.u32 %v626, 7
        %v628 = vsub.s32 0, %v627
        %v629 = vrot.slane %v584, %v628
        %v630 = vlaneseq
        %v631 = vshrl.u32 %v630, 7
        %v632 = vsub.s32 1, %v631
        %v633 = vrot.slane %v584, %v632
        %v636 = vmul.f32 %v588, %v629
        %v637 = vmul.f32 %v588, %v633
        %v638 = vmul.f32 %v593, %v629
        %v639 = vmul.f32 %v593, %v633
        %v640 = vmul.f32 %v598, %v629
        %v641 = vmul.f32 %v598, %v633
        %v642 = vmul.f32 %v603, %v629
        %v643 = vmul.f32 %v603, %v633
        %v644 = vmul.f32 %v608, %v629
        %v645 = vmul.f32 %v608, %v633
        %v646 = vmul.f32 %v613, %v629
        %v647 = vmul.f32 %v613, %v633
        %v648 = vmul.f32 %v618, %v629
        %v649 = vmul.f32 %v618, %v633
        %v650 = vmul.f32 %v623, %v629
        %v651 = vmul.f32 %v623, %v633
        %s652 = scalar_lea.vmem %s194, 512 [#allocation7]
        %653 = vst [vmem:[%s652] sm:$0xff] %v636
        %654 = vst [vmem:[%s652 + $0x8] sm:$0xff] %v637
        %655 = vst [vmem:[%s652 + $0x10] sm:$0xff] %v638
        %656 = vst [vmem:[%s652 + $0x18] sm:$0xff] %v639
        %657 = vst [vmem:[%s652 + $0x20] sm:$0xff] %v640
        %658 = vst [vmem:[%s652 + $0x28] sm:$0xff] %v641
        %659 = vst [vmem:[%s652 + $0x30] sm:$0xff] %v642
        %660 = vst [vmem:[%s652 + $0x38] sm:$0xff] %v643
        %661 = vst [vmem:[%s652 + $0x40] sm:$0xff] %v644
        %662 = vst [vmem:[%s652 + $0x48] sm:$0xff] %v645
        %663 = vst [vmem:[%s652 + $0x50] sm:$0xff] %v646
        %664 = vst [vmem:[%s652 + $0x58] sm:$0xff] %v647
        %665 = vst [vmem:[%s652 + $0x60] sm:$0xff] %v648
        %666 = vst [vmem:[%s652 + $0x68] sm:$0xff] %v649
        %667 = vst [vmem:[%s652 + $0x70] sm:$0xff] %v650
        %668 = vst [vmem:[%s652 + $0x78] sm:$0xff] %v651
        %s669 = scalar_lea.vmem [#allocation5], 320
        %v670 = vld [vmem:[%s669] sm:$0xff]
        %v671 = vld [vmem:[%s669 + $0x8] sm:$0xff]
        %v672 = vld [vmem:[%s669 + $0x10] sm:$0xff]
        %v673 = vld [vmem:[%s669 + $0x18] sm:$0xff]
        %v674 = vld [vmem:[%s669 + $0x20] sm:$0xff]
        %v675 = vld [vmem:[%s669 + $0x28] sm:$0xff]
        %v676 = vld [vmem:[%s669 + $0x30] sm:$0xff]
        %v677 = vld [vmem:[%s669 + $0x38] sm:$0xff]
        %s678 = scalar_lea.vmem %s170, 10 [#allocation2]
        %v679 = vld [vmem:[%s678] sm:$0x3]
        %681 = vset.pattern.permute.xlu0 0
        %682 = vperm.xlu0 %681, %v670
        %v683 = vpop.permute.xlu0 %682
        %686 = vset.pattern.permute.xlu0 0
        %687 = vperm.xlu0 %686, %v671
        %v688 = vpop.permute.xlu0 %687
        %691 = vset.pattern.permute.xlu0 0
        %692 = vperm.xlu0 %691, %v672
        %v693 = vpop.permute.xlu0 %692
        %696 = vset.pattern.permute.xlu0 0
        %697 = vperm.xlu0 %696, %v673
        %v698 = vpop.permute.xlu0 %697
        %701 = vset.pattern.permute.xlu0 0
        %702 = vperm.xlu0 %701, %v674
        %v703 = vpop.permute.xlu0 %702
        %706 = vset.pattern.permute.xlu0 0
        %707 = vperm.xlu0 %706, %v675
        %v708 = vpop.permute.xlu0 %707
        %711 = vset.pattern.permute.xlu0 0
        %712 = vperm.xlu0 %711, %v676
        %v713 = vpop.permute.xlu0 %712
        %716 = vset.pattern.permute.xlu0 0
        %717 = vperm.xlu0 %716, %v677
        %v718 = vpop.permute.xlu0 %717
        %v721 = vlaneseq
        %v722 = vshrl.u32 %v721, 7
        %v723 = vsub.s32 0, %v722
        %v724 = vrot.slane %v679, %v723
        %v725 = vlaneseq
        %v726 = vshrl.u32 %v725, 7
        %v727 = vsub.s32 1, %v726
        %v728 = vrot.slane %v679, %v727
        %v731 = vmul.f32 %v683, %v724
        %v732 = vmul.f32 %v683, %v728
        %v733 = vmul.f32 %v688, %v724
        %v734 = vmul.f32 %v688, %v728
        %v735 = vmul.f32 %v693, %v724
        %v736 = vmul.f32 %v693, %v728
        %v737 = vmul.f32 %v698, %v724
        %v738 = vmul.f32 %v698, %v728
        %v739 = vmul.f32 %v703, %v724
        %v740 = vmul.f32 %v703, %v728
        %v741 = vmul.f32 %v708, %v724
        %v742 = vmul.f32 %v708, %v728
        %v743 = vmul.f32 %v713, %v724
        %v744 = vmul.f32 %v713, %v728
        %v745 = vmul.f32 %v718, %v724
        %v746 = vmul.f32 %v718, %v728
        %s747 = scalar_lea.vmem %s194, 640 [#allocation7]
        %748 = vst [vmem:[%s747] sm:$0xff] %v731
        %749 = vst [vmem:[%s747 + $0x8] sm:$0xff] %v732
        %750 = vst [vmem:[%s747 + $0x10] sm:$0xff] %v733
        %751 = vst [vmem:[%s747 + $0x18] sm:$0xff] %v734
        %752 = vst [vmem:[%s747 + $0x20] sm:$0xff] %v735
        %753 = vst [vmem:[%s747 + $0x28] sm:$0xff] %v736
        %754 = vst [vmem:[%s747 + $0x30] sm:$0xff] %v737
        %755 = vst [vmem:[%s747 + $0x38] sm:$0xff] %v738
        %756 = vst [vmem:[%s747 + $0x40] sm:$0xff] %v739
        %757 = vst [vmem:[%s747 + $0x48] sm:$0xff] %v740
        %758 = vst [vmem:[%s747 + $0x50] sm:$0xff] %v741
        %759 = vst [vmem:[%s747 + $0x58] sm:$0xff] %v742
        %760 = vst [vmem:[%s747 + $0x60] sm:$0xff] %v743
        %761 = vst [vmem:[%s747 + $0x68] sm:$0xff] %v744
        %762 = vst [vmem:[%s747 + $0x70] sm:$0xff] %v745
        %763 = vst [vmem:[%s747 + $0x78] sm:$0xff] %v746
        %s764 = scalar_lea.vmem [#allocation5], 384
        %v765 = vld [vmem:[%s764] sm:$0xff]
        %v766 = vld [vmem:[%s764 + $0x8] sm:$0xff]
        %v767 = vld [vmem:[%s764 + $0x10] sm:$0xff]
        %v768 = vld [vmem:[%s764 + $0x18] sm:$0xff]
        %v769 = vld [vmem:[%s764 + $0x20] sm:$0xff]
        %v770 = vld [vmem:[%s764 + $0x28] sm:$0xff]
        %v771 = vld [vmem:[%s764 + $0x30] sm:$0xff]
        %v772 = vld [vmem:[%s764 + $0x38] sm:$0xff]
        %s773 = scalar_lea.vmem %s170, 12 [#allocation2]
        %v774 = vld [vmem:[%s773] sm:$0x3]
        %776 = vset.pattern.permute.xlu0 0
        %777 = vperm.xlu0 %776, %v765
        %v778 = vpop.permute.xlu0 %777
        %781 = vset.pattern.permute.xlu0 0
        %782 = vperm.xlu0 %781, %v766
        %v783 = vpop.permute.xlu0 %782
        %786 = vset.pattern.permute.xlu0 0
        %787 = vperm.xlu0 %786, %v767
        %v788 = vpop.permute.xlu0 %787
        %791 = vset.pattern.permute.xlu0 0
        %792 = vperm.xlu0 %791, %v768
        %v793 = vpop.permute.xlu0 %792
        %796 = vset.pattern.permute.xlu0 0
        %797 = vperm.xlu0 %796, %v769
        %v798 = vpop.permute.xlu0 %797
        %801 = vset.pattern.permute.xlu0 0
        %802 = vperm.xlu0 %801, %v770
        %v803 = vpop.permute.xlu0 %802
        %806 = vset.pattern.permute.xlu0 0
        %807 = vperm.xlu0 %806, %v771
        %v808 = vpop.permute.xlu0 %807
        %811 = vset.pattern.permute.xlu0 0
        %812 = vperm.xlu0 %811, %v772
        %v813 = vpop.permute.xlu0 %812
        %v816 = vlaneseq
        %v817 = vshrl.u32 %v816, 7
        %v818 = vsub.s32 0, %v817
        %v819 = vrot.slane %v774, %v818
        %v820 = vlaneseq
        %v821 = vshrl.u32 %v820, 7
        %v822 = vsub.s32 1, %v821
        %v823 = vrot.slane %v774, %v822
        %v826 = vmul.f32 %v778, %v819
        %v827 = vmul.f32 %v778, %v823
        %v828 = vmul.f32 %v783, %v819
        %v829 = vmul.f32 %v783, %v823
        %v830 = vmul.f32 %v788, %v819
        %v831 = vmul.f32 %v788, %v823
        %v832 = vmul.f32 %v793, %v819
        %v833 = vmul.f32 %v793, %v823
        %v834 = vmul.f32 %v798, %v819
        %v835 = vmul.f32 %v798, %v823
        %v836 = vmul.f32 %v803, %v819
        %v837 = vmul.f32 %v803, %v823
        %v838 = vmul.f32 %v808, %v819
        %v839 = vmul.f32 %v808, %v823
        %v840 = vmul.f32 %v813, %v819
        %v841 = vmul.f32 %v813, %v823
        %s842 = scalar_lea.vmem %s194, 768 [#allocation7]
        %843 = vst [vmem:[%s842] sm:$0xff] %v826
        %844 = vst [vmem:[%s842 + $0x8] sm:$0xff] %v827
        %845 = vst [vmem:[%s842 + $0x10] sm:$0xff] %v828
        %846 = vst [vmem:[%s842 + $0x18] sm:$0xff] %v829
        %847 = vst [vmem:[%s842 + $0x20] sm:$0xff] %v830
        %848 = vst [vmem:[%s842 + $0x28] sm:$0xff] %v831
        %849 = vst [vmem:[%s842 + $0x30] sm:$0xff] %v832
        %850 = vst [vmem:[%s842 + $0x38] sm:$0xff] %v833
        %851 = vst [vmem:[%s842 + $0x40] sm:$0xff] %v834
        %852 = vst [vmem:[%s842 + $0x48] sm:$0xff] %v835
        %853 = vst [vmem:[%s842 + $0x50] sm:$0xff] %v836
        %854 = vst [vmem:[%s842 + $0x58] sm:$0xff] %v837
        %855 = vst [vmem:[%s842 + $0x60] sm:$0xff] %v838
        %856 = vst [vmem:[%s842 + $0x68] sm:$0xff] %v839
        %857 = vst [vmem:[%s842 + $0x70] sm:$0xff] %v840
        %858 = vst [vmem:[%s842 + $0x78] sm:$0xff] %v841
        %s859 = scalar_lea.vmem [#allocation5], 448
        %v860 = vld [vmem:[%s859] sm:$0xff]
        %v861 = vld [vmem:[%s859 + $0x8] sm:$0xff]
        %v862 = vld [vmem:[%s859 + $0x10] sm:$0xff]
        %v863 = vld [vmem:[%s859 + $0x18] sm:$0xff]
        %v864 = vld [vmem:[%s859 + $0x20] sm:$0xff]
        %v865 = vld [vmem:[%s859 + $0x28] sm:$0xff]
        %v866 = vld [vmem:[%s859 + $0x30] sm:$0xff]
        %v867 = vld [vmem:[%s859 + $0x38] sm:$0xff]
        %s868 = scalar_lea.vmem %s170, 14 [#allocation2]
        %v869 = vld [vmem:[%s868] sm:$0x3]
        %871 = vset.pattern.permute.xlu0 0
        %872 = vperm.xlu0 %871, %v860
        %v873 = vpop.permute.xlu0 %872
        %876 = vset.pattern.permute.xlu0 0
        %877 = vperm.xlu0 %876, %v861
        %v878 = vpop.permute.xlu0 %877
        %881 = vset.pattern.permute.xlu0 0
        %882 = vperm.xlu0 %881, %v862
        %v883 = vpop.permute.xlu0 %882
        %886 = vset.pattern.permute.xlu0 0
        %887 = vperm.xlu0 %886, %v863
        %v888 = vpop.permute.xlu0 %887
        %891 = vset.pattern.permute.xlu0 0
        %892 = vperm.xlu0 %891, %v864
        %v893 = vpop.permute.xlu0 %892
        %896 = vset.pattern.permute.xlu0 0
        %897 = vperm.xlu0 %896, %v865
        %v898 = vpop.permute.xlu0 %897
        %901 = vset.pattern.permute.xlu0 0
        %902 = vperm.xlu0 %901, %v866
        %v903 = vpop.permute.xlu0 %902
        %906 = vset.pattern.permute.xlu0 0
        %907 = vperm.xlu0 %906, %v867
        %v908 = vpop.permute.xlu0 %907
        %v911 = vlaneseq
        %v912 = vshrl.u32 %v911, 7
        %v913 = vsub.s32 0, %v912
        %v914 = vrot.slane %v869, %v913
        %v915 = vlaneseq
        %v916 = vshrl.u32 %v915, 7
        %v917 = vsub.s32 1, %v916
        %v918 = vrot.slane %v869, %v917
        %v921 = vmul.f32 %v873, %v914
        %v922 = vmul.f32 %v873, %v918
        %v923 = vmul.f32 %v878, %v914
        %v924 = vmul.f32 %v878, %v918
        %v925 = vmul.f32 %v883, %v914
        %v926 = vmul.f32 %v883, %v918
        %v927 = vmul.f32 %v888, %v914
        %v928 = vmul.f32 %v888, %v918
        %v929 = vmul.f32 %v893, %v914
        %v930 = vmul.f32 %v893, %v918
        %v931 = vmul.f32 %v898, %v914
        %v932 = vmul.f32 %v898, %v918
        %v933 = vmul.f32 %v903, %v914
        %v934 = vmul.f32 %v903, %v918
        %v935 = vmul.f32 %v908, %v914
        %v936 = vmul.f32 %v908, %v918
        %s937 = scalar_lea.vmem %s194, 896 [#allocation7]
        %938 = vst [vmem:[%s937] sm:$0xff] %v921
        %939 = vst [vmem:[%s937 + $0x8] sm:$0xff] %v922
        %940 = vst [vmem:[%s937 + $0x10] sm:$0xff] %v923
        %941 = vst [vmem:[%s937 + $0x18] sm:$0xff] %v924
        %942 = vst [vmem:[%s937 + $0x20] sm:$0xff] %v925
        %943 = vst [vmem:[%s937 + $0x28] sm:$0xff] %v926
        %944 = vst [vmem:[%s937 + $0x30] sm:$0xff] %v927
        %945 = vst [vmem:[%s937 + $0x38] sm:$0xff] %v928
        %946 = vst [vmem:[%s937 + $0x40] sm:$0xff] %v929
        %947 = vst [vmem:[%s937 + $0x48] sm:$0xff] %v930
        %948 = vst [vmem:[%s937 + $0x50] sm:$0xff] %v931
        %949 = vst [vmem:[%s937 + $0x58] sm:$0xff] %v932
        %950 = vst [vmem:[%s937 + $0x60] sm:$0xff] %v933
        %951 = vst [vmem:[%s937 + $0x68] sm:$0xff] %v934
        %952 = vst [vmem:[%s937 + $0x70] sm:$0xff] %v935
        %953 = vst [vmem:[%s937 + $0x78] sm:$0xff] %v936
        %s954 = sand.u32 %s91, 1
        %s955 = scalar_lea.sflag [#allocation4], %s954
        %s956 = sand.u32 %s91, 1
        %s957 = smul.addr %s956, 1024
        %s958 = scalar_lea.vmem [#allocation7], %s957
        // Predicated region
        $region37: #{dablock_forward.5} parent=27 // pred_check
          %p959 = pneg %p101
        $region38: #{dablock_forward.5} parent=27 // pred_check_branch
          %961 = sbr.rel (%p959) target = $region40
        $region39: #{dablock_forward.5} parent=27 // pred_region
          %s962 = smul.u32 2, %s24
          %s964 = ssub.s32 16384, 16384
          %965 = vsyncadd %s955, %s964
          %s966 = smul.addr %s25, 128
          %s967 = sadd.s32 %s962, %s966
          %s968 = smul.addr %s967, 128
          %s969 = scalar_lea.hbm %s2, %s968
          %s970 = sshll.u32 %s958, 4
          %s971 = int_to_ptr.vmem [resolvable:$true] %s970
          %976 = dma.vmem_to_hbm [thread:$0]  %s971, 16384, %s969, %s955, 256, 256, 16
        $region40: #{dablock_forward.5} parent=27 // pred_fallthru
          _
      $region28: #{dablock_forward.5} parent=5 // pred_fallthru
        _
      %p977 = scmp.le.s32.totalorder 2, %s15
      // Predicated region
      $region41: #{dablock_forward.5} parent=5 // pred_check
        %p978 = pneg %p977
      $region42: #{dablock_forward.5} parent=5 // pred_check_branch
        %980 = sbr.rel (%p978) target = $region44
      $region43: #{dablock_forward.5} parent=5 // pred_region
        %s981 = ssub.s32 %s15, 2
        // Predicated region
        $region45: #{dablock_forward.5} parent=43 // pred_check
          %p982 = pneg %p107
        $region46: #{dablock_forward.5} parent=43 // pred_check_branch
          %984 = sbr.rel (%p982) target = $region48
        $region47: #{dablock_forward.5} parent=43 // pred_region
          %s985 = sand.u32 %s92, 1
          %s986 = scalar_lea.sflag [#allocation4], %s985
          %s987 = sand.u32 %s92, 1
          %s988 = smul.addr %s987, 1024
          %s989 = scalar_lea.vmem [#allocation7], %s988
          %990 = dma.done %s986, 16384
        $region48: #{dablock_forward.5} parent=43 // pred_fallthru
          _
      $region44: #{dablock_forward.5} parent=5 // pred_fallthru
        _
    $region6: #{dablock_forward.5} parent=1 // loop_footer
      %s19 = sadd.s32 1, %s15
    $region7: #{dablock_forward.5} parent=1 // loop_footer_branch
      %14 = sbr.rel target = $region3
    $region8: #{dablock_forward.5} parent=1 // loop_exit
      _
    %991 = vsyncpa [#allocation3], 1
    %s992 = scalar_lea.sflag [#allocation3], 1
    %993 = vsyncpa %s992, 1
    %994 = vsyncpa [#allocation6], 1
    %995 = vsyncpa [#allocation4], 1
    %s996 = scalar_lea.sflag [#allocation4], 1
    %997 = vsyncpa %s996, 1

// kernel: dablock_forward.6
$region0: #{dablock_forward.6}
  #allocation0 [shape = 'u32[]', space=smem, size = 0x4, offset = 0x4, fixed_abs, tag = 'smem constant byte address 0x4 - core index']
  #allocation1 [shape = 'u32[144,128]{1,0:T(1,128)}', space=vmem, size = 0x12000, scoped, tag = 'internal scratch']
  %s0 = inlined_call_operand.hbm [shape: f32[16,1,64,16], index: 0, kind: input, shape index: {}]
  %s1 = inlined_call_operand.hbm [shape: f32[1,2,64], index: 1, kind: input, shape index: {}]
  %s2 = inlined_call_operand.hbm [shape: f32[16,1,2,16], index: 2, kind: output, shape index: {}]
  %s3 = sld [smem:[#allocation0]]
  $region49: #{dablock_forward.6} parent=0
    _
  %s5 = ssub.s32 1, %s3
  %s6 = scalar_select 0, %s5, %s3
  $region1: #{dablock_forward.6} parent=0
    #allocation2 [shape = 'u8[65536]{0}', space=vmem, size = 0x10000, scoped, tag = 'input window, operand 0']
    #allocation3 [shape = 's32[2]{0}', space=sflag, size = 0x8, scoped, tag = 'scoped memory for dablock_forward.6']
    #allocation4 [shape = 's32[2]{0}', space=sflag, size = 0x8, scoped, tag = 'scoped memory for dablock_forward.6']
    #allocation5 [shape = 'u8[1024]{0}', space=vmem, size = 0x400, scoped, tag = 'input window, operand 1, single buffered']
    #allocation6 [shape = 's32[1]{0}', space=sflag, size = 0x4, scoped, tag = 'scoped memory for dablock_forward.6']
    #allocation7 [shape = 'u8[2048]{0}', space=vmem, size = 0x800, scoped, tag = 'output window, operand 0']
    %7 = vsyncpa [#allocation3], 0
    %s8 = scalar_lea.sflag [#allocation3], 1
    %9 = vsyncpa %s8, 0
    %10 = vsyncpa [#allocation6], 0
    %11 = vsyncpa [#allocation4], 0
    %s12 = scalar_lea.sflag [#allocation4], 1
    %13 = vsyncpa %s12, 0
    loop: start=0, step=1, limit=18
    $region2: #{dablock_forward.6} parent=1 // loop_pre_header
      _
    $region3: #{dablock_forward.6} parent=1 // loop_header
      %s15 = sphi 0, %s19
      %p16 = scmp.ge.s32.totalorder %s15, 18
      %s22 = sphi 0, %s34
      %s23 = sphi 0, %s30
      %s24 = sphi 0, %s22
      %s25 = sphi 0, %s23
      %s26 = sphi 0, %s24
      %s27 = sphi 0, %s25
      %s39 = sphi 0, %s41
      %s42 = sphi 0, %s39
      %s43 = sphi 0, %s42
      %s59 = sphi 0, %s43
      %s63 = sphi 0, %s63
      %s65 = sphi 0, %s63
      %s66 = sphi 0, %s65
      %s80 = sphi 0, %s66
      %s88 = sphi 0, %s90
      %s91 = sphi 0, %s88
      %s92 = sphi 0, %s91
      %s108 = sphi 0, %s92
    $region4: #{dablock_forward.6} parent=1 // loop_header_branch
      %18 = sbr.rel (%p16) target = $region8
    $region5: #{dablock_forward.6} parent=1 // loop_body
      %s20 = ssub.s32 %s15, 1
      %s21 = ssub.s32 %s15, 2
      %s28 = sadd.s32 1, %s23
      %p29 = scmp.ge.s32.totalorder %s28, 16
      %s30 = scalar_select %p29, 0, %s28
      %s31 = sadd.s32 1, %s22
      %s32 = scalar_select %p29, %s31, %s22
      %p33 = scmp.ge.s32.totalorder %s32, 1
      %s34 = scalar_select %p33, 0, %s32
      %s35 = ssub.s32 %s23, %s30
      %s36 = ssub.s32 %s22, %s34
      %s37 = sor.u32 %s35, %s36
      %p38 = scmp.eq.s32.totalorder %s37, 0
      %s40 = sadd.s32 %s39, 1
      %s41 = scalar_select %p38, %s39, %s40
      %p44 = pneg %p38
      %p45 = scmp.eq.s32.totalorder %s15, 15
      %p46 = por %p44, %p45
      %p47 = scmp.ne.s32.totalorder %s39, %s42
      %p48 = scmp.eq.s32.totalorder %s15, 0
      %p49 = por %p47, %p48
      %p50 = scmp.ne.s32.totalorder %s39, %s42
      %p51 = scmp.eq.s32.totalorder %s20, 15
      %p52 = por %p50, %p51
      %p53 = scmp.ne.s32.totalorder %s42, %s43
      %p54 = scmp.eq.s32.totalorder %s20, 0
      %p55 = por %p53, %p54
      %p56 = scmp.ne.s32.totalorder %s42, %s43
      %p57 = scmp.eq.s32.totalorder %s21, 15
      %p58 = por %p56, %p57
      %p60 = scmp.ne.s32.totalorder %s43, %s59
      %p61 = scmp.eq.s32.totalorder %s21, 0
      %p62 = por %p60, %p61
      %s64 = sadd.s32 %s63, 1
      %p67 = scmp.eq.s32.totalorder %s15, 15
      %p68 = scmp.ne.s32.totalorder %s63, %s65
      %p69 = scmp.eq.s32.totalorder %s15, 0
      %p70 = por %p68, %p69
      %p71 = scmp.ne.s32.totalorder %s63, %s65
      %p72 = scmp.eq.s32.totalorder %s20, 15
      %p73 = por %p71, %p72
      %p74 = scmp.ne.s32.totalorder %s65, %s66
      %p75 = scmp.eq.s32.totalorder %s20, 0
      %p76 = por %p74, %p75
      %p77 = scmp.ne.s32.totalorder %s65, %s66
      %p78 = scmp.eq.s32.totalorder %s21, 15
      %p79 = por %p77, %p78
      %p81 = scmp.ne.s32.totalorder %s66, %s80
      %p82 = scmp.eq.s32.totalorder %s21, 0
      %p83 = por %p81, %p82
      %s84 = ssub.s32 %s23, %s30
      %s85 = ssub.s32 %s22, %s34
      %s86 = sor.u32 %s84, %s85
      %p87 = scmp.eq.s32.totalorder %s86, 0
      %s89 = sadd.s32 %s88, 1
      %s90 = scalar_select %p87, %s88, %s89
      %p93 = pneg %p87
      %p94 = scmp.eq.s32.totalorder %s15, 15
      %p95 = por %p93, %p94
      %p96 = scmp.ne.s32.totalorder %s88, %s91
      %p97 = scmp.eq.s32.totalorder %s15, 0
      %p98 = por %p96, %p97
      %p99 = scmp.ne.s32.totalorder %s88, %s91
      %p100 = scmp.eq.s32.totalorder %s20, 15
      %p101 = por %p99, %p100
      %p102 = scmp.ne.s32.totalorder %s91, %s92
      %p103 = scmp.eq.s32.totalorder %s20, 0
      %p104 = por %p102, %p103
      %p105 = scmp.ne.s32.totalorder %s91, %s92
      %p106 = scmp.eq.s32.totalorder %s21, 15
      %p107 = por %p105, %p106
      %p109 = scmp.ne.s32.totalorder %s92, %s108
      %p110 = scmp.eq.s32.totalorder %s21, 0
      %p111 = por %p109, %p110
      %p112 = scmp.le.s32.totalorder 1, %s15
      %p113 = scmp.lt.s32.totalorder %s15, 17
      %p114 = pnand %p112, %p113
      %p115 = pneg %p114
      // Predicated region
      $region9: #{dablock_forward.6} parent=5 // pred_check
        _
      $region10: #{dablock_forward.6} parent=5 // pred_check_branch
        %117 = sbr.rel (%p114) target = $region12
      $region11: #{dablock_forward.6} parent=5 // pred_region
        %s118 = ssub.s32 %s15, 1
        // Predicated region
        $region13: #{dablock_forward.6} parent=11 // pred_check
          %p119 = pneg %p76
        $region14: #{dablock_forward.6} parent=11 // pred_check_branch
          %121 = sbr.rel (%p119) target = $region16
        $region15: #{dablock_forward.6} parent=11 // pred_region
          %s123 = ssub.s32 32, 32
          %124 = vsyncadd [#allocation6], %s123
          %s126 = sshll.u32 [#allocation5], 4
          %s127 = int_to_ptr.vmem [resolvable:$true] %s126
          %129 = dma.hbm_to_vmem [thread:$0]  %s1, 32, %s127, [#allocation6]
        $region16: #{dablock_forward.6} parent=11 // pred_fallthru
          _
      $region12: #{dablock_forward.6} parent=5 // pred_fallthru
        _
      %p130 = scmp.lt.s32.totalorder %s15, 16
      // Predicated region
      $region17: #{dablock_forward.6} parent=5 // pred_check
        %p131 = pneg %p130
      $region18: #{dablock_forward.6} parent=5 // pred_check_branch
        %133 = sbr.rel (%p131) target = $region20
      $region19: #{dablock_forward.6} parent=5 // pred_region
        // Predicated region
        $region21: #{dablock_forward.6} parent=19 // pred_check
          %p134 = pneg %p49
        $region22: #{dablock_forward.6} parent=19 // pred_check_branch
          %136 = sbr.rel (%p134) target = $region24
        $region23: #{dablock_forward.6} parent=19 // pred_region
          %s137 = sand.u32 %s39, 1
          %s138 = scalar_lea.sflag [#allocation3], %s137
          %s139 = sand.u32 %s39, 1
          %s140 = smul.addr %s139, 64
          %s141 = scalar_lea.vmem [#allocation2], %s140
          %s143 = ssub.s32 1024, 1024
          %144 = vsyncadd %s138, %s143
          %s145 = smul.addr %s23, 8
          %s146 = sadd.s32 %s22, %s145
          %s147 = smul.addr %s146, 128
          %s148 = scalar_lea.hbm %s0, %s147
          %s149 = sshll.u32 %s141, 4
          %s150 = int_to_ptr.vmem [resolvable:$true] %s149
          %155 = dma.hbm_to_vmem [thread:$0]  %s148, 1024, %s150, %s138, 128, 128, 8
        $region24: #{dablock_forward.6} parent=19 // pred_fallthru
          _
      $region20: #{dablock_forward.6} parent=5 // pred_fallthru
        _
      %p156 = scmp.le.s32.totalorder 1, %s15
      %p157 = scmp.lt.s32.totalorder %s15, 17
      %p158 = pnand %p156, %p157
      %p159 = pneg %p158
      // Predicated region
      $region25: #{dablock_forward.6} parent=5 // pred_check
        _
      $region26: #{dablock_forward.6} parent=5 // pred_check_branch
        %161 = sbr.rel (%p158) target = $region28
      $region27: #{dablock_forward.6} parent=5 // pred_region
        %s162 = ssub.s32 %s15, 1
        %s163 = sand.u32 %s42, 1
        %s164 = scalar_lea.sflag [#allocation3], %s163
        %s165 = sand.u32 %s42, 1
        %s166 = smul.addr %s165, 64
        %s167 = scalar_lea.vmem [#allocation2], %s166
        // Predicated region
        $region29: #{dablock_forward.6} parent=27 // pred_check
          %p168 = pneg %p55
        $region30: #{dablock_forward.6} parent=27 // pred_check_branch
          %170 = sbr.rel (%p168) target = $region32
        $region31: #{dablock_forward.6} parent=27 // pred_region
          %171 = dma.done %s164, 1024
        $region32: #{dablock_forward.6} parent=27 // pred_fallthru
          _
        // Predicated region
        $region33: #{dablock_forward.6} parent=27 // pred_check
          %p172 = pneg %p76
        $region34: #{dablock_forward.6} parent=27 // pred_check_branch
          %174 = sbr.rel (%p172) target = $region36
        $region35: #{dablock_forward.6} parent=27 // pred_region
          %175 = dma.done [#allocation6], 32
        $region36: #{dablock_forward.6} parent=27 // pred_fallthru
          _
        %s176 = sand.u32 %s42, 1
        %s177 = scalar_lea.sflag [#allocation3], %s176
        %s178 = sand.u32 %s42, 1
        %s179 = smul.addr %s178, 64
        %s180 = scalar_lea.vmem [#allocation2], %s179
        %p181 = pneg %p55
        %p182 = pneg %p52
        %p183 = pneg %p76
        %p184 = pneg %p73
        %p185 = pneg %p104
        %p186 = pneg %p101
        %s187 = sand.u32 %s91, 1
        %s188 = scalar_lea.sflag [#allocation4], %s187
        %s189 = sand.u32 %s91, 1
        %s190 = smul.addr %s189, 2
        %s191 = scalar_lea.vmem [#allocation7], %s190
        %v192 = vld [vmem:[#allocation5] sm:$0x3]
        %v193 = vld [vmem:[%s167] sm:$0xff]
        %v194 = vld [vmem:[%s167 + $0x8] sm:$0xff]
        %v195 = vld [vmem:[%s167 + $0x10] sm:$0xff]
        %v196 = vld [vmem:[%s167 + $0x18] sm:$0xff]
        %v197 = vld [vmem:[%s167 + $0x20] sm:$0xff]
        %v198 = vld [vmem:[%s167 + $0x28] sm:$0xff]
        %v199 = vld [vmem:[%s167 + $0x30] sm:$0xff]
        %v200 = vld [vmem:[%s167 + $0x38] sm:$0xff]
        %vm201 = vcmask 523264
        %v203 = vsel %vm201, %v192, 0
        %205 = vmatprep.subr.mxu0 0.0
        %206 = vmatpush1.msra.mxu0 %v193
        %207 = vmatprep.subr.mxu0 0.0
        %208 = vmatpush1.msra.mxu0 %v194
        %209 = vmatprep.subr.mxu0 0.0
        %210 = vmatpush1.msra.mxu0 %v195
        %211 = vmatprep.subr.mxu0 0.0
        %212 = vmatpush1.msra.mxu0 %v196
        %213 = vmatprep.subr.mxu0 0.0
        %214 = vmatpush1.msra.mxu0 %v197
        %215 = vmatprep.subr.mxu0 0.0
        %216 = vmatpush1.msra.mxu0 %v198
        %217 = vmatprep.subr.mxu0 0.0
        %218 = vmatpush1.msra.mxu0 %v199
        %219 = vmatprep.subr.mxu0 0.0
        %220 = vmatpush1.msra.mxu0 %v200
        %221 = vmatprep.subr.mxu0 0.0
        %222 = vmatpush1.msra.mxu0 0.0
        %223 = vmatprep.subr.mxu0 0.0
        %224 = vmatpush1.msra.mxu0 0.0
        %225 = vmatprep.subr.mxu0 0.0
        %226 = vmatpush1.msra.mxu0 0.0
        %227 = vmatprep.subr.mxu0 0.0
        %228 = vmatpush1.msra.mxu0 0.0
        %229 = vmatprep.subr.mxu0 0.0
        %230 = vmatpush1.msra.mxu0 0.0
        %231 = vmatprep.subr.mxu0 0.0
        %232 = vmatpush1.msra.mxu0 0.0
        %233 = vmatprep.subr.mxu0 0.0
        %234 = vmatpush1.msra.mxu0 0.0
        %235 = vmatprep.subr.mxu0 0.0
        %236 = vmatpush1.msra.mxu0 0.0
        %237 = vmatprep.subr.mxu0 0.0
        %238 = vmatpush1.msra.mxu0 0.0
        %239 = vmatprep.subr.mxu0 0.0
        %240 = vmatpush1.msra.mxu0 0.0
        %241 = vmatprep.subr.mxu0 0.0
        %242 = vmatpush1.msra.mxu0 0.0
        %243 = vmatprep.subr.mxu0 0.0
        %244 = vmatpush1.msra.mxu0 0.0
        %245 = vmatprep.subr.mxu0 0.0
        %246 = vmatpush1.msra.mxu0 0.0
        %247 = vmatprep.subr.mxu0 0.0
        %248 = vmatpush1.msra.mxu0 0.0
        %249 = vmatprep.subr.mxu0 0.0
        %250 = vmatpush1.msra.mxu0 0.0
        %251 = vmatprep.subr.mxu0 0.0
        %252 = vmatpush1.msra.mxu0 0.0
        %253 = vmatprep.subr.mxu0 0.0
        %254 = vmatpush1.msra.mxu0 0.0
        %255 = vmatprep.subr.mxu0 0.0
        %256 = vmatpush1.msra.mxu0 0.0
        %257 = vmatprep.subr.mxu0 0.0
        %258 = vmatpush1.msra.mxu0 0.0
        %259 = vmatprep.subr.mxu0 0.0
        %260 = vmatpush1.msra.mxu0 0.0
        %261 = vmatprep.subr.mxu0 0.0
        %262 = vmatpush1.msra.mxu0 0.0
        %263 = vmatprep.subr.mxu0 0.0
        %264 = vmatpush1.msra.mxu0 0.0
        %265 = vmatprep.subr.mxu0 0.0
        %266 = vmatpush1.msra.mxu0 0.0
        %267 = vmatprep.subr.mxu0 0.0
        %268 = vmatpush1.msra.mxu0 0.0
        %269 = vmatprep.mubr.f32.mxu0 0.0
        %270 = vmatmul.mubr.f32.gmra.mrb[0].mxu0 %v203
        %v271 = vpop.f32.mrb[0].mxu0
        %v272 = vadd.f32 0.0, %v271
        %v273 = vpop.f32.mrb[0].mxu0
        %274 = vdwg.mxu0
        %vm275 = vcmask 123904
        %276 = vst.msk [vmem:[%s191] sm:$0x3] %vm275, %v272
        %s277 = sand.u32 %s91, 1
        %s278 = scalar_lea.sflag [#allocation4], %s277
        %s279 = sand.u32 %s91, 1
        %s280 = smul.addr %s279, 2
        %s281 = scalar_lea.vmem [#allocation7], %s280
        // Predicated region
        $region37: #{dablock_forward.6} parent=27 // pred_check
          %p282 = pneg %p101
        $region38: #{dablock_forward.6} parent=27 // pred_check_branch
          %284 = sbr.rel (%p282) target = $region40
        $region39: #{dablock_forward.6} parent=27 // pred_region
          %s286 = ssub.s32 32, 32
          %287 = vsyncadd %s278, %s286
          %s288 = sadd.s32 %s24, %s25
          %s289 = smul.addr %s288, 32
          %s290 = scalar_lea.hbm %s2, %s289
          %s292 = sshll.u32 %s281, 4
          %s293 = int_to_ptr.vmem [resolvable:$true] %s292
          %295 = dma.vmem_to_hbm [thread:$0]  %s293, 32, %s290, %s278
        $region40: #{dablock_forward.6} parent=27 // pred_fallthru
          _
      $region28: #{dablock_forward.6} parent=5 // pred_fallthru
        _
      %p296 = scmp.le.s32.totalorder 2, %s15
      // Predicated region
      $region41: #{dablock_forward.6} parent=5 // pred_check
        %p297 = pneg %p296
      $region42: #{dablock_forward.6} parent=5 // pred_check_branch
        %299 = sbr.rel (%p297) target = $region44
      $region43: #{dablock_forward.6} parent=5 // pred_region
        %s300 = ssub.s32 %s15, 2
        // Predicated region
        $region45: #{dablock_forward.6} parent=43 // pred_check
          %p301 = pneg %p107
        $region46: #{dablock_forward.6} parent=43 // pred_check_branch
          %303 = sbr.rel (%p301) target = $region48
        $region47: #{dablock_forward.6} parent=43 // pred_region
          %s304 = sand.u32 %s92, 1
          %s305 = scalar_lea.sflag [#allocation4], %s304
          %s306 = sand.u32 %s92, 1
          %s307 = smul.addr %s306, 2
          %s308 = scalar_lea.vmem [#allocation7], %s307
          %309 = dma.done %s305, 32
        $region48: #{dablock_forward.6} parent=43 // pred_fallthru
          _
      $region44: #{dablock_forward.6} parent=5 // pred_fallthru
        _
    $region6: #{dablock_forward.6} parent=1 // loop_footer
      %s19 = sadd.s32 1, %s15
    $region7: #{dablock_forward.6} parent=1 // loop_footer_branch
      %14 = sbr.rel target = $region3
    $region8: #{dablock_forward.6} parent=1 // loop_exit
      _
    %310 = vsyncpa [#allocation3], 1
    %s311 = scalar_lea.sflag [#allocation3], 1
    %312 = vsyncpa %s311, 1
    %313 = vsyncpa [#allocation6], 1
    %314 = vsyncpa [#allocation4], 1
    %s315 = scalar_lea.sflag [#allocation4], 1
    %316 = vsyncpa %s315, 1

// kernel: mul.48
$region0: #{mul.48}
  #allocation0 [shape = 's32[1]{0}', space=sflag, size = 0x4, scoped, tag = 'scoped memory for mul.48']
  %s0 = inlined_call_operand.<no memory space> [shape: f32[], index: 0, kind: input, shape index: {}]
  %s1 = inlined_call_operand.vmem [shape: f32[8,64,1], index: 1, kind: output, shape index: {}]
  %v2 = vstv %s0
  %3 = vst [vmem:[%s1] sm:$0xff] %v2

// kernel: mul.49
$region0: #{mul.49}
  #allocation0 [shape = 's32[1]{0}', space=sflag, size = 0x4, scoped, tag = 'scoped memory for mul.49']
  %s0 = inlined_call_operand.vmem [shape: f32[8,64,1], index: 0, kind: input, shape index: {}]
  %s1 = inlined_call_operand.vmem [shape: f32[8,64,1], index: 1, kind: input, shape index: {}]
  %s2 = inlined_call_operand.vmem [shape: f32[8,64,1], index: 2, kind: output, shape index: {}]
  %v3 = vld [vmem:[%s0] sm:$0x1]
  %v4 = vld [vmem:[%s1] sm:$0x1]
  %5 = xla_tuple %v3, %v4
  %6 = xla_tuple %5
  %v7 = vmul.f32 %v3, %v4
  %8 = xla_tuple %v7
  %9 = vst [vmem:[%s2] sm:$0x1] %v7
  %s10 = scalar_lea.vmem %s0, 1
  %v11 = vld [vmem:[%s10] sm:$0x1]
  %s12 = scalar_lea.vmem %s1, 1
  %v13 = vld [vmem:[%s12] sm:$0x1]
  %14 = xla_tuple %v11, %v13
  %15 = xla_tuple %14
  %v16 = vmul.f32 %v11, %v13
  %17 = xla_tuple %v16
  %s18 = scalar_lea.vmem %s2, 1
  %19 = vst [vmem:[%s18] sm:$0x1] %v16
  %s20 = scalar_lea.vmem %s0, 2
  %v21 = vld [vmem:[%s20] sm:$0x1]
  %s22 = scalar_lea.vmem %s1, 2
  %v23 = vld [vmem:[%s22] sm:$0x1]
  %24 = xla_tuple %v21, %v23
  %25 = xla_tuple %24
  %v26 = vmul.f32 %v21, %v23
  %27 = xla_tuple %v26
  %s28 = scalar_lea.vmem %s2, 2
  %29 = vst [vmem:[%s28] sm:$0x1] %v26
  %s30 = scalar_lea.vmem %s0, 3
  %v31 = vld [vmem:[%s30] sm:$0x1]
  %s32 = scalar_lea.vmem %s1, 3
  %v33 = vld [vmem:[%s32] sm:$0x1]
  %34 = xla_tuple %v31, %v33
  %35 = xla_tuple %34
  %v36 = vmul.f32 %v31, %v33
  %37 = xla_tuple %v36
  %s38 = scalar_lea.vmem %s2, 3
  %39 = vst [vmem:[%s38] sm:$0x1] %v36
  %s40 = scalar_lea.vmem %s0, 4
  %v41 = vld [vmem:[%s40] sm:$0x1]
  %s42 = scalar_lea.vmem %s1, 4
  %v43 = vld [vmem:[%s42] sm:$0x1]
  %44 = xla_tuple %v41, %v43
  %45 = xla_tuple %44
  %v46 = vmul.f32 %v41, %v43
  %47 = xla_tuple %v46
  %s48 = scalar_lea.vmem %s2, 4
  %49 = vst [vmem:[%s48] sm:$0x1] %v46
  %s50 = scalar_lea.vmem %s0, 5
  %v51 = vld [vmem:[%s50] sm:$0x1]
  %s52 = scalar_lea.vmem %s1, 5
  %v53 = vld [vmem:[%s52] sm:$0x1]
  %54 = xla_tuple %v51, %v53
  %55 = xla_tuple %54
  %v56 = vmul.f32 %v51, %v53
  %57 = xla_tuple %v56
  %s58 = scalar_lea.vmem %s2, 5
  %59 = vst [vmem:[%s58] sm:$0x1] %v56
  %s60 = scalar_lea.vmem %s0, 6
  %v61 = vld [vmem:[%s60] sm:$0x1]
  %s62 = scalar_lea.vmem %s1, 6
  %v63 = vld [vmem:[%s62] sm:$0x1]
  %64 = xla_tuple %v61, %v63
  %65 = xla_tuple %64
  %v66 = vmul.f32 %v61, %v63
  %67 = xla_tuple %v66
  %s68 = scalar_lea.vmem %s2, 6
  %69 = vst [vmem:[%s68] sm:$0x1] %v66
  %s70 = scalar_lea.vmem %s0, 7
  %v71 = vld [vmem:[%s70] sm:$0x1]
  %s72 = scalar_lea.vmem %s1, 7
  %v73 = vld [vmem:[%s72] sm:$0x1]
  %74 = xla_tuple %v71, %v73
  %75 = xla_tuple %74
  %v76 = vmul.f32 %v71, %v73
  %77 = xla_tuple %v76
  %s78 = scalar_lea.vmem %s2, 7
  %79 = vst [vmem:[%s78] sm:$0x1] %v76

// kernel: dablock_forward.7
$region0: #{dablock_forward.7}
  #allocation0 [shape = 'u32[]', space=smem, size = 0x4, offset = 0x4, fixed_abs, tag = 'smem constant byte address 0x4 - core index']
  #allocation1 [shape = 'u32[144,128]{1,0:T(1,128)}', space=vmem, size = 0x12000, scoped, tag = 'internal scratch']
  %s0 = inlined_call_operand.hbm [shape: f32[2,8,1,16], index: 0, kind: input, shape index: {}]
  %s1 = inlined_call_operand.hbm [shape: f32[8,128,1], index: 1, kind: input, shape index: {}]
  %s2 = inlined_call_operand.hbm [shape: bf16[2,8,128,16], index: 2, kind: output, shape index: {}]
  %s3 = sld [smem:[#allocation0]]
  $region49: #{dablock_forward.7} parent=0
    _
  %s5 = ssub.s32 1, %s3
  %s6 = scalar_select 0, %s5, %s3
  $region1: #{dablock_forward.7} parent=0
    #allocation2 [shape = 'u8[8192]{0}', space=vmem, size = 0x2000, scoped, tag = 'input window, operand 0']
    #allocation3 [shape = 's32[2]{0}', space=sflag, size = 0x8, scoped, tag = 'scoped memory for dablock_forward.7']
    #allocation4 [shape = 's32[2]{0}', space=sflag, size = 0x8, scoped, tag = 'scoped memory for dablock_forward.7']
    #allocation5 [shape = 'u8[524288]{0}', space=vmem, size = 0x80000, scoped, tag = 'input window, operand 1, single buffered']
    #allocation6 [shape = 's32[1]{0}', space=sflag, size = 0x4, scoped, tag = 'scoped memory for dablock_forward.7']
    #allocation7 [shape = 'u8[524288]{0}', space=vmem, size = 0x80000, scoped, tag = 'output window, operand 0']
    %7 = vsyncpa [#allocation3], 0
    %s8 = scalar_lea.sflag [#allocation3], 1
    %9 = vsyncpa %s8, 0
    %10 = vsyncpa [#allocation6], 0
    %11 = vsyncpa [#allocation4], 0
    %s12 = scalar_lea.sflag [#allocation4], 1
    %13 = vsyncpa %s12, 0
    loop: start=0, step=1, limit=4
    $region2: #{dablock_forward.7} parent=1 // loop_pre_header
      _
    $region3: #{dablock_forward.7} parent=1 // loop_header
      %s15 = sphi 0, %s19
      %p16 = scmp.ge.s32.totalorder %s15, 4
      %s22 = sphi 0, %s34
      %s23 = sphi 0, %s30
      %s24 = sphi 0, %s22
      %s25 = sphi 0, %s23
      %s26 = sphi 0, %s24
      %s27 = sphi 0, %s25
      %s39 = sphi 0, %s41
      %s42 = sphi 0, %s39
      %s43 = sphi 0, %s42
      %s59 = sphi 0, %s43
      %s63 = sphi 0, %s63
      %s65 = sphi 0, %s63
      %s66 = sphi 0, %s65
      %s80 = sphi 0, %s66
      %s88 = sphi 0, %s90
      %s91 = sphi 0, %s88
      %s92 = sphi 0, %s91
      %s108 = sphi 0, %s92
    $region4: #{dablock_forward.7} parent=1 // loop_header_branch
      %18 = sbr.rel (%p16) target = $region8
    $region5: #{dablock_forward.7} parent=1 // loop_body
      %s20 = ssub.s32 %s15, 1
      %s21 = ssub.s32 %s15, 2
      %s28 = sadd.s32 1, %s23
      %p29 = scmp.ge.s32.totalorder %s28, 2
      %s30 = scalar_select %p29, 0, %s28
      %s31 = sadd.s32 1, %s22
      %s32 = scalar_select %p29, %s31, %s22
      %p33 = scmp.ge.s32.totalorder %s32, 1
      %s34 = scalar_select %p33, 0, %s32
      %s35 = ssub.s32 %s23, %s30
      %s36 = ssub.s32 %s22, %s34
      %s37 = sor.u32 %s35, %s36
      %p38 = scmp.eq.s32.totalorder %s37, 0
      %s40 = sadd.s32 %s39, 1
      %s41 = scalar_select %p38, %s39, %s40
      %p44 = pneg %p38
      %p45 = scmp.eq.s32.totalorder %s15, 1
      %p46 = por %p44, %p45
      %p47 = scmp.ne.s32.totalorder %s39, %s42
      %p48 = scmp.eq.s32.totalorder %s15, 0
      %p49 = por %p47, %p48
      %p50 = scmp.ne.s32.totalorder %s39, %s42
      %p51 = scmp.eq.s32.totalorder %s20, 1
      %p52 = por %p50, %p51
      %p53 = scmp.ne.s32.totalorder %s42, %s43
      %p54 = scmp.eq.s32.totalorder %s20, 0
      %p55 = por %p53, %p54
      %p56 = scmp.ne.s32.totalorder %s42, %s43
      %p57 = scmp.eq.s32.totalorder %s21, 1
      %p58 = por %p56, %p57
      %p60 = scmp.ne.s32.totalorder %s43, %s59
      %p61 = scmp.eq.s32.totalorder %s21, 0
      %p62 = por %p60, %p61
      %s64 = sadd.s32 %s63, 1
      %p67 = scmp.eq.s32.totalorder %s15, 1
      %p68 = scmp.ne.s32.totalorder %s63, %s65
      %p69 = scmp.eq.s32.totalorder %s15, 0
      %p70 = por %p68, %p69
      %p71 = scmp.ne.s32.totalorder %s63, %s65
      %p72 = scmp.eq.s32.totalorder %s20, 1
      %p73 = por %p71, %p72
      %p74 = scmp.ne.s32.totalorder %s65, %s66
      %p75 = scmp.eq.s32.totalorder %s20, 0
      %p76 = por %p74, %p75
      %p77 = scmp.ne.s32.totalorder %s65, %s66
      %p78 = scmp.eq.s32.totalorder %s21, 1
      %p79 = por %p77, %p78
      %p81 = scmp.ne.s32.totalorder %s66, %s80
      %p82 = scmp.eq.s32.totalorder %s21, 0
      %p83 = por %p81, %p82
      %s84 = ssub.s32 %s23, %s30
      %s85 = ssub.s32 %s22, %s34
      %s86 = sor.u32 %s84, %s85
      %p87 = scmp.eq.s32.totalorder %s86, 0
      %s89 = sadd.s32 %s88, 1
      %s90 = scalar_select %p87, %s88, %s89
      %p93 = pneg %p87
      %p94 = scmp.eq.s32.totalorder %s15, 1
      %p95 = por %p93, %p94
      %p96 = scmp.ne.s32.totalorder %s88, %s91
      %p97 = scmp.eq.s32.totalorder %s15, 0
      %p98 = por %p96, %p97
      %p99 = scmp.ne.s32.totalorder %s88, %s91
      %p100 = scmp.eq.s32.totalorder %s20, 1
      %p101 = por %p99, %p100
      %p102 = scmp.ne.s32.totalorder %s91, %s92
      %p103 = scmp.eq.s32.totalorder %s20, 0
      %p104 = por %p102, %p103
      %p105 = scmp.ne.s32.totalorder %s91, %s92
      %p106 = scmp.eq.s32.totalorder %s21, 1
      %p107 = por %p105, %p106
      %p109 = scmp.ne.s32.totalorder %s92, %s108
      %p110 = scmp.eq.s32.totalorder %s21, 0
      %p111 = por %p109, %p110
      %p112 = scmp.le.s32.totalorder 1, %s15
      %p113 = scmp.lt.s32.totalorder %s15, 3
      %p114 = pnand %p112, %p113
      %p115 = pneg %p114
      // Predicated region
      $region9: #{dablock_forward.7} parent=5 // pred_check
        _
      $region10: #{dablock_forward.7} parent=5 // pred_check_branch
        %117 = sbr.rel (%p114) target = $region12
      $region11: #{dablock_forward.7} parent=5 // pred_region
        %s118 = ssub.s32 %s15, 1
        // Predicated region
        $region13: #{dablock_forward.7} parent=11 // pred_check
          %p119 = pneg %p76
        $region14: #{dablock_forward.7} parent=11 // pred_check_branch
          %121 = sbr.rel (%p119) target = $region16
        $region15: #{dablock_forward.7} parent=11 // pred_region
          %s123 = ssub.s32 16384, 16384
          %124 = vsyncadd [#allocation6], %s123
          %s125 = sshll.u32 [#allocation5], 4
          %s126 = int_to_ptr.vmem [resolvable:$true] %s125
          %131 = dma.hbm_to_vmem [thread:$0]  %s1, 16384, %s126, [#allocation6], 128, 128, 8
        $region16: #{dablock_forward.7} parent=11 // pred_fallthru
          _
      $region12: #{dablock_forward.7} parent=5 // pred_fallthru
        _
      %p132 = scmp.lt.s32.totalorder %s15, 2
      // Predicated region
      $region17: #{dablock_forward.7} parent=5 // pred_check
        %p133 = pneg %p132
      $region18: #{dablock_forward.7} parent=5 // pred_check_branch
        %135 = sbr.rel (%p133) target = $region20
      $region19: #{dablock_forward.7} parent=5 // pred_region
        // Predicated region
        $region21: #{dablock_forward.7} parent=19 // pred_check
          %p136 = pneg %p49
        $region22: #{dablock_forward.7} parent=19 // pred_check_branch
          %138 = sbr.rel (%p136) target = $region24
        $region23: #{dablock_forward.7} parent=19 // pred_region
          %s139 = sand.u32 %s39, 1
          %s140 = scalar_lea.sflag [#allocation3], %s139
          %s141 = sand.u32 %s39, 1
          %s142 = smul.addr %s141, 8
          %s143 = scalar_lea.vmem [#allocation2], %s142
          %s145 = ssub.s32 128, 128
          %146 = vsyncadd %s140, %s145
          %s147 = smul.addr %s23, 8
          %s148 = sadd.s32 %s22, %s147
          %s149 = smul.addr %s148, 16
          %s150 = scalar_lea.hbm %s0, %s149
          %s151 = sshll.u32 %s143, 4
          %s152 = int_to_ptr.vmem [resolvable:$true] %s151
          %157 = dma.hbm_to_vmem [thread:$0]  %s150, 128, %s152, %s140, 16, 16, 1
        $region24: #{dablock_forward.7} parent=19 // pred_fallthru
          _
      $region20: #{dablock_forward.7} parent=5 // pred_fallthru
        _
      %p158 = scmp.le.s32.totalorder 1, %s15
      %p159 = scmp.lt.s32.totalorder %s15, 3
      %p160 = pnand %p158, %p159
      %p161 = pneg %p160
      // Predicated region
      $region25: #{dablock_forward.7} parent=5 // pred_check
        _
      $region26: #{dablock_forward.7} parent=5 // pred_check_branch
        %163 = sbr.rel (%p160) target = $region28
      $region27: #{dablock_forward.7} parent=5 // pred_region
        %s164 = ssub.s32 %s15, 1
        %s165 = sand.u32 %s42, 1
        %s166 = scalar_lea.sflag [#allocation3], %s165
        %s167 = sand.u32 %s42, 1
        %s168 = smul.addr %s167, 8
        %s169 = scalar_lea.vmem [#allocation2], %s168
        // Predicated region
        $region29: #{dablock_forward.7} parent=27 // pred_check
          %p170 = pneg %p55
        $region30: #{dablock_forward.7} parent=27 // pred_check_branch
          %172 = sbr.rel (%p170) target = $region32
        $region31: #{dablock_forward.7} parent=27 // pred_region
          %173 = dma.done %s166, 128
        $region32: #{dablock_forward.7} parent=27 // pred_fallthru
          _
        // Predicated region
        $region33: #{dablock_forward.7} parent=27 // pred_check
          %p174 = pneg %p76
        $region34: #{dablock_forward.7} parent=27 // pred_check_branch
          %176 = sbr.rel (%p174) target = $region36
        $region35: #{dablock_forward.7} parent=27 // pred_region
          %177 = dma.done [#allocation6], 16384
        $region36: #{dablock_forward.7} parent=27 // pred_fallthru
          _
        %s178 = sand.u32 %s42, 1
        %s179 = scalar_lea.sflag [#allocation3], %s178
        %s180 = sand.u32 %s42, 1
        %s181 = smul.addr %s180, 8
        %s182 = scalar_lea.vmem [#allocation2], %s181
        %p183 = pneg %p55
        %p184 = pneg %p52
        %p185 = pneg %p76
        %p186 = pneg %p73
        %p187 = pneg %p104
        %p188 = pneg %p101
        %s189 = sand.u32 %s91, 1
        %s190 = scalar_lea.sflag [#allocation4], %s189
        %s191 = sand.u32 %s91, 1
        %s192 = smul.addr %s191, 512
        %s193 = scalar_lea.vmem [#allocation7], %s192
        %v194 = vld [vmem:[#allocation5] sm:$0xff]
        %v195 = vld [vmem:[#allocation5 + $0x8] sm:$0xff]
        %v196 = vld [vmem:[#allocation5 + $0x10] sm:$0xff]
        %v197 = vld [vmem:[#allocation5 + $0x18] sm:$0xff]
        %v198 = vld [vmem:[#allocation5 + $0x20] sm:$0xff]
        %v199 = vld [vmem:[#allocation5 + $0x28] sm:$0xff]
        %v200 = vld [vmem:[#allocation5 + $0x30] sm:$0xff]
        %v201 = vld [vmem:[#allocation5 + $0x38] sm:$0xff]
        %v202 = vld [vmem:[#allocation5 + $0x40] sm:$0xff]
        %v203 = vld [vmem:[#allocation5 + $0x48] sm:$0xff]
        %v204 = vld [vmem:[#allocation5 + $0x50] sm:$0xff]
        %v205 = vld [vmem:[#allocation5 + $0x58] sm:$0xff]
        %v206 = vld [vmem:[#allocation5 + $0x60] sm:$0xff]
        %v207 = vld [vmem:[#allocation5 + $0x68] sm:$0xff]
        %v208 = vld [vmem:[#allocation5 + $0x70] sm:$0xff]
        %v209 = vld [vmem:[#allocation5 + $0x78] sm:$0xff]
        %v210 = vld [vmem:[%s169] sm:$0x1]
        %212 = vset.pattern.permute.xlu0 0
        %213 = vperm.xlu0 %212, %v194
        %v214 = vpop.permute.xlu0 %213
        %217 = vset.pattern.permute.xlu0 0
        %218 = vperm.xlu0 %217, %v195
        %v219 = vpop.permute.xlu0 %218
        %222 = vset.pattern.permute.xlu0 0
        %223 = vperm.xlu0 %222, %v196
        %v224 = vpop.permute.xlu0 %223
        %227 = vset.pattern.permute.xlu0 0
        %228 = vperm.xlu0 %227, %v197
        %v229 = vpop.permute.xlu0 %228
        %232 = vset.pattern.permute.xlu0 0
        %233 = vperm.xlu0 %232, %v198
        %v234 = vpop.permute.xlu0 %233
        %237 = vset.pattern.permute.xlu0 0
        %238 = vperm.xlu0 %237, %v199
        %v239 = vpop.permute.xlu0 %238
        %242 = vset.pattern.permute.xlu0 0
        %243 = vperm.xlu0 %242, %v200
        %v244 = vpop.permute.xlu0 %243
        %247 = vset.pattern.permute.xlu0 0
        %248 = vperm.xlu0 %247, %v201
        %v249 = vpop.permute.xlu0 %248
        %252 = vset.pattern.permute.xlu0 0
        %253 = vperm.xlu0 %252, %v202
        %v254 = vpop.permute.xlu0 %253
        %257 = vset.pattern.permute.xlu0 0
        %258 = vperm.xlu0 %257, %v203
        %v259 = vpop.permute.xlu0 %258
        %262 = vset.pattern.permute.xlu0 0
        %263 = vperm.xlu0 %262, %v204
        %v264 = vpop.permute.xlu0 %263
        %267 = vset.pattern.permute.xlu0 0
        %268 = vperm.xlu0 %267, %v205
        %v269 = vpop.permute.xlu0 %268
        %272 = vset.pattern.permute.xlu0 0
        %273 = vperm.xlu0 %272, %v206
        %v274 = vpop.permute.xlu0 %273
        %277 = vset.pattern.permute.xlu0 0
        %278 = vperm.xlu0 %277, %v207
        %v279 = vpop.permute.xlu0 %278
        %282 = vset.pattern.permute.xlu0 0
        %283 = vperm.xlu0 %282, %v208
        %v284 = vpop.permute.xlu0 %283
        %287 = vset.pattern.permute.xlu0 0
        %288 = vperm.xlu0 %287, %v209
        %v289 = vpop.permute.xlu0 %288
        %v292 = vlaneseq
        %v293 = vshrl.u32 %v292, 7
        %v294 = vsub.s32 0, %v293
        %v295 = vrot.slane %v210, %v294
        %v297 = vmul.f32 %v214, %v295
        %v298 = vmul.f32 %v219, %v295
        %v299 = vmul.f32 %v224, %v295
        %v300 = vmul.f32 %v229, %v295
        %v301 = vmul.f32 %v234, %v295
        %v302 = vmul.f32 %v239, %v295
        %v303 = vmul.f32 %v244, %v295
        %v304 = vmul.f32 %v249, %v295
        %v305 = vmul.f32 %v254, %v295
        %v306 = vmul.f32 %v259, %v295
        %v307 = vmul.f32 %v264, %v295
        %v308 = vmul.f32 %v269, %v295
        %v309 = vmul.f32 %v274, %v295
        %v310 = vmul.f32 %v279, %v295
        %v311 = vmul.f32 %v284, %v295
        %v312 = vmul.f32 %v289, %v295
        %v313 = vpack.c.bf16 %v298, %v297
        %v314 = vpack.c.bf16 %v300, %v299
        %v315 = vpack.c.bf16 %v302, %v301
        %v316 = vpack.c.bf16 %v304, %v303
        %v317 = vpack.c.bf16 %v306, %v305
        %v318 = vpack.c.bf16 %v308, %v307
        %v319 = vpack.c.bf16 %v310, %v309
        %v320 = vpack.c.bf16 %v312, %v311
        %v329 = vunpack.c.l.b16 %v313
        %v330 = vunpack.c.h.b16 %v313
        %v331 = vunpack.c.l.b16 %v314
        %v332 = vunpack.c.h.b16 %v314
        %v333 = vunpack.c.l.b16 %v315
        %v334 = vunpack.c.h.b16 %v315
        %v335 = vunpack.c.l.b16 %v316
        %v336 = vunpack.c.h.b16 %v316
        %v337 = vunpack.c.l.b16 %v317
        %v338 = vunpack.c.h.b16 %v317
        %v339 = vunpack.c.l.b16 %v318
        %v340 = vunpack.c.h.b16 %v318
        %v341 = vunpack.c.l.b16 %v319
        %v342 = vunpack.c.h.b16 %v319
        %v343 = vunpack.c.l.b16 %v320
        %v344 = vunpack.c.h.b16 %v320
        %v345 = vpack.c.b16 %v329, %v329
        %v346 = vpack.c.b16 %v330, %v330
        %v347 = vpack.c.b16 %v331, %v331
        %v348 = vpack.c.b16 %v332, %v332
        %v349 = vpack.c.b16 %v333, %v333
        %v350 = vpack.c.b16 %v334, %v334
        %v351 = vpack.c.b16 %v335, %v335
        %v352 = vpack.c.b16 %v336, %v336
        %v353 = vpack.c.b16 %v337, %v337
        %v354 = vpack.c.b16 %v338, %v338
        %v355 = vpack.c.b16 %v339, %v339
        %v356 = vpack.c.b16 %v340, %v340
        %v357 = vpack.c.b16 %v341, %v341
        %v358 = vpack.c.b16 %v342, %v342
        %v359 = vpack.c.b16 %v343, %v343
        %v360 = vpack.c.b16 %v344, %v344
        %vm377 = vcmask 125952
        %378 = vst.msk [vmem:[%s193] sm:$0xf] %vm377, %v345
        %379 = vst.msk [vmem:[%s193 + $0x4] sm:$0xf] %vm377, %v346
        %380 = vst.msk [vmem:[%s193 + $0x8] sm:$0xf] %vm377, %v347
        %381 = vst.msk [vmem:[%s193 + $0xc] sm:$0xf] %vm377, %v348
        %382 = vst.msk [vmem:[%s193 + $0x10] sm:$0xf] %vm377, %v349
        %383 = vst.msk [vmem:[%s193 + $0x14] sm:$0xf] %vm377, %v350
        %384 = vst.msk [vmem:[%s193 + $0x18] sm:$0xf] %vm377, %v351
        %385 = vst.msk [vmem:[%s193 + $0x1c] sm:$0xf] %vm377, %v352
        %386 = vst.msk [vmem:[%s193 + $0x20] sm:$0xf] %vm377, %v353
        %387 = vst.msk [vmem:[%s193 + $0x24] sm:$0xf] %vm377, %v354
        %388 = vst.msk [vmem:[%s193 + $0x28] sm:$0xf] %vm377, %v355
        %389 = vst.msk [vmem:[%s193 + $0x2c] sm:$0xf] %vm377, %v356
        %390 = vst.msk [vmem:[%s193 + $0x30] sm:$0xf] %vm377, %v357
        %391 = vst.msk [vmem:[%s193 + $0x34] sm:$0xf] %vm377, %v358
        %392 = vst.msk [vmem:[%s193 + $0x38] sm:$0xf] %vm377, %v359
        %393 = vst.msk [vmem:[%s193 + $0x3c] sm:$0xf] %vm377, %v360
        %s394 = scalar_lea.vmem [#allocation5], 128
        %v395 = vld [vmem:[%s394] sm:$0xff]
        %v396 = vld [vmem:[%s394 + $0x8] sm:$0xff]
        %v397 = vld [vmem:[%s394 + $0x10] sm:$0xff]
        %v398 = vld [vmem:[%s394 + $0x18] sm:$0xff]
        %v399 = vld [vmem:[%s394 + $0x20] sm:$0xff]
        %v400 = vld [vmem:[%s394 + $0x28] sm:$0xff]
        %v401 = vld [vmem:[%s394 + $0x30] sm:$0xff]
        %v402 = vld [vmem:[%s394 + $0x38] sm:$0xff]
        %v403 = vld [vmem:[%s394 + $0x40] sm:$0xff]
        %v404 = vld [vmem:[%s394 + $0x48] sm:$0xff]
        %v405 = vld [vmem:[%s394 + $0x50] sm:$0xff]
        %v406 = vld [vmem:[%s394 + $0x58] sm:$0xff]
        %v407 = vld [vmem:[%s394 + $0x60] sm:$0xff]
        %v408 = vld [vmem:[%s394 + $0x68] sm:$0xff]
        %v409 = vld [vmem:[%s394 + $0x70] sm:$0xff]
        %v410 = vld [vmem:[%s394 + $0x78] sm:$0xff]
        %s411 = scalar_lea.vmem %s169, 1 [#allocation2]
        %v412 = vld [vmem:[%s411] sm:$0x1]
        %414 = vset.pattern.permute.xlu0 0
        %415 = vperm.xlu0 %414, %v395
        %v416 = vpop.permute.xlu0 %415
        %419 = vset.pattern.permute.xlu0 0
        %420 = vperm.xlu0 %419, %v396
        %v421 = vpop.permute.xlu0 %420
        %424 = vset.pattern.permute.xlu0 0
        %425 = vperm.xlu0 %424, %v397
        %v426 = vpop.permute.xlu0 %425
        %429 = vset.pattern.permute.xlu0 0
        %430 = vperm.xlu0 %429, %v398
        %v431 = vpop.permute.xlu0 %430
        %434 = vset.pattern.permute.xlu0 0
        %435 = vperm.xlu0 %434, %v399
        %v436 = vpop.permute.xlu0 %435
        %439 = vset.pattern.permute.xlu0 0
        %440 = vperm.xlu0 %439, %v400
        %v441 = vpop.permute.xlu0 %440
        %444 = vset.pattern.permute.xlu0 0
        %445 = vperm.xlu0 %444, %v401
        %v446 = vpop.permute.xlu0 %445
        %449 = vset.pattern.permute.xlu0 0
        %450 = vperm.xlu0 %449, %v402
        %v451 = vpop.permute.xlu0 %450
        %454 = vset.pattern.permute.xlu0 0
        %455 = vperm.xlu0 %454, %v403
        %v456 = vpop.permute.xlu0 %455
        %459 = vset.pattern.permute.xlu0 0
        %460 = vperm.xlu0 %459, %v404
        %v461 = vpop.permute.xlu0 %460
        %464 = vset.pattern.permute.xlu0 0
        %465 = vperm.xlu0 %464, %v405
        %v466 = vpop.permute.xlu0 %465
        %469 = vset.pattern.permute.xlu0 0
        %470 = vperm.xlu0 %469, %v406
        %v471 = vpop.permute.xlu0 %470
        %474 = vset.pattern.permute.xlu0 0
        %475 = vperm.xlu0 %474, %v407
        %v476 = vpop.permute.xlu0 %475
        %479 = vset.pattern.permute.xlu0 0
        %480 = vperm.xlu0 %479, %v408
        %v481 = vpop.permute.xlu0 %480
        %484 = vset.pattern.permute.xlu0 0
        %485 = vperm.xlu0 %484, %v409
        %v486 = vpop.permute.xlu0 %485
        %489 = vset.pattern.permute.xlu0 0
        %490 = vperm.xlu0 %489, %v410
        %v491 = vpop.permute.xlu0 %490
        %v494 = vlaneseq
        %v495 = vshrl.u32 %v494, 7
        %v496 = vsub.s32 0, %v495
        %v497 = vrot.slane %v412, %v496
        %v499 = vmul.f32 %v416, %v497
        %v500 = vmul.f32 %v421, %v497
        %v501 = vmul.f32 %v426, %v497
        %v502 = vmul.f32 %v431, %v497
        %v503 = vmul.f32 %v436, %v497
        %v504 = vmul.f32 %v441, %v497
        %v505 = vmul.f32 %v446, %v497
        %v506 = vmul.f32 %v451, %v497
        %v507 = vmul.f32 %v456, %v497
        %v508 = vmul.f32 %v461, %v497
        %v509 = vmul.f32 %v466, %v497
        %v510 = vmul.f32 %v471, %v497
        %v511 = vmul.f32 %v476, %v497
        %v512 = vmul.f32 %v481, %v497
        %v513 = vmul.f32 %v486, %v497
        %v514 = vmul.f32 %v491, %v497
        %v515 = vpack.c.bf16 %v500, %v499
        %v516 = vpack.c.bf16 %v502, %v501
        %v517 = vpack.c.bf16 %v504, %v503
        %v518 = vpack.c.bf16 %v506, %v505
        %v519 = vpack.c.bf16 %v508, %v507
        %v520 = vpack.c.bf16 %v510, %v509
        %v521 = vpack.c.bf16 %v512, %v511
        %v522 = vpack.c.bf16 %v514, %v513
        %v531 = vunpack.c.l.b16 %v515
        %v532 = vunpack.c.h.b16 %v515
        %v533 = vunpack.c.l.b16 %v516
        %v534 = vunpack.c.h.b16 %v516
        %v535 = vunpack.c.l.b16 %v517
        %v536 = vunpack.c.h.b16 %v517
        %v537 = vunpack.c.l.b16 %v518
        %v538 = vunpack.c.h.b16 %v518
        %v539 = vunpack.c.l.b16 %v519
        %v540 = vunpack.c.h.b16 %v519
        %v541 = vunpack.c.l.b16 %v520
        %v542 = vunpack.c.h.b16 %v520
        %v543 = vunpack.c.l.b16 %v521
        %v544 = vunpack.c.h.b16 %v521
        %v545 = vunpack.c.l.b16 %v522
        %v546 = vunpack.c.h.b16 %v522
        %v547 = vpack.c.b16 %v531, %v531
        %v548 = vpack.c.b16 %v532, %v532
        %v549 = vpack.c.b16 %v533, %v533
        %v550 = vpack.c.b16 %v534, %v534
        %v551 = vpack.c.b16 %v535, %v535
        %v552 = vpack.c.b16 %v536, %v536
        %v553 = vpack.c.b16 %v537, %v537
        %v554 = vpack.c.b16 %v538, %v538
        %v555 = vpack.c.b16 %v539, %v539
        %v556 = vpack.c.b16 %v540, %v540
        %v557 = vpack.c.b16 %v541, %v541
        %v558 = vpack.c.b16 %v542, %v542
        %v559 = vpack.c.b16 %v543, %v543
        %v560 = vpack.c.b16 %v544, %v544
        %v561 = vpack.c.b16 %v545, %v545
        %v562 = vpack.c.b16 %v546, %v546
        %s579 = scalar_lea.vmem %s193, 64 [#allocation7]
        %580 = vst.msk [vmem:[%s579] sm:$0xf] %vm377, %v547
        %581 = vst.msk [vmem:[%s579 + $0x4] sm:$0xf] %vm377, %v548
        %582 = vst.msk [vmem:[%s579 + $0x8] sm:$0xf] %vm377, %v549
        %583 = vst.msk [vmem:[%s579 + $0xc] sm:$0xf] %vm377, %v550
        %584 = vst.msk [vmem:[%s579 + $0x10] sm:$0xf] %vm377, %v551
        %585 = vst.msk [vmem:[%s579 + $0x14] sm:$0xf] %vm377, %v552
        %586 = vst.msk [vmem:[%s579 + $0x18] sm:$0xf] %vm377, %v553
        %587 = vst.msk [vmem:[%s579 + $0x1c] sm:$0xf] %vm377, %v554
        %588 = vst.msk [vmem:[%s579 + $0x20] sm:$0xf] %vm377, %v555
        %589 = vst.msk [vmem:[%s579 + $0x24] sm:$0xf] %vm377, %v556
        %590 = vst.msk [vmem:[%s579 + $0x28] sm:$0xf] %vm377, %v557
        %591 = vst.msk [vmem:[%s579 + $0x2c] sm:$0xf] %vm377, %v558
        %592 = vst.msk [vmem:[%s579 + $0x30] sm:$0xf] %vm377, %v559
        %593 = vst.msk [vmem:[%s579 + $0x34] sm:$0xf] %vm377, %v560
        %594 = vst.msk [vmem:[%s579 + $0x38] sm:$0xf] %vm377, %v561
        %595 = vst.msk [vmem:[%s579 + $0x3c] sm:$0xf] %vm377, %v562
        %s596 = scalar_lea.vmem [#allocation5], 256
        %v597 = vld [vmem:[%s596] sm:$0xff]
        %v598 = vld [vmem:[%s596 + $0x8] sm:$0xff]
        %v599 = vld [vmem:[%s596 + $0x10] sm:$0xff]
        %v600 = vld [vmem:[%s596 + $0x18] sm:$0xff]
        %v601 = vld [vmem:[%s596 + $0x20] sm:$0xff]
        %v602 = vld [vmem:[%s596 + $0x28] sm:$0xff]
        %v603 = vld [vmem:[%s596 + $0x30] sm:$0xff]
        %v604 = vld [vmem:[%s596 + $0x38] sm:$0xff]
        %v605 = vld [vmem:[%s596 + $0x40] sm:$0xff]
        %v606 = vld [vmem:[%s596 + $0x48] sm:$0xff]
        %v607 = vld [vmem:[%s596 + $0x50] sm:$0xff]
        %v608 = vld [vmem:[%s596 + $0x58] sm:$0xff]
        %v609 = vld [vmem:[%s596 + $0x60] sm:$0xff]
        %v610 = vld [vmem:[%s596 + $0x68] sm:$0xff]
        %v611 = vld [vmem:[%s596 + $0x70] sm:$0xff]
        %v612 = vld [vmem:[%s596 + $0x78] sm:$0xff]
        %s613 = scalar_lea.vmem %s169, 2 [#allocation2]
        %v614 = vld [vmem:[%s613] sm:$0x1]
        %616 = vset.pattern.permute.xlu0 0
        %617 = vperm.xlu0 %616, %v597
        %v618 = vpop.permute.xlu0 %617
        %621 = vset.pattern.permute.xlu0 0
        %622 = vperm.xlu0 %621, %v598
        %v623 = vpop.permute.xlu0 %622
        %626 = vset.pattern.permute.xlu0 0
        %627 = vperm.xlu0 %626, %v599
        %v628 = vpop.permute.xlu0 %627
        %631 = vset.pattern.permute.xlu0 0
        %632 = vperm.xlu0 %631, %v600
        %v633 = vpop.permute.xlu0 %632
        %636 = vset.pattern.permute.xlu0 0
        %637 = vperm.xlu0 %636, %v601
        %v638 = vpop.permute.xlu0 %637
        %641 = vset.pattern.permute.xlu0 0
        %642 = vperm.xlu0 %641, %v602
        %v643 = vpop.permute.xlu0 %642
        %646 = vset.pattern.permute.xlu0 0
        %647 = vperm.xlu0 %646, %v603
        %v648 = vpop.permute.xlu0 %647
        %651 = vset.pattern.permute.xlu0 0
        %652 = vperm.xlu0 %651, %v604
        %v653 = vpop.permute.xlu0 %652
        %656 = vset.pattern.permute.xlu0 0
        %657 = vperm.xlu0 %656, %v605
        %v658 = vpop.permute.xlu0 %657
        %661 = vset.pattern.permute.xlu0 0
        %662 = vperm.xlu0 %661, %v606
        %v663 = vpop.permute.xlu0 %662
        %666 = vset.pattern.permute.xlu0 0
        %667 = vperm.xlu0 %666, %v607
        %v668 = vpop.permute.xlu0 %667
        %671 = vset.pattern.permute.xlu0 0
        %672 = vperm.xlu0 %671, %v608
        %v673 = vpop.permute.xlu0 %672
        %676 = vset.pattern.permute.xlu0 0
        %677 = vperm.xlu0 %676, %v609
        %v678 = vpop.permute.xlu0 %677
        %681 = vset.pattern.permute.xlu0 0
        %682 = vperm.xlu0 %681, %v610
        %v683 = vpop.permute.xlu0 %682
        %686 = vset.pattern.permute.xlu0 0
        %687 = vperm.xlu0 %686, %v611
        %v688 = vpop.permute.xlu0 %687
        %691 = vset.pattern.permute.xlu0 0
        %692 = vperm.xlu0 %691, %v612
        %v693 = vpop.permute.xlu0 %692
        %v696 = vlaneseq
        %v697 = vshrl.u32 %v696, 7
        %v698 = vsub.s32 0, %v697
        %v699 = vrot.slane %v614, %v698
        %v701 = vmul.f32 %v618, %v699
        %v702 = vmul.f32 %v623, %v699
        %v703 = vmul.f32 %v628, %v699
        %v704 = vmul.f32 %v633, %v699
        %v705 = vmul.f32 %v638, %v699
        %v706 = vmul.f32 %v643, %v699
        %v707 = vmul.f32 %v648, %v699
        %v708 = vmul.f32 %v653, %v699
        %v709 = vmul.f32 %v658, %v699
        %v710 = vmul.f32 %v663, %v699
        %v711 = vmul.f32 %v668, %v699
        %v712 = vmul.f32 %v673, %v699
        %v713 = vmul.f32 %v678, %v699
        %v714 = vmul.f32 %v683, %v699
        %v715 = vmul.f32 %v688, %v699
        %v716 = vmul.f32 %v693, %v699
        %v717 = vpack.c.bf16 %v702, %v701
        %v718 = vpack.c.bf16 %v704, %v703
        %v719 = vpack.c.bf16 %v706, %v705
        %v720 = vpack.c.bf16 %v708, %v707
        %v721 = vpack.c.bf16 %v710, %v709
        %v722 = vpack.c.bf16 %v712, %v711
        %v723 = vpack.c.bf16 %v714, %v713
        %v724 = vpack.c.bf16 %v716, %v715
        %v733 = vunpack.c.l.b16 %v717
        %v734 = vunpack.c.h.b16 %v717
        %v735 = vunpack.c.l.b16 %v718
        %v736 = vunpack.c.h.b16 %v718
        %v737 = vunpack.c.l.b16 %v719
        %v738 = vunpack.c.h.b16 %v719
        %v739 = vunpack.c.l.b16 %v720
        %v740 = vunpack.c.h.b16 %v720
        %v741 = vunpack.c.l.b16 %v721
        %v742 = vunpack.c.h.b16 %v721
        %v743 = vunpack.c.l.b16 %v722
        %v744 = vunpack.c.h.b16 %v722
        %v745 = vunpack.c.l.b16 %v723
        %v746 = vunpack.c.h.b16 %v723
        %v747 = vunpack.c.l.b16 %v724
        %v748 = vunpack.c.h.b16 %v724
        %v749 = vpack.c.b16 %v733, %v733
        %v750 = vpack.c.b16 %v734, %v734
        %v751 = vpack.c.b16 %v735, %v735
        %v752 = vpack.c.b16 %v736, %v736
        %v753 = vpack.c.b16 %v737, %v737
        %v754 = vpack.c.b16 %v738, %v738
        %v755 = vpack.c.b16 %v739, %v739
        %v756 = vpack.c.b16 %v740, %v740
        %v757 = vpack.c.b16 %v741, %v741
        %v758 = vpack.c.b16 %v742, %v742
        %v759 = vpack.c.b16 %v743, %v743
        %v760 = vpack.c.b16 %v744, %v744
        %v761 = vpack.c.b16 %v745, %v745
        %v762 = vpack.c.b16 %v746, %v746
        %v763 = vpack.c.b16 %v747, %v747
        %v764 = vpack.c.b16 %v748, %v748
        %s781 = scalar_lea.vmem %s193, 128 [#allocation7]
        %782 = vst.msk [vmem:[%s781] sm:$0xf] %vm377, %v749
        %783 = vst.msk [vmem:[%s781 + $0x4] sm:$0xf] %vm377, %v750
        %784 = vst.msk [vmem:[%s781 + $0x8] sm:$0xf] %vm377, %v751
        %785 = vst.msk [vmem:[%s781 + $0xc] sm:$0xf] %vm377, %v752
        %786 = vst.msk [vmem:[%s781 + $0x10] sm:$0xf] %vm377, %v753
        %787 = vst.msk [vmem:[%s781 + $0x14] sm:$0xf] %vm377, %v754
        %788 = vst.msk [vmem:[%s781 + $0x18] sm:$0xf] %vm377, %v755
        %789 = vst.msk [vmem:[%s781 + $0x1c] sm:$0xf] %vm377, %v756
        %790 = vst.msk [vmem:[%s781 + $0x20] sm:$0xf] %vm377, %v757
        %791 = vst.msk [vmem:[%s781 + $0x24] sm:$0xf] %vm377, %v758
        %792 = vst.msk [vmem:[%s781 + $0x28] sm:$0xf] %vm377, %v759
        %793 = vst.msk [vmem:[%s781 + $0x2c] sm:$0xf] %vm377, %v760
        %794 = vst.msk [vmem:[%s781 + $0x30] sm:$0xf] %vm377, %v761
        %795 = vst.msk [vmem:[%s781 + $0x34] sm:$0xf] %vm377, %v762
        %796 = vst.msk [vmem:[%s781 + $0x38] sm:$0xf] %vm377, %v763
        %797 = vst.msk [vmem:[%s781 + $0x3c] sm:$0xf] %vm377, %v764
        %s798 = scalar_lea.vmem [#allocation5], 384
        %v799 = vld [vmem:[%s798] sm:$0xff]
        %v800 = vld [vmem:[%s798 + $0x8] sm:$0xff]
        %v801 = vld [vmem:[%s798 + $0x10] sm:$0xff]
        %v802 = vld [vmem:[%s798 + $0x18] sm:$0xff]
        %v803 = vld [vmem:[%s798 + $0x20] sm:$0xff]
        %v804 = vld [vmem:[%s798 + $0x28] sm:$0xff]
        %v805 = vld [vmem:[%s798 + $0x30] sm:$0xff]
        %v806 = vld [vmem:[%s798 + $0x38] sm:$0xff]
        %v807 = vld [vmem:[%s798 + $0x40] sm:$0xff]
        %v808 = vld [vmem:[%s798 + $0x48] sm:$0xff]
        %v809 = vld [vmem:[%s798 + $0x50] sm:$0xff]
        %v810 = vld [vmem:[%s798 + $0x58] sm:$0xff]
        %v811 = vld [vmem:[%s798 + $0x60] sm:$0xff]
        %v812 = vld [vmem:[%s798 + $0x68] sm:$0xff]
        %v813 = vld [vmem:[%s798 + $0x70] sm:$0xff]
        %v814 = vld [vmem:[%s798 + $0x78] sm:$0xff]
        %s815 = scalar_lea.vmem %s169, 3 [#allocation2]
        %v816 = vld [vmem:[%s815] sm:$0x1]
        %818 = vset.pattern.permute.xlu0 0
        %819 = vperm.xlu0 %818, %v799
        %v820 = vpop.permute.xlu0 %819
        %823 = vset.pattern.permute.xlu0 0
        %824 = vperm.xlu0 %823, %v800
        %v825 = vpop.permute.xlu0 %824
        %828 = vset.pattern.permute.xlu0 0
        %829 = vperm.xlu0 %828, %v801
        %v830 = vpop.permute.xlu0 %829
        %833 = vset.pattern.permute.xlu0 0
        %834 = vperm.xlu0 %833, %v802
        %v835 = vpop.permute.xlu0 %834
        %838 = vset.pattern.permute.xlu0 0
        %839 = vperm.xlu0 %838, %v803
        %v840 = vpop.permute.xlu0 %839
        %843 = vset.pattern.permute.xlu0 0
        %844 = vperm.xlu0 %843, %v804
        %v845 = vpop.permute.xlu0 %844
        %848 = vset.pattern.permute.xlu0 0
        %849 = vperm.xlu0 %848, %v805
        %v850 = vpop.permute.xlu0 %849
        %853 = vset.pattern.permute.xlu0 0
        %854 = vperm.xlu0 %853, %v806
        %v855 = vpop.permute.xlu0 %854
        %858 = vset.pattern.permute.xlu0 0
        %859 = vperm.xlu0 %858, %v807
        %v860 = vpop.permute.xlu0 %859
        %863 = vset.pattern.permute.xlu0 0
        %864 = vperm.xlu0 %863, %v808
        %v865 = vpop.permute.xlu0 %864
        %868 = vset.pattern.permute.xlu0 0
        %869 = vperm.xlu0 %868, %v809
        %v870 = vpop.permute.xlu0 %869
        %873 = vset.pattern.permute.xlu0 0
        %874 = vperm.xlu0 %873, %v810
        %v875 = vpop.permute.xlu0 %874
        %878 = vset.pattern.permute.xlu0 0
        %879 = vperm.xlu0 %878, %v811
        %v880 = vpop.permute.xlu0 %879
        %883 = vset.pattern.permute.xlu0 0
        %884 = vperm.xlu0 %883, %v812
        %v885 = vpop.permute.xlu0 %884
        %888 = vset.pattern.permute.xlu0 0
        %889 = vperm.xlu0 %888, %v813
        %v890 = vpop.permute.xlu0 %889
        %893 = vset.pattern.permute.xlu0 0
        %894 = vperm.xlu0 %893, %v814
        %v895 = vpop.permute.xlu0 %894
        %v898 = vlaneseq
        %v899 = vshrl.u32 %v898, 7
        %v900 = vsub.s32 0, %v899
        %v901 = vrot.slane %v816, %v900
        %v903 = vmul.f32 %v820, %v901
        %v904 = vmul.f32 %v825, %v901
        %v905 = vmul.f32 %v830, %v901
        %v906 = vmul.f32 %v835, %v901
        %v907 = vmul.f32 %v840, %v901
        %v908 = vmul.f32 %v845, %v901
        %v909 = vmul.f32 %v850, %v901
        %v910 = vmul.f32 %v855, %v901
        %v911 = vmul.f32 %v860, %v901
        %v912 = vmul.f32 %v865, %v901
        %v913 = vmul.f32 %v870, %v901
        %v914 = vmul.f32 %v875, %v901
        %v915 = vmul.f32 %v880, %v901
        %v916 = vmul.f32 %v885, %v901
        %v917 = vmul.f32 %v890, %v901
        %v918 = vmul.f32 %v895, %v901
        %v919 = vpack.c.bf16 %v904, %v903
        %v920 = vpack.c.bf16 %v906, %v905
        %v921 = vpack.c.bf16 %v908, %v907
        %v922 = vpack.c.bf16 %v910, %v909
        %v923 = vpack.c.bf16 %v912, %v911
        %v924 = vpack.c.bf16 %v914, %v913
        %v925 = vpack.c.bf16 %v916, %v915
        %v926 = vpack.c.bf16 %v918, %v917
        %v935 = vunpack.c.l.b16 %v919
        %v936 = vunpack.c.h.b16 %v919
        %v937 = vunpack.c.l.b16 %v920
        %v938 = vunpack.c.h.b16 %v920
        %v939 = vunpack.c.l.b16 %v921
        %v940 = vunpack.c.h.b16 %v921
        %v941 = vunpack.c.l.b16 %v922
        %v942 = vunpack.c.h.b16 %v922
        %v943 = vunpack.c.l.b16 %v923
        %v944 = vunpack.c.h.b16 %v923
        %v945 = vunpack.c.l.b16 %v924
        %v946 = vunpack.c.h.b16 %v924
        %v947 = vunpack.c.l.b16 %v925
        %v948 = vunpack.c.h.b16 %v925
        %v949 = vunpack.c.l.b16 %v926
        %v950 = vunpack.c.h.b16 %v926
        %v951 = vpack.c.b16 %v935, %v935
        %v952 = vpack.c.b16 %v936, %v936
        %v953 = vpack.c.b16 %v937, %v937
        %v954 = vpack.c.b16 %v938, %v938
        %v955 = vpack.c.b16 %v939, %v939
        %v956 = vpack.c.b16 %v940, %v940
        %v957 = vpack.c.b16 %v941, %v941
        %v958 = vpack.c.b16 %v942, %v942
        %v959 = vpack.c.b16 %v943, %v943
        %v960 = vpack.c.b16 %v944, %v944
        %v961 = vpack.c.b16 %v945, %v945
        %v962 = vpack.c.b16 %v946, %v946
        %v963 = vpack.c.b16 %v947, %v947
        %v964 = vpack.c.b16 %v948, %v948
        %v965 = vpack.c.b16 %v949, %v949
        %v966 = vpack.c.b16 %v950, %v950
        %s983 = scalar_lea.vmem %s193, 192 [#allocation7]
        %984 = vst.msk [vmem:[%s983] sm:$0xf] %vm377, %v951
        %985 = vst.msk [vmem:[%s983 + $0x4] sm:$0xf] %vm377, %v952
        %986 = vst.msk [vmem:[%s983 + $0x8] sm:$0xf] %vm377, %v953
        %987 = vst.msk [vmem:[%s983 + $0xc] sm:$0xf] %vm377, %v954
        %988 = vst.msk [vmem:[%s983 + $0x10] sm:$0xf] %vm377, %v955
        %989 = vst.msk [vmem:[%s983 + $0x14] sm:$0xf] %vm377, %v956
        %990 = vst.msk [vmem:[%s983 + $0x18] sm:$0xf] %vm377, %v957
        %991 = vst.msk [vmem:[%s983 + $0x1c] sm:$0xf] %vm377, %v958
        %992 = vst.msk [vmem:[%s983 + $0x20] sm:$0xf] %vm377, %v959
        %993 = vst.msk [vmem:[%s983 + $0x24] sm:$0xf] %vm377, %v960
        %994 = vst.msk [vmem:[%s983 + $0x28] sm:$0xf] %vm377, %v961
        %995 = vst.msk [vmem:[%s983 + $0x2c] sm:$0xf] %vm377, %v962
        %996 = vst.msk [vmem:[%s983 + $0x30] sm:$0xf] %vm377, %v963
        %997 = vst.msk [vmem:[%s983 + $0x34] sm:$0xf] %vm377, %v964
        %998 = vst.msk [vmem:[%s983 + $0x38] sm:$0xf] %vm377, %v965
        %999 = vst.msk [vmem:[%s983 + $0x3c] sm:$0xf] %vm377, %v966
        %s1000 = scalar_lea.vmem [#allocation5], 512
        %v1001 = vld [vmem:[%s1000] sm:$0xff]
        %v1002 = vld [vmem:[%s1000 + $0x8] sm:$0xff]
        %v1003 = vld [vmem:[%s1000 + $0x10] sm:$0xff]
        %v1004 = vld [vmem:[%s1000 + $0x18] sm:$0xff]
        %v1005 = vld [vmem:[%s1000 + $0x20] sm:$0xff]
        %v1006 = vld [vmem:[%s1000 + $0x28] sm:$0xff]
        %v1007 = vld [vmem:[%s1000 + $0x30] sm:$0xff]
        %v1008 = vld [vmem:[%s1000 + $0x38] sm:$0xff]
        %v1009 = vld [vmem:[%s1000 + $0x40] sm:$0xff]
        %v1010 = vld [vmem:[%s1000 + $0x48] sm:$0xff]
        %v1011 = vld [vmem:[%s1000 + $0x50] sm:$0xff]
        %v1012 = vld [vmem:[%s1000 + $0x58] sm:$0xff]
        %v1013 = vld [vmem:[%s1000 + $0x60] sm:$0xff]
        %v1014 = vld [vmem:[%s1000 + $0x68] sm:$0xff]
        %v1015 = vld [vmem:[%s1000 + $0x70] sm:$0xff]
        %v1016 = vld [vmem:[%s1000 + $0x78] sm:$0xff]
        %s1017 = scalar_lea.vmem %s169, 4 [#allocation2]
        %v1018 = vld [vmem:[%s1017] sm:$0x1]
        %1020 = vset.pattern.permute.xlu0 0
        %1021 = vperm.xlu0 %1020, %v1001
        %v1022 = vpop.permute.xlu0 %1021
        %1025 = vset.pattern.permute.xlu0 0
        %1026 = vperm.xlu0 %1025, %v1002
        %v1027 = vpop.permute.xlu0 %1026
        %1030 = vset.pattern.permute.xlu0 0
        %1031 = vperm.xlu0 %1030, %v1003
        %v1032 = vpop.permute.xlu0 %1031
        %1035 = vset.pattern.permute.xlu0 0
        %1036 = vperm.xlu0 %1035, %v1004
        %v1037 = vpop.permute.xlu0 %1036
        %1040 = vset.pattern.permute.xlu0 0
        %1041 = vperm.xlu0 %1040, %v1005
        %v1042 = vpop.permute.xlu0 %1041
        %1045 = vset.pattern.permute.xlu0 0
        %1046 = vperm.xlu0 %1045, %v1006
        %v1047 = vpop.permute.xlu0 %1046
        %1050 = vset.pattern.permute.xlu0 0
        %1051 = vperm.xlu0 %1050, %v1007
        %v1052 = vpop.permute.xlu0 %1051
        %1055 = vset.pattern.permute.xlu0 0
        %1056 = vperm.xlu0 %1055, %v1008
        %v1057 = vpop.permute.xlu0 %1056
        %1060 = vset.pattern.permute.xlu0 0
        %1061 = vperm.xlu0 %1060, %v1009
        %v1062 = vpop.permute.xlu0 %1061
        %1065 = vset.pattern.permute.xlu0 0
        %1066 = vperm.xlu0 %1065, %v1010
        %v1067 = vpop.permute.xlu0 %1066
        %1070 = vset.pattern.permute.xlu0 0
        %1071 = vperm.xlu0 %1070, %v1011
        %v1072 = vpop.permute.xlu0 %1071
        %1075 = vset.pattern.permute.xlu0 0
        %1076 = vperm.xlu0 %1075, %v1012
        %v1077 = vpop.permute.xlu0 %1076
        %1080 = vset.pattern.permute.xlu0 0
        %1081 = vperm.xlu0 %1080, %v1013
        %v1082 = vpop.permute.xlu0 %1081
        %1085 = vset.pattern.permute.xlu0 0
        %1086 = vperm.xlu0 %1085, %v1014
        %v1087 = vpop.permute.xlu0 %1086
        %1090 = vset.pattern.permute.xlu0 0
        %1091 = vperm.xlu0 %1090, %v1015
        %v1092 = vpop.permute.xlu0 %1091
        %1095 = vset.pattern.permute.xlu0 0
        %1096 = vperm.xlu0 %1095, %v1016
        %v1097 = vpop.permute.xlu0 %1096
        %v1100 = vlaneseq
        %v1101 = vshrl.u32 %v1100, 7
        %v1102 = vsub.s32 0, %v1101
        %v1103 = vrot.slane %v1018, %v1102
        %v1105 = vmul.f32 %v1022, %v1103
        %v1106 = vmul.f32 %v1027, %v1103
        %v1107 = vmul.f32 %v1032, %v1103
        %v1108 = vmul.f32 %v1037, %v1103
        %v1109 = vmul.f32 %v1042, %v1103
        %v1110 = vmul.f32 %v1047, %v1103
        %v1111 = vmul.f32 %v1052, %v1103
        %v1112 = vmul.f32 %v1057, %v1103
        %v1113 = vmul.f32 %v1062, %v1103
        %v1114 = vmul.f32 %v1067, %v1103
        %v1115 = vmul.f32 %v1072, %v1103
        %v1116 = vmul.f32 %v1077, %v1103
        %v1117 = vmul.f32 %v1082, %v1103
        %v1118 = vmul.f32 %v1087, %v1103
        %v1119 = vmul.f32 %v1092, %v1103
        %v1120 = vmul.f32 %v1097, %v1103
        %v1121 = vpack.c.bf16 %v1106, %v1105
        %v1122 = vpack.c.bf16 %v1108, %v1107
        %v1123 = vpack.c.bf16 %v1110, %v1109
        %v1124 = vpack.c.bf16 %v1112, %v1111
        %v1125 = vpack.c.bf16 %v1114, %v1113
        %v1126 = vpack.c.bf16 %v1116, %v1115
        %v1127 = vpack.c.bf16 %v1118, %v1117
        %v1128 = vpack.c.bf16 %v1120, %v1119
        %v1137 = vunpack.c.l.b16 %v1121
        %v1138 = vunpack.c.h.b16 %v1121
        %v1139 = vunpack.c.l.b16 %v1122
        %v1140 = vunpack.c.h.b16 %v1122
        %v1141 = vunpack.c.l.b16 %v1123
        %v1142 = vunpack.c.h.b16 %v1123
        %v1143 = vunpack.c.l.b16 %v1124
        %v1144 = vunpack.c.h.b16 %v1124
        %v1145 = vunpack.c.l.b16 %v1125
        %v1146 = vunpack.c.h.b16 %v1125
        %v1147 = vunpack.c.l.b16 %v1126
        %v1148 = vunpack.c.h.b16 %v1126
        %v1149 = vunpack.c.l.b16 %v1127
        %v1150 = vunpack.c.h.b16 %v1127
        %v1151 = vunpack.c.l.b16 %v1128
        %v1152 = vunpack.c.h.b16 %v1128
        %v1153 = vpack.c.b16 %v1137, %v1137
        %v1154 = vpack.c.b16 %v1138, %v1138
        %v1155 = vpack.c.b16 %v1139, %v1139
        %v1156 = vpack.c.b16 %v1140, %v1140
        %v1157 = vpack.c.b16 %v1141, %v1141
        %v1158 = vpack.c.b16 %v1142, %v1142
        %v1159 = vpack.c.b16 %v1143, %v1143
        %v1160 = vpack.c.b16 %v1144, %v1144
        %v1161 = vpack.c.b16 %v1145, %v1145
        %v1162 = vpack.c.b16 %v1146, %v1146
        %v1163 = vpack.c.b16 %v1147, %v1147
        %v1164 = vpack.c.b16 %v1148, %v1148
        %v1165 = vpack.c.b16 %v1149, %v1149
        %v1166 = vpack.c.b16 %v1150, %v1150
        %v1167 = vpack.c.b16 %v1151, %v1151
        %v1168 = vpack.c.b16 %v1152, %v1152
        %s1185 = scalar_lea.vmem %s193, 256 [#allocation7]
        %1186 = vst.msk [vmem:[%s1185] sm:$0xf] %vm377, %v1153
        %1187 = vst.msk [vmem:[%s1185 + $0x4] sm:$0xf] %vm377, %v1154
        %1188 = vst.msk [vmem:[%s1185 + $0x8] sm:$0xf] %vm377, %v1155
        %1189 = vst.msk [vmem:[%s1185 + $0xc] sm:$0xf] %vm377, %v1156
        %1190 = vst.msk [vmem:[%s1185 + $0x10] sm:$0xf] %vm377, %v1157
        %1191 = vst.msk [vmem:[%s1185 + $0x14] sm:$0xf] %vm377, %v1158
        %1192 = vst.msk [vmem:[%s1185 + $0x18] sm:$0xf] %vm377, %v1159
        %1193 = vst.msk [vmem:[%s1185 + $0x1c] sm:$0xf] %vm377, %v1160
        %1194 = vst.msk [vmem:[%s1185 + $0x20] sm:$0xf] %vm377, %v1161
        %1195 = vst.msk [vmem:[%s1185 + $0x24] sm:$0xf] %vm377, %v1162
        %1196 = vst.msk [vmem:[%s1185 + $0x28] sm:$0xf] %vm377, %v1163
        %1197 = vst.msk [vmem:[%s1185 + $0x2c] sm:$0xf] %vm377, %v1164
        %1198 = vst.msk [vmem:[%s1185 + $0x30] sm:$0xf] %vm377, %v1165
        %1199 = vst.msk [vmem:[%s1185 + $0x34] sm:$0xf] %vm377, %v1166
        %1200 = vst.msk [vmem:[%s1185 + $0x38] sm:$0xf] %vm377, %v1167
        %1201 = vst.msk [vmem:[%s1185 + $0x3c] sm:$0xf] %vm377, %v1168
        %s1202 = scalar_lea.vmem [#allocation5], 640
        %v1203 = vld [vmem:[%s1202] sm:$0xff]
        %v1204 = vld [vmem:[%s1202 + $0x8] sm:$0xff]
        %v1205 = vld [vmem:[%s1202 + $0x10] sm:$0xff]
        %v1206 = vld [vmem:[%s1202 + $0x18] sm:$0xff]
        %v1207 = vld [vmem:[%s1202 + $0x20] sm:$0xff]
        %v1208 = vld [vmem:[%s1202 + $0x28] sm:$0xff]
        %v1209 = vld [vmem:[%s1202 + $0x30] sm:$0xff]
        %v1210 = vld [vmem:[%s1202 + $0x38] sm:$0xff]
        %v1211 = vld [vmem:[%s1202 + $0x40] sm:$0xff]
        %v1212 = vld [vmem:[%s1202 + $0x48] sm:$0xff]
        %v1213 = vld [vmem:[%s1202 + $0x50] sm:$0xff]
        %v1214 = vld [vmem:[%s1202 + $0x58] sm:$0xff]
        %v1215 = vld [vmem:[%s1202 + $0x60] sm:$0xff]
        %v1216 = vld [vmem:[%s1202 + $0x68] sm:$0xff]
        %v1217 = vld [vmem:[%s1202 + $0x70] sm:$0xff]
        %v1218 = vld [vmem:[%s1202 + $0x78] sm:$0xff]
        %s1219 = scalar_lea.vmem %s169, 5 [#allocation2]
        %v1220 = vld [vmem:[%s1219] sm:$0x1]
        %1222 = vset.pattern.permute.xlu0 0
        %1223 = vperm.xlu0 %1222, %v1203
        %v1224 = vpop.permute.xlu0 %1223
        %1227 = vset.pattern.permute.xlu0 0
        %1228 = vperm.xlu0 %1227, %v1204
        %v1229 = vpop.permute.xlu0 %1228
        %1232 = vset.pattern.permute.xlu0 0
        %1233 = vperm.xlu0 %1232, %v1205
        %v1234 = vpop.permute.xlu0 %1233
        %1237 = vset.pattern.permute.xlu0 0
        %1238 = vperm.xlu0 %1237, %v1206
        %v1239 = vpop.permute.xlu0 %1238
        %1242 = vset.pattern.permute.xlu0 0
        %1243 = vperm.xlu0 %1242, %v1207
        %v1244 = vpop.permute.xlu0 %1243
        %1247 = vset.pattern.permute.xlu0 0
        %1248 = vperm.xlu0 %1247, %v1208
        %v1249 = vpop.permute.xlu0 %1248
        %1252 = vset.pattern.permute.xlu0 0
        %1253 = vperm.xlu0 %1252, %v1209
        %v1254 = vpop.permute.xlu0 %1253
        %1257 = vset.pattern.permute.xlu0 0
        %1258 = vperm.xlu0 %1257, %v1210
        %v1259 = vpop.permute.xlu0 %1258
        %1262 = vset.pattern.permute.xlu0 0
        %1263 = vperm.xlu0 %1262, %v1211
        %v1264 = vpop.permute.xlu0 %1263
        %1267 = vset.pattern.permute.xlu0 0
        %1268 = vperm.xlu0 %1267, %v1212
        %v1269 = vpop.permute.xlu0 %1268
        %1272 = vset.pattern.permute.xlu0 0
        %1273 = vperm.xlu0 %1272, %v1213
        %v1274 = vpop.permute.xlu0 %1273
        %1277 = vset.pattern.permute.xlu0 0
        %1278 = vperm.xlu0 %1277, %v1214
        %v1279 = vpop.permute.xlu0 %1278
        %1282 = vset.pattern.permute.xlu0 0
        %1283 = vperm.xlu0 %1282, %v1215
        %v1284 = vpop.permute.xlu0 %1283
        %1287 = vset.pattern.permute.xlu0 0
        %1288 = vperm.xlu0 %1287, %v1216
        %v1289 = vpop.permute.xlu0 %1288
        %1292 = vset.pattern.permute.xlu0 0
        %1293 = vperm.xlu0 %1292, %v1217
        %v1294 = vpop.permute.xlu0 %1293
        %1297 = vset.pattern.permute.xlu0 0
        %1298 = vperm.xlu0 %1297, %v1218
        %v1299 = vpop.permute.xlu0 %1298
        %v1302 = vlaneseq
        %v1303 = vshrl.u32 %v1302, 7
        %v1304 = vsub.s32 0, %v1303
        %v1305 = vrot.slane %v1220, %v1304
        %v1307 = vmul.f32 %v1224, %v1305
        %v1308 = vmul.f32 %v1229, %v1305
        %v1309 = vmul.f32 %v1234, %v1305
        %v1310 = vmul.f32 %v1239, %v1305
        %v1311 = vmul.f32 %v1244, %v1305
        %v1312 = vmul.f32 %v1249, %v1305
        %v1313 = vmul.f32 %v1254, %v1305
        %v1314 = vmul.f32 %v1259, %v1305
        %v1315 = vmul.f32 %v1264, %v1305
        %v1316 = vmul.f32 %v1269, %v1305
        %v1317 = vmul.f32 %v1274, %v1305
        %v1318 = vmul.f32 %v1279, %v1305
        %v1319 = vmul.f32 %v1284, %v1305
        %v1320 = vmul.f32 %v1289, %v1305
        %v1321 = vmul.f32 %v1294, %v1305
        %v1322 = vmul.f32 %v1299, %v1305
        %v1323 = vpack.c.bf16 %v1308, %v1307
        %v1324 = vpack.c.bf16 %v1310, %v1309
        %v1325 = vpack.c.bf16 %v1312, %v1311
        %v1326 = vpack.c.bf16 %v1314, %v1313
        %v1327 = vpack.c.bf16 %v1316, %v1315
        %v1328 = vpack.c.bf16 %v1318, %v1317
        %v1329 = vpack.c.bf16 %v1320, %v1319
        %v1330 = vpack.c.bf16 %v1322, %v1321
        %v1339 = vunpack.c.l.b16 %v1323
        %v1340 = vunpack.c.h.b16 %v1323
        %v1341 = vunpack.c.l.b16 %v1324
        %v1342 = vunpack.c.h.b16 %v1324
        %v1343 = vunpack.c.l.b16 %v1325
        %v1344 = vunpack.c.h.b16 %v1325
        %v1345 = vunpack.c.l.b16 %v1326
        %v1346 = vunpack.c.h.b16 %v1326
        %v1347 = vunpack.c.l.b16 %v1327
        %v1348 = vunpack.c.h.b16 %v1327
        %v1349 = vunpack.c.l.b16 %v1328
        %v1350 = vunpack.c.h.b16 %v1328
        %v1351 = vunpack.c.l.b16 %v1329
        %v1352 = vunpack.c.h.b16 %v1329
        %v1353 = vunpack.c.l.b16 %v1330
        %v1354 = vunpack.c.h.b16 %v1330
        %v1355 = vpack.c.b16 %v1339, %v1339
        %v1356 = vpack.c.b16 %v1340, %v1340
        %v1357 = vpack.c.b16 %v1341, %v1341
        %v1358 = vpack.c.b16 %v1342, %v1342
        %v1359 = vpack.c.b16 %v1343, %v1343
        %v1360 = vpack.c.b16 %v1344, %v1344
        %v1361 = vpack.c.b16 %v1345, %v1345
        %v1362 = vpack.c.b16 %v1346, %v1346
        %v1363 = vpack.c.b16 %v1347, %v1347
        %v1364 = vpack.c.b16 %v1348, %v1348
        %v1365 = vpack.c.b16 %v1349, %v1349
        %v1366 = vpack.c.b16 %v1350, %v1350
        %v1367 = vpack.c.b16 %v1351, %v1351
        %v1368 = vpack.c.b16 %v1352, %v1352
        %v1369 = vpack.c.b16 %v1353, %v1353
        %v1370 = vpack.c.b16 %v1354, %v1354
        %s1387 = scalar_lea.vmem %s193, 320 [#allocation7]
        %1388 = vst.msk [vmem:[%s1387] sm:$0xf] %vm377, %v1355
        %1389 = vst.msk [vmem:[%s1387 + $0x4] sm:$0xf] %vm377, %v1356
        %1390 = vst.msk [vmem:[%s1387 + $0x8] sm:$0xf] %vm377, %v1357
        %1391 = vst.msk [vmem:[%s1387 + $0xc] sm:$0xf] %vm377, %v1358
        %1392 = vst.msk [vmem:[%s1387 + $0x10] sm:$0xf] %vm377, %v1359
        %1393 = vst.msk [vmem:[%s1387 + $0x14] sm:$0xf] %vm377, %v1360
        %1394 = vst.msk [vmem:[%s1387 + $0x18] sm:$0xf] %vm377, %v1361
        %1395 = vst.msk [vmem:[%s1387 + $0x1c] sm:$0xf] %vm377, %v1362
        %1396 = vst.msk [vmem:[%s1387 + $0x20] sm:$0xf] %vm377, %v1363
        %1397 = vst.msk [vmem:[%s1387 + $0x24] sm:$0xf] %vm377, %v1364
        %1398 = vst.msk [vmem:[%s1387 + $0x28] sm:$0xf] %vm377, %v1365
        %1399 = vst.msk [vmem:[%s1387 + $0x2c] sm:$0xf] %vm377, %v1366
        %1400 = vst.msk [vmem:[%s1387 + $0x30] sm:$0xf] %vm377, %v1367
        %1401 = vst.msk [vmem:[%s1387 + $0x34] sm:$0xf] %vm377, %v1368
        %1402 = vst.msk [vmem:[%s1387 + $0x38] sm:$0xf] %vm377, %v1369
        %1403 = vst.msk [vmem:[%s1387 + $0x3c] sm:$0xf] %vm377, %v1370
        %s1404 = scalar_lea.vmem [#allocation5], 768
        %v1405 = vld [vmem:[%s1404] sm:$0xff]
        %v1406 = vld [vmem:[%s1404 + $0x8] sm:$0xff]
        %v1407 = vld [vmem:[%s1404 + $0x10] sm:$0xff]
        %v1408 = vld [vmem:[%s1404 + $0x18] sm:$0xff]
        %v1409 = vld [vmem:[%s1404 + $0x20] sm:$0xff]
        %v1410 = vld [vmem:[%s1404 + $0x28] sm:$0xff]
        %v1411 = vld [vmem:[%s1404 + $0x30] sm:$0xff]
        %v1412 = vld [vmem:[%s1404 + $0x38] sm:$0xff]
        %v1413 = vld [vmem:[%s1404 + $0x40] sm:$0xff]
        %v1414 = vld [vmem:[%s1404 + $0x48] sm:$0xff]
        %v1415 = vld [vmem:[%s1404 + $0x50] sm:$0xff]
        %v1416 = vld [vmem:[%s1404 + $0x58] sm:$0xff]
        %v1417 = vld [vmem:[%s1404 + $0x60] sm:$0xff]
        %v1418 = vld [vmem:[%s1404 + $0x68] sm:$0xff]
        %v1419 = vld [vmem:[%s1404 + $0x70] sm:$0xff]
        %v1420 = vld [vmem:[%s1404 + $0x78] sm:$0xff]
        %s1421 = scalar_lea.vmem %s169, 6 [#allocation2]
        %v1422 = vld [vmem:[%s1421] sm:$0x1]
        %1424 = vset.pattern.permute.xlu0 0
        %1425 = vperm.xlu0 %1424, %v1405
        %v1426 = vpop.permute.xlu0 %1425
        %1429 = vset.pattern.permute.xlu0 0
        %1430 = vperm.xlu0 %1429, %v1406
        %v1431 = vpop.permute.xlu0 %1430
        %1434 = vset.pattern.permute.xlu0 0
        %1435 = vperm.xlu0 %1434, %v1407
        %v1436 = vpop.permute.xlu0 %1435
        %1439 = vset.pattern.permute.xlu0 0
        %1440 = vperm.xlu0 %1439, %v1408
        %v1441 = vpop.permute.xlu0 %1440
        %1444 = vset.pattern.permute.xlu0 0
        %1445 = vperm.xlu0 %1444, %v1409
        %v1446 = vpop.permute.xlu0 %1445
        %1449 = vset.pattern.permute.xlu0 0
        %1450 = vperm.xlu0 %1449, %v1410
        %v1451 = vpop.permute.xlu0 %1450
        %1454 = vset.pattern.permute.xlu0 0
        %1455 = vperm.xlu0 %1454, %v1411
        %v1456 = vpop.permute.xlu0 %1455
        %1459 = vset.pattern.permute.xlu0 0
        %1460 = vperm.xlu0 %1459, %v1412
        %v1461 = vpop.permute.xlu0 %1460
        %1464 = vset.pattern.permute.xlu0 0
        %1465 = vperm.xlu0 %1464, %v1413
        %v1466 = vpop.permute.xlu0 %1465
        %1469 = vset.pattern.permute.xlu0 0
        %1470 = vperm.xlu0 %1469, %v1414
        %v1471 = vpop.permute.xlu0 %1470
        %1474 = vset.pattern.permute.xlu0 0
        %1475 = vperm.xlu0 %1474, %v1415
        %v1476 = vpop.permute.xlu0 %1475
        %1479 = vset.pattern.permute.xlu0 0
        %1480 = vperm.xlu0 %1479, %v1416
        %v1481 = vpop.permute.xlu0 %1480
        %1484 = vset.pattern.permute.xlu0 0
        %1485 = vperm.xlu0 %1484, %v1417
        %v1486 = vpop.permute.xlu0 %1485
        %1489 = vset.pattern.permute.xlu0 0
        %1490 = vperm.xlu0 %1489, %v1418
        %v1491 = vpop.permute.xlu0 %1490
        %1494 = vset.pattern.permute.xlu0 0
        %1495 = vperm.xlu0 %1494, %v1419
        %v1496 = vpop.permute.xlu0 %1495
        %1499 = vset.pattern.permute.xlu0 0
        %1500 = vperm.xlu0 %1499, %v1420
        %v1501 = vpop.permute.xlu0 %1500
        %v1504 = vlaneseq
        %v1505 = vshrl.u32 %v1504, 7
        %v1506 = vsub.s32 0, %v1505
        %v1507 = vrot.slane %v1422, %v1506
        %v1509 = vmul.f32 %v1426, %v1507
        %v1510 = vmul.f32 %v1431, %v1507
        %v1511 = vmul.f32 %v1436, %v1507
        %v1512 = vmul.f32 %v1441, %v1507
        %v1513 = vmul.f32 %v1446, %v1507
        %v1514 = vmul.f32 %v1451, %v1507
        %v1515 = vmul.f32 %v1456, %v1507
        %v1516 = vmul.f32 %v1461, %v1507
        %v1517 = vmul.f32 %v1466, %v1507
        %v1518 = vmul.f32 %v1471, %v1507
        %v1519 = vmul.f32 %v1476, %v1507
        %v1520 = vmul.f32 %v1481, %v1507
        %v1521 = vmul.f32 %v1486, %v1507
        %v1522 = vmul.f32 %v1491, %v1507
        %v1523 = vmul.f32 %v1496, %v1507
        %v1524 = vmul.f32 %v1501, %v1507
        %v1525 = vpack.c.bf16 %v1510, %v1509
        %v1526 = vpack.c.bf16 %v1512, %v1511
        %v1527 = vpack.c.bf16 %v1514, %v1513
        %v1528 = vpack.c.bf16 %v1516, %v1515
        %v1529 = vpack.c.bf16 %v1518, %v1517
        %v1530 = vpack.c.bf16 %v1520, %v1519
        %v1531 = vpack.c.bf16 %v1522, %v1521
        %v1532 = vpack.c.bf16 %v1524, %v1523
        %v1541 = vunpack.c.l.b16 %v1525
        %v1542 = vunpack.c.h.b16 %v1525
        %v1543 = vunpack.c.l.b16 %v1526
        %v1544 = vunpack.c.h.b16 %v1526
        %v1545 = vunpack.c.l.b16 %v1527
        %v1546 = vunpack.c.h.b16 %v1527
        %v1547 = vunpack.c.l.b16 %v1528
        %v1548 = vunpack.c.h.b16 %v1528
        %v1549 = vunpack.c.l.b16 %v1529
        %v1550 = vunpack.c.h.b16 %v1529
        %v1551 = vunpack.c.l.b16 %v1530
        %v1552 = vunpack.c.h.b16 %v1530
        %v1553 = vunpack.c.l.b16 %v1531
        %v1554 = vunpack.c.h.b16 %v1531
        %v1555 = vunpack.c.l.b16 %v1532
        %v1556 = vunpack.c.h.b16 %v1532
        %v1557 = vpack.c.b16 %v1541, %v1541
        %v1558 = vpack.c.b16 %v1542, %v1542
        %v1559 = vpack.c.b16 %v1543, %v1543
        %v1560 = vpack.c.b16 %v1544, %v1544
        %v1561 = vpack.c.b16 %v1545, %v1545
        %v1562 = vpack.c.b16 %v1546, %v1546
        %v1563 = vpack.c.b16 %v1547, %v1547
        %v1564 = vpack.c.b16 %v1548, %v1548
        %v1565 = vpack.c.b16 %v1549, %v1549
        %v1566 = vpack.c.b16 %v1550, %v1550
        %v1567 = vpack.c.b16 %v1551, %v1551
        %v1568 = vpack.c.b16 %v1552, %v1552
        %v1569 = vpack.c.b16 %v1553, %v1553
        %v1570 = vpack.c.b16 %v1554, %v1554
        %v1571 = vpack.c.b16 %v1555, %v1555
        %v1572 = vpack.c.b16 %v1556, %v1556
        %s1589 = scalar_lea.vmem %s193, 384 [#allocation7]
        %1590 = vst.msk [vmem:[%s1589] sm:$0xf] %vm377, %v1557
        %1591 = vst.msk [vmem:[%s1589 + $0x4] sm:$0xf] %vm377, %v1558
        %1592 = vst.msk [vmem:[%s1589 + $0x8] sm:$0xf] %vm377, %v1559
        %1593 = vst.msk [vmem:[%s1589 + $0xc] sm:$0xf] %vm377, %v1560
        %1594 = vst.msk [vmem:[%s1589 + $0x10] sm:$0xf] %vm377, %v1561
        %1595 = vst.msk [vmem:[%s1589 + $0x14] sm:$0xf] %vm377, %v1562
        %1596 = vst.msk [vmem:[%s1589 + $0x18] sm:$0xf] %vm377, %v1563
        %1597 = vst.msk [vmem:[%s1589 + $0x1c] sm:$0xf] %vm377, %v1564
        %1598 = vst.msk [vmem:[%s1589 + $0x20] sm:$0xf] %vm377, %v1565
        %1599 = vst.msk [vmem:[%s1589 + $0x24] sm:$0xf] %vm377, %v1566
        %1600 = vst.msk [vmem:[%s1589 + $0x28] sm:$0xf] %vm377, %v1567
        %1601 = vst.msk [vmem:[%s1589 + $0x2c] sm:$0xf] %vm377, %v1568
        %1602 = vst.msk [vmem:[%s1589 + $0x30] sm:$0xf] %vm377, %v1569
        %1603 = vst.msk [vmem:[%s1589 + $0x34] sm:$0xf] %vm377, %v1570
        %1604 = vst.msk [vmem:[%s1589 + $0x38] sm:$0xf] %vm377, %v1571
        %1605 = vst.msk [vmem:[%s1589 + $0x3c] sm:$0xf] %vm377, %v1572
        %s1606 = scalar_lea.vmem [#allocation5], 896
        %v1607 = vld [vmem:[%s1606] sm:$0xff]
        %v1608 = vld [vmem:[%s1606 + $0x8] sm:$0xff]
        %v1609 = vld [vmem:[%s1606 + $0x10] sm:$0xff]
        %v1610 = vld [vmem:[%s1606 + $0x18] sm:$0xff]
        %v1611 = vld [vmem:[%s1606 + $0x20] sm:$0xff]
        %v1612 = vld [vmem:[%s1606 + $0x28] sm:$0xff]
        %v1613 = vld [vmem:[%s1606 + $0x30] sm:$0xff]
        %v1614 = vld [vmem:[%s1606 + $0x38] sm:$0xff]
        %v1615 = vld [vmem:[%s1606 + $0x40] sm:$0xff]
        %v1616 = vld [vmem:[%s1606 + $0x48] sm:$0xff]
        %v1617 = vld [vmem:[%s1606 + $0x50] sm:$0xff]
        %v1618 = vld [vmem:[%s1606 + $0x58] sm:$0xff]
        %v1619 = vld [vmem:[%s1606 + $0x60] sm:$0xff]
        %v1620 = vld [vmem:[%s1606 + $0x68] sm:$0xff]
        %v1621 = vld [vmem:[%s1606 + $0x70] sm:$0xff]
        %v1622 = vld [vmem:[%s1606 + $0x78] sm:$0xff]
        %s1623 = scalar_lea.vmem %s169, 7 [#allocation2]
        %v1624 = vld [vmem:[%s1623] sm:$0x1]
        %1626 = vset.pattern.permute.xlu0 0
        %1627 = vperm.xlu0 %1626, %v1607
        %v1628 = vpop.permute.xlu0 %1627
        %1631 = vset.pattern.permute.xlu0 0
        %1632 = vperm.xlu0 %1631, %v1608
        %v1633 = vpop.permute.xlu0 %1632
        %1636 = vset.pattern.permute.xlu0 0
        %1637 = vperm.xlu0 %1636, %v1609
        %v1638 = vpop.permute.xlu0 %1637
        %1641 = vset.pattern.permute.xlu0 0
        %1642 = vperm.xlu0 %1641, %v1610
        %v1643 = vpop.permute.xlu0 %1642
        %1646 = vset.pattern.permute.xlu0 0
        %1647 = vperm.xlu0 %1646, %v1611
        %v1648 = vpop.permute.xlu0 %1647
        %1651 = vset.pattern.permute.xlu0 0
        %1652 = vperm.xlu0 %1651, %v1612
        %v1653 = vpop.permute.xlu0 %1652
        %1656 = vset.pattern.permute.xlu0 0
        %1657 = vperm.xlu0 %1656, %v1613
        %v1658 = vpop.permute.xlu0 %1657
        %1661 = vset.pattern.permute.xlu0 0
        %1662 = vperm.xlu0 %1661, %v1614
        %v1663 = vpop.permute.xlu0 %1662
        %1666 = vset.pattern.permute.xlu0 0
        %1667 = vperm.xlu0 %1666, %v1615
        %v1668 = vpop.permute.xlu0 %1667
        %1671 = vset.pattern.permute.xlu0 0
        %1672 = vperm.xlu0 %1671, %v1616
        %v1673 = vpop.permute.xlu0 %1672
        %1676 = vset.pattern.permute.xlu0 0
        %1677 = vperm.xlu0 %1676, %v1617
        %v1678 = vpop.permute.xlu0 %1677
        %1681 = vset.pattern.permute.xlu0 0
        %1682 = vperm.xlu0 %1681, %v1618
        %v1683 = vpop.permute.xlu0 %1682
        %1686 = vset.pattern.permute.xlu0 0
        %1687 = vperm.xlu0 %1686, %v1619
        %v1688 = vpop.permute.xlu0 %1687
        %1691 = vset.pattern.permute.xlu0 0
        %1692 = vperm.xlu0 %1691, %v1620
        %v1693 = vpop.permute.xlu0 %1692
        %1696 = vset.pattern.permute.xlu0 0
        %1697 = vperm.xlu0 %1696, %v1621
        %v1698 = vpop.permute.xlu0 %1697
        %1701 = vset.pattern.permute.xlu0 0
        %1702 = vperm.xlu0 %1701, %v1622
        %v1703 = vpop.permute.xlu0 %1702
        %v1706 = vlaneseq
        %v1707 = vshrl.u32 %v1706, 7
        %v1708 = vsub.s32 0, %v1707
        %v1709 = vrot.slane %v1624, %v1708
        %v1711 = vmul.f32 %v1628, %v1709
        %v1712 = vmul.f32 %v1633, %v1709
        %v1713 = vmul.f32 %v1638, %v1709
        %v1714 = vmul.f32 %v1643, %v1709
        %v1715 = vmul.f32 %v1648, %v1709
        %v1716 = vmul.f32 %v1653, %v1709
        %v1717 = vmul.f32 %v1658, %v1709
        %v1718 = vmul.f32 %v1663, %v1709
        %v1719 = vmul.f32 %v1668, %v1709
        %v1720 = vmul.f32 %v1673, %v1709
        %v1721 = vmul.f32 %v1678, %v1709
        %v1722 = vmul.f32 %v1683, %v1709
        %v1723 = vmul.f32 %v1688, %v1709
        %v1724 = vmul.f32 %v1693, %v1709
        %v1725 = vmul.f32 %v1698, %v1709
        %v1726 = vmul.f32 %v1703, %v1709
        %v1727 = vpack.c.bf16 %v1712, %v1711
        %v1728 = vpack.c.bf16 %v1714, %v1713
        %v1729 = vpack.c.bf16 %v1716, %v1715
        %v1730 = vpack.c.bf16 %v1718, %v1717
        %v1731 = vpack.c.bf16 %v1720, %v1719
        %v1732 = vpack.c.bf16 %v1722, %v1721
        %v1733 = vpack.c.bf16 %v1724, %v1723
        %v1734 = vpack.c.bf16 %v1726, %v1725
        %v1743 = vunpack.c.l.b16 %v1727
        %v1744 = vunpack.c.h.b16 %v1727
        %v1745 = vunpack.c.l.b16 %v1728
        %v1746 = vunpack.c.h.b16 %v1728
        %v1747 = vunpack.c.l.b16 %v1729
        %v1748 = vunpack.c.h.b16 %v1729
        %v1749 = vunpack.c.l.b16 %v1730
        %v1750 = vunpack.c.h.b16 %v1730
        %v1751 = vunpack.c.l.b16 %v1731
        %v1752 = vunpack.c.h.b16 %v1731
        %v1753 = vunpack.c.l.b16 %v1732
        %v1754 = vunpack.c.h.b16 %v1732
        %v1755 = vunpack.c.l.b16 %v1733
        %v1756 = vunpack.c.h.b16 %v1733
        %v1757 = vunpack.c.l.b16 %v1734
        %v1758 = vunpack.c.h.b16 %v1734
        %v1759 = vpack.c.b16 %v1743, %v1743
        %v1760 = vpack.c.b16 %v1744, %v1744
        %v1761 = vpack.c.b16 %v1745, %v1745
        %v1762 = vpack.c.b16 %v1746, %v1746
        %v1763 = vpack.c.b16 %v1747, %v1747
        %v1764 = vpack.c.b16 %v1748, %v1748
        %v1765 = vpack.c.b16 %v1749, %v1749
        %v1766 = vpack.c.b16 %v1750, %v1750
        %v1767 = vpack.c.b16 %v1751, %v1751
        %v1768 = vpack.c.b16 %v1752, %v1752
        %v1769 = vpack.c.b16 %v1753, %v1753
        %v1770 = vpack.c.b16 %v1754, %v1754
        %v1771 = vpack.c.b16 %v1755, %v1755
        %v1772 = vpack.c.b16 %v1756, %v1756
        %v1773 = vpack.c.b16 %v1757, %v1757
        %v1774 = vpack.c.b16 %v1758, %v1758
        %s1791 = scalar_lea.vmem %s193, 448 [#allocation7]
        %1792 = vst.msk [vmem:[%s1791] sm:$0xf] %vm377, %v1759
        %1793 = vst.msk [vmem:[%s1791 + $0x4] sm:$0xf] %vm377, %v1760
        %1794 = vst.msk [vmem:[%s1791 + $0x8] sm:$0xf] %vm377, %v1761
        %1795 = vst.msk [vmem:[%s1791 + $0xc] sm:$0xf] %vm377, %v1762
        %1796 = vst.msk [vmem:[%s1791 + $0x10] sm:$0xf] %vm377, %v1763
        %1797 = vst.msk [vmem:[%s1791 + $0x14] sm:$0xf] %vm377, %v1764
        %1798 = vst.msk [vmem:[%s1791 + $0x18] sm:$0xf] %vm377, %v1765
        %1799 = vst.msk [vmem:[%s1791 + $0x1c] sm:$0xf] %vm377, %v1766
        %1800 = vst.msk [vmem:[%s1791 + $0x20] sm:$0xf] %vm377, %v1767
        %1801 = vst.msk [vmem:[%s1791 + $0x24] sm:$0xf] %vm377, %v1768
        %1802 = vst.msk [vmem:[%s1791 + $0x28] sm:$0xf] %vm377, %v1769
        %1803 = vst.msk [vmem:[%s1791 + $0x2c] sm:$0xf] %vm377, %v1770
        %1804 = vst.msk [vmem:[%s1791 + $0x30] sm:$0xf] %vm377, %v1771
        %1805 = vst.msk [vmem:[%s1791 + $0x34] sm:$0xf] %vm377, %v1772
        %1806 = vst.msk [vmem:[%s1791 + $0x38] sm:$0xf] %vm377, %v1773
        %1807 = vst.msk [vmem:[%s1791 + $0x3c] sm:$0xf] %vm377, %v1774
        %s1808 = sand.u32 %s91, 1
        %s1809 = scalar_lea.sflag [#allocation4], %s1808
        %s1810 = sand.u32 %s91, 1
        %s1811 = smul.addr %s1810, 512
        %s1812 = scalar_lea.vmem [#allocation7], %s1811
        // Predicated region
        $region37: #{dablock_forward.7} parent=27 // pred_check
          %p1813 = pneg %p101
        $region38: #{dablock_forward.7} parent=27 // pred_check_branch
          %1815 = sbr.rel (%p1813) target = $region40
        $region39: #{dablock_forward.7} parent=27 // pred_region
          %s1817 = ssub.s32 8192, 8192
          %1818 = vsyncadd %s1809, %s1817
          %s1819 = smul.addr %s25, 128
          %s1820 = sadd.s32 %s24, %s1819
          %s1821 = smul.addr %s1820, 64
          %s1822 = scalar_lea.hbm %s2, %s1821
          %s1823 = sshll.u32 %s1812, 4
          %s1824 = int_to_ptr.vmem [resolvable:$true] %s1823
          %1829 = dma.vmem_to_hbm [thread:$0]  %s1824, 8192, %s1822, %s1809, 64, 64, 4
        $region40: #{dablock_forward.7} parent=27 // pred_fallthru
          _
      $region28: #{dablock_forward.7} parent=5 // pred_fallthru
        _
      %p1830 = scmp.le.s32.totalorder 2, %s15
      // Predicated region
      $region41: #{dablock_forward.7} parent=5 // pred_check
        %p1831 = pneg %p1830
      $region42: #{dablock_forward.7} parent=5 // pred_check_branch
        %1833 = sbr.rel (%p1831) target = $region44
      $region43: #{dablock_forward.7} parent=5 // pred_region
        %s1834 = ssub.s32 %s15, 2
        // Predicated region
        $region45: #{dablock_forward.7} parent=43 // pred_check
          %p1835 = pneg %p107
        $region46: #{dablock_forward.7} parent=43 // pred_check_branch
          %1837 = sbr.rel (%p1835) target = $region48
        $region47: #{dablock_forward.7} parent=43 // pred_region
          %s1838 = sand.u32 %s92, 1
          %s1839 = scalar_lea.sflag [#allocation4], %s1838
          %s1840 = sand.u32 %s92, 1
          %s1841 = smul.addr %s1840, 512
          %s1842 = scalar_lea.vmem [#allocation7], %s1841
          %1843 = dma.done %s1839, 8192
        $region48: #{dablock_forward.7} parent=43 // pred_fallthru
          _
      $region44: #{dablock_forward.7} parent=5 // pred_fallthru
        _
    $region6: #{dablock_forward.7} parent=1 // loop_footer
      %s19 = sadd.s32 1, %s15
    $region7: #{dablock_forward.7} parent=1 // loop_footer_branch
      %14 = sbr.rel target = $region3
    $region8: #{dablock_forward.7} parent=1 // loop_exit
      _
    %1844 = vsyncpa [#allocation3], 1
    %s1845 = scalar_lea.sflag [#allocation3], 1
    %1846 = vsyncpa %s1845, 1
    %1847 = vsyncpa [#allocation6], 1
    %1848 = vsyncpa [#allocation4], 1
    %s1849 = scalar_lea.sflag [#allocation4], 1
    %1850 = vsyncpa %s1849, 1

// kernel: dablock_forward.8
$region0: #{dablock_forward.8}
  #allocation0 [shape = 'u32[]', space=smem, size = 0x4, offset = 0x4, fixed_abs, tag = 'smem constant byte address 0x4 - core index']
  #allocation1 [shape = 'u32[144,128]{1,0:T(1,128)}', space=vmem, size = 0x12000, scoped, tag = 'internal scratch']
  #allocation2 [shape = 'f32[256,16]{1,0:T(8,128)}', space=vmem, size = 0x20000, scoped, tag = 'scratch operand']
  %s0 = inlined_call_operand.hbm [shape: f32[2,8,64,256], index: 0, kind: input, shape index: {}]
  %s1 = inlined_call_operand.hbm [shape: bf16[2,8,128,16], index: 1, kind: input, shape index: {}]
  %s2 = inlined_call_operand.hbm [shape: f32[2,8,2,16], index: 2, kind: input, shape index: {}]
  %s3 = inlined_call_operand.hbm [shape: f32[256,2], index: 3, kind: input, shape index: {}]
  %s4 = inlined_call_operand.hbm [shape: f32[2,7], index: 4, kind: input, shape index: {}]
  %s5 = inlined_call_operand.hbm [shape: bf16[2,8,64,256], index: 5, kind: output, shape index: {}]
  %s6 = sld [smem:[#allocation0]]
  $region80: #{dablock_forward.8} parent=0
    _
  %s8 = ssub.s32 1, %s6
  %s9 = scalar_select 0, %s8, %s6
  $region1: #{dablock_forward.8} parent=0
    #allocation3 [shape = 'u8[131072]{0}', space=vmem, size = 0x20000, scoped, tag = 'input window, operand 0']
    #allocation4 [shape = 's32[2]{0}', space=sflag, size = 0x8, scoped, tag = 'scoped memory for dablock_forward.8']
    #allocation5 [shape = 's32[2]{0}', space=sflag, size = 0x8, scoped, tag = 'scoped memory for dablock_forward.8']
    #allocation6 [shape = 'u8[65536]{0}', space=vmem, size = 0x10000, scoped, tag = 'input window, operand 1']
    #allocation7 [shape = 's32[2]{0}', space=sflag, size = 0x8, scoped, tag = 'scoped memory for dablock_forward.8']
    #allocation8 [shape = 'u8[2048]{0}', space=vmem, size = 0x800, scoped, tag = 'input window, operand 2']
    #allocation9 [shape = 'u8[131072]{0}', space=vmem, size = 0x20000, scoped, tag = 'input window, operand 3, single buffered']
    #allocation10 [shape = 's32[1]{0}', space=sflag, size = 0x4, scoped, tag = 'scoped memory for dablock_forward.8']
    #allocation11 [shape = 'u8[1024]{0}', space=vmem, size = 0x400, scoped, tag = 'input window, operand 4, single buffered']
    #allocation12 [shape = 'u8[65536]{0}', space=vmem, size = 0x10000, scoped, tag = 'output window, operand 0']
    %10 = vsyncpa [#allocation4], 0
    %s11 = scalar_lea.sflag [#allocation4], 1
    %12 = vsyncpa %s11, 0
    %13 = vsyncpa [#allocation7], 0
    %s14 = scalar_lea.sflag [#allocation7], 1
    %15 = vsyncpa %s14, 0
    %16 = vsyncpa [#allocation10], 0
    %17 = vsyncpa [#allocation5], 0
    %s18 = scalar_lea.sflag [#allocation5], 1
    %19 = vsyncpa %s18, 0
    loop: start=0, step=1, limit=18
    $region2: #{dablock_forward.8} parent=1 // loop_pre_header
      _
    $region3: #{dablock_forward.8} parent=1 // loop_header
      %s21 = sphi 0, %s25
      %p22 = scmp.ge.s32.totalorder %s21, 18
      %s28 = sphi 0, %s47
      %s29 = sphi 0, %s43
      %s30 = sphi 0, %s39
      %s31 = sphi 0, %s28
      %s32 = sphi 0, %s29
      %s33 = sphi 0, %s30
      %s34 = sphi 0, %s31
      %s35 = sphi 0, %s32
      %s36 = sphi 0, %s33
      %s54 = sphi 0, %s56
      %s57 = sphi 0, %s54
      %s58 = sphi 0, %s57
      %s74 = sphi 0, %s58
      %s82 = sphi 0, %s84
      %s85 = sphi 0, %s82
      %s86 = sphi 0, %s85
      %s102 = sphi 0, %s86
      %s110 = sphi 0, %s112
      %s113 = sphi 0, %s110
      %s114 = sphi 0, %s113
      %s130 = sphi 0, %s114
      %s136 = sphi 0, %s138
      %s139 = sphi 0, %s136
      %s140 = sphi 0, %s139
      %s156 = sphi 0, %s140
      %s160 = sphi 0, %s160
      %s162 = sphi 0, %s160
      %s163 = sphi 0, %s162
      %s177 = sphi 0, %s163
      %s187 = sphi 0, %s189
      %s190 = sphi 0, %s187
      %s191 = sphi 0, %s190
      %s207 = sphi 0, %s191
    $region4: #{dablock_forward.8} parent=1 // loop_header_branch
      %24 = sbr.rel (%p22) target = $region8
    $region5: #{dablock_forward.8} parent=1 // loop_body
      %s26 = ssub.s32 %s21, 1
      %s27 = ssub.s32 %s21, 2
      %s37 = sadd.s32 1, %s30
      %p38 = scmp.ge.s32.totalorder %s37, 1
      %s39 = scalar_select %p38, 0, %s37
      %s40 = sadd.s32 1, %s29
      %s41 = scalar_select %p38, %s40, %s29
      %p42 = scmp.ge.s32.totalorder %s41, 2
      %s43 = scalar_select %p42, 0, %s41
      %s44 = sadd.s32 1, %s28
      %s45 = scalar_select %p42, %s44, %s28
      %p46 = scmp.ge.s32.totalorder %s45, 8
      %s47 = scalar_select %p46, 0, %s45
      %s48 = ssub.s32 %s29, %s43
      %s49 = ssub.s32 %s28, %s47
      %s50 = sor.u32 %s48, %s49
      %s51 = ssub.s32 %s30, %s39
      %s52 = sor.u32 %s50, %s51
      %p53 = scmp.eq.s32.totalorder %s52, 0
      %s55 = sadd.s32 %s54, 1
      %s56 = scalar_select %p53, %s54, %s55
      %p59 = pneg %p53
      %p60 = scmp.eq.s32.totalorder %s21, 15
      %p61 = por %p59, %p60
      %p62 = scmp.ne.s32.totalorder %s54, %s57
      %p63 = scmp.eq.s32.totalorder %s21, 0
      %p64 = por %p62, %p63
      %p65 = scmp.ne.s32.totalorder %s54, %s57
      %p66 = scmp.eq.s32.totalorder %s26, 15
      %p67 = por %p65, %p66
      %p68 = scmp.ne.s32.totalorder %s57, %s58
      %p69 = scmp.eq.s32.totalorder %s26, 0
      %p70 = por %p68, %p69
      %p71 = scmp.ne.s32.totalorder %s57, %s58
      %p72 = scmp.eq.s32.totalorder %s27, 15
      %p73 = por %p71, %p72
      %p75 = scmp.ne.s32.totalorder %s58, %s74
      %p76 = scmp.eq.s32.totalorder %s27, 0
      %p77 = por %p75, %p76
      %s78 = ssub.s32 %s29, %s43
      %s79 = ssub.s32 %s28, %s47
      %s80 = sor.u32 %s78, %s79
      %p81 = scmp.eq.s32.totalorder %s80, 0
      %s83 = sadd.s32 %s82, 1
      %s84 = scalar_select %p81, %s82, %s83
      %p87 = pneg %p81
      %p88 = scmp.eq.s32.totalorder %s21, 15
      %p89 = por %p87, %p88
      %p90 = scmp.ne.s32.totalorder %s82, %s85
      %p91 = scmp.eq.s32.totalorder %s21, 0
      %p92 = por %p90, %p91
      %p93 = scmp.ne.s32.totalorder %s82, %s85
      %p94 = scmp.eq.s32.totalorder %s26, 15
      %p95 = por %p93, %p94
      %p96 = scmp.ne.s32.totalorder %s85, %s86
      %p97 = scmp.eq.s32.totalorder %s26, 0
      %p98 = por %p96, %p97
      %p99 = scmp.ne.s32.totalorder %s85, %s86
      %p100 = scmp.eq.s32.totalorder %s27, 15
      %p101 = por %p99, %p100
      %p103 = scmp.ne.s32.totalorder %s86, %s102
      %p104 = scmp.eq.s32.totalorder %s27, 0
      %p105 = por %p103, %p104
      %s106 = ssub.s32 %s29, %s43
      %s107 = ssub.s32 %s28, %s47
      %s108 = sor.u32 %s106, %s107
      %p109 = scmp.eq.s32.totalorder %s108, 0
      %s111 = sadd.s32 %s110, 1
      %s112 = scalar_select %p109, %s110, %s111
      %p115 = pneg %p109
      %p116 = scmp.eq.s32.totalorder %s21, 15
      %p117 = por %p115, %p116
      %p118 = scmp.ne.s32.totalorder %s110, %s113
      %p119 = scmp.eq.s32.totalorder %s21, 0
      %p120 = por %p118, %p119
      %p121 = scmp.ne.s32.totalorder %s110, %s113
      %p122 = scmp.eq.s32.totalorder %s26, 15
      %p123 = por %p121, %p122
      %p124 = scmp.ne.s32.totalorder %s113, %s114
      %p125 = scmp.eq.s32.totalorder %s26, 0
      %p126 = por %p124, %p125
      %p127 = scmp.ne.s32.totalorder %s113, %s114
      %p128 = scmp.eq.s32.totalorder %s27, 15
      %p129 = por %p127, %p128
      %p131 = scmp.ne.s32.totalorder %s114, %s130
      %p132 = scmp.eq.s32.totalorder %s27, 0
      %p133 = por %p131, %p132
      %s134 = ssub.s32 %s30, %s39
      %p135 = scmp.eq.s32.totalorder %s134, 0
      %s137 = sadd.s32 %s136, 1
      %s138 = scalar_select %p135, %s136, %s137
      %p141 = pneg %p135
      %p142 = scmp.eq.s32.totalorder %s21, 15
      %p143 = por %p141, %p142
      %p144 = scmp.ne.s32.totalorder %s136, %s139
      %p145 = scmp.eq.s32.totalorder %s21, 0
      %p146 = por %p144, %p145
      %p147 = scmp.ne.s32.totalorder %s136, %s139
      %p148 = scmp.eq.s32.totalorder %s26, 15
      %p149 = por %p147, %p148
      %p150 = scmp.ne.s32.totalorder %s139, %s140
      %p151 = scmp.eq.s32.totalorder %s26, 0
      %p152 = por %p150, %p151
      %p153 = scmp.ne.s32.totalorder %s139, %s140
      %p154 = scmp.eq.s32.totalorder %s27, 15
      %p155 = por %p153, %p154
      %p157 = scmp.ne.s32.totalorder %s140, %s156
      %p158 = scmp.eq.s32.totalorder %s27, 0
      %p159 = por %p157, %p158
      %s161 = sadd.s32 %s160, 1
      %p164 = scmp.eq.s32.totalorder %s21, 15
      %p165 = scmp.ne.s32.totalorder %s160, %s162
      %p166 = scmp.eq.s32.totalorder %s21, 0
      %p167 = por %p165, %p166
      %p168 = scmp.ne.s32.totalorder %s160, %s162
      %p169 = scmp.eq.s32.totalorder %s26, 15
      %p170 = por %p168, %p169
      %p171 = scmp.ne.s32.totalorder %s162, %s163
      %p172 = scmp.eq.s32.totalorder %s26, 0
      %p173 = por %p171, %p172
      %p174 = scmp.ne.s32.totalorder %s162, %s163
      %p175 = scmp.eq.s32.totalorder %s27, 15
      %p176 = por %p174, %p175
      %p178 = scmp.ne.s32.totalorder %s163, %s177
      %p179 = scmp.eq.s32.totalorder %s27, 0
      %p180 = por %p178, %p179
      %s181 = ssub.s32 %s29, %s43
      %s182 = ssub.s32 %s28, %s47
      %s183 = sor.u32 %s181, %s182
      %s184 = ssub.s32 %s30, %s39
      %s185 = sor.u32 %s183, %s184
      %p186 = scmp.eq.s32.totalorder %s185, 0
      %s188 = sadd.s32 %s187, 1
      %s189 = scalar_select %p186, %s187, %s188
      %p192 = pneg %p186
      %p193 = scmp.eq.s32.totalorder %s21, 15
      %p194 = por %p192, %p193
      %p195 = scmp.ne.s32.totalorder %s187, %s190
      %p196 = scmp.eq.s32.totalorder %s21, 0
      %p197 = por %p195, %p196
      %p198 = scmp.ne.s32.totalorder %s187, %s190
      %p199 = scmp.eq.s32.totalorder %s26, 15
      %p200 = por %p198, %p199
      %p201 = scmp.ne.s32.totalorder %s190, %s191
      %p202 = scmp.eq.s32.totalorder %s26, 0
      %p203 = por %p201, %p202
      %p204 = scmp.ne.s32.totalorder %s190, %s191
      %p205 = scmp.eq.s32.totalorder %s27, 15
      %p206 = por %p204, %p205
      %p208 = scmp.ne.s32.totalorder %s191, %s207
      %p209 = scmp.eq.s32.totalorder %s27, 0
      %p210 = por %p208, %p209
      %p211 = scmp.le.s32.totalorder 1, %s21
      %p212 = scmp.lt.s32.totalorder %s21, 17
      %p213 = pnand %p211, %p212
      %p214 = pneg %p213
      // Predicated region
      $region9: #{dablock_forward.8} parent=5 // pred_check
        _
      $region10: #{dablock_forward.8} parent=5 // pred_check_branch
        %216 = sbr.rel (%p213) target = $region12
      $region11: #{dablock_forward.8} parent=5 // pred_region
        %s217 = ssub.s32 %s21, 1
        // Predicated region
        $region13: #{dablock_forward.8} parent=11 // pred_check
          %p218 = pneg %p152
        $region14: #{dablock_forward.8} parent=11 // pred_check_branch
          %220 = sbr.rel (%p218) target = $region16
        $region15: #{dablock_forward.8} parent=11 // pred_region
          %s221 = smul.u32 32, %s33
          %s223 = ssub.s32 4096, 4096
          %224 = vsyncadd [#allocation10], %s223
          %s225 = smul.addr %s221, 128
          %s226 = scalar_lea.hbm %s3, %s225
          %s227 = sshll.u32 [#allocation9], 4
          %s228 = int_to_ptr.vmem [resolvable:$true] %s227
          %233 = dma.hbm_to_vmem [thread:$0]  %s226, 4096, %s228, [#allocation10], 128, 128, 8
        $region16: #{dablock_forward.8} parent=11 // pred_fallthru
          _
        // Predicated region
        $region17: #{dablock_forward.8} parent=11 // pred_check
          %p234 = pneg %p173
        $region18: #{dablock_forward.8} parent=11 // pred_check_branch
          %236 = sbr.rel (%p234) target = $region20
        $region19: #{dablock_forward.8} parent=11 // pred_region
          %s238 = ssub.s32 32, 32
          %239 = vsyncadd [#allocation10], %s238
          %s241 = sshll.u32 [#allocation11], 4
          %s242 = int_to_ptr.vmem [resolvable:$true] %s241
          %244 = dma.hbm_to_vmem [thread:$0]  %s4, 32, %s242, [#allocation10]
        $region20: #{dablock_forward.8} parent=11 // pred_fallthru
          _
      $region12: #{dablock_forward.8} parent=5 // pred_fallthru
        _
      %p245 = scmp.lt.s32.totalorder %s21, 16
      // Predicated region
      $region21: #{dablock_forward.8} parent=5 // pred_check
        %p246 = pneg %p245
      $region22: #{dablock_forward.8} parent=5 // pred_check_branch
        %248 = sbr.rel (%p246) target = $region24
      $region23: #{dablock_forward.8} parent=5 // pred_region
        // Predicated region
        $region25: #{dablock_forward.8} parent=23 // pred_check
          %p249 = pneg %p64
        $region26: #{dablock_forward.8} parent=23 // pred_check_branch
          %251 = sbr.rel (%p249) target = $region28
        $region27: #{dablock_forward.8} parent=23 // pred_region
          %s252 = sand.u32 %s54, 1
          %s253 = scalar_lea.sflag [#allocation4], %s252
          %s254 = sand.u32 %s54, 1
          %s255 = smul.addr %s254, 128
          %s256 = scalar_lea.vmem [#allocation3], %s255
          %s257 = smul.u32 2, %s30
          %s259 = ssub.s32 2048, 2048
          %260 = vsyncadd %s253, %s259
          %s261 = smul.addr %s28, 16
          %s262 = sadd.s32 %s257, %s261
          %s263 = smul.addr %s29, 128
          %s264 = sadd.s32 %s262, %s263
          %s265 = smul.addr %s264, 128
          %s266 = scalar_lea.hbm %s0, %s265
          %s267 = sshll.u32 %s256, 4
          %s268 = int_to_ptr.vmem [resolvable:$true] %s267
          %273 = dma.hbm_to_vmem [thread:$0]  %s266, 2048, %s268, %s253, 256, 256, 16
        $region28: #{dablock_forward.8} parent=23 // pred_fallthru
          _
        // Predicated region
        $region29: #{dablock_forward.8} parent=23 // pred_check
          %p274 = pneg %p92
        $region30: #{dablock_forward.8} parent=23 // pred_check_branch
          %276 = sbr.rel (%p274) target = $region32
        $region31: #{dablock_forward.8} parent=23 // pred_region
          %s277 = sand.u32 %s21, 1
          %s278 = scalar_lea.sflag [#allocation7], %s277
          %s279 = sand.u32 %s82, 1
          %s280 = smul.addr %s279, 64
          %s281 = scalar_lea.vmem [#allocation6], %s280
          %s283 = ssub.s32 1024, 1024
          %284 = vsyncadd %s278, %s283
          %s285 = smul.addr %s28, 16
          %s286 = smul.addr %s29, 128
          %s287 = sadd.s32 %s285, %s286
          %s288 = smul.addr %s287, 64
          %s289 = scalar_lea.hbm %s1, %s288
          %s290 = sshll.u32 %s281, 4
          %s291 = int_to_ptr.vmem [resolvable:$true] %s290
          %296 = dma.hbm_to_vmem [thread:$0]  %s289, 1024, %s291, %s278, 64, 64, 4
        $region32: #{dablock_forward.8} parent=23 // pred_fallthru
          _
        // Predicated region
        $region33: #{dablock_forward.8} parent=23 // pred_check
          %p297 = pneg %p120
        $region34: #{dablock_forward.8} parent=23 // pred_check_branch
          %299 = sbr.rel (%p297) target = $region36
        $region35: #{dablock_forward.8} parent=23 // pred_region
          %s300 = sand.u32 %s21, 1
          %s301 = scalar_lea.sflag [#allocation7], %s300
          %s302 = sand.u32 %s110, 1
          %s303 = smul.addr %s302, 2
          %s304 = scalar_lea.vmem [#allocation8], %s303
          %s306 = ssub.s32 32, 32
          %307 = vsyncadd %s301, %s306
          %s308 = smul.addr %s29, 8
          %s309 = sadd.s32 %s28, %s308
          %s310 = smul.addr %s309, 32
          %s311 = scalar_lea.hbm %s2, %s310
          %s313 = sshll.u32 %s304, 4
          %s314 = int_to_ptr.vmem [resolvable:$true] %s313
          %316 = dma.hbm_to_vmem [thread:$0]  %s311, 32, %s314, %s301
        $region36: #{dablock_forward.8} parent=23 // pred_fallthru
          _
      $region24: #{dablock_forward.8} parent=5 // pred_fallthru
        _
      %p317 = scmp.le.s32.totalorder 1, %s21
      %p318 = scmp.lt.s32.totalorder %s21, 17
      %p319 = pnand %p317, %p318
      %p320 = pneg %p319
      // Predicated region
      $region37: #{dablock_forward.8} parent=5 // pred_check
        _
      $region38: #{dablock_forward.8} parent=5 // pred_check_branch
        %322 = sbr.rel (%p319) target = $region40
      $region39: #{dablock_forward.8} parent=5 // pred_region
        %s323 = ssub.s32 %s21, 1
        %s324 = sand.u32 %s57, 1
        %s325 = scalar_lea.sflag [#allocation4], %s324
        %s326 = sand.u32 %s57, 1
        %s327 = smul.addr %s326, 128
        %s328 = scalar_lea.vmem [#allocation3], %s327
        // Predicated region
        $region41: #{dablock_forward.8} parent=39 // pred_check
          %p329 = pneg %p70
        $region42: #{dablock_forward.8} parent=39 // pred_check_branch
          %331 = sbr.rel (%p329) target = $region44
        $region43: #{dablock_forward.8} parent=39 // pred_region
          %332 = dma.done %s325, 2048
        $region44: #{dablock_forward.8} parent=39 // pred_fallthru
          _
        %s333 = sand.u32 %s26, 1
        %s334 = scalar_lea.sflag [#allocation7], %s333
        %s335 = sand.u32 %s85, 1
        %s336 = smul.addr %s335, 64
        %s337 = scalar_lea.vmem [#allocation6], %s336
        // Predicated region
        $region45: #{dablock_forward.8} parent=39 // pred_check
          %p338 = pneg %p98
        $region46: #{dablock_forward.8} parent=39 // pred_check_branch
          %340 = sbr.rel (%p338) target = $region48
        $region47: #{dablock_forward.8} parent=39 // pred_region
          %341 = dma.done %s334, 1024
        $region48: #{dablock_forward.8} parent=39 // pred_fallthru
          _
        %s342 = sand.u32 %s26, 1
        %s343 = scalar_lea.sflag [#allocation7], %s342
        %s344 = sand.u32 %s113, 1
        %s345 = smul.addr %s344, 2
        %s346 = scalar_lea.vmem [#allocation8], %s345
        // Predicated region
        $region49: #{dablock_forward.8} parent=39 // pred_check
          %p347 = pneg %p126
        $region50: #{dablock_forward.8} parent=39 // pred_check_branch
          %349 = sbr.rel (%p347) target = $region52
        $region51: #{dablock_forward.8} parent=39 // pred_region
          %350 = dma.done %s343, 32
        $region52: #{dablock_forward.8} parent=39 // pred_fallthru
          _
        // Predicated region
        $region53: #{dablock_forward.8} parent=39 // pred_check
          %p351 = pneg %p152
        $region54: #{dablock_forward.8} parent=39 // pred_check_branch
          %353 = sbr.rel (%p351) target = $region56
        $region55: #{dablock_forward.8} parent=39 // pred_region
          %354 = dma.done [#allocation10], 4096
        $region56: #{dablock_forward.8} parent=39 // pred_fallthru
          _
        // Predicated region
        $region57: #{dablock_forward.8} parent=39 // pred_check
          %p355 = pneg %p173
        $region58: #{dablock_forward.8} parent=39 // pred_check_branch
          %357 = sbr.rel (%p355) target = $region60
        $region59: #{dablock_forward.8} parent=39 // pred_region
          %358 = dma.done [#allocation10], 32
        $region60: #{dablock_forward.8} parent=39 // pred_fallthru
          _
        %s359 = sand.u32 %s57, 1
        %s360 = scalar_lea.sflag [#allocation4], %s359
        %s361 = sand.u32 %s57, 1
        %s362 = smul.addr %s361, 128
        %s363 = scalar_lea.vmem [#allocation3], %s362
        %p364 = pneg %p70
        %p365 = pneg %p67
        %s366 = sand.u32 %s26, 1
        %s367 = scalar_lea.sflag [#allocation7], %s366
        %s368 = sand.u32 %s85, 1
        %s369 = smul.addr %s368, 64
        %s370 = scalar_lea.vmem [#allocation6], %s369
        %p371 = pneg %p98
        %p372 = pneg %p95
        %s373 = sand.u32 %s26, 1
        %s374 = scalar_lea.sflag [#allocation7], %s373
        %s375 = sand.u32 %s113, 1
        %s376 = smul.addr %s375, 2
        %s377 = scalar_lea.vmem [#allocation8], %s376
        %p378 = pneg %p126
        %p379 = pneg %p123
        %p380 = pneg %p152
        %p381 = pneg %p149
        %p382 = pneg %p173
        %p383 = pneg %p170
        %p384 = pneg %p203
        %p385 = pneg %p200
        %s386 = sand.u32 %s190, 1
        %s387 = scalar_lea.sflag [#allocation5], %s386
        %s388 = sand.u32 %s190, 1
        %s389 = smul.addr %s388, 64
        %s390 = scalar_lea.vmem [#allocation12], %s389
        %s391 = smul.u32 2, %s33
        %s392 = smul.u32 32, %s33
        %s393 = smul.u32 2, %s33
        %v395 = vld [vmem:[%s328] sm:$0xff]
        %v396 = vld [vmem:[%s328 + $0x8] sm:$0xff]
        %v397 = vld [vmem:[%s328 + $0x10] sm:$0xff]
        %v398 = vld [vmem:[%s328 + $0x18] sm:$0xff]
        %v399 = vld [vmem:[%s328 + $0x20] sm:$0xff]
        %v400 = vld [vmem:[%s328 + $0x28] sm:$0xff]
        %v401 = vld [vmem:[%s328 + $0x30] sm:$0xff]
        %v402 = vld [vmem:[%s328 + $0x38] sm:$0xff]
        %v403 = vld [vmem:[%s328 + $0x40] sm:$0xff]
        %v404 = vld [vmem:[%s328 + $0x48] sm:$0xff]
        %v405 = vld [vmem:[%s328 + $0x50] sm:$0xff]
        %v406 = vld [vmem:[%s328 + $0x58] sm:$0xff]
        %v407 = vld [vmem:[%s328 + $0x60] sm:$0xff]
        %v408 = vld [vmem:[%s328 + $0x68] sm:$0xff]
        %v409 = vld [vmem:[%s328 + $0x70] sm:$0xff]
        %v410 = vld [vmem:[%s328 + $0x78] sm:$0xff]
        %v411 = vpack.c.bf16 %v397, %v395
        %v412 = vpack.c.bf16 %v398, %v396
        %v413 = vpack.c.bf16 %v401, %v399
        %v414 = vpack.c.bf16 %v402, %v400
        %v415 = vpack.c.bf16 %v405, %v403
        %v416 = vpack.c.bf16 %v406, %v404
        %v417 = vpack.c.bf16 %v409, %v407
        %v418 = vpack.c.bf16 %v410, %v408
        %v419 = vld [vmem:[%s337] sm:$0xf]
        %v420 = vld [vmem:[%s337 + $0x4] sm:$0xf]
        %v421 = vld [vmem:[%s337 + $0x8] sm:$0xf]
        %v422 = vld [vmem:[%s337 + $0xc] sm:$0xf]
        %v423 = vld [vmem:[%s337 + $0x10] sm:$0xf]
        %v424 = vld [vmem:[%s337 + $0x14] sm:$0xf]
        %v425 = vld [vmem:[%s337 + $0x18] sm:$0xf]
        %v426 = vld [vmem:[%s337 + $0x1c] sm:$0xf]
        %v427 = vld [vmem:[%s337 + $0x20] sm:$0xf]
        %v428 = vld [vmem:[%s337 + $0x24] sm:$0xf]
        %v429 = vld [vmem:[%s337 + $0x28] sm:$0xf]
        %v430 = vld [vmem:[%s337 + $0x2c] sm:$0xf]
        %v431 = vld [vmem:[%s337 + $0x30] sm:$0xf]
        %v432 = vld [vmem:[%s337 + $0x34] sm:$0xf]
        %v433 = vld [vmem:[%s337 + $0x38] sm:$0xf]
        %v434 = vld [vmem:[%s337 + $0x3c] sm:$0xf]
        %435 = vxpose.xlu0.c.b16.start [1/8] %v411, 128
        %436 = vxpose.xlu0.c.b16.cont [2/8] %v413, 128
        %437 = vxpose.xlu0.c.b16.cont [3/8] %v415, 128
        %438 = vxpose.xlu0.c.b16.cont [4/8] %v417, 128
        %439 = vxpose.xlu0.c.b16.cont [5/8] 0, 128
        %440 = vxpose.xlu0.c.b16.cont [6/8] 0, 128
        %441 = vxpose.xlu0.c.b16.cont [7/8] 0, 128
        %442 = vxpose.xlu0.c.b16.end [8/8] 0, 128
        %v443 = vpop.trf.xlu0
        %v444 = vpop.trf.xlu0
        %v445 = vpop.trf.xlu0
        %v446 = vpop.trf.xlu0
        %v447 = vpop.trf.xlu0
        %v448 = vpop.trf.xlu0
        %v449 = vpop.trf.xlu0
        %v450 = vpop.trf.xlu0
        %451 = vxpose.xlu0.c.b16.start [1/8] %v412, 128
        %452 = vxpose.xlu0.c.b16.cont [2/8] %v414, 128
        %453 = vxpose.xlu0.c.b16.cont [3/8] %v416, 128
        %454 = vxpose.xlu0.c.b16.cont [4/8] %v418, 128
        %455 = vxpose.xlu0.c.b16.cont [5/8] 0, 128
        %456 = vxpose.xlu0.c.b16.cont [6/8] 0, 128
        %457 = vxpose.xlu0.c.b16.cont [7/8] 0, 128
        %458 = vxpose.xlu0.c.b16.end [8/8] 0, 128
        %v459 = vpop.trf.xlu0
        %v460 = vpop.trf.xlu0
        %v461 = vpop.trf.xlu0
        %v462 = vpop.trf.xlu0
        %v463 = vpop.trf.xlu0
        %v464 = vpop.trf.xlu0
        %v465 = vpop.trf.xlu0
        %v466 = vpop.trf.xlu0
        %v475 = vunpack.c.l.b16 %v419
        %v476 = vunpack.c.l.b16 %v420
        %v477 = vunpack.c.l.b16 %v421
        %v478 = vunpack.c.l.b16 %v422
        %v479 = vunpack.c.l.b16 %v423
        %v480 = vunpack.c.l.b16 %v424
        %v481 = vunpack.c.l.b16 %v425
        %v482 = vunpack.c.l.b16 %v426
        %v483 = vpack.c.b16 %v476, %v475
        %v484 = vpack.c.b16 %v478, %v477
        %v485 = vpack.c.b16 %v480, %v479
        %v486 = vpack.c.b16 %v482, %v481
        %vm491 = vcmask 523264
        %v493 = vsel %vm491, %v443, 0
        %v496 = vsel %vm491, %v444, 0
        %v499 = vsel %vm491, %v445, 0
        %v502 = vsel %vm491, %v446, 0
        %v505 = vsel %vm491, %v447, 0
        %v508 = vsel %vm491, %v448, 0
        %v511 = vsel %vm491, %v449, 0
        %v514 = vsel %vm491, %v450, 0
        %v517 = vsel %vm491, %v459, 0
        %v520 = vsel %vm491, %v460, 0
        %v523 = vsel %vm491, %v461, 0
        %v526 = vsel %vm491, %v462, 0
        %v529 = vsel %vm491, %v463, 0
        %v532 = vsel %vm491, %v464, 0
        %v535 = vsel %vm491, %v465, 0
        %v538 = vsel %vm491, %v466, 0
        %540 = vmatprep.subr.bf16.mxu0 0
        %541 = vmatpush1.bf16.msra.mxu0 %v483
        %542 = vmatprep.subr.bf16.mxu0 0
        %543 = vmatpush1.bf16.msra.mxu0 %v484
        %544 = vmatprep.subr.bf16.mxu0 0
        %545 = vmatpush1.bf16.msra.mxu0 %v485
        %546 = vmatprep.subr.bf16.mxu0 0
        %547 = vmatpush1.bf16.msra.mxu0 %v486
        %548 = vmatprep.subr.bf16.mxu0 0
        %549 = vmatpush1.bf16.msra.mxu0 0
        %550 = vmatprep.subr.bf16.mxu0 0
        %551 = vmatpush1.bf16.msra.mxu0 0
        %552 = vmatprep.subr.bf16.mxu0 0
        %553 = vmatpush1.bf16.msra.mxu0 0
        %554 = vmatprep.subr.bf16.mxu0 0
        %555 = vmatpush1.bf16.msra.mxu0 0
        %556 = vmatprep.subr.bf16.mxu0 0
        %557 = vmatpush1.bf16.msra.mxu0 0
        %558 = vmatprep.subr.bf16.mxu0 0
        %559 = vmatpush1.bf16.msra.mxu0 0
        %560 = vmatprep.subr.bf16.mxu0 0
        %561 = vmatpush1.bf16.msra.mxu0 0
        %562 = vmatprep.subr.bf16.mxu0 0
        %563 = vmatpush1.bf16.msra.mxu0 0
        %564 = vmatprep.subr.bf16.mxu0 0
        %565 = vmatpush1.bf16.msra.mxu0 0
        %566 = vmatprep.subr.bf16.mxu0 0
        %567 = vmatpush1.bf16.msra.mxu0 0
        %568 = vmatprep.subr.bf16.mxu0 0
        %569 = vmatpush1.bf16.msra.mxu0 0
        %570 = vmatprep.subr.bf16.mxu0 0
        %571 = vmatpush1.bf16.msra.mxu0 0
        %572 = vmatprep.mubr.bf16.mxu0 0
        %573 = vmatmul.mubr.bf16.gmra.mrb[0].mxu0 %v493
        %v574 = vpop.f32.mrb[0].mxu0
        %v575 = vadd.f32 0.0, %v574
        %v576 = vpop.f32.mrb[0].mxu0
        %v577 = vpop.f32.mrb[0].mxu0
        %v578 = vadd.f32 0.0, %v577
        %v579 = vpop.f32.mrb[0].mxu0
        %580 = vmatprep.mubr.bf16.mxu0 0
        %581 = vmatmul.mubr.bf16.gmra.mrb[0].mxu0 %v496
        %v582 = vpop.f32.mrb[0].mxu0
        %v583 = vadd.f32 0.0, %v582
        %v584 = vpop.f32.mrb[0].mxu0
        %v585 = vpop.f32.mrb[0].mxu0
        %v586 = vadd.f32 0.0, %v585
        %v587 = vpop.f32.mrb[0].mxu0
        %588 = vmatprep.mubr.bf16.mxu0 0
        %589 = vmatmul.mubr.bf16.gmra.mrb[0].mxu0 %v499
        %v590 = vpop.f32.mrb[0].mxu0
        %v591 = vadd.f32 0.0, %v590
        %v592 = vpop.f32.mrb[0].mxu0
        %v593 = vpop.f32.mrb[0].mxu0
        %v594 = vadd.f32 0.0, %v593
        %v595 = vpop.f32.mrb[0].mxu0
        %596 = vmatprep.mubr.bf16.mxu0 0
        %597 = vmatmul.mubr.bf16.gmra.mrb[0].mxu0 %v502
        %v598 = vpop.f32.mrb[0].mxu0
        %v599 = vadd.f32 0.0, %v598
        %v600 = vpop.f32.mrb[0].mxu0
        %v601 = vpop.f32.mrb[0].mxu0
        %v602 = vadd.f32 0.0, %v601
        %v603 = vpop.f32.mrb[0].mxu0
        %604 = vmatprep.mubr.bf16.mxu0 0
        %605 = vmatmul.mubr.bf16.gmra.mrb[0].mxu0 %v505
        %v606 = vpop.f32.mrb[0].mxu0
        %v607 = vadd.f32 0.0, %v606
        %v608 = vpop.f32.mrb[0].mxu0
        %v609 = vpop.f32.mrb[0].mxu0
        %v610 = vadd.f32 0.0, %v609
        %v611 = vpop.f32.mrb[0].mxu0
        %612 = vmatprep.mubr.bf16.mxu0 0
        %613 = vmatmul.mubr.bf16.gmra.mrb[0].mxu0 %v508
        %v614 = vpop.f32.mrb[0].mxu0
        %v615 = vadd.f32 0.0, %v614
        %v616 = vpop.f32.mrb[0].mxu0
        %v617 = vpop.f32.mrb[0].mxu0
        %v618 = vadd.f32 0.0, %v617
        %v619 = vpop.f32.mrb[0].mxu0
        %620 = vmatprep.mubr.bf16.mxu0 0
        %621 = vmatmul.mubr.bf16.gmra.mrb[0].mxu0 %v511
        %v622 = vpop.f32.mrb[0].mxu0
        %v623 = vadd.f32 0.0, %v622
        %v624 = vpop.f32.mrb[0].mxu0
        %v625 = vpop.f32.mrb[0].mxu0
        %v626 = vadd.f32 0.0, %v625
        %v627 = vpop.f32.mrb[0].mxu0
        %628 = vmatprep.mubr.bf16.mxu0 0
        %629 = vmatmul.mubr.bf16.gmra.mrb[0].mxu0 %v514
        %v630 = vpop.f32.mrb[0].mxu0
        %v631 = vadd.f32 0.0, %v630
        %v632 = vpop.f32.mrb[0].mxu0
        %v633 = vpop.f32.mrb[0].mxu0
        %v634 = vadd.f32 0.0, %v633
        %v635 = vpop.f32.mrb[0].mxu0
        %636 = vmatprep.mubr.bf16.mxu0 0
        %637 = vmatmul.mubr.bf16.gmra.mrb[0].mxu0 %v517
        %v638 = vpop.f32.mrb[0].mxu0
        %v639 = vadd.f32 0.0, %v638
        %v640 = vpop.f32.mrb[0].mxu0
        %v641 = vpop.f32.mrb[0].mxu0
        %v642 = vadd.f32 0.0, %v641
        %v643 = vpop.f32.mrb[0].mxu0
        %644 = vmatprep.mubr.bf16.mxu0 0
        %645 = vmatmul.mubr.bf16.gmra.mrb[0].mxu0 %v520
        %v646 = vpop.f32.mrb[0].mxu0
        %v647 = vadd.f32 0.0, %v646
        %v648 = vpop.f32.mrb[0].mxu0
        %v649 = vpop.f32.mrb[0].mxu0
        %v650 = vadd.f32 0.0, %v649
        %v651 = vpop.f32.mrb[0].mxu0
        %652 = vmatprep.mubr.bf16.mxu0 0
        %653 = vmatmul.mubr.bf16.gmra.mrb[0].mxu0 %v523
        %v654 = vpop.f32.mrb[0].mxu0
        %v655 = vadd.f32 0.0, %v654
        %v656 = vpop.f32.mrb[0].mxu0
        %v657 = vpop.f32.mrb[0].mxu0
        %v658 = vadd.f32 0.0, %v657
        %v659 = vpop.f32.mrb[0].mxu0
        %660 = vmatprep.mubr.bf16.mxu0 0
        %661 = vmatmul.mubr.bf16.gmra.mrb[0].mxu0 %v526
        %v662 = vpop.f32.mrb[0].mxu0
        %v663 = vadd.f32 0.0, %v662
        %v664 = vpop.f32.mrb[0].mxu0
        %v665 = vpop.f32.mrb[0].mxu0
        %v666 = vadd.f32 0.0, %v665
        %v667 = vpop.f32.mrb[0].mxu0
        %668 = vmatprep.mubr.bf16.mxu0 0
        %669 = vmatmul.mubr.bf16.gmra.mrb[0].mxu0 %v529
        %v670 = vpop.f32.mrb[0].mxu0
        %v671 = vadd.f32 0.0, %v670
        %v672 = vpop.f32.mrb[0].mxu0
        %v673 = vpop.f32.mrb[0].mxu0
        %v674 = vadd.f32 0.0, %v673
        %v675 = vpop.f32.mrb[0].mxu0
        %676 = vmatprep.mubr.bf16.mxu0 0
        %677 = vmatmul.mubr.bf16.gmra.mrb[0].mxu0 %v532
        %v678 = vpop.f32.mrb[0].mxu0
        %v679 = vadd.f32 0.0, %v678
        %v680 = vpop.f32.mrb[0].mxu0
        %v681 = vpop.f32.mrb[0].mxu0
        %v682 = vadd.f32 0.0, %v681
        %v683 = vpop.f32.mrb[0].mxu0
        %684 = vmatprep.mubr.bf16.mxu0 0
        %685 = vmatmul.mubr.bf16.gmra.mrb[0].mxu0 %v535
        %v686 = vpop.f32.mrb[0].mxu0
        %v687 = vadd.f32 0.0, %v686
        %v688 = vpop.f32.mrb[0].mxu0
        %v689 = vpop.f32.mrb[0].mxu0
        %v690 = vadd.f32 0.0, %v689
        %v691 = vpop.f32.mrb[0].mxu0
        %692 = vmatprep.mubr.bf16.mxu0 0
        %693 = vmatmul.mubr.bf16.gmra.mrb[0].mxu0 %v538
        %v694 = vpop.f32.mrb[0].mxu0
        %v695 = vadd.f32 0.0, %v694
        %v696 = vpop.f32.mrb[0].mxu0
        %v697 = vpop.f32.mrb[0].mxu0
        %v698 = vadd.f32 0.0, %v697
        %v699 = vpop.f32.mrb[0].mxu0
        %700 = vdwg.mxu0
        %vm701 = vcmask 130048
        %702 = vst.msk [vmem:[#allocation2] sm:$0xff] %vm701, %v575
        %703 = vst.msk [vmem:[#allocation2 + $0x8] sm:$0xff] %vm701, %v578
        %704 = vst.msk [vmem:[#allocation2 + $0x10] sm:$0xff] %vm701, %v583
        %705 = vst.msk [vmem:[#allocation2 + $0x18] sm:$0xff] %vm701, %v586
        %706 = vst.msk [vmem:[#allocation2 + $0x20] sm:$0xff] %vm701, %v591
        %707 = vst.msk [vmem:[#allocation2 + $0x28] sm:$0xff] %vm701, %v594
        %708 = vst.msk [vmem:[#allocation2 + $0x30] sm:$0xff] %vm701, %v599
        %709 = vst.msk [vmem:[#allocation2 + $0x38] sm:$0xff] %vm701, %v602
        %710 = vst.msk [vmem:[#allocation2 + $0x40] sm:$0xff] %vm701, %v607
        %711 = vst.msk [vmem:[#allocation2 + $0x48] sm:$0xff] %vm701, %v610
        %712 = vst.msk [vmem:[#allocation2 + $0x50] sm:$0xff] %vm701, %v615
        %713 = vst.msk [vmem:[#allocation2 + $0x58] sm:$0xff] %vm701, %v618
        %714 = vst.msk [vmem:[#allocation2 + $0x60] sm:$0xff] %vm701, %v623
        %715 = vst.msk [vmem:[#allocation2 + $0x68] sm:$0xff] %vm701, %v626
        %716 = vst.msk [vmem:[#allocation2 + $0x70] sm:$0xff] %vm701, %v631
        %717 = vst.msk [vmem:[#allocation2 + $0x78] sm:$0xff] %vm701, %v634
        %718 = vst.msk [vmem:[#allocation2 + $0x80] sm:$0xff] %vm701, %v639
        %719 = vst.msk [vmem:[#allocation2 + $0x88] sm:$0xff] %vm701, %v642
        %720 = vst.msk [vmem:[#allocation2 + $0x90] sm:$0xff] %vm701, %v647
        %721 = vst.msk [vmem:[#allocation2 + $0x98] sm:$0xff] %vm701, %v650
        %722 = vst.msk [vmem:[#allocation2 + $0xa0] sm:$0xff] %vm701, %v655
        %723 = vst.msk [vmem:[#allocation2 + $0xa8] sm:$0xff] %vm701, %v658
        %724 = vst.msk [vmem:[#allocation2 + $0xb0] sm:$0xff] %vm701, %v663
        %725 = vst.msk [vmem:[#allocation2 + $0xb8] sm:$0xff] %vm701, %v666
        %726 = vst.msk [vmem:[#allocation2 + $0xc0] sm:$0xff] %vm701, %v671
        %727 = vst.msk [vmem:[#allocation2 + $0xc8] sm:$0xff] %vm701, %v674
        %728 = vst.msk [vmem:[#allocation2 + $0xd0] sm:$0xff] %vm701, %v679
        %729 = vst.msk [vmem:[#allocation2 + $0xd8] sm:$0xff] %vm701, %v682
        %730 = vst.msk [vmem:[#allocation2 + $0xe0] sm:$0xff] %vm701, %v687
        %731 = vst.msk [vmem:[#allocation2 + $0xe8] sm:$0xff] %vm701, %v690
        %732 = vst.msk [vmem:[#allocation2 + $0xf0] sm:$0xff] %vm701, %v695
        %733 = vst.msk [vmem:[#allocation2 + $0xf8] sm:$0xff] %vm701, %v698
        %v734 = vld [vmem:[%s346] sm:$0x3]
        %v735 = vld [vmem:[#allocation11] sm:$0x3]
        %v736 = vpack.c.bf16 %v735, %v735
        loop: start=0, step=1, limit=256
        $region61: #{dablock_forward.8} parent=39 // loop_pre_header
          _
        $region62: #{dablock_forward.8} parent=39 // loop_header
          %s738 = sphi 0, %s742
          %p739 = scmp.ge.s32.totalorder %s738, 256
        $region63: #{dablock_forward.8} parent=39 // loop_header_branch
          %741 = sbr.rel (%p739) target = $region67
        $region64: #{dablock_forward.8} parent=39 // loop_body
          %s743 = scalar_lea.vmem [#allocation9], %s738
          %v744 = vld [vmem:[%s743] sm:$0x1]
          %746 = vset.pattern.permute.xlu0 0
          %747 = vperm.xlu0 %746, %v744
          %v748 = vpop.permute.xlu0 %747
          %v750 = vsub.f32 %v748, %v734
          %v751 = vand.u32 2147483647, %v750
          %v752 = vadd.f32 %v751, 1.0
          %v753 = vlog2.pop %v752
          %v754 = vmul.f32 %v753, 0.6931472
          %vm755 = vcmp.ge.f32.partialorder %v750, 0.0
          %v756 = vsub.f32 0.0, %v754
          %v757 = vsel %vm755, %v754, %v756
          %758 = vset.pattern.permute.xlu0 1
          %759 = vperm.xlu0 %758, %v744
          %v760 = vpop.permute.xlu0 %759
          %v763 = vrot.slane %v734, 1
          %v765 = vsub.f32 %v760, %v763
          %v766 = vand.u32 2147483647, %v765
          %v767 = vadd.f32 %v766, 1.0
          %v768 = vlog2.pop %v767
          %v769 = vmul.f32 %v768, 0.6931472
          %vm770 = vcmp.ge.f32.partialorder %v765, 0.0
          %v771 = vsub.f32 0.0, %v769
          %v772 = vsel %vm770, %v769, %v771
          %774 = vset.pattern.permute.xlu0 0
          %775 = vperm.xlu0 %774, %v735
          %v776 = vpop.permute.xlu0 %775
          %v778 = vlaneseq
          %v779 = vshrl.u32 %v778, 7
          %v780 = vsub.s32 0, %v779
          %v781 = vrot.slane %v757, %v780
          %v782 = vmul.f32 %v776, %v781
          %783 = vset.pattern.permute.xlu0 1
          %784 = vperm.xlu0 %783, %v735
          %v785 = vpop.permute.xlu0 %784
          %v787 = vlaneseq
          %v788 = vshrl.u32 %v787, 7
          %v789 = vsub.s32 0, %v788
          %v790 = vrot.slane %v772, %v789
          %v791 = vmul.f32 %v785, %v790
          %v792 = vadd.f32 %v782, %v791
          %793 = vset.pattern.permute.xlu0 2
          %794 = vperm.xlu0 %793, %v735
          %v795 = vpop.permute.xlu0 %794
          %v797 = vadd.f32 %v792, %v795
          %v798 = vmax.f32 %v797, 0.0
          %v799 = vpack.c.bf16 %v798, %v798
          %800 = vset.pattern.permute.xlu0 5
          %801 = vperm.xlu0 %800, %v735
          %v802 = vpop.permute.xlu0 %801
          %805 = vrot.lane.b32.xlu0 %v736, 125
          %v806 = vpop.permute.xlu0 %805
          %vm807 = vcmask 15360
          %v809 = vsel %vm807, %v806, 0
          %vm811 = vcmask 1040384
          %v813 = vsel %vm811, %v799, 0
          %815 = vmatprep.subr.bf16.mxu0 0
          %816 = vmatpush1.bf16.msra.mxu0 %v813
          %817 = vmatprep.subr.bf16.mxu0 0
          %818 = vmatpush1.bf16.msra.mxu0 0
          %819 = vmatprep.subr.bf16.mxu0 0
          %820 = vmatpush1.bf16.msra.mxu0 0
          %821 = vmatprep.subr.bf16.mxu0 0
          %822 = vmatpush1.bf16.msra.mxu0 0
          %823 = vmatprep.subr.bf16.mxu0 0
          %824 = vmatpush1.bf16.msra.mxu0 0
          %825 = vmatprep.subr.bf16.mxu0 0
          %826 = vmatpush1.bf16.msra.mxu0 0
          %827 = vmatprep.subr.bf16.mxu0 0
          %828 = vmatpush1.bf16.msra.mxu0 0
          %829 = vmatprep.subr.bf16.mxu0 0
          %830 = vmatpush1.bf16.msra.mxu0 0
          %831 = vmatprep.subr.bf16.mxu0 0
          %832 = vmatpush1.bf16.msra.mxu0 0
          %833 = vmatprep.subr.bf16.mxu0 0
          %834 = vmatpush1.bf16.msra.mxu0 0
          %835 = vmatprep.subr.bf16.mxu0 0
          %836 = vmatpush1.bf16.msra.mxu0 0
          %837 = vmatprep.subr.bf16.mxu0 0
          %838 = vmatpush1.bf16.msra.mxu0 0
          %839 = vmatprep.subr.bf16.mxu0 0
          %840 = vmatpush1.bf16.msra.mxu0 0
          %841 = vmatprep.subr.bf16.mxu0 0
          %842 = vmatpush1.bf16.msra.mxu0 0
          %843 = vmatprep.subr.bf16.mxu0 0
          %844 = vmatpush1.bf16.msra.mxu0 0
          %845 = vmatprep.subr.bf16.mxu0 0
          %846 = vmatpush1.bf16.msra.mxu0 0
          %847 = vmatprep.mubr.bf16.mxu0 0
          %848 = vmatmul.mubr.bf16.gmra.mrb[0].mxu0 %v809
          %v849 = vpop.f32.mrb[0].mxu0
          %v850 = vadd.f32 %v802, %v849
          %v851 = vpop.f32.mrb[0].mxu0
          %v852 = vpop.f32.mrb[0].mxu0
          %v853 = vpop.f32.mrb[0].mxu0
          %854 = vdwg.mxu0
          %v855 = vmax.f32 %v850, 0.0
          %v856 = vpack.c.bf16 %v855, %v855
          %857 = vrot.lane.b32.xlu0 %v736, 122
          %v858 = vpop.permute.xlu0 %857
          %860 = vxpose.xlu0.c.b16.start [1/8] %v858, 128
          %861 = vxpose.xlu0.c.b16.cont [2/8] 0, 128
          %862 = vxpose.xlu0.c.b16.cont [3/8] 0, 128
          %863 = vxpose.xlu0.c.b16.cont [4/8] 0, 128
          %864 = vxpose.xlu0.c.b16.cont [5/8] 0, 128
          %865 = vxpose.xlu0.c.b16.cont [6/8] 0, 128
          %866 = vxpose.xlu0.c.b16.cont [7/8] 0, 128
          %867 = vxpose.xlu0.c.b16.end [8/8] 0, 128
          %v868 = vpop.trf.xlu0
          %v869 = vpop.trf.xlu0
          %v870 = vpop.trf.xlu0
          %v871 = vpop.trf.xlu0
          %v872 = vpop.trf.xlu0
          %v873 = vpop.trf.xlu0
          %v874 = vpop.trf.xlu0
          %v875 = vpop.trf.xlu0
          %v877 = vsel %vm807, %v868, 0
          %v880 = vsel %vm811, %v856, 0
          %882 = vmatprep.subr.bf16.mxu0 0
          %883 = vmatpush1.bf16.msra.mxu0 %v880
          %884 = vmatprep.subr.bf16.mxu0 0
          %885 = vmatpush1.bf16.msra.mxu0 0
          %886 = vmatprep.subr.bf16.mxu0 0
          %887 = vmatpush1.bf16.msra.mxu0 0
          %888 = vmatprep.subr.bf16.mxu0 0
          %889 = vmatpush1.bf16.msra.mxu0 0
          %890 = vmatprep.subr.bf16.mxu0 0
          %891 = vmatpush1.bf16.msra.mxu0 0
          %892 = vmatprep.subr.bf16.mxu0 0
          %893 = vmatpush1.bf16.msra.mxu0 0
          %894 = vmatprep.subr.bf16.mxu0 0
          %895 = vmatpush1.bf16.msra.mxu0 0
          %896 = vmatprep.subr.bf16.mxu0 0
          %897 = vmatpush1.bf16.msra.mxu0 0
          %898 = vmatprep.subr.bf16.mxu0 0
          %899 = vmatpush1.bf16.msra.mxu0 0
          %900 = vmatprep.subr.bf16.mxu0 0
          %901 = vmatpush1.bf16.msra.mxu0 0
          %902 = vmatprep.subr.bf16.mxu0 0
          %903 = vmatpush1.bf16.msra.mxu0 0
          %904 = vmatprep.subr.bf16.mxu0 0
          %905 = vmatpush1.bf16.msra.mxu0 0
          %906 = vmatprep.subr.bf16.mxu0 0
          %907 = vmatpush1.bf16.msra.mxu0 0
          %908 = vmatprep.subr.bf16.mxu0 0
          %909 = vmatpush1.bf16.msra.mxu0 0
          %910 = vmatprep.subr.bf16.mxu0 0
          %911 = vmatpush1.bf16.msra.mxu0 0
          %912 = vmatprep.subr.bf16.mxu0 0
          %913 = vmatpush1.bf16.msra.mxu0 0
          %914 = vmatprep.mubr.bf16.mxu0 0
          %915 = vmatmul.mubr.bf16.gmra.mrb[0].mxu0 %v877
          %v916 = vpop.f32.mrb[0].mxu0
          %v917 = vadd.f32 0.0, %v916
          %v918 = vpop.f32.mrb[0].mxu0
          %v919 = vpop.f32.mrb[0].mxu0
          %v920 = vpop.f32.mrb[0].mxu0
          %921 = vdwg.mxu0
          %s922 = scalar_lea.vmem [#allocation2], %s738
          %v923 = vld [vmem:[%s922] sm:$0x1]
          %v924 = vadd.f32 %v923, %v917
          %vm925 = vcmask 122880
          %926 = vst.msk [vmem:[%s922] sm:$0x1] %vm925, %v924
        $region65: #{dablock_forward.8} parent=39 // loop_footer
          %s742 = sadd.s32 1, %s738
        $region66: #{dablock_forward.8} parent=39 // loop_footer_branch
          %737 = sbr.rel target = $region62
        $region67: #{dablock_forward.8} parent=39 // loop_exit
          _
        %v927 = vld [vmem:[#allocation2] sm:$0xff]
        %v928 = vld [vmem:[#allocation2 + $0x8] sm:$0xff]
        %v929 = vld [vmem:[#allocation2 + $0x10] sm:$0xff]
        %v930 = vld [vmem:[#allocation2 + $0x18] sm:$0xff]
        %v931 = vld [vmem:[#allocation2 + $0x20] sm:$0xff]
        %v932 = vld [vmem:[#allocation2 + $0x28] sm:$0xff]
        %v933 = vld [vmem:[#allocation2 + $0x30] sm:$0xff]
        %v934 = vld [vmem:[#allocation2 + $0x38] sm:$0xff]
        %v935 = vld [vmem:[#allocation2 + $0x40] sm:$0xff]
        %v936 = vld [vmem:[#allocation2 + $0x48] sm:$0xff]
        %v937 = vld [vmem:[#allocation2 + $0x50] sm:$0xff]
        %v938 = vld [vmem:[#allocation2 + $0x58] sm:$0xff]
        %v939 = vld [vmem:[#allocation2 + $0x60] sm:$0xff]
        %v940 = vld [vmem:[#allocation2 + $0x68] sm:$0xff]
        %v941 = vld [vmem:[#allocation2 + $0x70] sm:$0xff]
        %v942 = vld [vmem:[#allocation2 + $0x78] sm:$0xff]
        %v943 = vld [vmem:[#allocation2 + $0x80] sm:$0xff]
        %v944 = vld [vmem:[#allocation2 + $0x88] sm:$0xff]
        %v945 = vld [vmem:[#allocation2 + $0x90] sm:$0xff]
        %v946 = vld [vmem:[#allocation2 + $0x98] sm:$0xff]
        %v947 = vld [vmem:[#allocation2 + $0xa0] sm:$0xff]
        %v948 = vld [vmem:[#allocation2 + $0xa8] sm:$0xff]
        %v949 = vld [vmem:[#allocation2 + $0xb0] sm:$0xff]
        %v950 = vld [vmem:[#allocation2 + $0xb8] sm:$0xff]
        %v951 = vld [vmem:[#allocation2 + $0xc0] sm:$0xff]
        %v952 = vld [vmem:[#allocation2 + $0xc8] sm:$0xff]
        %v953 = vld [vmem:[#allocation2 + $0xd0] sm:$0xff]
        %v954 = vld [vmem:[#allocation2 + $0xd8] sm:$0xff]
        %v955 = vld [vmem:[#allocation2 + $0xe0] sm:$0xff]
        %v956 = vld [vmem:[#allocation2 + $0xe8] sm:$0xff]
        %v957 = vld [vmem:[#allocation2 + $0xf0] sm:$0xff]
        %v958 = vld [vmem:[#allocation2 + $0xf8] sm:$0xff]
        %v959 = vsel %vm701, %v927, -inf
        %960 = vmax.xlane.f32.xlu0 %v959
        %v961 = vpop.xlane.xlu0 %960
        %v962 = vsel %vm701, %v928, -inf
        %963 = vmax.xlane.f32.xlu0 %v962
        %v964 = vpop.xlane.xlu0 %963
        %v965 = vsel %vm701, %v929, -inf
        %966 = vmax.xlane.f32.xlu0 %v965
        %v967 = vpop.xlane.xlu0 %966
        %v968 = vsel %vm701, %v930, -inf
        %969 = vmax.xlane.f32.xlu0 %v968
        %v970 = vpop.xlane.xlu0 %969
        %v971 = vsel %vm701, %v931, -inf
        %972 = vmax.xlane.f32.xlu0 %v971
        %v973 = vpop.xlane.xlu0 %972
        %v974 = vsel %vm701, %v932, -inf
        %975 = vmax.xlane.f32.xlu0 %v974
        %v976 = vpop.xlane.xlu0 %975
        %v977 = vsel %vm701, %v933, -inf
        %978 = vmax.xlane.f32.xlu0 %v977
        %v979 = vpop.xlane.xlu0 %978
        %v980 = vsel %vm701, %v934, -inf
        %981 = vmax.xlane.f32.xlu0 %v980
        %v982 = vpop.xlane.xlu0 %981
        %v983 = vsel %vm701, %v935, -inf
        %984 = vmax.xlane.f32.xlu0 %v983
        %v985 = vpop.xlane.xlu0 %984
        %v986 = vsel %vm701, %v936, -inf
        %987 = vmax.xlane.f32.xlu0 %v986
        %v988 = vpop.xlane.xlu0 %987
        %v989 = vsel %vm701, %v937, -inf
        %990 = vmax.xlane.f32.xlu0 %v989
        %v991 = vpop.xlane.xlu0 %990
        %v992 = vsel %vm701, %v938, -inf
        %993 = vmax.xlane.f32.xlu0 %v992
        %v994 = vpop.xlane.xlu0 %993
        %v995 = vsel %vm701, %v939, -inf
        %996 = vmax.xlane.f32.xlu0 %v995
        %v997 = vpop.xlane.xlu0 %996
        %v998 = vsel %vm701, %v940, -inf
        %999 = vmax.xlane.f32.xlu0 %v998
        %v1000 = vpop.xlane.xlu0 %999
        %v1001 = vsel %vm701, %v941, -inf
        %1002 = vmax.xlane.f32.xlu0 %v1001
        %v1003 = vpop.xlane.xlu0 %1002
        %v1004 = vsel %vm701, %v942, -inf
        %1005 = vmax.xlane.f32.xlu0 %v1004
        %v1006 = vpop.xlane.xlu0 %1005
        %v1007 = vsel %vm701, %v943, -inf
        %1008 = vmax.xlane.f32.xlu0 %v1007
        %v1009 = vpop.xlane.xlu0 %1008
        %v1010 = vsel %vm701, %v944, -inf
        %1011 = vmax.xlane.f32.xlu0 %v1010
        %v1012 = vpop.xlane.xlu0 %1011
        %v1013 = vsel %vm701, %v945, -inf
        %1014 = vmax.xlane.f32.xlu0 %v1013
        %v1015 = vpop.xlane.xlu0 %1014
        %v1016 = vsel %vm701, %v946, -inf
        %1017 = vmax.xlane.f32.xlu0 %v1016
        %v1018 = vpop.xlane.xlu0 %1017
        %v1019 = vsel %vm701, %v947, -inf
        %1020 = vmax.xlane.f32.xlu0 %v1019
        %v1021 = vpop.xlane.xlu0 %1020
        %v1022 = vsel %vm701, %v948, -inf
        %1023 = vmax.xlane.f32.xlu0 %v1022
        %v1024 = vpop.xlane.xlu0 %1023
        %v1025 = vsel %vm701, %v949, -inf
        %1026 = vmax.xlane.f32.xlu0 %v1025
        %v1027 = vpop.xlane.xlu0 %1026
        %v1028 = vsel %vm701, %v950, -inf
        %1029 = vmax.xlane.f32.xlu0 %v1028
        %v1030 = vpop.xlane.xlu0 %1029
        %v1031 = vsel %vm701, %v951, -inf
        %1032 = vmax.xlane.f32.xlu0 %v1031
        %v1033 = vpop.xlane.xlu0 %1032
        %v1034 = vsel %vm701, %v952, -inf
        %1035 = vmax.xlane.f32.xlu0 %v1034
        %v1036 = vpop.xlane.xlu0 %1035
        %v1037 = vsel %vm701, %v953, -inf
        %1038 = vmax.xlane.f32.xlu0 %v1037
        %v1039 = vpop.xlane.xlu0 %1038
        %v1040 = vsel %vm701, %v954, -inf
        %1041 = vmax.xlane.f32.xlu0 %v1040
        %v1042 = vpop.xlane.xlu0 %1041
        %v1043 = vsel %vm701, %v955, -inf
        %1044 = vmax.xlane.f32.xlu0 %v1043
        %v1045 = vpop.xlane.xlu0 %1044
        %v1046 = vsel %vm701, %v956, -inf
        %1047 = vmax.xlane.f32.xlu0 %v1046
        %v1048 = vpop.xlane.xlu0 %1047
        %v1049 = vsel %vm701, %v957, -inf
        %1050 = vmax.xlane.f32.xlu0 %v1049
        %v1051 = vpop.xlane.xlu0 %1050
        %v1052 = vsel %vm701, %v958, -inf
        %1053 = vmax.xlane.f32.xlu0 %v1052
        %v1054 = vpop.xlane.xlu0 %1053
        %v1055 = vsub.f32 %v927, %v961
        %v1056 = vsub.f32 %v928, %v964
        %v1057 = vsub.f32 %v929, %v967
        %v1058 = vsub.f32 %v930, %v970
        %v1059 = vsub.f32 %v931, %v973
        %v1060 = vsub.f32 %v932, %v976
        %v1061 = vsub.f32 %v933, %v979
        %v1062 = vsub.f32 %v934, %v982
        %v1063 = vsub.f32 %v935, %v985
        %v1064 = vsub.f32 %v936, %v988
        %v1065 = vsub.f32 %v937, %v991
        %v1066 = vsub.f32 %v938, %v994
        %v1067 = vsub.f32 %v939, %v997
        %v1068 = vsub.f32 %v940, %v1000
        %v1069 = vsub.f32 %v941, %v1003
        %v1070 = vsub.f32 %v942, %v1006
        %v1071 = vsub.f32 %v943, %v1009
        %v1072 = vsub.f32 %v944, %v1012
        %v1073 = vsub.f32 %v945, %v1015
        %v1074 = vsub.f32 %v946, %v1018
        %v1075 = vsub.f32 %v947, %v1021
        %v1076 = vsub.f32 %v948, %v1024
        %v1077 = vsub.f32 %v949, %v1027
        %v1078 = vsub.f32 %v950, %v1030
        %v1079 = vsub.f32 %v951, %v1033
        %v1080 = vsub.f32 %v952, %v1036
        %v1081 = vsub.f32 %v953, %v1039
        %v1082 = vsub.f32 %v954, %v1042
        %v1083 = vsub.f32 %v955, %v1045
        %v1084 = vsub.f32 %v956, %v1048
        %v1085 = vsub.f32 %v957, %v1051
        %v1086 = vsub.f32 %v958, %v1054
        %v1087 = vmul.f32 %v1055, 1.442695
        %v1088 = vpow.pop %v1087
        %v1089 = vmul.f32 %v1056, 1.442695
        %v1090 = vpow.pop %v1089
        %v1091 = vmul.f32 %v1057, 1.442695
        %v1092 = vpow.pop %v1091
        %v1093 = vmul.f32 %v1058, 1.442695
        %v1094 = vpow.pop %v1093
        %v1095 = vmul.f32 %v1059, 1.442695
        %v1096 = vpow.pop %v1095
        %v1097 = vmul.f32 %v1060, 1.442695
        %v1098 = vpow.pop %v1097
        %v1099 = vmul.f32 %v1061, 1.442695
        %v1100 = vpow.pop %v1099
        %v1101 = vmul.f32 %v1062, 1.442695
        %v1102 = vpow.pop %v1101
        %v1103 = vmul.f32 %v1063, 1.442695
        %v1104 = vpow.pop %v1103
        %v1105 = vmul.f32 %v1064, 1.442695
        %v1106 = vpow.pop %v1105
        %v1107 = vmul.f32 %v1065, 1.442695
        %v1108 = vpow.pop %v1107
        %v1109 = vmul.f32 %v1066, 1.442695
        %v1110 = vpow.pop %v1109
        %v1111 = vmul.f32 %v1067, 1.442695
        %v1112 = vpow.pop %v1111
        %v1113 = vmul.f32 %v1068, 1.442695
        %v1114 = vpow.pop %v1113
        %v1115 = vmul.f32 %v1069, 1.442695
        %v1116 = vpow.pop %v1115
        %v1117 = vmul.f32 %v1070, 1.442695
        %v1118 = vpow.pop %v1117
        %v1119 = vmul.f32 %v1071, 1.442695
        %v1120 = vpow.pop %v1119
        %v1121 = vmul.f32 %v1072, 1.442695
        %v1122 = vpow.pop %v1121
        %v1123 = vmul.f32 %v1073, 1.442695
        %v1124 = vpow.pop %v1123
        %v1125 = vmul.f32 %v1074, 1.442695
        %v1126 = vpow.pop %v1125
        %v1127 = vmul.f32 %v1075, 1.442695
        %v1128 = vpow.pop %v1127
        %v1129 = vmul.f32 %v1076, 1.442695
        %v1130 = vpow.pop %v1129
        %v1131 = vmul.f32 %v1077, 1.442695
        %v1132 = vpow.pop %v1131
        %v1133 = vmul.f32 %v1078, 1.442695
        %v1134 = vpow.pop %v1133
        %v1135 = vmul.f32 %v1079, 1.442695
        %v1136 = vpow.pop %v1135
        %v1137 = vmul.f32 %v1080, 1.442695
        %v1138 = vpow.pop %v1137
        %v1139 = vmul.f32 %v1081, 1.442695
        %v1140 = vpow.pop %v1139
        %v1141 = vmul.f32 %v1082, 1.442695
        %v1142 = vpow.pop %v1141
        %v1143 = vmul.f32 %v1083, 1.442695
        %v1144 = vpow.pop %v1143
        %v1145 = vmul.f32 %v1084, 1.442695
        %v1146 = vpow.pop %v1145
        %v1147 = vmul.f32 %v1085, 1.442695
        %v1148 = vpow.pop %v1147
        %v1149 = vmul.f32 %v1086, 1.442695
        %v1150 = vpow.pop %v1149
        %v1151 = vsel %vm701, %v1088, 0.0
        %1152 = vadd.xlane.f32.xlu0 %v1151
        %v1153 = vpop.xlane.xlu0 %1152
        %v1154 = vsel %vm701, %v1090, 0.0
        %1155 = vadd.xlane.f32.xlu0 %v1154
        %v1156 = vpop.xlane.xlu0 %1155
        %v1157 = vsel %vm701, %v1092, 0.0
        %1158 = vadd.xlane.f32.xlu0 %v1157
        %v1159 = vpop.xlane.xlu0 %1158
        %v1160 = vsel %vm701, %v1094, 0.0
        %1161 = vadd.xlane.f32.xlu0 %v1160
        %v1162 = vpop.xlane.xlu0 %1161
        %v1163 = vsel %vm701, %v1096, 0.0
        %1164 = vadd.xlane.f32.xlu0 %v1163
        %v1165 = vpop.xlane.xlu0 %1164
        %v1166 = vsel %vm701, %v1098, 0.0
        %1167 = vadd.xlane.f32.xlu0 %v1166
        %v1168 = vpop.xlane.xlu0 %1167
        %v1169 = vsel %vm701, %v1100, 0.0
        %1170 = vadd.xlane.f32.xlu0 %v1169
        %v1171 = vpop.xlane.xlu0 %1170
        %v1172 = vsel %vm701, %v1102, 0.0
        %1173 = vadd.xlane.f32.xlu0 %v1172
        %v1174 = vpop.xlane.xlu0 %1173
        %v1175 = vsel %vm701, %v1104, 0.0
        %1176 = vadd.xlane.f32.xlu0 %v1175
        %v1177 = vpop.xlane.xlu0 %1176
        %v1178 = vsel %vm701, %v1106, 0.0
        %1179 = vadd.xlane.f32.xlu0 %v1178
        %v1180 = vpop.xlane.xlu0 %1179
        %v1181 = vsel %vm701, %v1108, 0.0
        %1182 = vadd.xlane.f32.xlu0 %v1181
        %v1183 = vpop.xlane.xlu0 %1182
        %v1184 = vsel %vm701, %v1110, 0.0
        %1185 = vadd.xlane.f32.xlu0 %v1184
        %v1186 = vpop.xlane.xlu0 %1185
        %v1187 = vsel %vm701, %v1112, 0.0
        %1188 = vadd.xlane.f32.xlu0 %v1187
        %v1189 = vpop.xlane.xlu0 %1188
        %v1190 = vsel %vm701, %v1114, 0.0
        %1191 = vadd.xlane.f32.xlu0 %v1190
        %v1192 = vpop.xlane.xlu0 %1191
        %v1193 = vsel %vm701, %v1116, 0.0
        %1194 = vadd.xlane.f32.xlu0 %v1193
        %v1195 = vpop.xlane.xlu0 %1194
        %v1196 = vsel %vm701, %v1118, 0.0
        %1197 = vadd.xlane.f32.xlu0 %v1196
        %v1198 = vpop.xlane.xlu0 %1197
        %v1199 = vsel %vm701, %v1120, 0.0
        %1200 = vadd.xlane.f32.xlu0 %v1199
        %v1201 = vpop.xlane.xlu0 %1200
        %v1202 = vsel %vm701, %v1122, 0.0
        %1203 = vadd.xlane.f32.xlu0 %v1202
        %v1204 = vpop.xlane.xlu0 %1203
        %v1205 = vsel %vm701, %v1124, 0.0
        %1206 = vadd.xlane.f32.xlu0 %v1205
        %v1207 = vpop.xlane.xlu0 %1206
        %v1208 = vsel %vm701, %v1126, 0.0
        %1209 = vadd.xlane.f32.xlu0 %v1208
        %v1210 = vpop.xlane.xlu0 %1209
        %v1211 = vsel %vm701, %v1128, 0.0
        %1212 = vadd.xlane.f32.xlu0 %v1211
        %v1213 = vpop.xlane.xlu0 %1212
        %v1214 = vsel %vm701, %v1130, 0.0
        %1215 = vadd.xlane.f32.xlu0 %v1214
        %v1216 = vpop.xlane.xlu0 %1215
        %v1217 = vsel %vm701, %v1132, 0.0
        %1218 = vadd.xlane.f32.xlu0 %v1217
        %v1219 = vpop.xlane.xlu0 %1218
        %v1220 = vsel %vm701, %v1134, 0.0
        %1221 = vadd.xlane.f32.xlu0 %v1220
        %v1222 = vpop.xlane.xlu0 %1221
        %v1223 = vsel %vm701, %v1136, 0.0
        %1224 = vadd.xlane.f32.xlu0 %v1223
        %v1225 = vpop.xlane.xlu0 %1224
        %v1226 = vsel %vm701, %v1138, 0.0
        %1227 = vadd.xlane.f32.xlu0 %v1226
        %v1228 = vpop.xlane.xlu0 %1227
        %v1229 = vsel %vm701, %v1140, 0.0
        %1230 = vadd.xlane.f32.xlu0 %v1229
        %v1231 = vpop.xlane.xlu0 %1230
        %v1232 = vsel %vm701, %v1142, 0.0
        %1233 = vadd.xlane.f32.xlu0 %v1232
        %v1234 = vpop.xlane.xlu0 %1233
        %v1235 = vsel %vm701, %v1144, 0.0
        %1236 = vadd.xlane.f32.xlu0 %v1235
        %v1237 = vpop.xlane.xlu0 %1236
        %v1238 = vsel %vm701, %v1146, 0.0
        %1239 = vadd.xlane.f32.xlu0 %v1238
        %v1240 = vpop.xlane.xlu0 %1239
        %v1241 = vsel %vm701, %v1148, 0.0
        %1242 = vadd.xlane.f32.xlu0 %v1241
        %v1243 = vpop.xlane.xlu0 %1242
        %v1244 = vsel %vm701, %v1150, 0.0
        %1245 = vadd.xlane.f32.xlu0 %v1244
        %v1246 = vpop.xlane.xlu0 %1245
        %v1247 = vrcp.pop %v1153
        %v1248 = vrcp.pop %v1156
        %v1249 = vrcp.pop %v1159
        %v1250 = vrcp.pop %v1162
        %v1251 = vrcp.pop %v1165
        %v1252 = vrcp.pop %v1168
        %v1253 = vrcp.pop %v1171
        %v1254 = vrcp.pop %v1174
        %v1255 = vrcp.pop %v1177
        %v1256 = vrcp.pop %v1180
        %v1257 = vrcp.pop %v1183
        %v1258 = vrcp.pop %v1186
        %v1259 = vrcp.pop %v1189
        %v1260 = vrcp.pop %v1192
        %v1261 = vrcp.pop %v1195
        %v1262 = vrcp.pop %v1198
        %v1263 = vrcp.pop %v1201
        %v1264 = vrcp.pop %v1204
        %v1265 = vrcp.pop %v1207
        %v1266 = vrcp.pop %v1210
        %v1267 = vrcp.pop %v1213
        %v1268 = vrcp.pop %v1216
        %v1269 = vrcp.pop %v1219
        %v1270 = vrcp.pop %v1222
        %v1271 = vrcp.pop %v1225
        %v1272 = vrcp.pop %v1228
        %v1273 = vrcp.pop %v1231
        %v1274 = vrcp.pop %v1234
        %v1275 = vrcp.pop %v1237
        %v1276 = vrcp.pop %v1240
        %v1277 = vrcp.pop %v1243
        %v1278 = vrcp.pop %v1246
        %v1279 = vmul.f32 %v1088, %v1247
        %v1280 = vmul.f32 %v1090, %v1248
        %v1281 = vmul.f32 %v1092, %v1249
        %v1282 = vmul.f32 %v1094, %v1250
        %v1283 = vmul.f32 %v1096, %v1251
        %v1284 = vmul.f32 %v1098, %v1252
        %v1285 = vmul.f32 %v1100, %v1253
        %v1286 = vmul.f32 %v1102, %v1254
        %v1287 = vmul.f32 %v1104, %v1255
        %v1288 = vmul.f32 %v1106, %v1256
        %v1289 = vmul.f32 %v1108, %v1257
        %v1290 = vmul.f32 %v1110, %v1258
        %v1291 = vmul.f32 %v1112, %v1259
        %v1292 = vmul.f32 %v1114, %v1260
        %v1293 = vmul.f32 %v1116, %v1261
        %v1294 = vmul.f32 %v1118, %v1262
        %v1295 = vmul.f32 %v1120, %v1263
        %v1296 = vmul.f32 %v1122, %v1264
        %v1297 = vmul.f32 %v1124, %v1265
        %v1298 = vmul.f32 %v1126, %v1266
        %v1299 = vmul.f32 %v1128, %v1267
        %v1300 = vmul.f32 %v1130, %v1268
        %v1301 = vmul.f32 %v1132, %v1269
        %v1302 = vmul.f32 %v1134, %v1270
        %v1303 = vmul.f32 %v1136, %v1271
        %v1304 = vmul.f32 %v1138, %v1272
        %v1305 = vmul.f32 %v1140, %v1273
        %v1306 = vmul.f32 %v1142, %v1274
        %v1307 = vmul.f32 %v1144, %v1275
        %v1308 = vmul.f32 %v1146, %v1276
        %v1309 = vmul.f32 %v1148, %v1277
        %v1310 = vmul.f32 %v1150, %v1278
        %v1311 = vpack.c.bf16 %v1280, %v1279
        %v1312 = vpack.c.bf16 %v1282, %v1281
        %v1313 = vpack.c.bf16 %v1284, %v1283
        %v1314 = vpack.c.bf16 %v1286, %v1285
        %v1315 = vpack.c.bf16 %v1288, %v1287
        %v1316 = vpack.c.bf16 %v1290, %v1289
        %v1317 = vpack.c.bf16 %v1292, %v1291
        %v1318 = vpack.c.bf16 %v1294, %v1293
        %v1319 = vpack.c.bf16 %v1296, %v1295
        %v1320 = vpack.c.bf16 %v1298, %v1297
        %v1321 = vpack.c.bf16 %v1300, %v1299
        %v1322 = vpack.c.bf16 %v1302, %v1301
        %v1323 = vpack.c.bf16 %v1304, %v1303
        %v1324 = vpack.c.bf16 %v1306, %v1305
        %v1325 = vpack.c.bf16 %v1308, %v1307
        %v1326 = vpack.c.bf16 %v1310, %v1309
        %v1335 = vunpack.c.l.b16 %v427
        %v1336 = vunpack.c.l.b16 %v428
        %v1337 = vunpack.c.l.b16 %v429
        %v1338 = vunpack.c.l.b16 %v430
        %v1339 = vunpack.c.l.b16 %v431
        %v1340 = vunpack.c.l.b16 %v432
        %v1341 = vunpack.c.l.b16 %v433
        %v1342 = vunpack.c.l.b16 %v434
        %v1343 = vpack.c.b16 %v1336, %v1335
        %v1344 = vpack.c.b16 %v1338, %v1337
        %v1345 = vpack.c.b16 %v1340, %v1339
        %v1346 = vpack.c.b16 %v1342, %v1341
        %v1348 = vsel %vm701, %v1343, 0
        %v1351 = vsel %vm701, %v1344, 0
        %v1354 = vsel %vm701, %v1345, 0
        %v1357 = vsel %vm701, %v1346, 0
        %v1360 = vsel %vm701, %v1311, 0
        %v1363 = vsel %vm701, %v1312, 0
        %v1366 = vsel %vm701, %v1313, 0
        %v1369 = vsel %vm701, %v1314, 0
        %v1372 = vsel %vm701, %v1315, 0
        %v1375 = vsel %vm701, %v1316, 0
        %v1378 = vsel %vm701, %v1317, 0
        %v1381 = vsel %vm701, %v1318, 0
        %v1384 = vsel %vm701, %v1319, 0
        %v1387 = vsel %vm701, %v1320, 0
        %v1390 = vsel %vm701, %v1321, 0
        %v1393 = vsel %vm701, %v1322, 0
        %v1396 = vsel %vm701, %v1323, 0
        %v1399 = vsel %vm701, %v1324, 0
        %v1402 = vsel %vm701, %v1325, 0
        %v1405 = vsel %vm701, %v1326, 0
        %1407 = vmatprep.subr.bf16.mxu0 0
        %1408 = vmatpush1.bf16.xpose.msra.mxu0 %v1360
        %1409 = vmatprep.subr.bf16.mxu0 0
        %1410 = vmatpush1.bf16.xpose.msra.mxu0 %v1363
        %1411 = vmatprep.subr.bf16.mxu0 0
        %1412 = vmatpush1.bf16.xpose.msra.mxu0 %v1366
        %1413 = vmatprep.subr.bf16.mxu0 0
        %1414 = vmatpush1.bf16.xpose.msra.mxu0 %v1369
        %1415 = vmatprep.subr.bf16.mxu0 0
        %1416 = vmatpush1.bf16.xpose.msra.mxu0 %v1372
        %1417 = vmatprep.subr.bf16.mxu0 0
        %1418 = vmatpush1.bf16.xpose.msra.mxu0 %v1375
        %1419 = vmatprep.subr.bf16.mxu0 0
        %1420 = vmatpush1.bf16.xpose.msra.mxu0 %v1378
        %1421 = vmatprep.subr.bf16.mxu0 0
        %1422 = vmatpush1.bf16.xpose.msra.mxu0 %v1381
        %1423 = vmatprep.subr.bf16.mxu0 0
        %1424 = vmatpush1.bf16.xpose.msra.mxu0 %v1384
        %1425 = vmatprep.subr.bf16.mxu0 0
        %1426 = vmatpush1.bf16.xpose.msra.mxu0 %v1387
        %1427 = vmatprep.subr.bf16.mxu0 0
        %1428 = vmatpush1.bf16.xpose.msra.mxu0 %v1390
        %1429 = vmatprep.subr.bf16.mxu0 0
        %1430 = vmatpush1.bf16.xpose.msra.mxu0 %v1393
        %1431 = vmatprep.subr.bf16.mxu0 0
        %1432 = vmatpush1.bf16.xpose.msra.mxu0 %v1396
        %1433 = vmatprep.subr.bf16.mxu0 0
        %1434 = vmatpush1.bf16.xpose.msra.mxu0 %v1399
        %1435 = vmatprep.subr.bf16.mxu0 0
        %1436 = vmatpush1.bf16.xpose.msra.mxu0 %v1402
        %1437 = vmatprep.subr.bf16.mxu0 0
        %1438 = vmatpush1.bf16.xpose.msra.mxu0 %v1405
        %1439 = vmatprep.mubr.bf16.mxu0 0
        %1440 = vmatmul.mubr.bf16.gmra.mrb[0].mxu0 %v1348
        %v1441 = vpop.f32.mrb[0].mxu0
        %v1442 = vadd.f32 0.0, %v1441
        %v1443 = vpop.f32.mrb[0].mxu0
        %v1444 = vadd.f32 0.0, %v1443
        %v1445 = vpop.f32.mrb[0].mxu0
        %v1446 = vadd.f32 0.0, %v1445
        %v1447 = vpop.f32.mrb[0].mxu0
        %v1448 = vadd.f32 0.0, %v1447
        %1449 = vmatprep.mubr.bf16.mxu0 0
        %1450 = vmatmul.mubr.bf16.gmra.mrb[0].mxu0 %v1351
        %v1451 = vpop.f32.mrb[0].mxu0
        %v1452 = vadd.f32 0.0, %v1451
        %v1453 = vpop.f32.mrb[0].mxu0
        %v1454 = vadd.f32 0.0, %v1453
        %v1455 = vpop.f32.mrb[0].mxu0
        %v1456 = vadd.f32 0.0, %v1455
        %v1457 = vpop.f32.mrb[0].mxu0
        %v1458 = vadd.f32 0.0, %v1457
        %1459 = vmatprep.mubr.bf16.mxu0 0
        %1460 = vmatmul.mubr.bf16.gmra.mrb[0].mxu0 %v1354
        %v1461 = vpop.f32.mrb[0].mxu0
        %v1462 = vadd.f32 0.0, %v1461
        %v1463 = vpop.f32.mrb[0].mxu0
        %v1464 = vadd.f32 0.0, %v1463
        %v1465 = vpop.f32.mrb[0].mxu0
        %v1466 = vadd.f32 0.0, %v1465
        %v1467 = vpop.f32.mrb[0].mxu0
        %v1468 = vadd.f32 0.0, %v1467
        %1469 = vmatprep.mubr.bf16.mxu0 0
        %1470 = vmatmul.mubr.bf16.gmra.mrb[0].mxu0 %v1357
        %v1471 = vpop.f32.mrb[0].mxu0
        %v1472 = vadd.f32 0.0, %v1471
        %v1473 = vpop.f32.mrb[0].mxu0
        %v1474 = vadd.f32 0.0, %v1473
        %v1475 = vpop.f32.mrb[0].mxu0
        %v1476 = vadd.f32 0.0, %v1475
        %v1477 = vpop.f32.mrb[0].mxu0
        %v1478 = vadd.f32 0.0, %v1477
        %1479 = vdwg.mxu0
        %v1480 = vpack.c.bf16 %v1446, %v1442
        %v1481 = vpack.c.bf16 %v1448, %v1444
        %v1482 = vpack.c.bf16 %v1456, %v1452
        %v1483 = vpack.c.bf16 %v1458, %v1454
        %v1484 = vpack.c.bf16 %v1466, %v1462
        %v1485 = vpack.c.bf16 %v1468, %v1464
        %v1486 = vpack.c.bf16 %v1476, %v1472
        %v1487 = vpack.c.bf16 %v1478, %v1474
        %v1496 = vunpack.c.l.b16 %v1480
        %v1497 = vunpack.c.l.b16 %v1481
        %v1498 = vunpack.c.h.b16 %v1480
        %v1499 = vunpack.c.h.b16 %v1481
        %v1500 = vunpack.c.l.b16 %v1482
        %v1501 = vunpack.c.l.b16 %v1483
        %v1502 = vunpack.c.h.b16 %v1482
        %v1503 = vunpack.c.h.b16 %v1483
        %v1504 = vunpack.c.l.b16 %v1484
        %v1505 = vunpack.c.l.b16 %v1485
        %v1506 = vunpack.c.h.b16 %v1484
        %v1507 = vunpack.c.h.b16 %v1485
        %v1508 = vunpack.c.l.b16 %v1486
        %v1509 = vunpack.c.l.b16 %v1487
        %v1510 = vunpack.c.h.b16 %v1486
        %v1511 = vunpack.c.h.b16 %v1487
        %v1512 = vpack.c.b16 %v1497, %v1496
        %v1513 = vpack.c.b16 %v1499, %v1498
        %v1514 = vpack.c.b16 %v1501, %v1500
        %v1515 = vpack.c.b16 %v1503, %v1502
        %v1516 = vpack.c.b16 %v1505, %v1504
        %v1517 = vpack.c.b16 %v1507, %v1506
        %v1518 = vpack.c.b16 %v1509, %v1508
        %v1519 = vpack.c.b16 %v1511, %v1510
        %1528 = vst [vmem:[%s390] sm:$0xff] %v1512
        %1529 = vst [vmem:[%s390 + $0x8] sm:$0xff] %v1513
        %1530 = vst [vmem:[%s390 + $0x10] sm:$0xff] %v1514
        %1531 = vst [vmem:[%s390 + $0x18] sm:$0xff] %v1515
        %1532 = vst [vmem:[%s390 + $0x20] sm:$0xff] %v1516
        %1533 = vst [vmem:[%s390 + $0x28] sm:$0xff] %v1517
        %1534 = vst [vmem:[%s390 + $0x30] sm:$0xff] %v1518
        %1535 = vst [vmem:[%s390 + $0x38] sm:$0xff] %v1519
        %s1536 = sand.u32 %s190, 1
        %s1537 = scalar_lea.sflag [#allocation5], %s1536
        %s1538 = sand.u32 %s190, 1
        %s1539 = smul.addr %s1538, 64
        %s1540 = scalar_lea.vmem [#allocation12], %s1539
        // Predicated region
        $region68: #{dablock_forward.8} parent=39 // pred_check
          %p1541 = pneg %p200
        $region69: #{dablock_forward.8} parent=39 // pred_check_branch
          %1543 = sbr.rel (%p1541) target = $region71
        $region70: #{dablock_forward.8} parent=39 // pred_region
          %s1544 = smul.u32 2, %s33
          %s1546 = ssub.s32 1024, 1024
          %1547 = vsyncadd %s1537, %s1546
          %s1548 = smul.addr %s31, 16
          %s1549 = sadd.s32 %s1544, %s1548
          %s1550 = smul.addr %s32, 128
          %s1551 = sadd.s32 %s1549, %s1550
          %s1552 = smul.addr %s1551, 64
          %s1553 = scalar_lea.hbm %s5, %s1552
          %s1554 = sshll.u32 %s1540, 4
          %s1555 = int_to_ptr.vmem [resolvable:$true] %s1554
          %1560 = dma.vmem_to_hbm [thread:$0]  %s1555, 1024, %s1553, %s1537, 128, 128, 8
        $region71: #{dablock_forward.8} parent=39 // pred_fallthru
          _
      $region40: #{dablock_forward.8} parent=5 // pred_fallthru
        _
      %p1561 = scmp.le.s32.totalorder 2, %s21
      // Predicated region
      $region72: #{dablock_forward.8} parent=5 // pred_check
        %p1562 = pneg %p1561
      $region73: #{dablock_forward.8} parent=5 // pred_check_branch
        %1564 = sbr.rel (%p1562) target = $region75
      $region74: #{dablock_forward.8} parent=5 // pred_region
        %s1565 = ssub.s32 %s21, 2
        // Predicated region
        $region76: #{dablock_forward.8} parent=74 // pred_check
          %p1566 = pneg %p206
        $region77: #{dablock_forward.8} parent=74 // pred_check_branch
          %1568 = sbr.rel (%p1566) target = $region79
        $region78: #{dablock_forward.8} parent=74 // pred_region
          %s1569 = sand.u32 %s191, 1
          %s1570 = scalar_lea.sflag [#allocation5], %s1569
          %s1571 = sand.u32 %s191, 1
          %s1572 = smul.addr %s1571, 64
          %s1573 = scalar_lea.vmem [#allocation12], %s1572
          %1574 = dma.done %s1570, 1024
        $region79: #{dablock_forward.8} parent=74 // pred_fallthru
          _
      $region75: #{dablock_forward.8} parent=5 // pred_fallthru
        _
    $region6: #{dablock_forward.8} parent=1 // loop_footer
      %s25 = sadd.s32 1, %s21
    $region7: #{dablock_forward.8} parent=1 // loop_footer_branch
      %20 = sbr.rel target = $region3
    $region8: #{dablock_forward.8} parent=1 // loop_exit
      _
    %1575 = vsyncpa [#allocation4], 1
    %s1576 = scalar_lea.sflag [#allocation4], 1
    %1577 = vsyncpa %s1576, 1
    %1578 = vsyncpa [#allocation7], 1
    %s1579 = scalar_lea.sflag [#allocation7], 1
    %1580 = vsyncpa %s1579, 1
    %1581 = vsyncpa [#allocation10], 1
    %1582 = vsyncpa [#allocation5], 1
    %s1583 = scalar_lea.sflag [#allocation5], 1
    %1584 = vsyncpa %s1583, 1

// kernel: dablock_forward.9
$region0: #{dablock_forward.9}
  #allocation0 [shape = 'u32[]', space=smem, size = 0x4, offset = 0x4, fixed_abs, tag = 'smem constant byte address 0x4 - core index']
  #allocation1 [shape = 'u32[144,128]{1,0:T(1,128)}', space=vmem, size = 0x12000, scoped, tag = 'internal scratch']
  %s0 = inlined_call_operand.hbm [shape: bf16[2,512,256], index: 0, kind: input, shape index: {}]
  %s1 = inlined_call_operand.hbm [shape: f32[2,8,256], index: 1, kind: input, shape index: {}]
  %s2 = inlined_call_operand.hbm [shape: bf16[8,512], index: 2, kind: input, shape index: {}]
  %s3 = inlined_call_operand.hbm [shape: f32[8,1], index: 3, kind: input, shape index: {}]
  %s4 = inlined_call_operand.hbm [shape: bf16[16,8], index: 4, kind: input, shape index: {}]
  %s5 = inlined_call_operand.hbm [shape: f32[16,1], index: 5, kind: input, shape index: {}]
  %s6 = inlined_call_operand.hbm [shape: bf16[8,16], index: 6, kind: input, shape index: {}]
  %s7 = inlined_call_operand.hbm [shape: f32[8,1], index: 7, kind: input, shape index: {}]
  %s8 = inlined_call_operand.hbm [shape: f32[2,8,256], index: 8, kind: output, shape index: {}]
  %s9 = sld [smem:[#allocation0]]
  $region97: #{dablock_forward.9} parent=0
    _
  %s11 = ssub.s32 1, %s9
  %s12 = scalar_select 0, %s11, %s9
  $region1: #{dablock_forward.9} parent=0
    #allocation2 [shape = 'u8[524288]{0}', space=vmem, size = 0x80000, scoped, tag = 'input window, operand 0']
    #allocation3 [shape = 's32[2]{0}', space=sflag, size = 0x8, scoped, tag = 'scoped memory for dablock_forward.9']
    #allocation4 [shape = 's32[2]{0}', space=sflag, size = 0x8, scoped, tag = 'scoped memory for dablock_forward.9']
    #allocation5 [shape = 'u8[16384]{0}', space=vmem, size = 0x4000, scoped, tag = 'input window, operand 1']
    #allocation6 [shape = 's32[2]{0}', space=sflag, size = 0x8, scoped, tag = 'scoped memory for dablock_forward.9']
    #allocation7 [shape = 'u8[8192]{0}', space=vmem, size = 0x2000, scoped, tag = 'input window, operand 2, single buffered']
    #allocation8 [shape = 'u8[4096]{0}', space=vmem, size = 0x1000, scoped, tag = 'input window, operand 3, single buffered']
    #allocation9 [shape = 's32[1]{0}', space=sflag, size = 0x4, scoped, tag = 'scoped memory for dablock_forward.9']
    #allocation10 [shape = 'u8[4096]{0}', space=vmem, size = 0x1000, scoped, tag = 'input window, operand 4, single buffered']
    #allocation11 [shape = 'u8[8192]{0}', space=vmem, size = 0x2000, scoped, tag = 'input window, operand 5, single buffered']
    #allocation12 [shape = 's32[1]{0}', space=sflag, size = 0x4, scoped, tag = 'scoped memory for dablock_forward.9']
    #allocation13 [shape = 'u8[2048]{0}', space=vmem, size = 0x800, scoped, tag = 'input window, operand 6, single buffered']
    #allocation14 [shape = 'u8[4096]{0}', space=vmem, size = 0x1000, scoped, tag = 'input window, operand 7, single buffered']
    #allocation15 [shape = 's32[1]{0}', space=sflag, size = 0x4, scoped, tag = 'scoped memory for dablock_forward.9']
    #allocation16 [shape = 'u8[16384]{0}', space=vmem, size = 0x4000, scoped, tag = 'output window, operand 0']
    %13 = vsyncpa [#allocation3], 0
    %s14 = scalar_lea.sflag [#allocation3], 1
    %15 = vsyncpa %s14, 0
    %16 = vsyncpa [#allocation6], 0
    %s17 = scalar_lea.sflag [#allocation6], 1
    %18 = vsyncpa %s17, 0
    %19 = vsyncpa [#allocation9], 0
    %20 = vsyncpa [#allocation12], 0
    %21 = vsyncpa [#allocation15], 0
    %22 = vsyncpa [#allocation4], 0
    %s23 = scalar_lea.sflag [#allocation4], 1
    %24 = vsyncpa %s23, 0
    loop: start=0, step=1, limit=4
    $region2: #{dablock_forward.9} parent=1 // loop_pre_header
      _
    $region3: #{dablock_forward.9} parent=1 // loop_header
      %s26 = sphi 0, %s30
      %p27 = scmp.ge.s32.totalorder %s26, 4
      %s33 = sphi 0, %s45
      %s34 = sphi 0, %s41
      %s35 = sphi 0, %s33
      %s36 = sphi 0, %s34
      %s37 = sphi 0, %s35
      %s38 = sphi 0, %s36
      %s50 = sphi 0, %s52
      %s53 = sphi 0, %s50
      %s54 = sphi 0, %s53
      %s70 = sphi 0, %s54
      %s78 = sphi 0, %s80
      %s81 = sphi 0, %s78
      %s82 = sphi 0, %s81
      %s98 = sphi 0, %s82
      %s102 = sphi 0, %s102
      %s104 = sphi 0, %s102
      %s105 = sphi 0, %s104
      %s119 = sphi 0, %s105
      %s123 = sphi 0, %s123
      %s125 = sphi 0, %s123
      %s126 = sphi 0, %s125
      %s140 = sphi 0, %s126
      %s144 = sphi 0, %s144
      %s146 = sphi 0, %s144
      %s147 = sphi 0, %s146
      %s161 = sphi 0, %s147
      %s165 = sphi 0, %s165
      %s167 = sphi 0, %s165
      %s168 = sphi 0, %s167
      %s182 = sphi 0, %s168
      %s186 = sphi 0, %s186
      %s188 = sphi 0, %s186
      %s189 = sphi 0, %s188
      %s203 = sphi 0, %s189
      %s207 = sphi 0, %s207
      %s209 = sphi 0, %s207
      %s210 = sphi 0, %s209
      %s224 = sphi 0, %s210
      %s232 = sphi 0, %s234
      %s235 = sphi 0, %s232
      %s236 = sphi 0, %s235
      %s252 = sphi 0, %s236
    $region4: #{dablock_forward.9} parent=1 // loop_header_branch
      %29 = sbr.rel (%p27) target = $region8
    $region5: #{dablock_forward.9} parent=1 // loop_body
      %s31 = ssub.s32 %s26, 1
      %s32 = ssub.s32 %s26, 2
      %s39 = sadd.s32 1, %s34
      %p40 = scmp.ge.s32.totalorder %s39, 2
      %s41 = scalar_select %p40, 0, %s39
      %s42 = sadd.s32 1, %s33
      %s43 = scalar_select %p40, %s42, %s33
      %p44 = scmp.ge.s32.totalorder %s43, 1
      %s45 = scalar_select %p44, 0, %s43
      %s46 = ssub.s32 %s34, %s41
      %s47 = ssub.s32 %s33, %s45
      %s48 = sor.u32 %s46, %s47
      %p49 = scmp.eq.s32.totalorder %s48, 0
      %s51 = sadd.s32 %s50, 1
      %s52 = scalar_select %p49, %s50, %s51
      %p55 = pneg %p49
      %p56 = scmp.eq.s32.totalorder %s26, 1
      %p57 = por %p55, %p56
      %p58 = scmp.ne.s32.totalorder %s50, %s53
      %p59 = scmp.eq.s32.totalorder %s26, 0
      %p60 = por %p58, %p59
      %p61 = scmp.ne.s32.totalorder %s50, %s53
      %p62 = scmp.eq.s32.totalorder %s31, 1
      %p63 = por %p61, %p62
      %p64 = scmp.ne.s32.totalorder %s53, %s54
      %p65 = scmp.eq.s32.totalorder %s31, 0
      %p66 = por %p64, %p65
      %p67 = scmp.ne.s32.totalorder %s53, %s54
      %p68 = scmp.eq.s32.totalorder %s32, 1
      %p69 = por %p67, %p68
      %p71 = scmp.ne.s32.totalorder %s54, %s70
      %p72 = scmp.eq.s32.totalorder %s32, 0
      %p73 = por %p71, %p72
      %s74 = ssub.s32 %s34, %s41
      %s75 = ssub.s32 %s33, %s45
      %s76 = sor.u32 %s74, %s75
      %p77 = scmp.eq.s32.totalorder %s76, 0
      %s79 = sadd.s32 %s78, 1
      %s80 = scalar_select %p77, %s78, %s79
      %p83 = pneg %p77
      %p84 = scmp.eq.s32.totalorder %s26, 1
      %p85 = por %p83, %p84
      %p86 = scmp.ne.s32.totalorder %s78, %s81
      %p87 = scmp.eq.s32.totalorder %s26, 0
      %p88 = por %p86, %p87
      %p89 = scmp.ne.s32.totalorder %s78, %s81
      %p90 = scmp.eq.s32.totalorder %s31, 1
      %p91 = por %p89, %p90
      %p92 = scmp.ne.s32.totalorder %s81, %s82
      %p93 = scmp.eq.s32.totalorder %s31, 0
      %p94 = por %p92, %p93
      %p95 = scmp.ne.s32.totalorder %s81, %s82
      %p96 = scmp.eq.s32.totalorder %s32, 1
      %p97 = por %p95, %p96
      %p99 = scmp.ne.s32.totalorder %s82, %s98
      %p100 = scmp.eq.s32.totalorder %s32, 0
      %p101 = por %p99, %p100
      %s103 = sadd.s32 %s102, 1
      %p106 = scmp.eq.s32.totalorder %s26, 1
      %p107 = scmp.ne.s32.totalorder %s102, %s104
      %p108 = scmp.eq.s32.totalorder %s26, 0
      %p109 = por %p107, %p108
      %p110 = scmp.ne.s32.totalorder %s102, %s104
      %p111 = scmp.eq.s32.totalorder %s31, 1
      %p112 = por %p110, %p111
      %p113 = scmp.ne.s32.totalorder %s104, %s105
      %p114 = scmp.eq.s32.totalorder %s31, 0
      %p115 = por %p113, %p114
      %p116 = scmp.ne.s32.totalorder %s104, %s105
      %p117 = scmp.eq.s32.totalorder %s32, 1
      %p118 = por %p116, %p117
      %p120 = scmp.ne.s32.totalorder %s105, %s119
      %p121 = scmp.eq.s32.totalorder %s32, 0
      %p122 = por %p120, %p121
      %s124 = sadd.s32 %s123, 1
      %p127 = scmp.eq.s32.totalorder %s26, 1
      %p128 = scmp.ne.s32.totalorder %s123, %s125
      %p129 = scmp.eq.s32.totalorder %s26, 0
      %p130 = por %p128, %p129
      %p131 = scmp.ne.s32.totalorder %s123, %s125
      %p132 = scmp.eq.s32.totalorder %s31, 1
      %p133 = por %p131, %p132
      %p134 = scmp.ne.s32.totalorder %s125, %s126
      %p135 = scmp.eq.s32.totalorder %s31, 0
      %p136 = por %p134, %p135
      %p137 = scmp.ne.s32.totalorder %s125, %s126
      %p138 = scmp.eq.s32.totalorder %s32, 1
      %p139 = por %p137, %p138
      %p141 = scmp.ne.s32.totalorder %s126, %s140
      %p142 = scmp.eq.s32.totalorder %s32, 0
      %p143 = por %p141, %p142
      %s145 = sadd.s32 %s144, 1
      %p148 = scmp.eq.s32.totalorder %s26, 1
      %p149 = scmp.ne.s32.totalorder %s144, %s146
      %p150 = scmp.eq.s32.totalorder %s26, 0
      %p151 = por %p149, %p150
      %p152 = scmp.ne.s32.totalorder %s144, %s146
      %p153 = scmp.eq.s32.totalorder %s31, 1
      %p154 = por %p152, %p153
      %p155 = scmp.ne.s32.totalorder %s146, %s147
      %p156 = scmp.eq.s32.totalorder %s31, 0
      %p157 = por %p155, %p156
      %p158 = scmp.ne.s32.totalorder %s146, %s147
      %p159 = scmp.eq.s32.totalorder %s32, 1
      %p160 = por %p158, %p159
      %p162 = scmp.ne.s32.totalorder %s147, %s161
      %p163 = scmp.eq.s32.totalorder %s32, 0
      %p164 = por %p162, %p163
      %s166 = sadd.s32 %s165, 1
      %p169 = scmp.eq.s32.totalorder %s26, 1
      %p170 = scmp.ne.s32.totalorder %s165, %s167
      %p171 = scmp.eq.s32.totalorder %s26, 0
      %p172 = por %p170, %p171
      %p173 = scmp.ne.s32.totalorder %s165, %s167
      %p174 = scmp.eq.s32.totalorder %s31, 1
      %p175 = por %p173, %p174
      %p176 = scmp.ne.s32.totalorder %s167, %s168
      %p177 = scmp.eq.s32.totalorder %s31, 0
      %p178 = por %p176, %p177
      %p179 = scmp.ne.s32.totalorder %s167, %s168
      %p180 = scmp.eq.s32.totalorder %s32, 1
      %p181 = por %p179, %p180
      %p183 = scmp.ne.s32.totalorder %s168, %s182
      %p184 = scmp.eq.s32.totalorder %s32, 0
      %p185 = por %p183, %p184
      %s187 = sadd.s32 %s186, 1
      %p190 = scmp.eq.s32.totalorder %s26, 1
      %p191 = scmp.ne.s32.totalorder %s186, %s188
      %p192 = scmp.eq.s32.totalorder %s26, 0
      %p193 = por %p191, %p192
      %p194 = scmp.ne.s32.totalorder %s186, %s188
      %p195 = scmp.eq.s32.totalorder %s31, 1
      %p196 = por %p194, %p195
      %p197 = scmp.ne.s32.totalorder %s188, %s189
      %p198 = scmp.eq.s32.totalorder %s31, 0
      %p199 = por %p197, %p198
      %p200 = scmp.ne.s32.totalorder %s188, %s189
      %p201 = scmp.eq.s32.totalorder %s32, 1
      %p202 = por %p200, %p201
      %p204 = scmp.ne.s32.totalorder %s189, %s203
      %p205 = scmp.eq.s32.totalorder %s32, 0
      %p206 = por %p204, %p205
      %s208 = sadd.s32 %s207, 1
      %p211 = scmp.eq.s32.totalorder %s26, 1
      %p212 = scmp.ne.s32.totalorder %s207, %s209
      %p213 = scmp.eq.s32.totalorder %s26, 0
      %p214 = por %p212, %p213
      %p215 = scmp.ne.s32.totalorder %s207, %s209
      %p216 = scmp.eq.s32.totalorder %s31, 1
      %p217 = por %p215, %p216
      %p218 = scmp.ne.s32.totalorder %s209, %s210
      %p219 = scmp.eq.s32.totalorder %s31, 0
      %p220 = por %p218, %p219
      %p221 = scmp.ne.s32.totalorder %s209, %s210
      %p222 = scmp.eq.s32.totalorder %s32, 1
      %p223 = por %p221, %p222
      %p225 = scmp.ne.s32.totalorder %s210, %s224
      %p226 = scmp.eq.s32.totalorder %s32, 0
      %p227 = por %p225, %p226
      %s228 = ssub.s32 %s34, %s41
      %s229 = ssub.s32 %s33, %s45
      %s230 = sor.u32 %s228, %s229
      %p231 = scmp.eq.s32.totalorder %s230, 0
      %s233 = sadd.s32 %s232, 1
      %s234 = scalar_select %p231, %s232, %s233
      %p237 = pneg %p231
      %p238 = scmp.eq.s32.totalorder %s26, 1
      %p239 = por %p237, %p238
      %p240 = scmp.ne.s32.totalorder %s232, %s235
      %p241 = scmp.eq.s32.totalorder %s26, 0
      %p242 = por %p240, %p241
      %p243 = scmp.ne.s32.totalorder %s232, %s235
      %p244 = scmp.eq.s32.totalorder %s31, 1
      %p245 = por %p243, %p244
      %p246 = scmp.ne.s32.totalorder %s235, %s236
      %p247 = scmp.eq.s32.totalorder %s31, 0
      %p248 = por %p246, %p247
      %p249 = scmp.ne.s32.totalorder %s235, %s236
      %p250 = scmp.eq.s32.totalorder %s32, 1
      %p251 = por %p249, %p250
      %p253 = scmp.ne.s32.totalorder %s236, %s252
      %p254 = scmp.eq.s32.totalorder %s32, 0
      %p255 = por %p253, %p254
      %p256 = scmp.le.s32.totalorder 1, %s26
      %p257 = scmp.lt.s32.totalorder %s26, 3
      %p258 = pnand %p256, %p257
      %p259 = pneg %p258
      // Predicated region
      $region9: #{dablock_forward.9} parent=5 // pred_check
        _
      $region10: #{dablock_forward.9} parent=5 // pred_check_branch
        %261 = sbr.rel (%p258) target = $region12
      $region11: #{dablock_forward.9} parent=5 // pred_region
        %s262 = ssub.s32 %s26, 1
        // Predicated region
        $region13: #{dablock_forward.9} parent=11 // pred_check
          %p263 = pneg %p115
        $region14: #{dablock_forward.9} parent=11 // pred_check_branch
          %265 = sbr.rel (%p263) target = $region16
        $region15: #{dablock_forward.9} parent=11 // pred_region
          %s267 = ssub.s32 256, 256
          %268 = vsyncadd [#allocation6], %s267
          %s270 = sshll.u32 [#allocation7], 4
          %s271 = int_to_ptr.vmem [resolvable:$true] %s270
          %273 = dma.hbm_to_vmem [thread:$0]  %s2, 256, %s271, [#allocation6]
        $region16: #{dablock_forward.9} parent=11 // pred_fallthru
          _
        // Predicated region
        $region17: #{dablock_forward.9} parent=11 // pred_check
          %p274 = pneg %p136
        $region18: #{dablock_forward.9} parent=11 // pred_check_branch
          %276 = sbr.rel (%p274) target = $region20
        $region19: #{dablock_forward.9} parent=11 // pred_region
          %s278 = ssub.s32 128, 128
          %279 = vsyncadd [#allocation9], %s278
          %s281 = sshll.u32 [#allocation8], 4
          %s282 = int_to_ptr.vmem [resolvable:$true] %s281
          %284 = dma.hbm_to_vmem [thread:$0]  %s3, 128, %s282, [#allocation9]
        $region20: #{dablock_forward.9} parent=11 // pred_fallthru
          _
        // Predicated region
        $region21: #{dablock_forward.9} parent=11 // pred_check
          %p285 = pneg %p157
        $region22: #{dablock_forward.9} parent=11 // pred_check_branch
          %287 = sbr.rel (%p285) target = $region24
        $region23: #{dablock_forward.9} parent=11 // pred_region
          %s289 = ssub.s32 128, 128
          %290 = vsyncadd [#allocation9], %s289
          %s291 = sshll.u32 [#allocation10], 4
          %s292 = int_to_ptr.vmem [resolvable:$true] %s291
          %297 = dma.hbm_to_vmem [thread:$0]  %s4, 128, %s292, [#allocation9], 64, 64, 4
        $region24: #{dablock_forward.9} parent=11 // pred_fallthru
          _
        // Predicated region
        $region25: #{dablock_forward.9} parent=11 // pred_check
          %p298 = pneg %p178
        $region26: #{dablock_forward.9} parent=11 // pred_check_branch
          %300 = sbr.rel (%p298) target = $region28
        $region27: #{dablock_forward.9} parent=11 // pred_region
          %s302 = ssub.s32 256, 256
          %303 = vsyncadd [#allocation12], %s302
          %s304 = sshll.u32 [#allocation11], 4
          %s305 = int_to_ptr.vmem [resolvable:$true] %s304
          %310 = dma.hbm_to_vmem [thread:$0]  %s5, 256, %s305, [#allocation12], 128, 128, 8
        $region28: #{dablock_forward.9} parent=11 // pred_fallthru
          _
        // Predicated region
        $region29: #{dablock_forward.9} parent=11 // pred_check
          %p311 = pneg %p199
        $region30: #{dablock_forward.9} parent=11 // pred_check_branch
          %313 = sbr.rel (%p311) target = $region32
        $region31: #{dablock_forward.9} parent=11 // pred_region
          %s315 = ssub.s32 64, 64
          %316 = vsyncadd [#allocation12], %s315
          %s318 = sshll.u32 [#allocation13], 4
          %s319 = int_to_ptr.vmem [resolvable:$true] %s318
          %321 = dma.hbm_to_vmem [thread:$0]  %s6, 64, %s319, [#allocation12]
        $region32: #{dablock_forward.9} parent=11 // pred_fallthru
          _
        // Predicated region
        $region33: #{dablock_forward.9} parent=11 // pred_check
          %p322 = pneg %p220
        $region34: #{dablock_forward.9} parent=11 // pred_check_branch
          %324 = sbr.rel (%p322) target = $region36
        $region35: #{dablock_forward.9} parent=11 // pred_region
          %s326 = ssub.s32 128, 128
          %327 = vsyncadd [#allocation15], %s326
          %s329 = sshll.u32 [#allocation14], 4
          %s330 = int_to_ptr.vmem [resolvable:$true] %s329
          %332 = dma.hbm_to_vmem [thread:$0]  %s7, 128, %s330, [#allocation15]
        $region36: #{dablock_forward.9} parent=11 // pred_fallthru
          _
      $region12: #{dablock_forward.9} parent=5 // pred_fallthru
        _
      %p333 = scmp.lt.s32.totalorder %s26, 2
      // Predicated region
      $region37: #{dablock_forward.9} parent=5 // pred_check
        %p334 = pneg %p333
      $region38: #{dablock_forward.9} parent=5 // pred_check_branch
        %336 = sbr.rel (%p334) target = $region40
      $region39: #{dablock_forward.9} parent=5 // pred_region
        // Predicated region
        $region41: #{dablock_forward.9} parent=39 // pred_check
          %p337 = pneg %p60
        $region42: #{dablock_forward.9} parent=39 // pred_check_branch
          %339 = sbr.rel (%p337) target = $region44
        $region43: #{dablock_forward.9} parent=39 // pred_region
          %s340 = sand.u32 %s50, 1
          %s341 = scalar_lea.sflag [#allocation3], %s340
          %s342 = sand.u32 %s50, 1
          %s343 = smul.addr %s342, 512
          %s344 = scalar_lea.vmem [#allocation2], %s343
          %s345 = smul.u32 2, %s33
          %s347 = ssub.s32 8192, 8192
          %348 = vsyncadd %s341, %s347
          %s349 = smul.addr %s34, 128
          %s350 = sadd.s32 %s345, %s349
          %s351 = smul.addr %s350, 64
          %s352 = scalar_lea.hbm %s0, %s351
          %s353 = sshll.u32 %s344, 4
          %s354 = int_to_ptr.vmem [resolvable:$true] %s353
          %359 = dma.hbm_to_vmem [thread:$0]  %s352, 8192, %s354, %s341, 128, 128, 8
        $region44: #{dablock_forward.9} parent=39 // pred_fallthru
          _
        // Predicated region
        $region45: #{dablock_forward.9} parent=39 // pred_check
          %p360 = pneg %p88
        $region46: #{dablock_forward.9} parent=39 // pred_check_branch
          %362 = sbr.rel (%p360) target = $region48
        $region47: #{dablock_forward.9} parent=39 // pred_region
          %s363 = sand.u32 %s26, 1
          %s364 = scalar_lea.sflag [#allocation6], %s363
          %s365 = sand.u32 %s78, 1
          %s366 = smul.addr %s365, 16
          %s367 = scalar_lea.vmem [#allocation5], %s366
          %s368 = smul.u32 2, %s33
          %s370 = ssub.s32 256, 256
          %371 = vsyncadd %s364, %s370
          %s372 = smul.addr %s34, 2
          %s373 = sadd.s32 %s368, %s372
          %s374 = smul.addr %s373, 128
          %s375 = scalar_lea.hbm %s1, %s374
          %s377 = sshll.u32 %s367, 4
          %s378 = int_to_ptr.vmem [resolvable:$true] %s377
          %380 = dma.hbm_to_vmem [thread:$0]  %s375, 256, %s378, %s364
        $region48: #{dablock_forward.9} parent=39 // pred_fallthru
          _
      $region40: #{dablock_forward.9} parent=5 // pred_fallthru
        _
      %p381 = scmp.le.s32.totalorder 1, %s26
      %p382 = scmp.lt.s32.totalorder %s26, 3
      %p383 = pnand %p381, %p382
      %p384 = pneg %p383
      // Predicated region
      $region49: #{dablock_forward.9} parent=5 // pred_check
        _
      $region50: #{dablock_forward.9} parent=5 // pred_check_branch
        %386 = sbr.rel (%p383) target = $region52
      $region51: #{dablock_forward.9} parent=5 // pred_region
        %s387 = ssub.s32 %s26, 1
        %s388 = sand.u32 %s53, 1
        %s389 = scalar_lea.sflag [#allocation3], %s388
        %s390 = sand.u32 %s53, 1
        %s391 = smul.addr %s390, 512
        %s392 = scalar_lea.vmem [#allocation2], %s391
        // Predicated region
        $region53: #{dablock_forward.9} parent=51 // pred_check
          %p393 = pneg %p66
        $region54: #{dablock_forward.9} parent=51 // pred_check_branch
          %395 = sbr.rel (%p393) target = $region56
        $region55: #{dablock_forward.9} parent=51 // pred_region
          %396 = dma.done %s389, 8192
        $region56: #{dablock_forward.9} parent=51 // pred_fallthru
          _
        %s397 = sand.u32 %s31, 1
        %s398 = scalar_lea.sflag [#allocation6], %s397
        %s399 = sand.u32 %s81, 1
        %s400 = smul.addr %s399, 16
        %s401 = scalar_lea.vmem [#allocation5], %s400
        // Predicated region
        $region57: #{dablock_forward.9} parent=51 // pred_check
          %p402 = pneg %p94
        $region58: #{dablock_forward.9} parent=51 // pred_check_branch
          %404 = sbr.rel (%p402) target = $region60
        $region59: #{dablock_forward.9} parent=51 // pred_region
          %405 = dma.done %s398, 256
        $region60: #{dablock_forward.9} parent=51 // pred_fallthru
          _
        // Predicated region
        $region61: #{dablock_forward.9} parent=51 // pred_check
          %p406 = pneg %p115
        $region62: #{dablock_forward.9} parent=51 // pred_check_branch
          %408 = sbr.rel (%p406) target = $region64
        $region63: #{dablock_forward.9} parent=51 // pred_region
          %409 = dma.done [#allocation6], 256
        $region64: #{dablock_forward.9} parent=51 // pred_fallthru
          _
        // Predicated region
        $region65: #{dablock_forward.9} parent=51 // pred_check
          %p410 = pneg %p136
        $region66: #{dablock_forward.9} parent=51 // pred_check_branch
          %412 = sbr.rel (%p410) target = $region68
        $region67: #{dablock_forward.9} parent=51 // pred_region
          %413 = dma.done [#allocation9], 128
        $region68: #{dablock_forward.9} parent=51 // pred_fallthru
          _
        // Predicated region
        $region69: #{dablock_forward.9} parent=51 // pred_check
          %p414 = pneg %p157
        $region70: #{dablock_forward.9} parent=51 // pred_check_branch
          %416 = sbr.rel (%p414) target = $region72
        $region71: #{dablock_forward.9} parent=51 // pred_region
          %417 = dma.done [#allocation9], 128
        $region72: #{dablock_forward.9} parent=51 // pred_fallthru
          _
        // Predicated region
        $region73: #{dablock_forward.9} parent=51 // pred_check
          %p418 = pneg %p178
        $region74: #{dablock_forward.9} parent=51 // pred_check_branch
          %420 = sbr.rel (%p418) target = $region76
        $region75: #{dablock_forward.9} parent=51 // pred_region
          %421 = dma.done [#allocation12], 256
        $region76: #{dablock_forward.9} parent=51 // pred_fallthru
          _
        // Predicated region
        $region77: #{dablock_forward.9} parent=51 // pred_check
          %p422 = pneg %p199
        $region78: #{dablock_forward.9} parent=51 // pred_check_branch
          %424 = sbr.rel (%p422) target = $region80
        $region79: #{dablock_forward.9} parent=51 // pred_region
          %425 = dma.done [#allocation12], 64
        $region80: #{dablock_forward.9} parent=51 // pred_fallthru
          _
        // Predicated region
        $region81: #{dablock_forward.9} parent=51 // pred_check
          %p426 = pneg %p220
        $region82: #{dablock_forward.9} parent=51 // pred_check_branch
          %428 = sbr.rel (%p426) target = $region84
        $region83: #{dablock_forward.9} parent=51 // pred_region
          %429 = dma.done [#allocation15], 128
        $region84: #{dablock_forward.9} parent=51 // pred_fallthru
          _
        %s430 = sand.u32 %s53, 1
        %s431 = scalar_lea.sflag [#allocation3], %s430
        %s432 = sand.u32 %s53, 1
        %s433 = smul.addr %s432, 512
        %s434 = scalar_lea.vmem [#allocation2], %s433
        %p435 = pneg %p66
        %p436 = pneg %p63
        %s437 = sand.u32 %s31, 1
        %s438 = scalar_lea.sflag [#allocation6], %s437
        %s439 = sand.u32 %s81, 1
        %s440 = smul.addr %s439, 16
        %s441 = scalar_lea.vmem [#allocation5], %s440
        %p442 = pneg %p94
        %p443 = pneg %p91
        %p444 = pneg %p115
        %p445 = pneg %p112
        %p446 = pneg %p136
        %p447 = pneg %p133
        %p448 = pneg %p157
        %p449 = pneg %p154
        %p450 = pneg %p178
        %p451 = pneg %p175
        %p452 = pneg %p199
        %p453 = pneg %p196
        %p454 = pneg %p220
        %p455 = pneg %p217
        %p456 = pneg %p248
        %p457 = pneg %p245
        %s458 = sand.u32 %s235, 1
        %s459 = scalar_lea.sflag [#allocation4], %s458
        %s460 = sand.u32 %s235, 1
        %s461 = smul.addr %s460, 16
        %s462 = scalar_lea.vmem [#allocation16], %s461
        %s463 = smul.u32 2, %s35
        %s464 = smul.u32 2, %s35
        %s465 = smul.u32 2, %s35
        %v467 = vld [vmem:[%s392] sm:$0xff]
        %v468 = vld [vmem:[%s392 + $0x8] sm:$0xff]
        %v469 = vld [vmem:[%s392 + $0x10] sm:$0xff]
        %v470 = vld [vmem:[%s392 + $0x18] sm:$0xff]
        %v471 = vld [vmem:[%s392 + $0x20] sm:$0xff]
        %v472 = vld [vmem:[%s392 + $0x28] sm:$0xff]
        %v473 = vld [vmem:[%s392 + $0x30] sm:$0xff]
        %v474 = vld [vmem:[%s392 + $0x38] sm:$0xff]
        %v475 = vld [vmem:[%s392 + $0x40] sm:$0xff]
        %v476 = vld [vmem:[%s392 + $0x48] sm:$0xff]
        %v477 = vld [vmem:[%s392 + $0x50] sm:$0xff]
        %v478 = vld [vmem:[%s392 + $0x58] sm:$0xff]
        %v479 = vld [vmem:[%s392 + $0x60] sm:$0xff]
        %v480 = vld [vmem:[%s392 + $0x68] sm:$0xff]
        %v481 = vld [vmem:[%s392 + $0x70] sm:$0xff]
        %v482 = vld [vmem:[%s392 + $0x78] sm:$0xff]
        %v483 = vld [vmem:[%s392 + $0x80] sm:$0xff]
        %v484 = vld [vmem:[%s392 + $0x88] sm:$0xff]
        %v485 = vld [vmem:[%s392 + $0x90] sm:$0xff]
        %v486 = vld [vmem:[%s392 + $0x98] sm:$0xff]
        %v487 = vld [vmem:[%s392 + $0xa0] sm:$0xff]
        %v488 = vld [vmem:[%s392 + $0xa8] sm:$0xff]
        %v489 = vld [vmem:[%s392 + $0xb0] sm:$0xff]
        %v490 = vld [vmem:[%s392 + $0xb8] sm:$0xff]
        %v491 = vld [vmem:[%s392 + $0xc0] sm:$0xff]
        %v492 = vld [vmem:[%s392 + $0xc8] sm:$0xff]
        %v493 = vld [vmem:[%s392 + $0xd0] sm:$0xff]
        %v494 = vld [vmem:[%s392 + $0xd8] sm:$0xff]
        %v495 = vld [vmem:[%s392 + $0xe0] sm:$0xff]
        %v496 = vld [vmem:[%s392 + $0xe8] sm:$0xff]
        %v497 = vld [vmem:[%s392 + $0xf0] sm:$0xff]
        %v498 = vld [vmem:[%s392 + $0xf8] sm:$0xff]
        %v499 = vld [vmem:[%s392 + $0x100] sm:$0xff]
        %v500 = vld [vmem:[%s392 + $0x108] sm:$0xff]
        %v501 = vld [vmem:[%s392 + $0x110] sm:$0xff]
        %v502 = vld [vmem:[%s392 + $0x118] sm:$0xff]
        %v503 = vld [vmem:[%s392 + $0x120] sm:$0xff]
        %v504 = vld [vmem:[%s392 + $0x128] sm:$0xff]
        %v505 = vld [vmem:[%s392 + $0x130] sm:$0xff]
        %v506 = vld [vmem:[%s392 + $0x138] sm:$0xff]
        %v507 = vld [vmem:[%s392 + $0x140] sm:$0xff]
        %v508 = vld [vmem:[%s392 + $0x148] sm:$0xff]
        %v509 = vld [vmem:[%s392 + $0x150] sm:$0xff]
        %v510 = vld [vmem:[%s392 + $0x158] sm:$0xff]
        %v511 = vld [vmem:[%s392 + $0x160] sm:$0xff]
        %v512 = vld [vmem:[%s392 + $0x168] sm:$0xff]
        %v513 = vld [vmem:[%s392 + $0x170] sm:$0xff]
        %v514 = vld [vmem:[%s392 + $0x178] sm:$0xff]
        %v515 = vld [vmem:[%s392 + $0x180] sm:$0xff]
        %v516 = vld [vmem:[%s392 + $0x188] sm:$0xff]
        %v517 = vld [vmem:[%s392 + $0x190] sm:$0xff]
        %v518 = vld [vmem:[%s392 + $0x198] sm:$0xff]
        %v519 = vld [vmem:[%s392 + $0x1a0] sm:$0xff]
        %v520 = vld [vmem:[%s392 + $0x1a8] sm:$0xff]
        %v521 = vld [vmem:[%s392 + $0x1b0] sm:$0xff]
        %v522 = vld [vmem:[%s392 + $0x1b8] sm:$0xff]
        %v523 = vld [vmem:[%s392 + $0x1c0] sm:$0xff]
        %v524 = vld [vmem:[%s392 + $0x1c8] sm:$0xff]
        %v525 = vld [vmem:[%s392 + $0x1d0] sm:$0xff]
        %v526 = vld [vmem:[%s392 + $0x1d8] sm:$0xff]
        %v527 = vld [vmem:[%s392 + $0x1e0] sm:$0xff]
        %v528 = vld [vmem:[%s392 + $0x1e8] sm:$0xff]
        %v529 = vld [vmem:[%s392 + $0x1f0] sm:$0xff]
        %v530 = vld [vmem:[%s392 + $0x1f8] sm:$0xff]
        %v531 = vld [vmem:[%s401] sm:$0xff]
        %v532 = vld [vmem:[%s401 + $0x8] sm:$0xff]
        %v533 = vld [vmem:[#allocation7] sm:$0xff]
        %v534 = vld [vmem:[#allocation7 + $0x8] sm:$0xff]
        %v537 = vunpack.c.l.b16 %v533
        %v538 = vunpack.c.h.b16 %v533
        %v539 = vunpack.c.l.b16 %v534
        %v540 = vunpack.c.h.b16 %v534
        %v541 = vpack.c.b16 %v537, %v537
        %v542 = vpack.c.b16 %v538, %v538
        %v543 = vpack.c.b16 %v539, %v539
        %v544 = vpack.c.b16 %v540, %v540
        %v613 = vunpack.c.l.b16 %v467
        %v614 = vunpack.c.h.b16 %v467
        %v615 = vunpack.c.l.b16 %v468
        %v616 = vunpack.c.h.b16 %v468
        %v617 = vunpack.c.l.b16 %v469
        %v618 = vunpack.c.h.b16 %v469
        %v619 = vunpack.c.l.b16 %v470
        %v620 = vunpack.c.h.b16 %v470
        %v621 = vunpack.c.l.b16 %v471
        %v622 = vunpack.c.h.b16 %v471
        %v623 = vunpack.c.l.b16 %v472
        %v624 = vunpack.c.h.b16 %v472
        %v625 = vunpack.c.l.b16 %v473
        %v626 = vunpack.c.h.b16 %v473
        %v627 = vunpack.c.l.b16 %v474
        %v628 = vunpack.c.h.b16 %v474
        %v629 = vunpack.c.l.b16 %v475
        %v630 = vunpack.c.h.b16 %v475
        %v631 = vunpack.c.l.b16 %v476
        %v632 = vunpack.c.h.b16 %v476
        %v633 = vunpack.c.l.b16 %v477
        %v634 = vunpack.c.h.b16 %v477
        %v635 = vunpack.c.l.b16 %v478
        %v636 = vunpack.c.h.b16 %v478
        %v637 = vunpack.c.l.b16 %v479
        %v638 = vunpack.c.h.b16 %v479
        %v639 = vunpack.c.l.b16 %v480
        %v640 = vunpack.c.h.b16 %v480
        %v641 = vunpack.c.l.b16 %v481
        %v642 = vunpack.c.h.b16 %v481
        %v643 = vunpack.c.l.b16 %v482
        %v644 = vunpack.c.h.b16 %v482
        %v645 = vunpack.c.l.b16 %v483
        %v646 = vunpack.c.h.b16 %v483
        %v647 = vunpack.c.l.b16 %v484
        %v648 = vunpack.c.h.b16 %v484
        %v649 = vunpack.c.l.b16 %v485
        %v650 = vunpack.c.h.b16 %v485
        %v651 = vunpack.c.l.b16 %v486
        %v652 = vunpack.c.h.b16 %v486
        %v653 = vunpack.c.l.b16 %v487
        %v654 = vunpack.c.h.b16 %v487
        %v655 = vunpack.c.l.b16 %v488
        %v656 = vunpack.c.h.b16 %v488
        %v657 = vunpack.c.l.b16 %v489
        %v658 = vunpack.c.h.b16 %v489
        %v659 = vunpack.c.l.b16 %v490
        %v660 = vunpack.c.h.b16 %v490
        %v661 = vunpack.c.l.b16 %v491
        %v662 = vunpack.c.h.b16 %v491
        %v663 = vunpack.c.l.b16 %v492
        %v664 = vunpack.c.h.b16 %v492
        %v665 = vunpack.c.l.b16 %v493
        %v666 = vunpack.c.h.b16 %v493
        %v667 = vunpack.c.l.b16 %v494
        %v668 = vunpack.c.h.b16 %v494
        %v669 = vunpack.c.l.b16 %v495
        %v670 = vunpack.c.h.b16 %v495
        %v671 = vunpack.c.l.b16 %v496
        %v672 = vunpack.c.h.b16 %v496
        %v673 = vunpack.c.l.b16 %v497
        %v674 = vunpack.c.h.b16 %v497
        %v675 = vunpack.c.l.b16 %v498
        %v676 = vunpack.c.h.b16 %v498
        %v677 = vunpack.c.l.b16 %v499
        %v678 = vunpack.c.h.b16 %v499
        %v679 = vunpack.c.l.b16 %v500
        %v680 = vunpack.c.h.b16 %v500
        %v681 = vunpack.c.l.b16 %v501
        %v682 = vunpack.c.h.b16 %v501
        %v683 = vunpack.c.l.b16 %v502
        %v684 = vunpack.c.h.b16 %v502
        %v685 = vunpack.c.l.b16 %v503
        %v686 = vunpack.c.h.b16 %v503
        %v687 = vunpack.c.l.b16 %v504
        %v688 = vunpack.c.h.b16 %v504
        %v689 = vunpack.c.l.b16 %v505
        %v690 = vunpack.c.h.b16 %v505
        %v691 = vunpack.c.l.b16 %v506
        %v692 = vunpack.c.h.b16 %v506
        %v693 = vunpack.c.l.b16 %v507
        %v694 = vunpack.c.h.b16 %v507
        %v695 = vunpack.c.l.b16 %v508
        %v696 = vunpack.c.h.b16 %v508
        %v697 = vunpack.c.l.b16 %v509
        %v698 = vunpack.c.h.b16 %v509
        %v699 = vunpack.c.l.b16 %v510
        %v700 = vunpack.c.h.b16 %v510
        %v701 = vunpack.c.l.b16 %v511
        %v702 = vunpack.c.h.b16 %v511
        %v703 = vunpack.c.l.b16 %v512
        %v704 = vunpack.c.h.b16 %v512
        %v705 = vunpack.c.l.b16 %v513
        %v706 = vunpack.c.h.b16 %v513
        %v707 = vunpack.c.l.b16 %v514
        %v708 = vunpack.c.h.b16 %v514
        %v709 = vunpack.c.l.b16 %v515
        %v710 = vunpack.c.h.b16 %v515
        %v711 = vunpack.c.l.b16 %v516
        %v712 = vunpack.c.h.b16 %v516
        %v713 = vunpack.c.l.b16 %v517
        %v714 = vunpack.c.h.b16 %v517
        %v715 = vunpack.c.l.b16 %v518
        %v716 = vunpack.c.h.b16 %v518
        %v717 = vunpack.c.l.b16 %v519
        %v718 = vunpack.c.h.b16 %v519
        %v719 = vunpack.c.l.b16 %v520
        %v720 = vunpack.c.h.b16 %v520
        %v721 = vunpack.c.l.b16 %v521
        %v722 = vunpack.c.h.b16 %v521
        %v723 = vunpack.c.l.b16 %v522
        %v724 = vunpack.c.h.b16 %v522
        %v725 = vunpack.c.l.b16 %v523
        %v726 = vunpack.c.h.b16 %v523
        %v727 = vunpack.c.l.b16 %v524
        %v728 = vunpack.c.h.b16 %v524
        %v729 = vunpack.c.l.b16 %v525
        %v730 = vunpack.c.h.b16 %v525
        %v731 = vunpack.c.l.b16 %v526
        %v732 = vunpack.c.h.b16 %v526
        %v733 = vunpack.c.l.b16 %v527
        %v734 = vunpack.c.h.b16 %v527
        %v735 = vunpack.c.l.b16 %v528
        %v736 = vunpack.c.h.b16 %v528
        %v737 = vunpack.c.l.b16 %v529
        %v738 = vunpack.c.h.b16 %v529
        %v739 = vunpack.c.l.b16 %v530
        %v740 = vunpack.c.h.b16 %v530
        %v741 = vpack.c.b16 %v615, %v613
        %v742 = vpack.c.b16 %v616, %v614
        %v743 = vpack.c.b16 %v619, %v617
        %v744 = vpack.c.b16 %v620, %v618
        %v745 = vpack.c.b16 %v623, %v621
        %v746 = vpack.c.b16 %v624, %v622
        %v747 = vpack.c.b16 %v627, %v625
        %v748 = vpack.c.b16 %v628, %v626
        %v749 = vpack.c.b16 %v631, %v629
        %v750 = vpack.c.b16 %v632, %v630
        %v751 = vpack.c.b16 %v635, %v633
        %v752 = vpack.c.b16 %v636, %v634
        %v753 = vpack.c.b16 %v639, %v637
        %v754 = vpack.c.b16 %v640, %v638
        %v755 = vpack.c.b16 %v643, %v641
        %v756 = vpack.c.b16 %v644, %v642
        %v757 = vpack.c.b16 %v647, %v645
        %v758 = vpack.c.b16 %v648, %v646
        %v759 = vpack.c.b16 %v651, %v649
        %v760 = vpack.c.b16 %v652, %v650
        %v761 = vpack.c.b16 %v655, %v653
        %v762 = vpack.c.b16 %v656, %v654
        %v763 = vpack.c.b16 %v659, %v657
        %v764 = vpack.c.b16 %v660, %v658
        %v765 = vpack.c.b16 %v663, %v661
        %v766 = vpack.c.b16 %v664, %v662
        %v767 = vpack.c.b16 %v667, %v665
        %v768 = vpack.c.b16 %v668, %v666
        %v769 = vpack.c.b16 %v671, %v669
        %v770 = vpack.c.b16 %v672, %v670
        %v771 = vpack.c.b16 %v675, %v673
        %v772 = vpack.c.b16 %v676, %v674
        %v773 = vpack.c.b16 %v679, %v677
        %v774 = vpack.c.b16 %v680, %v678
        %v775 = vpack.c.b16 %v683, %v681
        %v776 = vpack.c.b16 %v684, %v682
        %v777 = vpack.c.b16 %v687, %v685
        %v778 = vpack.c.b16 %v688, %v686
        %v779 = vpack.c.b16 %v691, %v689
        %v780 = vpack.c.b16 %v692, %v690
        %v781 = vpack.c.b16 %v695, %v693
        %v782 = vpack.c.b16 %v696, %v694
        %v783 = vpack.c.b16 %v699, %v697
        %v784 = vpack.c.b16 %v700, %v698
        %v785 = vpack.c.b16 %v703, %v701
        %v786 = vpack.c.b16 %v704, %v702
        %v787 = vpack.c.b16 %v707, %v705
        %v788 = vpack.c.b16 %v708, %v706
        %v789 = vpack.c.b16 %v711, %v709
        %v790 = vpack.c.b16 %v712, %v710
        %v791 = vpack.c.b16 %v715, %v713
        %v792 = vpack.c.b16 %v716, %v714
        %v793 = vpack.c.b16 %v719, %v717
        %v794 = vpack.c.b16 %v720, %v718
        %v795 = vpack.c.b16 %v723, %v721
        %v796 = vpack.c.b16 %v724, %v722
        %v797 = vpack.c.b16 %v727, %v725
        %v798 = vpack.c.b16 %v728, %v726
        %v799 = vpack.c.b16 %v731, %v729
        %v800 = vpack.c.b16 %v732, %v730
        %v801 = vpack.c.b16 %v735, %v733
        %v802 = vpack.c.b16 %v736, %v734
        %v803 = vpack.c.b16 %v739, %v737
        %v804 = vpack.c.b16 %v740, %v738
        %869 = vmatprep.subr.bf16.mxu0 %v742
        %870 = vmatpush1.bf16.msra.mxu0 %v741
        %871 = vmatprep.subr.bf16.mxu0 %v744
        %872 = vmatpush1.bf16.msra.mxu0 %v743
        %873 = vmatprep.subr.bf16.mxu0 %v746
        %874 = vmatpush1.bf16.msra.mxu0 %v745
        %875 = vmatprep.subr.bf16.mxu0 %v748
        %876 = vmatpush1.bf16.msra.mxu0 %v747
        %877 = vmatprep.subr.bf16.mxu0 %v750
        %878 = vmatpush1.bf16.msra.mxu0 %v749
        %879 = vmatprep.subr.bf16.mxu0 %v752
        %880 = vmatpush1.bf16.msra.mxu0 %v751
        %881 = vmatprep.subr.bf16.mxu0 %v754
        %882 = vmatpush1.bf16.msra.mxu0 %v753
        %883 = vmatprep.subr.bf16.mxu0 %v756
        %884 = vmatpush1.bf16.msra.mxu0 %v755
        %885 = vmatprep.subr.bf16.mxu0 %v758
        %886 = vmatpush1.bf16.msra.mxu0 %v757
        %887 = vmatprep.subr.bf16.mxu0 %v760
        %888 = vmatpush1.bf16.msra.mxu0 %v759
        %889 = vmatprep.subr.bf16.mxu0 %v762
        %890 = vmatpush1.bf16.msra.mxu0 %v761
        %891 = vmatprep.subr.bf16.mxu0 %v764
        %892 = vmatpush1.bf16.msra.mxu0 %v763
        %893 = vmatprep.subr.bf16.mxu0 %v766
        %894 = vmatpush1.bf16.msra.mxu0 %v765
        %895 = vmatprep.subr.bf16.mxu0 %v768
        %896 = vmatpush1.bf16.msra.mxu0 %v767
        %897 = vmatprep.subr.bf16.mxu0 %v770
        %898 = vmatpush1.bf16.msra.mxu0 %v769
        %899 = vmatprep.subr.bf16.mxu0 %v772
        %900 = vmatpush1.bf16.msra.mxu0 %v771
        %901 = vmatprep.mubr.bf16.mxu0 %v542
        %902 = vmatmul.mubr.bf16.gmra.mrb[0].mxu0 %v541
        %v903 = vpop.f32.mrb[0].mxu0
        %v904 = vadd.f32 0.0, %v903
        %v905 = vpop.f32.mrb[0].mxu0
        %v906 = vadd.f32 0.0, %v905
        %v907 = vpop.f32.mrb[0].mxu0
        %v908 = vpop.f32.mrb[0].mxu0
        %909 = vdwg.mxu0
        %910 = vmatprep.subr.bf16.mxu0 %v774
        %911 = vmatpush1.bf16.msra.mxu0 %v773
        %912 = vmatprep.subr.bf16.mxu0 %v776
        %913 = vmatpush1.bf16.msra.mxu0 %v775
        %914 = vmatprep.subr.bf16.mxu0 %v778
        %915 = vmatpush1.bf16.msra.mxu0 %v777
        %916 = vmatprep.subr.bf16.mxu0 %v780
        %917 = vmatpush1.bf16.msra.mxu0 %v779
        %918 = vmatprep.subr.bf16.mxu0 %v782
        %919 = vmatpush1.bf16.msra.mxu0 %v781
        %920 = vmatprep.subr.bf16.mxu0 %v784
        %921 = vmatpush1.bf16.msra.mxu0 %v783
        %922 = vmatprep.subr.bf16.mxu0 %v786
        %923 = vmatpush1.bf16.msra.mxu0 %v785
        %924 = vmatprep.subr.bf16.mxu0 %v788
        %925 = vmatpush1.bf16.msra.mxu0 %v787
        %926 = vmatprep.subr.bf16.mxu0 %v790
        %927 = vmatpush1.bf16.msra.mxu0 %v789
        %928 = vmatprep.subr.bf16.mxu0 %v792
        %929 = vmatpush1.bf16.msra.mxu0 %v791
        %930 = vmatprep.subr.bf16.mxu0 %v794
        %931 = vmatpush1.bf16.msra.mxu0 %v793
        %932 = vmatprep.subr.bf16.mxu0 %v796
        %933 = vmatpush1.bf16.msra.mxu0 %v795
        %934 = vmatprep.subr.bf16.mxu0 %v798
        %935 = vmatpush1.bf16.msra.mxu0 %v797
        %936 = vmatprep.subr.bf16.mxu0 %v800
        %937 = vmatpush1.bf16.msra.mxu0 %v799
        %938 = vmatprep.subr.bf16.mxu0 %v802
        %939 = vmatpush1.bf16.msra.mxu0 %v801
        %940 = vmatprep.subr.bf16.mxu0 %v804
        %941 = vmatpush1.bf16.msra.mxu0 %v803
        %942 = vmatprep.mubr.bf16.mxu0 %v544
        %943 = vmatmul.mubr.bf16.gmra.mrb[0].mxu0 %v543
        %v944 = vpop.f32.mrb[0].mxu0
        %v945 = vadd.f32 %v904, %v944
        %v946 = vpop.f32.mrb[0].mxu0
        %v947 = vadd.f32 %v906, %v946
        %v948 = vpop.f32.mrb[0].mxu0
        %v949 = vpop.f32.mrb[0].mxu0
        %950 = vdwg.mxu0
        %v951 = vadd.f32 %v531, %v945
        %v952 = vadd.f32 %v532, %v947
        %v953 = vld [vmem:[#allocation8] sm:$0xff]
        %955 = vset.pattern.permute.xlu0 0
        %956 = vperm.xlu0 %955, %v953
        %v957 = vpop.permute.xlu0 %956
        %v959 = vadd.f32 %v951, %v957
        %v960 = vadd.f32 %v952, %v957
        %v961 = vld [vmem:[#allocation10] sm:$0xf]
        %v962 = vld [vmem:[#allocation10 + $0x4] sm:$0xf]
        %v963 = vpack.c.bf16 %v959, %v959
        %v964 = vpack.c.bf16 %v960, %v960
        %v965 = vld [vmem:[#allocation11] sm:$0xff]
        %v966 = vld [vmem:[#allocation11 + $0x8] sm:$0xff]
        %968 = vset.pattern.permute.xlu0 0
        %969 = vperm.xlu0 %968, %v965
        %v970 = vpop.permute.xlu0 %969
        %973 = vset.pattern.permute.xlu0 0
        %974 = vperm.xlu0 %973, %v966
        %v975 = vpop.permute.xlu0 %974
        %v979 = vunpack.c.l.b16 %v961
        %v980 = vunpack.c.l.b16 %v962
        %v981 = vpack.c.b16 %v980, %v979
        %vm982 = vcmask 64512
        %v984 = vsel %vm982, %v981, 0
        %vm986 = vcmask 1043456
        %v988 = vsel %vm986, %v963, 0
        %v991 = vsel %vm986, %v964, 0
        %993 = vmatprep.subr.bf16.mxu0 %v991
        %994 = vmatpush1.bf16.msra.mxu0 %v988
        %995 = vmatprep.subr.bf16.mxu0 0
        %996 = vmatpush1.bf16.msra.mxu0 0
        %997 = vmatprep.subr.bf16.mxu0 0
        %998 = vmatpush1.bf16.msra.mxu0 0
        %999 = vmatprep.subr.bf16.mxu0 0
        %1000 = vmatpush1.bf16.msra.mxu0 0
        %1001 = vmatprep.subr.bf16.mxu0 0
        %1002 = vmatpush1.bf16.msra.mxu0 0
        %1003 = vmatprep.subr.bf16.mxu0 0
        %1004 = vmatpush1.bf16.msra.mxu0 0
        %1005 = vmatprep.subr.bf16.mxu0 0
        %1006 = vmatpush1.bf16.msra.mxu0 0
        %1007 = vmatprep.subr.bf16.mxu0 0
        %1008 = vmatpush1.bf16.msra.mxu0 0
        %1009 = vmatprep.subr.bf16.mxu0 0
        %1010 = vmatpush1.bf16.msra.mxu0 0
        %1011 = vmatprep.subr.bf16.mxu0 0
        %1012 = vmatpush1.bf16.msra.mxu0 0
        %1013 = vmatprep.subr.bf16.mxu0 0
        %1014 = vmatpush1.bf16.msra.mxu0 0
        %1015 = vmatprep.subr.bf16.mxu0 0
        %1016 = vmatpush1.bf16.msra.mxu0 0
        %1017 = vmatprep.subr.bf16.mxu0 0
        %1018 = vmatpush1.bf16.msra.mxu0 0
        %1019 = vmatprep.subr.bf16.mxu0 0
        %1020 = vmatpush1.bf16.msra.mxu0 0
        %1021 = vmatprep.subr.bf16.mxu0 0
        %1022 = vmatpush1.bf16.msra.mxu0 0
        %1023 = vmatprep.subr.bf16.mxu0 0
        %1024 = vmatpush1.bf16.msra.mxu0 0
        %1025 = vmatprep.mubr.bf16.mxu0 0
        %1026 = vmatmul.mubr.bf16.gmra.mrb[0].mxu0 %v984
        %v1027 = vpop.f32.mrb[0].mxu0
        %v1028 = vadd.f32 %v970, %v1027
        %v1029 = vpop.f32.mrb[0].mxu0
        %v1030 = vadd.f32 %v970, %v1029
        %v1031 = vpop.f32.mrb[0].mxu0
        %v1032 = vadd.f32 %v975, %v1031
        %v1033 = vpop.f32.mrb[0].mxu0
        %v1034 = vadd.f32 %v975, %v1033
        %1035 = vdwg.mxu0
        %v1036 = vxor.u32 %v1028, 2147483648
        %v1037 = vxor.u32 %v1030, 2147483648
        %v1038 = vxor.u32 %v1032, 2147483648
        %v1039 = vxor.u32 %v1034, 2147483648
        %v1040 = vmul.f32 %v1036, 1.442695
        %v1041 = vpow.pop %v1040
        %v1042 = vmul.f32 %v1037, 1.442695
        %v1043 = vpow.pop %v1042
        %v1044 = vmul.f32 %v1038, 1.442695
        %v1045 = vpow.pop %v1044
        %v1046 = vmul.f32 %v1039, 1.442695
        %v1047 = vpow.pop %v1046
        %v1048 = vadd.f32 %v1041, 1.0
        %v1049 = vadd.f32 %v1043, 1.0
        %v1050 = vadd.f32 %v1045, 1.0
        %v1051 = vadd.f32 %v1047, 1.0
        %v1052 = vrcp.pop %v1048
        %v1053 = vmul.f32 1.0, %v1052
        %v1054 = vrcp.pop %v1049
        %v1055 = vmul.f32 1.0, %v1054
        %v1056 = vrcp.pop %v1050
        %v1057 = vmul.f32 1.0, %v1056
        %v1058 = vrcp.pop %v1051
        %v1059 = vmul.f32 1.0, %v1058
        %v1060 = vmul.f32 %v1028, %v1053
        %v1061 = vmul.f32 %v1030, %v1055
        %v1062 = vmul.f32 %v1032, %v1057
        %v1063 = vmul.f32 %v1034, %v1059
        %v1064 = vld [vmem:[#allocation13] sm:$0xf]
        %v1065 = vpack.c.bf16 %v1062, %v1060
        %v1066 = vpack.c.bf16 %v1063, %v1061
        %v1067 = vld [vmem:[#allocation14] sm:$0xff]
        %1069 = vset.pattern.permute.xlu0 0
        %1070 = vperm.xlu0 %1069, %v1067
        %v1071 = vpop.permute.xlu0 %1070
        %vm1073 = vcmask 130048
        %v1075 = vsel %vm1073, %v1064, 0
        %1077 = vmatprep.subr.bf16.mxu0 %v1066
        %1078 = vmatpush1.bf16.msra.mxu0 %v1065
        %1079 = vmatprep.subr.bf16.mxu0 0
        %1080 = vmatpush1.bf16.msra.mxu0 0
        %1081 = vmatprep.subr.bf16.mxu0 0
        %1082 = vmatpush1.bf16.msra.mxu0 0
        %1083 = vmatprep.subr.bf16.mxu0 0
        %1084 = vmatpush1.bf16.msra.mxu0 0
        %1085 = vmatprep.subr.bf16.mxu0 0
        %1086 = vmatpush1.bf16.msra.mxu0 0
        %1087 = vmatprep.subr.bf16.mxu0 0
        %1088 = vmatpush1.bf16.msra.mxu0 0
        %1089 = vmatprep.subr.bf16.mxu0 0
        %1090 = vmatpush1.bf16.msra.mxu0 0
        %1091 = vmatprep.subr.bf16.mxu0 0
        %1092 = vmatpush1.bf16.msra.mxu0 0
        %1093 = vmatprep.subr.bf16.mxu0 0
        %1094 = vmatpush1.bf16.msra.mxu0 0
        %1095 = vmatprep.subr.bf16.mxu0 0
        %1096 = vmatpush1.bf16.msra.mxu0 0
        %1097 = vmatprep.subr.bf16.mxu0 0
        %1098 = vmatpush1.bf16.msra.mxu0 0
        %1099 = vmatprep.subr.bf16.mxu0 0
        %1100 = vmatpush1.bf16.msra.mxu0 0
        %1101 = vmatprep.subr.bf16.mxu0 0
        %1102 = vmatpush1.bf16.msra.mxu0 0
        %1103 = vmatprep.subr.bf16.mxu0 0
        %1104 = vmatpush1.bf16.msra.mxu0 0
        %1105 = vmatprep.subr.bf16.mxu0 0
        %1106 = vmatpush1.bf16.msra.mxu0 0
        %1107 = vmatprep.subr.bf16.mxu0 0
        %1108 = vmatpush1.bf16.msra.mxu0 0
        %1109 = vmatprep.mubr.bf16.mxu0 0
        %1110 = vmatmul.mubr.bf16.gmra.mrb[0].mxu0 %v1075
        %v1111 = vpop.f32.mrb[0].mxu0
        %v1112 = vadd.f32 %v1071, %v1111
        %v1113 = vpop.f32.mrb[0].mxu0
        %v1114 = vadd.f32 %v1071, %v1113
        %v1115 = vpop.f32.mrb[0].mxu0
        %v1116 = vpop.f32.mrb[0].mxu0
        %1117 = vdwg.mxu0
        %v1118 = vadd.f32 %v959, %v1112
        %v1119 = vadd.f32 %v960, %v1114
        %1120 = vst [vmem:[%s462] sm:$0xff] %v1118
        %1121 = vst [vmem:[%s462 + $0x8] sm:$0xff] %v1119
        %s1122 = sand.u32 %s235, 1
        %s1123 = scalar_lea.sflag [#allocation4], %s1122
        %s1124 = sand.u32 %s235, 1
        %s1125 = smul.addr %s1124, 16
        %s1126 = scalar_lea.vmem [#allocation16], %s1125
        // Predicated region
        $region85: #{dablock_forward.9} parent=51 // pred_check
          %p1127 = pneg %p245
        $region86: #{dablock_forward.9} parent=51 // pred_check_branch
          %1129 = sbr.rel (%p1127) target = $region88
        $region87: #{dablock_forward.9} parent=51 // pred_region
          %s1130 = smul.u32 2, %s35
          %s1132 = ssub.s32 256, 256
          %1133 = vsyncadd %s1123, %s1132
          %s1134 = smul.addr %s36, 2
          %s1135 = sadd.s32 %s1130, %s1134
          %s1136 = smul.addr %s1135, 128
          %s1137 = scalar_lea.hbm %s8, %s1136
          %s1139 = sshll.u32 %s1126, 4
          %s1140 = int_to_ptr.vmem [resolvable:$true] %s1139
          %1142 = dma.vmem_to_hbm [thread:$0]  %s1140, 256, %s1137, %s1123
        $region88: #{dablock_forward.9} parent=51 // pred_fallthru
          _
      $region52: #{dablock_forward.9} parent=5 // pred_fallthru
        _
      %p1143 = scmp.le.s32.totalorder 2, %s26
      // Predicated region
      $region89: #{dablock_forward.9} parent=5 // pred_check
        %p1144 = pneg %p1143
      $region90: #{dablock_forward.9} parent=5 // pred_check_branch
        %1146 = sbr.rel (%p1144) target = $region92
      $region91: #{dablock_forward.9} parent=5 // pred_region
        %s1147 = ssub.s32 %s26, 2
        // Predicated region
        $region93: #{dablock_forward.9} parent=91 // pred_check
          %p1148 = pneg %p251
        $region94: #{dablock_forward.9} parent=91 // pred_check_branch
          %1150 = sbr.rel (%p1148) target = $region96
        $region95: #{dablock_forward.9} parent=91 // pred_region
          %s1151 = sand.u32 %s236, 1
          %s1152 = scalar_lea.sflag [#allocation4], %s1151
          %s1153 = sand.u32 %s236, 1
          %s1154 = smul.addr %s1153, 16
          %s1155 = scalar_lea.vmem [#allocation16], %s1154
          %1156 = dma.done %s1152, 256
        $region96: #{dablock_forward.9} parent=91 // pred_fallthru
          _
      $region92: #{dablock_forward.9} parent=5 // pred_fallthru
        _
    $region6: #{dablock_forward.9} parent=1 // loop_footer
      %s30 = sadd.s32 1, %s26
    $region7: #{dablock_forward.9} parent=1 // loop_footer_branch
      %25 = sbr.rel target = $region3
    $region8: #{dablock_forward.9} parent=1 // loop_exit
      _
    %1157 = vsyncpa [#allocation3], 1
    %s1158 = scalar_lea.sflag [#allocation3], 1
    %1159 = vsyncpa %s1158, 1
    %1160 = vsyncpa [#allocation6], 1
    %s1161 = scalar_lea.sflag [#allocation6], 1
    %1162 = vsyncpa %s1161, 1
    %1163 = vsyncpa [#allocation9], 1
    %1164 = vsyncpa [#allocation12], 1
    %1165 = vsyncpa [#allocation15], 1
    %1166 = vsyncpa [#allocation4], 1
    %s1167 = scalar_lea.sflag [#allocation4], 1
    %1168 = vsyncpa %s1167, 1

</llo_original>
